<compile_context>
chip_gen: v6e
topology: v6e:2x2x1
jax: 0.10.0
libtpu: 0.0.40
codegen_flags: <defaults>
</compile_context>

<pallas_src>
import functools

import jax
import jax.numpy as jnp
from jax import lax
from jax.experimental import pallas as pl
from jax.experimental.pallas import tpu as pltpu


# ---------------------------------------------------------------------------
# Pallas kernel: chunked conv(as matmul) + ReLU + pooled-sum accumulation,
#                projection MLP on the final spatial step.
# ---------------------------------------------------------------------------
def _simclr_kernel(inv_hw, hw, tp, ch, need_mask,
                   patches_ref,   # (TB, TP, K)  bf16 im2col patch tile (pipelined)
                   wconv_ref,     # (K, 512)     bf16 conv weight (resident)
                   bconv_ref,     # (1, 512)     f32 conv bias (resident)
                   w1_ref,        # (512, 512)   bf16 head hidden weight (resident)
                   b1_ref,        # (1, 512)     f32 head hidden bias (resident)
                   w2_ref,        # (512, 128)   bf16 head output weight (resident)
                   b2_ref,        # (1, 128)     f32 head output bias (resident)
                   out_ref,       # (TB, 128)    f32 z (resident across spatial axis)
                   acc_ref):      # (TB, 512)    f32 pooled-sum scratch
    s = pl.program_id(1)

    @pl.when(s == 0)
    def _init():
        acc_ref[...] = jnp.zeros_like(acc_ref)

    tb, _, k = patches_ref.shape
    feat = wconv_ref.shape[1]
    n_chunks = tp // ch

    # Hoist resident loads out of the chunk loop (JAX doesn't CSE broadcasts).
    wconv = wconv_ref[...]
    bconv = bconv_ref[...]

    def chunk_body(c, acc):
        start = pl.multiple_of(c * ch, ch)
        p = patches_ref[:, pl.ds(start, ch), :]                       # (TB, CH, K) bf16
        conv = jnp.dot(p.reshape(tb * ch, k), wconv,
                       preferred_element_type=jnp.float32)            # (TB*CH, F) f32
        conv = jnp.maximum(conv + bconv, 0.0)                          # bias + ReLU
        conv = conv.reshape(tb, ch, feat)
        if need_mask:
            # Zero out spatial rows that are padding past H*W (pad rows would
            # otherwise contribute relu(bias) to the pooled sum).
            pos = s * tp + start + lax.broadcasted_iota(jnp.int32, (1, ch, 1), 1)
            conv = jnp.where(pos < hw, conv, 0.0)
        return acc + jnp.sum(conv, axis=1)                             # (TB, F)

    acc_ref[...] += lax.fori_loop(
        0, n_chunks, chunk_body,
        jnp.zeros((tb, feat), jnp.float32), unroll=True)

    @pl.when(s == pl.num_programs(1) - 1)
    def _finalize():
        # Mean pool == AdaptiveAvgPool2d(1) + flatten(start_dim=1).
        feats = acc_ref[...] * inv_hw                                  # (TB, 512) f32

        # Projection head: Linear -> ReLU -> Linear (bf16 MXU, f32 accumulate).
        h = jnp.dot(feats.astype(jnp.bfloat16), w1_ref[...],
                    preferred_element_type=jnp.float32) + b1_ref[...]
        h = jnp.maximum(h, 0.0)                                        # (TB, 512)
        z = jnp.dot(h.astype(jnp.bfloat16), w2_ref[...],
                    preferred_element_type=jnp.float32) + b2_ref[...]
        out_ref[...] = z.astype(out_ref.dtype)                         # (TB, 128)


# ---------------------------------------------------------------------------
# Glue: im2col (pad + patch extraction) in bf16 — layout plumbing, stays in JAX.
# ---------------------------------------------------------------------------
def im2col_bf16(x, kh=3, kw=3, pad=1):
    """x: (B, C, H, W) NCHW f32 -> bf16 patches (B, H*W, C*kh*kw), stride 1."""
    B, C, H, W = x.shape
    x = x.astype(jnp.bfloat16)                                         # cast BEFORE 9x expansion
    xp = jnp.pad(x, ((0, 0), (0, 0), (pad, pad), (pad, pad)))
    cols = [xp[:, :, i:i + H, j:j + W] for i in range(kh) for j in range(kw)]
    patches = jnp.stack(cols, axis=2)                                  # (B, C, kh*kw, H, W)
    patches = patches.transpose(0, 3, 4, 1, 2)                         # (B, H, W, C, kh*kw)
    return patches.reshape(B, H * W, C * kh * kw)


def _choose_spatial_tiling(hw, max_tp=1024):
    """Spatial tile TP (<= max_tp) and padded spatial extent HW_pad (multiple of TP)."""
    for tp in (1024, 512, 256, 128, 64, 32, 16, 8):
        if tp <= max_tp and hw % tp == 0:
            return tp, hw                       # exact tiling, no mask needed
    # No clean divisor: pad H*W up to a multiple of 256 and mask in-kernel.
    tp = min(256, max_tp)
    hw_pad = ((hw + tp - 1) // tp) * tp
    return tp, hw_pad


# ---------------------------------------------------------------------------
# Wrapper: parameter setup + pallas_call
# ---------------------------------------------------------------------------
def make_params(key, c_in, feat_dim=512, hidden_dim=512, out_dim=128, kh=3, kw=3):
    ks = jax.random.split(key, 6)
    k = c_in * kh * kw
    scale = lambda fan_in: 1.0 / jnp.sqrt(jnp.float32(fan_in))
    wconv = jax.random.normal(ks[0], (k, feat_dim), jnp.float32) * scale(k)
    bconv = jax.random.normal(ks[1], (1, feat_dim), jnp.float32) * 0.01
    w1 = jax.random.normal(ks[2], (feat_dim, hidden_dim), jnp.float32) * scale(feat_dim)
    b1 = jax.random.normal(ks[3], (1, hidden_dim), jnp.float32) * 0.01
    w2 = jax.random.normal(ks[4], (hidden_dim, out_dim), jnp.float32) * scale(hidden_dim)
    b2 = jax.random.normal(ks[5], (1, out_dim), jnp.float32) * 0.01
    return wconv, bconv, w1, b1, w2, b2


@jax.jit
def simclr_forward(x_nchw, wconv, bconv, w1, b1, w2, b2):
    B, C, H, W = x_nchw.shape
    HW = H * W
    K, F = wconv.shape
    Fh = w1.shape[1]
    O = w2.shape[1]

    # im2col in bf16 (layout work stays in JAX).
    patches = im2col_bf16(x_nchw)                                      # (B, HW, K) bf16

    # Batch tile: 16 keeps the bf16 head matmuls sublane-aligned and gives
    # >=2 batch blocks for B>=32 (v7x two-core sharding); 8 for tiny batches.
    TB = 16 if B > 8 else 8
    B_pad = ((B + TB - 1) // TB) * TB

    TP, HW_pad = _choose_spatial_tiling(HW)
    need_mask = HW_pad != HW
    if B_pad != B or need_mask:
        patches = jnp.pad(patches, ((0, B_pad - B), (0, HW_pad - HW), (0, 0)))

    # Conv-matmul chunk size: ~256-512 rows per MXU push, <=32 unrolled chunks
    # per grid step (bounds the live f32 intermediate to <= ~1 MiB).
    CH = max(8, min(TP, 256 // TB))
    while TP // CH > 32:
        CH *= 2

    grid = (B_pad // TB, HW_pad // TP)                                 # (batch, spatial-reduce)

    kernel = functools.partial(_simclr_kernel, 1.0 / float(HW), HW, TP, CH, need_mask)

    cost = pl.CostEstimate(
        flops=2 * B_pad * HW_pad * K * F + 2 * B_pad * (F * Fh + Fh * O),
        transcendentals=0,
        bytes_accessed=(B_pad * HW_pad * K * 2                         # bf16 patches
                        + (K * F + F * Fh + Fh * O) * 2                # bf16 weights
                        + (F + Fh + O) * 4                             # f32 biases
                        + B_pad * O * 4),                              # f32 output
    )

    z_pad = pl.pallas_call(
        kernel,
        out_shape=jax.ShapeDtypeStruct((B_pad, O), jnp.float32),
        grid_spec=pltpu.PrefetchScalarGridSpec(
            num_scalar_prefetch=0,
            grid=grid,
            in_specs=[
                # Patch tile: pipelined / double-buffered by Pallas.
                pl.BlockSpec((TB, TP, K), lambda b, s: (b, s, 0)),
                # Weights & biases: VMEM-resident (constant index_map).
                pl.BlockSpec((K, F), lambda b, s: (0, 0)),
                pl.BlockSpec((1, F), lambda b, s: (0, 0)),
                pl.BlockSpec((F, Fh), lambda b, s: (0, 0)),
                pl.BlockSpec((1, Fh), lambda b, s: (0, 0)),
                pl.BlockSpec((Fh, O), lambda b, s: (0, 0)),
                pl.BlockSpec((1, O), lambda b, s: (0, 0)),
            ],
            # Output resident across the spatial (reduction) axis.
            out_specs=pl.BlockSpec((TB, O), lambda b, s: (b, 0)),
            scratch_shapes=[pltpu.VMEM((TB, F), jnp.float32)],
        ),
        compiler_params=pltpu.CompilerParams(
            dimension_semantics=("parallel", "arbitrary"),
            vmem_limit_bytes=48 << 20,   # safe on v7x (64 MiB physical) and below
        ),
        cost_estimate=cost,
    )(patches,
      wconv.astype(jnp.bfloat16), bconv,
      w1.astype(jnp.bfloat16), b1,
      w2.astype(jnp.bfloat16), b2)

    return z_pad[:B]


if __name__ == "__main__":
    key = jax.random.PRNGKey(0)
    k_x, k_p = jax.random.split(key)

    # Small deterministic example input, PyTorch NCHW convention.
    B, C, H, W = 2, 4, 16, 16
    x = jax.random.normal(k_x, (B, C, H, W), jnp.float32)

    params = make_params(k_p, c_in=C)
    z = simclr_forward(x, *params)
    z = jax.block_until_ready(z)

    assert z.shape == (B, 128) and z.dtype == jnp.float32
    print("KERNEL_OK")
</pallas_src>

<mosaic_0001>
module attributes {stable_mosaic.version = 11 : i64} {
  func.func @_simclr_kernel(%arg0: i32, %arg1: i32, %arg2: memref<8x256x36xbf16, #tpu.memory_space<vmem>>, %arg3: memref<36x512xbf16, #tpu.memory_space<vmem>>, %arg4: memref<1x512xf32, #tpu.memory_space<vmem>>, %arg5: memref<512x512xbf16, #tpu.memory_space<vmem>>, %arg6: memref<1x512xf32, #tpu.memory_space<vmem>>, %arg7: memref<512x128xbf16, #tpu.memory_space<vmem>>, %arg8: memref<1x128xf32, #tpu.memory_space<vmem>>, %arg9: memref<8x128xf32, #tpu.memory_space<vmem>>, %arg10: memref<8x512xf32, #tpu.memory_space<vmem>>) attributes {dimension_semantics = [#tpu.dimension_semantics<parallel>, #tpu.dimension_semantics<arbitrary>], iteration_bounds = array<i64: 1, 1>, scalar_prefetch = 0 : i64, scratch_operands = 1 : i64, tpu.core_type = #tpu.core_type<tc>, window_params = [{transform_indices = @transform_0, window_bounds = array<i64: 8, 256, 36>}, {pipeline_mode = #tpu.pipeline_mode<synchronous>, transform_indices = @transform_1, window_bounds = array<i64: 36, 512>}, {pipeline_mode = #tpu.pipeline_mode<synchronous>, transform_indices = @transform_2, window_bounds = array<i64: 1, 512>}, {pipeline_mode = #tpu.pipeline_mode<synchronous>, transform_indices = @transform_3, window_bounds = array<i64: 512, 512>}, {pipeline_mode = #tpu.pipeline_mode<synchronous>, transform_indices = @transform_4, window_bounds = array<i64: 1, 512>}, {pipeline_mode = #tpu.pipeline_mode<synchronous>, transform_indices = @transform_5, window_bounds = array<i64: 512, 128>}, {pipeline_mode = #tpu.pipeline_mode<synchronous>, transform_indices = @transform_6, window_bounds = array<i64: 1, 128>}, {transform_indices = @transform_7, window_bounds = array<i64: 8, 128>}]} {
    %c0_i32 = arith.constant 0 : i32
    %0 = arith.cmpi eq, %arg1, %c0_i32 : i32
    %1 = arith.extui %0 : i1 to i32
    %c0_i32_0 = arith.constant 0 : i32
    %2 = arith.cmpi ne, %1, %c0_i32_0 : i32
    scf.if %2 {
      %cst_58 = arith.constant 0.000000e+00 : f32
      %116 = vector.broadcast %cst_58 : f32 to vector<8x512xf32>
      %c0_59 = arith.constant 0 : index
      %c0_60 = arith.constant 0 : index
      %117 = vector.load %arg10[%c0_59, %c0_60] : memref<8x512xf32, #tpu.memory_space<vmem>>, vector<8x512xf32>
      tpu.vector_store %arg10[%c0_59, %c0_60], %116 {strides = array<i32>} : memref<8x512xf32, #tpu.memory_space<vmem>>, vector<8x512xf32>,
    } else {
    }
    %c0 = arith.constant 0 : index
    %c0_1 = arith.constant 0 : index
    %3 = vector.load %arg3[%c0, %c0_1] : memref<36x512xbf16, #tpu.memory_space<vmem>>, vector<36x512xbf16>
    %c0_2 = arith.constant 0 : index
    %c0_3 = arith.constant 0 : index
    %4 = vector.load %arg4[%c0_2, %c0_3] : memref<1x512xf32, #tpu.memory_space<vmem>>, vector<1x512xf32>
    %c0_4 = arith.constant 0 : index
    %c0_5 = arith.constant 0 : index
    %5 = vector.load %arg10[%c0_4, %c0_5] : memref<8x512xf32, #tpu.memory_space<vmem>>, vector<8x512xf32>
    %cst = arith.constant 0.000000e+00 : f32
    %6 = vector.broadcast %cst : f32 to vector<8x512xf32>
    %c0_i32_6 = arith.constant 0 : i32
    %c32_i32 = arith.constant 32 : i32
    %7 = arith.muli %c0_i32_6, %c32_i32 : i32
    %8 = tpu.assume_multiple %7, 32 : i32
    %c0_7 = arith.constant 0 : index
    %9 = arith.index_cast %8 : i32 to index
    %c0_8 = arith.constant 0 : index
    %10 = vector.load %arg2[%c0_7, %9, %c0_8] : memref<8x256x36xbf16, #tpu.memory_space<vmem>>, vector<8x32x36xbf16>
    %11 = vector.shape_cast %10 : vector<8x32x36xbf16> to vector<256x36xbf16>
    %cst_9 = arith.constant dense<0.000000e+00> : vector<256x512xf32>
    %12 = tpu.matmul %11, %3, %cst_9 {dimension_numbers = #tpu.dot_dimension_numbers<[1], [0], [0], [1], [0, 0, 1, 1], [], []>} : vector<256x36xbf16>, vector<36x512xbf16>, vector<256x512xf32> -> vector<256x512xf32>
    %13 = vector.broadcast %4 : vector<1x512xf32> to vector<256x512xf32>
    %14 = arith.addf %12, %13 : vector<256x512xf32>
    %cst_10 = arith.constant 0.000000e+00 : f32
    %15 = vector.broadcast %cst_10 : f32 to vector<256x512xf32>
    %16 = arith.maximumf %14, %15 : vector<256x512xf32>
    %17 = vector.shape_cast %16 : vector<256x512xf32> to vector<8x32x512xf32>
    %cst_11 = arith.constant dense<0.000000e+00> : vector<8x512xf32>
    %18 = vector.multi_reduction <add>, %17, %cst_11 [1] : vector<8x32x512xf32> to vector<8x512xf32>
    %19 = arith.addf %6, %18 : vector<8x512xf32>
    %c1_i32 = arith.constant 1 : i32
    %c32_i32_12 = arith.constant 32 : i32
    %20 = arith.muli %c1_i32, %c32_i32_12 : i32
    %21 = tpu.assume_multiple %20, 32 : i32
    %c0_13 = arith.constant 0 : index
    %22 = arith.index_cast %21 : i32 to index
    %c0_14 = arith.constant 0 : index
    %23 = vector.load %arg2[%c0_13, %22, %c0_14] : memref<8x256x36xbf16, #tpu.memory_space<vmem>>, vector<8x32x36xbf16>
    %24 = vector.shape_cast %23 : vector<8x32x36xbf16> to vector<256x36xbf16>
    %cst_15 = arith.constant dense<0.000000e+00> : vector<256x512xf32>
    %25 = tpu.matmul %24, %3, %cst_15 {dimension_numbers = #tpu.dot_dimension_numbers<[1], [0], [0], [1], [0, 0, 1, 1], [], []>} : vector<256x36xbf16>, vector<36x512xbf16>, vector<256x512xf32> -> vector<256x512xf32>
    %26 = vector.broadcast %4 : vector<1x512xf32> to vector<256x512xf32>
    %27 = arith.addf %25, %26 : vector<256x512xf32>
    %cst_16 = arith.constant 0.000000e+00 : f32
    %28 = vector.broadcast %cst_16 : f32 to vector<256x512xf32>
    %29 = arith.maximumf %27, %28 : vector<256x512xf32>
    %30 = vector.shape_cast %29 : vector<256x512xf32> to vector<8x32x512xf32>
    %cst_17 = arith.constant dense<0.000000e+00> : vector<8x512xf32>
    %31 = vector.multi_reduction <add>, %30, %cst_17 [1] : vector<8x32x512xf32> to vector<8x512xf32>
    %32 = arith.addf %19, %31 : vector<8x512xf32>
    %c2_i32 = arith.constant 2 : i32
    %c32_i32_18 = arith.constant 32 : i32
    %33 = arith.muli %c2_i32, %c32_i32_18 : i32
    %34 = tpu.assume_multiple %33, 32 : i32
    %c0_19 = arith.constant 0 : index
    %35 = arith.index_cast %34 : i32 to index
    %c0_20 = arith.constant 0 : index
    %36 = vector.load %arg2[%c0_19, %35, %c0_20] : memref<8x256x36xbf16, #tpu.memory_space<vmem>>, vector<8x32x36xbf16>
    %37 = vector.shape_cast %36 : vector<8x32x36xbf16> to vector<256x36xbf16>
    %cst_21 = arith.constant dense<0.000000e+00> : vector<256x512xf32>
    %38 = tpu.matmul %37, %3, %cst_21 {dimension_numbers = #tpu.dot_dimension_numbers<[1], [0], [0], [1], [0, 0, 1, 1], [], []>} : vector<256x36xbf16>, vector<36x512xbf16>, vector<256x512xf32> -> vector<256x512xf32>
    %39 = vector.broadcast %4 : vector<1x512xf32> to vector<256x512xf32>
    %40 = arith.addf %38, %39 : vector<256x512xf32>
    %cst_22 = arith.constant 0.000000e+00 : f32
    %41 = vector.broadcast %cst_22 : f32 to vector<256x512xf32>
    %42 = arith.maximumf %40, %41 : vector<256x512xf32>
    %43 = vector.shape_cast %42 : vector<256x512xf32> to vector<8x32x512xf32>
    %cst_23 = arith.constant dense<0.000000e+00> : vector<8x512xf32>
    %44 = vector.multi_reduction <add>, %43, %cst_23 [1] : vector<8x32x512xf32> to vector<8x512xf32>
    %45 = arith.addf %32, %44 : vector<8x512xf32>
    %c3_i32 = arith.constant 3 : i32
    %c32_i32_24 = arith.constant 32 : i32
    %46 = arith.muli %c3_i32, %c32_i32_24 : i32
    %47 = tpu.assume_multiple %46, 32 : i32
    %c0_25 = arith.constant 0 : index
    %48 = arith.index_cast %47 : i32 to index
    %c0_26 = arith.constant 0 : index
    %49 = vector.load %arg2[%c0_25, %48, %c0_26] : memref<8x256x36xbf16, #tpu.memory_space<vmem>>, vector<8x32x36xbf16>
    %50 = vector.shape_cast %49 : vector<8x32x36xbf16> to vector<256x36xbf16>
    %cst_27 = arith.constant dense<0.000000e+00> : vector<256x512xf32>
    %51 = tpu.matmul %50, %3, %cst_27 {dimension_numbers = #tpu.dot_dimension_numbers<[1], [0], [0], [1], [0, 0, 1, 1], [], []>} : vector<256x36xbf16>, vector<36x512xbf16>, vector<256x512xf32> -> vector<256x512xf32>
    %52 = vector.broadcast %4 : vector<1x512xf32> to vector<256x512xf32>
    %53 = arith.addf %51, %52 : vector<256x512xf32>
    %cst_28 = arith.constant 0.000000e+00 : f32
    %54 = vector.broadcast %cst_28 : f32 to vector<256x512xf32>
    %55 = arith.maximumf %53, %54 : vector<256x512xf32>
    %56 = vector.shape_cast %55 : vector<256x512xf32> to vector<8x32x512xf32>
    %cst_29 = arith.constant dense<0.000000e+00> : vector<8x512xf32>
    %57 = vector.multi_reduction <add>, %56, %cst_29 [1] : vector<8x32x512xf32> to vector<8x512xf32>
    %58 = arith.addf %45, %57 : vector<8x512xf32>
    %c4_i32 = arith.constant 4 : i32
    %c32_i32_30 = arith.constant 32 : i32
    %59 = arith.muli %c4_i32, %c32_i32_30 : i32
    %60 = tpu.assume_multiple %59, 32 : i32
    %c0_31 = arith.constant 0 : index
    %61 = arith.index_cast %60 : i32 to index
    %c0_32 = arith.constant 0 : index
    %62 = vector.load %arg2[%c0_31, %61, %c0_32] : memref<8x256x36xbf16, #tpu.memory_space<vmem>>, vector<8x32x36xbf16>
    %63 = vector.shape_cast %62 : vector<8x32x36xbf16> to vector<256x36xbf16>
    %cst_33 = arith.constant dense<0.000000e+00> : vector<256x512xf32>
    %64 = tpu.matmul %63, %3, %cst_33 {dimension_numbers = #tpu.dot_dimension_numbers<[1], [0], [0], [1], [0, 0, 1, 1], [], []>} : vector<256x36xbf16>, vector<36x512xbf16>, vector<256x512xf32> -> vector<256x512xf32>
    %65 = vector.broadcast %4 : vector<1x512xf32> to vector<256x512xf32>
    %66 = arith.addf %64, %65 : vector<256x512xf32>
    %cst_34 = arith.constant 0.000000e+00 : f32
    %67 = vector.broadcast %cst_34 : f32 to vector<256x512xf32>
    %68 = arith.maximumf %66, %67 : vector<256x512xf32>
    %69 = vector.shape_cast %68 : vector<256x512xf32> to vector<8x32x512xf32>
    %cst_35 = arith.constant dense<0.000000e+00> : vector<8x512xf32>
    %70 = vector.multi_reduction <add>, %69, %cst_35 [1] : vector<8x32x512xf32> to vector<8x512xf32>
    %71 = arith.addf %58, %70 : vector<8x512xf32>
    %c5_i32 = arith.constant 5 : i32
    %c32_i32_36 = arith.constant 32 : i32
    %72 = arith.muli %c5_i32, %c32_i32_36 : i32
    %73 = tpu.assume_multiple %72, 32 : i32
    %c0_37 = arith.constant 0 : index
    %74 = arith.index_cast %73 : i32 to index
    %c0_38 = arith.constant 0 : index
    %75 = vector.load %arg2[%c0_37, %74, %c0_38] : memref<8x256x36xbf16, #tpu.memory_space<vmem>>, vector<8x32x36xbf16>
    %76 = vector.shape_cast %75 : vector<8x32x36xbf16> to vector<256x36xbf16>
    %cst_39 = arith.constant dense<0.000000e+00> : vector<256x512xf32>
    %77 = tpu.matmul %76, %3, %cst_39 {dimension_numbers = #tpu.dot_dimension_numbers<[1], [0], [0], [1], [0, 0, 1, 1], [], []>} : vector<256x36xbf16>, vector<36x512xbf16>, vector<256x512xf32> -> vector<256x512xf32>
    %78 = vector.broadcast %4 : vector<1x512xf32> to vector<256x512xf32>
    %79 = arith.addf %77, %78 : vector<256x512xf32>
    %cst_40 = arith.constant 0.000000e+00 : f32
    %80 = vector.broadcast %cst_40 : f32 to vector<256x512xf32>
    %81 = arith.maximumf %79, %80 : vector<256x512xf32>
    %82 = vector.shape_cast %81 : vector<256x512xf32> to vector<8x32x512xf32>
    %cst_41 = arith.constant dense<0.000000e+00> : vector<8x512xf32>
    %83 = vector.multi_reduction <add>, %82, %cst_41 [1] : vector<8x32x512xf32> to vector<8x512xf32>
    %84 = arith.addf %71, %83 : vector<8x512xf32>
    %c6_i32 = arith.constant 6 : i32
    %c32_i32_42 = arith.constant 32 : i32
    %85 = arith.muli %c6_i32, %c32_i32_42 : i32
    %86 = tpu.assume_multiple %85, 32 : i32
    %c0_43 = arith.constant 0 : index
    %87 = arith.index_cast %86 : i32 to index
    %c0_44 = arith.constant 0 : index
    %88 = vector.load %arg2[%c0_43, %87, %c0_44] : memref<8x256x36xbf16, #tpu.memory_space<vmem>>, vector<8x32x36xbf16>
    %89 = vector.shape_cast %88 : vector<8x32x36xbf16> to vector<256x36xbf16>
    %cst_45 = arith.constant dense<0.000000e+00> : vector<256x512xf32>
    %90 = tpu.matmul %89, %3, %cst_45 {dimension_numbers = #tpu.dot_dimension_numbers<[1], [0], [0], [1], [0, 0, 1, 1], [], []>} : vector<256x36xbf16>, vector<36x512xbf16>, vector<256x512xf32> -> vector<256x512xf32>
    %91 = vector.broadcast %4 : vector<1x512xf32> to vector<256x512xf32>
    %92 = arith.addf %90, %91 : vector<256x512xf32>
    %cst_46 = arith.constant 0.000000e+00 : f32
    %93 = vector.broadcast %cst_46 : f32 to vector<256x512xf32>
    %94 = arith.maximumf %92, %93 : vector<256x512xf32>
    %95 = vector.shape_cast %94 : vector<256x512xf32> to vector<8x32x512xf32>
    %cst_47 = arith.constant dense<0.000000e+00> : vector<8x512xf32>
    %96 = vector.multi_reduction <add>, %95, %cst_47 [1] : vector<8x32x512xf32> to vector<8x512xf32>
    %97 = arith.addf %84, %96 : vector<8x512xf32>
    %c7_i32 = arith.constant 7 : i32
    %c32_i32_48 = arith.constant 32 : i32
    %98 = arith.muli %c7_i32, %c32_i32_48 : i32
    %99 = tpu.assume_multiple %98, 32 : i32
    %c0_49 = arith.constant 0 : index
    %100 = arith.index_cast %99 : i32 to index
    %c0_50 = arith.constant 0 : index
    %101 = vector.load %arg2[%c0_49, %100, %c0_50] : memref<8x256x36xbf16, #tpu.memory_space<vmem>>, vector<8x32x36xbf16>
    %102 = vector.shape_cast %101 : vector<8x32x36xbf16> to vector<256x36xbf16>
    %cst_51 = arith.constant dense<0.000000e+00> : vector<256x512xf32>
    %103 = tpu.matmul %102, %3, %cst_51 {dimension_numbers = #tpu.dot_dimension_numbers<[1], [0], [0], [1], [0, 0, 1, 1], [], []>} : vector<256x36xbf16>, vector<36x512xbf16>, vector<256x512xf32> -> vector<256x512xf32>
    %104 = vector.broadcast %4 : vector<1x512xf32> to vector<256x512xf32>
    %105 = arith.addf %103, %104 : vector<256x512xf32>
    %cst_52 = arith.constant 0.000000e+00 : f32
    %106 = vector.broadcast %cst_52 : f32 to vector<256x512xf32>
    %107 = arith.maximumf %105, %106 : vector<256x512xf32>
    %108 = vector.shape_cast %107 : vector<256x512xf32> to vector<8x32x512xf32>
    %cst_53 = arith.constant dense<0.000000e+00> : vector<8x512xf32>
    %109 = vector.multi_reduction <add>, %108, %cst_53 [1] : vector<8x32x512xf32> to vector<8x512xf32>
    %110 = arith.addf %97, %109 : vector<8x512xf32>
    %c8_i32 = arith.constant 8 : i32
    %111 = arith.addf %5, %110 : vector<8x512xf32>
    %c0_54 = arith.constant 0 : index
    %c0_55 = arith.constant 0 : index
    %112 = vector.load %arg10[%c0_54, %c0_55] : memref<8x512xf32, #tpu.memory_space<vmem>>, vector<8x512xf32>
    tpu.vector_store %arg10[%c0_54, %c0_55], %111 {strides = array<i32>} : memref<8x512xf32, #tpu.memory_space<vmem>>, vector<8x512xf32>,
    %c0_i32_56 = arith.constant 0 : i32
    %113 = arith.cmpi eq, %arg1, %c0_i32_56 : i32
    %114 = arith.extui %113 : i1 to i32
    %c0_i32_57 = arith.constant 0 : i32
    %115 = arith.cmpi ne, %114, %c0_i32_57 : i32
    scf.if %115 {
      %c0_58 = arith.constant 0 : index
      %c0_59 = arith.constant 0 : index
      %116 = vector.load %arg10[%c0_58, %c0_59] : memref<8x512xf32, #tpu.memory_space<vmem>>, vector<8x512xf32>
      %cst_60 = arith.constant 3.906250e-03 : f32
      %117 = vector.broadcast %cst_60 : f32 to vector<8x512xf32>
      %118 = arith.mulf %116, %117 : vector<8x512xf32>
      %119 = arith.truncf %118 : vector<8x512xf32> to vector<8x512xbf16>
      %c0_61 = arith.constant 0 : index
      %c0_62 = arith.constant 0 : index
      %120 = vector.load %arg5[%c0_61, %c0_62] : memref<512x512xbf16, #tpu.memory_space<vmem>>, vector<512x512xbf16>
      %cst_63 = arith.constant dense<0.000000e+00> : vector<8x512xf32>
      %121 = tpu.matmul %119, %120, %cst_63 {dimension_numbers = #tpu.dot_dimension_numbers<[1], [0], [0], [1], [0, 0, 1, 1], [], []>} : vector<8x512xbf16>, vector<512x512xbf16>, vector<8x512xf32> -> vector<8x512xf32>
      %c0_64 = arith.constant 0 : index
      %c0_65 = arith.constant 0 : index
      %122 = vector.load %arg6[%c0_64, %c0_65] : memref<1x512xf32, #tpu.memory_space<vmem>>, vector<1x512xf32>
      %123 = vector.broadcast %122 : vector<1x512xf32> to vector<8x512xf32>
      %124 = arith.addf %121, %123 : vector<8x512xf32>
      %cst_66 = arith.constant 0.000000e+00 : f32
      %125 = vector.broadcast %cst_66 : f32 to vector<8x512xf32>
      %126 = arith.maximumf %124, %125 : vector<8x512xf32>
      %127 = arith.truncf %126 : vector<8x512xf32> to vector<8x512xbf16>
      %c0_67 = arith.constant 0 : index
      %c0_68 = arith.constant 0 : index
      %128 = vector.load %arg7[%c0_67, %c0_68] : memref<512x128xbf16, #tpu.memory_space<vmem>>, vector<512x128xbf16>
      %cst_69 = arith.constant dense<0.000000e+00> : vector<8x128xf32>
      %129 = tpu.matmul %127, %128, %cst_69 {dimension_numbers = #tpu.dot_dimension_numbers<[1], [0], [0], [1], [0, 0, 1, 1], [], []>} : vector<8x512xbf16>, vector<512x128xbf16>, vector<8x128xf32> -> vector<8x128xf32>
      %c0_70 = arith.constant 0 : index
      %c0_71 = arith.constant 0 : index
      %130 = vector.load %arg8[%c0_70, %c0_71] : memref<1x128xf32, #tpu.memory_space<vmem>>, vector<1x128xf32>
      %131 = vector.broadcast %130 : vector<1x128xf32> to vector<8x128xf32>
      %132 = arith.addf %129, %131 : vector<8x128xf32>
      %c0_72 = arith.constant 0 : index
      %c0_73 = arith.constant 0 : index
      %133 = vector.load %arg9[%c0_72, %c0_73] : memref<8x128xf32, #tpu.memory_space<vmem>>, vector<8x128xf32>
      tpu.vector_store %arg9[%c0_72, %c0_73], %132 {strides = array<i32>} : memref<8x128xf32, #tpu.memory_space<vmem>>, vector<8x128xf32>,
    } else {
    }
    return
  }
  func.func @transform_0(%arg0: i32, %arg1: i32) -> (i32, i32, i32) {
    %c0_i32 = arith.constant 0 : i32
    %c0_i32_0 = arith.constant 0 : i32
    return %arg0, %arg1, %c0_i32 : i32, i32, i32
  }
  func.func @transform_1(%arg0: i32, %arg1: i32) -> (i32, i32) {
    %c0_i32 = arith.constant 0 : i32
    %c0_i32_0 = arith.constant 0 : i32
    %c0_i32_1 = arith.constant 0 : i32
    return %c0_i32, %c0_i32_0 : i32, i32
  }
  func.func @transform_2(%arg0: i32, %arg1: i32) -> (i32, i32) {
    %c0_i32 = arith.constant 0 : i32
    %c0_i32_0 = arith.constant 0 : i32
    %c0_i32_1 = arith.constant 0 : i32
    return %c0_i32, %c0_i32_0 : i32, i32
  }
  func.func @transform_3(%arg0: i32, %arg1: i32) -> (i32, i32) {
    %c0_i32 = arith.constant 0 : i32
    %c0_i32_0 = arith.constant 0 : i32
    %c0_i32_1 = arith.constant 0 : i32
    return %c0_i32, %c0_i32_0 : i32, i32
  }
  func.func @transform_4(%arg0: i32, %arg1: i32) -> (i32, i32) {
    %c0_i32 = arith.constant 0 : i32
    %c0_i32_0 = arith.constant 0 : i32
    %c0_i32_1 = arith.constant 0 : i32
    return %c0_i32, %c0_i32_0 : i32, i32
  }
  func.func @transform_5(%arg0: i32, %arg1: i32) -> (i32, i32) {
    %c0_i32 = arith.constant 0 : i32
    %c0_i32_0 = arith.constant 0 : i32
    %c0_i32_1 = arith.constant 0 : i32
    return %c0_i32, %c0_i32_0 : i32, i32
  }
  func.func @transform_6(%arg0: i32, %arg1: i32) -> (i32, i32) {
    %c0_i32 = arith.constant 0 : i32
    %c0_i32_0 = arith.constant 0 : i32
    %c0_i32_1 = arith.constant 0 : i32
    return %c0_i32, %c0_i32_0 : i32, i32
  }
  func.func @transform_7(%arg0: i32, %arg1: i32) -> (i32, i32) {
    %c0_i32 = arith.constant 0 : i32
    %c0_i32_0 = arith.constant 0 : i32
    return %arg0, %c0_i32 : i32, i32
  }
}

</mosaic_0001>

<llo_original>
// kernel: simclr_forward.1
$region0: #{simclr_forward.1}
  #allocation0 [shape = 'u32[]', space=smem, size = 0x4, offset = 0x4, fixed_abs, tag = 'smem constant byte address 0x4 - core index']
  #allocation1 [shape = 'u32[144,128]{1,0:T(1,128)}', space=vmem, size = 0x12000, scoped, tag = 'internal scratch']
  #allocation2 [shape = 'f32[8,512]{1,0:T(8,128)}', space=vmem, size = 0x4000, scoped, tag = 'scratch operand']
  %s0 = inlined_call_operand.vmem [shape: bf16[8,256,36], index: 0, kind: input, shape index: {}]
  %s1 = inlined_call_operand.vmem [shape: bf16[36,512], index: 1, kind: input, shape index: {}]
  %s2 = inlined_call_operand.vmem [shape: f32[1,512], index: 2, kind: input, shape index: {}]
  %s3 = inlined_call_operand.vmem [shape: bf16[512,512], index: 3, kind: input, shape index: {}]
  %s4 = inlined_call_operand.vmem [shape: f32[1,512], index: 4, kind: input, shape index: {}]
  %s5 = inlined_call_operand.vmem [shape: bf16[512,128], index: 5, kind: input, shape index: {}]
  %s6 = inlined_call_operand.vmem [shape: f32[1,128], index: 6, kind: input, shape index: {}]
  %s7 = inlined_call_operand.vmem [shape: f32[8,128], index: 7, kind: output, shape index: {}]
  %s8 = sld [smem:[#allocation0]]
  $region46: #{simclr_forward.1} parent=0
    _
  %s10 = ssub.s32 1, %s8
  %s11 = scalar_select 0, %s10, %s8
  // Predicated region
  $region2: #{simclr_forward.1} parent=0 // pred_check
    _
  $region3: #{simclr_forward.1} parent=0 // pred_check_branch
    %13 = sbr.rel (0) target = $region5
  $region4: #{simclr_forward.1} parent=0 // pred_region
    _
  $region5: #{simclr_forward.1} parent=0 // pred_fallthru
    _
  // Predicated region
  $region6: #{simclr_forward.1} parent=0 // pred_check
    _
  $region7: #{simclr_forward.1} parent=0 // pred_check_branch
    %15 = sbr.rel (0) target = $region9
  $region8: #{simclr_forward.1} parent=0 // pred_region
    _
  $region9: #{simclr_forward.1} parent=0 // pred_fallthru
    _
  // Predicated region
  $region10: #{simclr_forward.1} parent=0 // pred_check
    _
  $region11: #{simclr_forward.1} parent=0 // pred_check_branch
    %17 = sbr.rel (0) target = $region13
  $region12: #{simclr_forward.1} parent=0 // pred_region
    _
  $region13: #{simclr_forward.1} parent=0 // pred_fallthru
    _
  // Predicated region
  $region14: #{simclr_forward.1} parent=0 // pred_check
    _
  $region15: #{simclr_forward.1} parent=0 // pred_check_branch
    %19 = sbr.rel (0) target = $region17
  $region16: #{simclr_forward.1} parent=0 // pred_region
    _
  $region17: #{simclr_forward.1} parent=0 // pred_fallthru
    _
  // Predicated region
  $region18: #{simclr_forward.1} parent=0 // pred_check
    _
  $region19: #{simclr_forward.1} parent=0 // pred_check_branch
    %21 = sbr.rel (0) target = $region21
  $region20: #{simclr_forward.1} parent=0 // pred_region
    _
  $region21: #{simclr_forward.1} parent=0 // pred_fallthru
    _
  // Predicated region
  $region22: #{simclr_forward.1} parent=0 // pred_check
    _
  $region23: #{simclr_forward.1} parent=0 // pred_check_branch
    %23 = sbr.rel (0) target = $region25
  $region24: #{simclr_forward.1} parent=0 // pred_region
    _
  $region25: #{simclr_forward.1} parent=0 // pred_fallthru
    _
  // Predicated region
  $region26: #{simclr_forward.1} parent=0 // pred_check
    _
  $region27: #{simclr_forward.1} parent=0 // pred_check_branch
    %25 = sbr.rel (0) target = $region29
  $region28: #{simclr_forward.1} parent=0 // pred_region
    _
  $region29: #{simclr_forward.1} parent=0 // pred_fallthru
    _
  %p27 = scmp.eq.s32.totalorder 0, 0
  // Predicated region
  $region30: #{simclr_forward.1} parent=0 // pred_check
    %p28 = pneg %p27
  $region31: #{simclr_forward.1} parent=0 // pred_check_branch
    %30 = sbr.rel (%p28) target = $region33
  $region32: #{simclr_forward.1} parent=0 // pred_region
    %31 = vst [vmem:[#allocation2] sm:$0xff] 0.0
    %32 = vst [vmem:[#allocation2 + $0x8] sm:$0xff] 0.0
    %33 = vst [vmem:[#allocation2 + $0x10] sm:$0xff] 0.0
    %34 = vst [vmem:[#allocation2 + $0x18] sm:$0xff] 0.0
  $region33: #{simclr_forward.1} parent=0 // pred_fallthru
    _
  %v35 = vld [vmem:[%s1] sm:$0xff]
  %v36 = vld [vmem:[%s1 + $0x8] sm:$0xff]
  %v37 = vld [vmem:[%s1 + $0x10] sm:$0xff]
  %v38 = vld [vmem:[%s1 + $0x18] sm:$0xff]
  %v39 = vld [vmem:[%s1 + $0x20] sm:$0xff]
  %v40 = vld [vmem:[%s1 + $0x28] sm:$0xff]
  %v41 = vld [vmem:[%s1 + $0x30] sm:$0xff]
  %v42 = vld [vmem:[%s1 + $0x38] sm:$0xff]
  %v43 = vld [vmem:[%s1 + $0x40] sm:$0x33]
  %v44 = vld [vmem:[%s1 + $0x48] sm:$0x33]
  %v45 = vld [vmem:[%s2] sm:$0xf]
  %v46 = vld [vmem:[#allocation2] sm:$0xff]
  %v47 = vld [vmem:[#allocation2 + $0x8] sm:$0xff]
  %v48 = vld [vmem:[#allocation2 + $0x10] sm:$0xff]
  %v49 = vld [vmem:[#allocation2 + $0x18] sm:$0xff]
  %v50 = vld [vmem:[%s0] sm:$0xf]
  %v51 = vld [vmem:[%s0 + $0x4] sm:$0xf]
  %v52 = vld [vmem:[%s0 + $0x8] sm:$0xf]
  %v53 = vld [vmem:[%s0 + $0xc] sm:$0xf]
  %v54 = vld [vmem:[%s0 + $0x80] sm:$0xf]
  %v55 = vld [vmem:[%s0 + $0x84] sm:$0xf]
  %v56 = vld [vmem:[%s0 + $0x88] sm:$0xf]
  %v57 = vld [vmem:[%s0 + $0x8c] sm:$0xf]
  %v58 = vld [vmem:[%s0 + $0x100] sm:$0xf]
  %v59 = vld [vmem:[%s0 + $0x104] sm:$0xf]
  %v60 = vld [vmem:[%s0 + $0x108] sm:$0xf]
  %v61 = vld [vmem:[%s0 + $0x10c] sm:$0xf]
  %v62 = vld [vmem:[%s0 + $0x180] sm:$0xf]
  %v63 = vld [vmem:[%s0 + $0x184] sm:$0xf]
  %v64 = vld [vmem:[%s0 + $0x188] sm:$0xf]
  %v65 = vld [vmem:[%s0 + $0x18c] sm:$0xf]
  %v66 = vld [vmem:[%s0 + $0x200] sm:$0xf]
  %v67 = vld [vmem:[%s0 + $0x204] sm:$0xf]
  %v68 = vld [vmem:[%s0 + $0x208] sm:$0xf]
  %v69 = vld [vmem:[%s0 + $0x20c] sm:$0xf]
  %v70 = vld [vmem:[%s0 + $0x280] sm:$0xf]
  %v71 = vld [vmem:[%s0 + $0x284] sm:$0xf]
  %v72 = vld [vmem:[%s0 + $0x288] sm:$0xf]
  %v73 = vld [vmem:[%s0 + $0x28c] sm:$0xf]
  %v74 = vld [vmem:[%s0 + $0x300] sm:$0xf]
  %v75 = vld [vmem:[%s0 + $0x304] sm:$0xf]
  %v76 = vld [vmem:[%s0 + $0x308] sm:$0xf]
  %v77 = vld [vmem:[%s0 + $0x30c] sm:$0xf]
  %v78 = vld [vmem:[%s0 + $0x380] sm:$0xf]
  %v79 = vld [vmem:[%s0 + $0x384] sm:$0xf]
  %v80 = vld [vmem:[%s0 + $0x388] sm:$0xf]
  %v81 = vld [vmem:[%s0 + $0x38c] sm:$0xf]
  %v83 = vlaneseq
  %v84 = vshrl.u32 %v83, 7
  %v85 = vsub.s32 0, %v84
  %v86 = vrot.slane %v45, %v85
  %v87 = vlaneseq
  %v88 = vshrl.u32 %v87, 7
  %v89 = vsub.s32 1, %v88
  %v90 = vrot.slane %v45, %v89
  %v91 = vlaneseq
  %v92 = vshrl.u32 %v91, 7
  %v93 = vsub.s32 2, %v92
  %v94 = vrot.slane %v45, %v93
  %v95 = vlaneseq
  %v96 = vshrl.u32 %v95, 7
  %v97 = vsub.s32 3, %v96
  %v98 = vrot.slane %v45, %v97
  %v135 = vunpack.c.l.b16 %v50
  %v136 = vunpack.c.l.b16 %v51
  %v137 = vunpack.c.l.b16 %v52
  %v138 = vunpack.c.l.b16 %v53
  %v139 = vunpack.c.l.b16 %v54
  %v140 = vunpack.c.l.b16 %v55
  %v141 = vunpack.c.l.b16 %v56
  %v142 = vunpack.c.l.b16 %v57
  %v143 = vunpack.c.l.b16 %v58
  %v144 = vunpack.c.l.b16 %v59
  %v145 = vunpack.c.l.b16 %v60
  %v146 = vunpack.c.l.b16 %v61
  %v147 = vunpack.c.l.b16 %v62
  %v148 = vunpack.c.l.b16 %v63
  %v149 = vunpack.c.l.b16 %v64
  %v150 = vunpack.c.l.b16 %v65
  %v151 = vunpack.c.l.b16 %v66
  %v152 = vunpack.c.l.b16 %v67
  %v153 = vunpack.c.l.b16 %v68
  %v154 = vunpack.c.l.b16 %v69
  %v155 = vunpack.c.l.b16 %v70
  %v156 = vunpack.c.l.b16 %v71
  %v157 = vunpack.c.l.b16 %v72
  %v158 = vunpack.c.l.b16 %v73
  %v159 = vunpack.c.l.b16 %v74
  %v160 = vunpack.c.l.b16 %v75
  %v161 = vunpack.c.l.b16 %v76
  %v162 = vunpack.c.l.b16 %v77
  %v163 = vunpack.c.l.b16 %v78
  %v164 = vunpack.c.l.b16 %v79
  %v165 = vunpack.c.l.b16 %v80
  %v166 = vunpack.c.l.b16 %v81
  %v167 = vpack.c.b16 %v136, %v135
  %v168 = vpack.c.b16 %v138, %v137
  %v169 = vpack.c.b16 %v140, %v139
  %v170 = vpack.c.b16 %v142, %v141
  %v171 = vpack.c.b16 %v144, %v143
  %v172 = vpack.c.b16 %v146, %v145
  %v173 = vpack.c.b16 %v148, %v147
  %v174 = vpack.c.b16 %v150, %v149
  %v175 = vpack.c.b16 %v152, %v151
  %v176 = vpack.c.b16 %v154, %v153
  %v177 = vpack.c.b16 %v156, %v155
  %v178 = vpack.c.b16 %v158, %v157
  %v179 = vpack.c.b16 %v160, %v159
  %v180 = vpack.c.b16 %v162, %v161
  %v181 = vpack.c.b16 %v164, %v163
  %v182 = vpack.c.b16 %v166, %v165
  %v193 = vunpack.c.l.b16 %v35
  %v194 = vunpack.c.h.b16 %v35
  %v195 = vunpack.c.l.b16 %v36
  %v196 = vunpack.c.h.b16 %v36
  %v197 = vunpack.c.l.b16 %v37
  %v198 = vunpack.c.h.b16 %v37
  %v199 = vunpack.c.l.b16 %v38
  %v200 = vunpack.c.h.b16 %v38
  %v201 = vunpack.c.l.b16 %v39
  %v202 = vunpack.c.h.b16 %v39
  %v203 = vunpack.c.l.b16 %v40
  %v204 = vunpack.c.h.b16 %v40
  %v205 = vunpack.c.l.b16 %v41
  %v206 = vunpack.c.h.b16 %v41
  %v207 = vunpack.c.l.b16 %v42
  %v208 = vunpack.c.h.b16 %v42
  %v209 = vunpack.c.l.b16 %v43
  %v210 = vunpack.c.h.b16 %v43
  %v211 = vunpack.c.l.b16 %v44
  %v212 = vunpack.c.h.b16 %v44
  %v213 = vpack.c.b16 %v197, %v193
  %v214 = vpack.c.b16 %v198, %v194
  %v215 = vpack.c.b16 %v199, %v195
  %v216 = vpack.c.b16 %v200, %v196
  %v217 = vpack.c.b16 %v205, %v201
  %v218 = vpack.c.b16 %v206, %v202
  %v219 = vpack.c.b16 %v207, %v203
  %v220 = vpack.c.b16 %v208, %v204
  %v221 = vpack.c.b16 %v209, %v209
  %v222 = vpack.c.b16 %v210, %v210
  %v223 = vpack.c.b16 %v211, %v211
  %v224 = vpack.c.b16 %v212, %v212
  %vm233 = vcmask 293888
  %v235 = vsel %vm233, %v167, 0
  %v238 = vsel %vm233, %v168, 0
  %v241 = vsel %vm233, %v169, 0
  %v244 = vsel %vm233, %v170, 0
  %v247 = vsel %vm233, %v171, 0
  %v250 = vsel %vm233, %v172, 0
  %v253 = vsel %vm233, %v173, 0
  %v256 = vsel %vm233, %v174, 0
  %v259 = vsel %vm233, %v175, 0
  %v262 = vsel %vm233, %v176, 0
  %v265 = vsel %vm233, %v177, 0
  %v268 = vsel %vm233, %v178, 0
  %v271 = vsel %vm233, %v179, 0
  %v274 = vsel %vm233, %v180, 0
  %v277 = vsel %vm233, %v181, 0
  %v280 = vsel %vm233, %v182, 0
  %vm282 = vcmask 1041408
  %v284 = vsel %vm282, %v221, 0
  %v287 = vsel %vm282, %v222, 0
  %v290 = vsel %vm282, %v223, 0
  %v293 = vsel %vm282, %v224, 0
  %295 = vmatprep.subr.bf16.mxu0 0
  %296 = vmatpush1.bf16.msra.mxu0 0
  %297 = vmatprep.subr.bf16.mxu0 0
  %298 = vmatpush1.bf16.msra.mxu0 0
  %299 = vmatprep.subr.bf16.mxu0 0
  %300 = vmatpush1.bf16.msra.mxu0 0
  %301 = vmatprep.subr.bf16.mxu0 0
  %302 = vmatpush1.bf16.msra.mxu0 0
  %303 = vmatprep.subr.bf16.mxu0 0
  %304 = vmatpush1.bf16.msra.mxu0 0
  %305 = vmatprep.subr.bf16.mxu0 %v287
  %306 = vmatpush1.bf16.msra.mxu0 %v284
  %307 = vmatprep.subr.bf16.mxu0 %v218
  %308 = vmatpush1.bf16.msra.mxu0 %v217
  %309 = vmatprep.subr.bf16.mxu0 %v214
  %310 = vmatpush1.bf16.msra.mxu0 %v213
  %311 = vmatprep.subr.bf16.mxu0 0
  %312 = vmatpush2.bf16.msra.mxu0 0
  %313 = vmatprep.subr.bf16.mxu0 0
  %314 = vmatpush2.bf16.msra.mxu0 0
  %315 = vmatprep.subr.bf16.mxu0 0
  %316 = vmatpush2.bf16.msra.mxu0 0
  %317 = vmatprep.subr.bf16.mxu0 0
  %318 = vmatpush2.bf16.msra.mxu0 0
  %319 = vmatprep.subr.bf16.mxu0 0
  %320 = vmatpush2.bf16.msra.mxu0 0
  %321 = vmatprep.subr.bf16.mxu0 0
  %322 = vmatpush2.bf16.msra.mxu0 0
  %323 = vmatprep.subr.bf16.mxu0 0
  %324 = vmatpush2.bf16.msra.mxu0 0
  %325 = vmatprep.subr.bf16.mxu0 0
  %326 = vmatpush2.bf16.msra.mxu0 0
  %327 = vmatprep.mubr.bf16.mxu0 0
  %328 = vmatmul.mubr.bf16.gmra.mxu0 %v235
  %v329 = vpop.f32.mrf.mxu0
  %v330 = vadd.f32 %v86, %v329
  %v331 = vpop.f32.mrf.mxu0
  %v332 = vadd.f32 %v90, %v331
  %v333 = vpop.f32.mrf.mxu0
  %v334 = vadd.f32 %v86, %v333
  %v335 = vpop.f32.mrf.mxu0
  %v336 = vadd.f32 %v90, %v335
  %337 = vmatprep.mubr.bf16.mxu0 0
  %338 = vmatmul.mubr.bf16.gmra.mxu0 %v238
  %v339 = vpop.f32.mrf.mxu0
  %v340 = vadd.f32 %v86, %v339
  %v341 = vpop.f32.mrf.mxu0
  %v342 = vadd.f32 %v90, %v341
  %v343 = vpop.f32.mrf.mxu0
  %v344 = vadd.f32 %v86, %v343
  %v345 = vpop.f32.mrf.mxu0
  %v346 = vadd.f32 %v90, %v345
  %347 = vmatprep.mubr.bf16.mxu0 0
  %348 = vmatmul.mubr.bf16.gmra.mxu0 %v241
  %v349 = vpop.f32.mrf.mxu0
  %v350 = vadd.f32 %v86, %v349
  %v351 = vpop.f32.mrf.mxu0
  %v352 = vadd.f32 %v90, %v351
  %v353 = vpop.f32.mrf.mxu0
  %v354 = vadd.f32 %v86, %v353
  %v355 = vpop.f32.mrf.mxu0
  %v356 = vadd.f32 %v90, %v355
  %357 = vmatprep.mubr.bf16.mxu0 0
  %358 = vmatmul.mubr.bf16.gmra.mxu0 %v244
  %v359 = vpop.f32.mrf.mxu0
  %v360 = vadd.f32 %v86, %v359
  %v361 = vpop.f32.mrf.mxu0
  %v362 = vadd.f32 %v90, %v361
  %v363 = vpop.f32.mrf.mxu0
  %v364 = vadd.f32 %v86, %v363
  %v365 = vpop.f32.mrf.mxu0
  %v366 = vadd.f32 %v90, %v365
  %367 = vmatprep.mubr.bf16.mxu0 0
  %368 = vmatmul.mubr.bf16.gmra.mxu0 %v247
  %v369 = vpop.f32.mrf.mxu0
  %v370 = vadd.f32 %v86, %v369
  %v371 = vpop.f32.mrf.mxu0
  %v372 = vadd.f32 %v90, %v371
  %v373 = vpop.f32.mrf.mxu0
  %v374 = vadd.f32 %v86, %v373
  %v375 = vpop.f32.mrf.mxu0
  %v376 = vadd.f32 %v90, %v375
  %377 = vmatprep.mubr.bf16.mxu0 0
  %378 = vmatmul.mubr.bf16.gmra.mxu0 %v250
  %v379 = vpop.f32.mrf.mxu0
  %v380 = vadd.f32 %v86, %v379
  %v381 = vpop.f32.mrf.mxu0
  %v382 = vadd.f32 %v90, %v381
  %v383 = vpop.f32.mrf.mxu0
  %v384 = vadd.f32 %v86, %v383
  %v385 = vpop.f32.mrf.mxu0
  %v386 = vadd.f32 %v90, %v385
  %387 = vmatprep.mubr.bf16.mxu0 0
  %388 = vmatmul.mubr.bf16.gmra.mxu0 %v253
  %v389 = vpop.f32.mrf.mxu0
  %v390 = vadd.f32 %v86, %v389
  %v391 = vpop.f32.mrf.mxu0
  %v392 = vadd.f32 %v90, %v391
  %v393 = vpop.f32.mrf.mxu0
  %v394 = vadd.f32 %v86, %v393
  %v395 = vpop.f32.mrf.mxu0
  %v396 = vadd.f32 %v90, %v395
  %397 = vmatprep.mubr.bf16.mxu0 0
  %398 = vmatmul.mubr.bf16.gmra.mxu0 %v256
  %v399 = vpop.f32.mrf.mxu0
  %v400 = vadd.f32 %v86, %v399
  %v401 = vpop.f32.mrf.mxu0
  %v402 = vadd.f32 %v90, %v401
  %v403 = vpop.f32.mrf.mxu0
  %v404 = vadd.f32 %v86, %v403
  %v405 = vpop.f32.mrf.mxu0
  %v406 = vadd.f32 %v90, %v405
  %407 = vmatprep.mubr.bf16.mxu0 0
  %408 = vmatmul.mubr.bf16.gmra.mxu0 %v259
  %v409 = vpop.f32.mrf.mxu0
  %v410 = vadd.f32 %v86, %v409
  %v411 = vpop.f32.mrf.mxu0
  %v412 = vadd.f32 %v90, %v411
  %v413 = vpop.f32.mrf.mxu0
  %v414 = vadd.f32 %v86, %v413
  %v415 = vpop.f32.mrf.mxu0
  %v416 = vadd.f32 %v90, %v415
  %417 = vmatprep.mubr.bf16.mxu0 0
  %418 = vmatmul.mubr.bf16.gmra.mxu0 %v262
  %v419 = vpop.f32.mrf.mxu0
  %v420 = vadd.f32 %v86, %v419
  %v421 = vpop.f32.mrf.mxu0
  %v422 = vadd.f32 %v90, %v421
  %v423 = vpop.f32.mrf.mxu0
  %v424 = vadd.f32 %v86, %v423
  %v425 = vpop.f32.mrf.mxu0
  %v426 = vadd.f32 %v90, %v425
  %427 = vmatprep.mubr.bf16.mxu0 0
  %428 = vmatmul.mubr.bf16.gmra.mxu0 %v265
  %v429 = vpop.f32.mrf.mxu0
  %v430 = vadd.f32 %v86, %v429
  %v431 = vpop.f32.mrf.mxu0
  %v432 = vadd.f32 %v90, %v431
  %v433 = vpop.f32.mrf.mxu0
  %v434 = vadd.f32 %v86, %v433
  %v435 = vpop.f32.mrf.mxu0
  %v436 = vadd.f32 %v90, %v435
  %437 = vmatprep.mubr.bf16.mxu0 0
  %438 = vmatmul.mubr.bf16.gmra.mxu0 %v268
  %v439 = vpop.f32.mrf.mxu0
  %v440 = vadd.f32 %v86, %v439
  %v441 = vpop.f32.mrf.mxu0
  %v442 = vadd.f32 %v90, %v441
  %v443 = vpop.f32.mrf.mxu0
  %v444 = vadd.f32 %v86, %v443
  %v445 = vpop.f32.mrf.mxu0
  %v446 = vadd.f32 %v90, %v445
  %447 = vmatprep.mubr.bf16.mxu0 0
  %448 = vmatmul.mubr.bf16.gmra.mxu0 %v271
  %v449 = vpop.f32.mrf.mxu0
  %v450 = vadd.f32 %v86, %v449
  %v451 = vpop.f32.mrf.mxu0
  %v452 = vadd.f32 %v90, %v451
  %v453 = vpop.f32.mrf.mxu0
  %v454 = vadd.f32 %v86, %v453
  %v455 = vpop.f32.mrf.mxu0
  %v456 = vadd.f32 %v90, %v455
  %457 = vmatprep.mubr.bf16.mxu0 0
  %458 = vmatmul.mubr.bf16.gmra.mxu0 %v274
  %v459 = vpop.f32.mrf.mxu0
  %v460 = vadd.f32 %v86, %v459
  %v461 = vpop.f32.mrf.mxu0
  %v462 = vadd.f32 %v90, %v461
  %v463 = vpop.f32.mrf.mxu0
  %v464 = vadd.f32 %v86, %v463
  %v465 = vpop.f32.mrf.mxu0
  %v466 = vadd.f32 %v90, %v465
  %467 = vmatprep.mubr.bf16.mxu0 0
  %468 = vmatmul.mubr.bf16.gmra.mxu0 %v277
  %v469 = vpop.f32.mrf.mxu0
  %v470 = vadd.f32 %v86, %v469
  %v471 = vpop.f32.mrf.mxu0
  %v472 = vadd.f32 %v90, %v471
  %v473 = vpop.f32.mrf.mxu0
  %v474 = vadd.f32 %v86, %v473
  %v475 = vpop.f32.mrf.mxu0
  %v476 = vadd.f32 %v90, %v475
  %477 = vmatprep.mubr.bf16.mxu0 0
  %478 = vmatmul.mubr.bf16.gmra.mxu0 %v280
  %v479 = vpop.f32.mrf.mxu0
  %v480 = vadd.f32 %v86, %v479
  %v481 = vpop.f32.mrf.mxu0
  %v482 = vadd.f32 %v90, %v481
  %v483 = vpop.f32.mrf.mxu0
  %v484 = vadd.f32 %v86, %v483
  %v485 = vpop.f32.mrf.mxu0
  %v486 = vadd.f32 %v90, %v485
  %487 = vdwg.mxu0
  %488 = vmatprep.subr.bf16.mxu0 0
  %489 = vmatpush1.bf16.msra.mxu0 0
  %490 = vmatprep.subr.bf16.mxu0 0
  %491 = vmatpush1.bf16.msra.mxu0 0
  %492 = vmatprep.subr.bf16.mxu0 0
  %493 = vmatpush1.bf16.msra.mxu0 0
  %494 = vmatprep.subr.bf16.mxu0 0
  %495 = vmatpush1.bf16.msra.mxu0 0
  %496 = vmatprep.subr.bf16.mxu0 0
  %497 = vmatpush1.bf16.msra.mxu0 0
  %498 = vmatprep.subr.bf16.mxu0 %v293
  %499 = vmatpush1.bf16.msra.mxu0 %v290
  %500 = vmatprep.subr.bf16.mxu0 %v220
  %501 = vmatpush1.bf16.msra.mxu0 %v219
  %502 = vmatprep.subr.bf16.mxu0 %v216
  %503 = vmatpush1.bf16.msra.mxu0 %v215
  %504 = vmatprep.subr.bf16.mxu0 0
  %505 = vmatpush2.bf16.msra.mxu0 0
  %506 = vmatprep.subr.bf16.mxu0 0
  %507 = vmatpush2.bf16.msra.mxu0 0
  %508 = vmatprep.subr.bf16.mxu0 0
  %509 = vmatpush2.bf16.msra.mxu0 0
  %510 = vmatprep.subr.bf16.mxu0 0
  %511 = vmatpush2.bf16.msra.mxu0 0
  %512 = vmatprep.subr.bf16.mxu0 0
  %513 = vmatpush2.bf16.msra.mxu0 0
  %514 = vmatprep.subr.bf16.mxu0 0
  %515 = vmatpush2.bf16.msra.mxu0 0
  %516 = vmatprep.subr.bf16.mxu0 0
  %517 = vmatpush2.bf16.msra.mxu0 0
  %518 = vmatprep.subr.bf16.mxu0 0
  %519 = vmatpush2.bf16.msra.mxu0 0
  %520 = vmatprep.mubr.bf16.mxu0 0
  %521 = vmatmul.mubr.bf16.gmra.mxu0 %v235
  %v522 = vpop.f32.mrf.mxu0
  %v523 = vadd.f32 %v94, %v522
  %v524 = vpop.f32.mrf.mxu0
  %v525 = vadd.f32 %v98, %v524
  %v526 = vpop.f32.mrf.mxu0
  %v527 = vadd.f32 %v94, %v526
  %v528 = vpop.f32.mrf.mxu0
  %v529 = vadd.f32 %v98, %v528
  %530 = vmatprep.mubr.bf16.mxu0 0
  %531 = vmatmul.mubr.bf16.gmra.mxu0 %v238
  %v532 = vpop.f32.mrf.mxu0
  %v533 = vadd.f32 %v94, %v532
  %v534 = vpop.f32.mrf.mxu0
  %v535 = vadd.f32 %v98, %v534
  %v536 = vpop.f32.mrf.mxu0
  %v537 = vadd.f32 %v94, %v536
  %v538 = vpop.f32.mrf.mxu0
  %v539 = vadd.f32 %v98, %v538
  %540 = vmatprep.mubr.bf16.mxu0 0
  %541 = vmatmul.mubr.bf16.gmra.mxu0 %v241
  %v542 = vpop.f32.mrf.mxu0
  %v543 = vadd.f32 %v94, %v542
  %v544 = vpop.f32.mrf.mxu0
  %v545 = vadd.f32 %v98, %v544
  %v546 = vpop.f32.mrf.mxu0
  %v547 = vadd.f32 %v94, %v546
  %v548 = vpop.f32.mrf.mxu0
  %v549 = vadd.f32 %v98, %v548
  %550 = vmatprep.mubr.bf16.mxu0 0
  %551 = vmatmul.mubr.bf16.gmra.mxu0 %v244
  %v552 = vpop.f32.mrf.mxu0
  %v553 = vadd.f32 %v94, %v552
  %v554 = vpop.f32.mrf.mxu0
  %v555 = vadd.f32 %v98, %v554
  %v556 = vpop.f32.mrf.mxu0
  %v557 = vadd.f32 %v94, %v556
  %v558 = vpop.f32.mrf.mxu0
  %v559 = vadd.f32 %v98, %v558
  %560 = vmatprep.mubr.bf16.mxu0 0
  %561 = vmatmul.mubr.bf16.gmra.mxu0 %v247
  %v562 = vpop.f32.mrf.mxu0
  %v563 = vadd.f32 %v94, %v562
  %v564 = vpop.f32.mrf.mxu0
  %v565 = vadd.f32 %v98, %v564
  %v566 = vpop.f32.mrf.mxu0
  %v567 = vadd.f32 %v94, %v566
  %v568 = vpop.f32.mrf.mxu0
  %v569 = vadd.f32 %v98, %v568
  %570 = vmatprep.mubr.bf16.mxu0 0
  %571 = vmatmul.mubr.bf16.gmra.mxu0 %v250
  %v572 = vpop.f32.mrf.mxu0
  %v573 = vadd.f32 %v94, %v572
  %v574 = vpop.f32.mrf.mxu0
  %v575 = vadd.f32 %v98, %v574
  %v576 = vpop.f32.mrf.mxu0
  %v577 = vadd.f32 %v94, %v576
  %v578 = vpop.f32.mrf.mxu0
  %v579 = vadd.f32 %v98, %v578
  %580 = vmatprep.mubr.bf16.mxu0 0
  %581 = vmatmul.mubr.bf16.gmra.mxu0 %v253
  %v582 = vpop.f32.mrf.mxu0
  %v583 = vadd.f32 %v94, %v582
  %v584 = vpop.f32.mrf.mxu0
  %v585 = vadd.f32 %v98, %v584
  %v586 = vpop.f32.mrf.mxu0
  %v587 = vadd.f32 %v94, %v586
  %v588 = vpop.f32.mrf.mxu0
  %v589 = vadd.f32 %v98, %v588
  %590 = vmatprep.mubr.bf16.mxu0 0
  %591 = vmatmul.mubr.bf16.gmra.mxu0 %v256
  %v592 = vpop.f32.mrf.mxu0
  %v593 = vadd.f32 %v94, %v592
  %v594 = vpop.f32.mrf.mxu0
  %v595 = vadd.f32 %v98, %v594
  %v596 = vpop.f32.mrf.mxu0
  %v597 = vadd.f32 %v94, %v596
  %v598 = vpop.f32.mrf.mxu0
  %v599 = vadd.f32 %v98, %v598
  %600 = vmatprep.mubr.bf16.mxu0 0
  %601 = vmatmul.mubr.bf16.gmra.mxu0 %v259
  %v602 = vpop.f32.mrf.mxu0
  %v603 = vadd.f32 %v94, %v602
  %v604 = vpop.f32.mrf.mxu0
  %v605 = vadd.f32 %v98, %v604
  %v606 = vpop.f32.mrf.mxu0
  %v607 = vadd.f32 %v94, %v606
  %v608 = vpop.f32.mrf.mxu0
  %v609 = vadd.f32 %v98, %v608
  %610 = vmatprep.mubr.bf16.mxu0 0
  %611 = vmatmul.mubr.bf16.gmra.mxu0 %v262
  %v612 = vpop.f32.mrf.mxu0
  %v613 = vadd.f32 %v94, %v612
  %v614 = vpop.f32.mrf.mxu0
  %v615 = vadd.f32 %v98, %v614
  %v616 = vpop.f32.mrf.mxu0
  %v617 = vadd.f32 %v94, %v616
  %v618 = vpop.f32.mrf.mxu0
  %v619 = vadd.f32 %v98, %v618
  %620 = vmatprep.mubr.bf16.mxu0 0
  %621 = vmatmul.mubr.bf16.gmra.mxu0 %v265
  %v622 = vpop.f32.mrf.mxu0
  %v623 = vadd.f32 %v94, %v622
  %v624 = vpop.f32.mrf.mxu0
  %v625 = vadd.f32 %v98, %v624
  %v626 = vpop.f32.mrf.mxu0
  %v627 = vadd.f32 %v94, %v626
  %v628 = vpop.f32.mrf.mxu0
  %v629 = vadd.f32 %v98, %v628
  %630 = vmatprep.mubr.bf16.mxu0 0
  %631 = vmatmul.mubr.bf16.gmra.mxu0 %v268
  %v632 = vpop.f32.mrf.mxu0
  %v633 = vadd.f32 %v94, %v632
  %v634 = vpop.f32.mrf.mxu0
  %v635 = vadd.f32 %v98, %v634
  %v636 = vpop.f32.mrf.mxu0
  %v637 = vadd.f32 %v94, %v636
  %v638 = vpop.f32.mrf.mxu0
  %v639 = vadd.f32 %v98, %v638
  %640 = vmatprep.mubr.bf16.mxu0 0
  %641 = vmatmul.mubr.bf16.gmra.mxu0 %v271
  %v642 = vpop.f32.mrf.mxu0
  %v643 = vadd.f32 %v94, %v642
  %v644 = vpop.f32.mrf.mxu0
  %v645 = vadd.f32 %v98, %v644
  %v646 = vpop.f32.mrf.mxu0
  %v647 = vadd.f32 %v94, %v646
  %v648 = vpop.f32.mrf.mxu0
  %v649 = vadd.f32 %v98, %v648
  %650 = vmatprep.mubr.bf16.mxu0 0
  %651 = vmatmul.mubr.bf16.gmra.mxu0 %v274
  %v652 = vpop.f32.mrf.mxu0
  %v653 = vadd.f32 %v94, %v652
  %v654 = vpop.f32.mrf.mxu0
  %v655 = vadd.f32 %v98, %v654
  %v656 = vpop.f32.mrf.mxu0
  %v657 = vadd.f32 %v94, %v656
  %v658 = vpop.f32.mrf.mxu0
  %v659 = vadd.f32 %v98, %v658
  %660 = vmatprep.mubr.bf16.mxu0 0
  %661 = vmatmul.mubr.bf16.gmra.mxu0 %v277
  %v662 = vpop.f32.mrf.mxu0
  %v663 = vadd.f32 %v94, %v662
  %v664 = vpop.f32.mrf.mxu0
  %v665 = vadd.f32 %v98, %v664
  %v666 = vpop.f32.mrf.mxu0
  %v667 = vadd.f32 %v94, %v666
  %v668 = vpop.f32.mrf.mxu0
  %v669 = vadd.f32 %v98, %v668
  %670 = vmatprep.mubr.bf16.mxu0 0
  %671 = vmatmul.mubr.bf16.gmra.mxu0 %v280
  %v672 = vpop.f32.mrf.mxu0
  %v673 = vadd.f32 %v94, %v672
  %v674 = vpop.f32.mrf.mxu0
  %v675 = vadd.f32 %v98, %v674
  %v676 = vpop.f32.mrf.mxu0
  %v677 = vadd.f32 %v94, %v676
  %v678 = vpop.f32.mrf.mxu0
  %v679 = vadd.f32 %v98, %v678
  %680 = vdwg.mxu0
  %v681 = vmax.f32 %v330, 0.0
  %v682 = vmax.f32 %v332, 0.0
  %v683 = vmax.f32 %v523, 0.0
  %v684 = vmax.f32 %v525, 0.0
  %v685 = vmax.f32 %v334, 0.0
  %v686 = vmax.f32 %v336, 0.0
  %v687 = vmax.f32 %v527, 0.0
  %v688 = vmax.f32 %v529, 0.0
  %v689 = vmax.f32 %v340, 0.0
  %v690 = vmax.f32 %v342, 0.0
  %v691 = vmax.f32 %v533, 0.0
  %v692 = vmax.f32 %v535, 0.0
  %v693 = vmax.f32 %v344, 0.0
  %v694 = vmax.f32 %v346, 0.0
  %v695 = vmax.f32 %v537, 0.0
  %v696 = vmax.f32 %v539, 0.0
  %v697 = vmax.f32 %v350, 0.0
  %v698 = vmax.f32 %v352, 0.0
  %v699 = vmax.f32 %v543, 0.0
  %v700 = vmax.f32 %v545, 0.0
  %v701 = vmax.f32 %v354, 0.0
  %v702 = vmax.f32 %v356, 0.0
  %v703 = vmax.f32 %v547, 0.0
  %v704 = vmax.f32 %v549, 0.0
  %v705 = vmax.f32 %v360, 0.0
  %v706 = vmax.f32 %v362, 0.0
  %v707 = vmax.f32 %v553, 0.0
  %v708 = vmax.f32 %v555, 0.0
  %v709 = vmax.f32 %v364, 0.0
  %v710 = vmax.f32 %v366, 0.0
  %v711 = vmax.f32 %v557, 0.0
  %v712 = vmax.f32 %v559, 0.0
  %v713 = vmax.f32 %v370, 0.0
  %v714 = vmax.f32 %v372, 0.0
  %v715 = vmax.f32 %v563, 0.0
  %v716 = vmax.f32 %v565, 0.0
  %v717 = vmax.f32 %v374, 0.0
  %v718 = vmax.f32 %v376, 0.0
  %v719 = vmax.f32 %v567, 0.0
  %v720 = vmax.f32 %v569, 0.0
  %v721 = vmax.f32 %v380, 0.0
  %v722 = vmax.f32 %v382, 0.0
  %v723 = vmax.f32 %v573, 0.0
  %v724 = vmax.f32 %v575, 0.0
  %v725 = vmax.f32 %v384, 0.0
  %v726 = vmax.f32 %v386, 0.0
  %v727 = vmax.f32 %v577, 0.0
  %v728 = vmax.f32 %v579, 0.0
  %v729 = vmax.f32 %v390, 0.0
  %v730 = vmax.f32 %v392, 0.0
  %v731 = vmax.f32 %v583, 0.0
  %v732 = vmax.f32 %v585, 0.0
  %v733 = vmax.f32 %v394, 0.0
  %v734 = vmax.f32 %v396, 0.0
  %v735 = vmax.f32 %v587, 0.0
  %v736 = vmax.f32 %v589, 0.0
  %v737 = vmax.f32 %v400, 0.0
  %v738 = vmax.f32 %v402, 0.0
  %v739 = vmax.f32 %v593, 0.0
  %v740 = vmax.f32 %v595, 0.0
  %v741 = vmax.f32 %v404, 0.0
  %v742 = vmax.f32 %v406, 0.0
  %v743 = vmax.f32 %v597, 0.0
  %v744 = vmax.f32 %v599, 0.0
  %v745 = vmax.f32 %v410, 0.0
  %v746 = vmax.f32 %v412, 0.0
  %v747 = vmax.f32 %v603, 0.0
  %v748 = vmax.f32 %v605, 0.0
  %v749 = vmax.f32 %v414, 0.0
  %v750 = vmax.f32 %v416, 0.0
  %v751 = vmax.f32 %v607, 0.0
  %v752 = vmax.f32 %v609, 0.0
  %v753 = vmax.f32 %v420, 0.0
  %v754 = vmax.f32 %v422, 0.0
  %v755 = vmax.f32 %v613, 0.0
  %v756 = vmax.f32 %v615, 0.0
  %v757 = vmax.f32 %v424, 0.0
  %v758 = vmax.f32 %v426, 0.0
  %v759 = vmax.f32 %v617, 0.0
  %v760 = vmax.f32 %v619, 0.0
  %v761 = vmax.f32 %v430, 0.0
  %v762 = vmax.f32 %v432, 0.0
  %v763 = vmax.f32 %v623, 0.0
  %v764 = vmax.f32 %v625, 0.0
  %v765 = vmax.f32 %v434, 0.0
  %v766 = vmax.f32 %v436, 0.0
  %v767 = vmax.f32 %v627, 0.0
  %v768 = vmax.f32 %v629, 0.0
  %v769 = vmax.f32 %v440, 0.0
  %v770 = vmax.f32 %v442, 0.0
  %v771 = vmax.f32 %v633, 0.0
  %v772 = vmax.f32 %v635, 0.0
  %v773 = vmax.f32 %v444, 0.0
  %v774 = vmax.f32 %v446, 0.0
  %v775 = vmax.f32 %v637, 0.0
  %v776 = vmax.f32 %v639, 0.0
  %v777 = vmax.f32 %v450, 0.0
  %v778 = vmax.f32 %v452, 0.0
  %v779 = vmax.f32 %v643, 0.0
  %v780 = vmax.f32 %v645, 0.0
  %v781 = vmax.f32 %v454, 0.0
  %v782 = vmax.f32 %v456, 0.0
  %v783 = vmax.f32 %v647, 0.0
  %v784 = vmax.f32 %v649, 0.0
  %v785 = vmax.f32 %v460, 0.0
  %v786 = vmax.f32 %v462, 0.0
  %v787 = vmax.f32 %v653, 0.0
  %v788 = vmax.f32 %v655, 0.0
  %v789 = vmax.f32 %v464, 0.0
  %v790 = vmax.f32 %v466, 0.0
  %v791 = vmax.f32 %v657, 0.0
  %v792 = vmax.f32 %v659, 0.0
  %v793 = vmax.f32 %v470, 0.0
  %v794 = vmax.f32 %v472, 0.0
  %v795 = vmax.f32 %v663, 0.0
  %v796 = vmax.f32 %v665, 0.0
  %v797 = vmax.f32 %v474, 0.0
  %v798 = vmax.f32 %v476, 0.0
  %v799 = vmax.f32 %v667, 0.0
  %v800 = vmax.f32 %v669, 0.0
  %v801 = vmax.f32 %v480, 0.0
  %v802 = vmax.f32 %v482, 0.0
  %v803 = vmax.f32 %v673, 0.0
  %v804 = vmax.f32 %v675, 0.0
  %v805 = vmax.f32 %v484, 0.0
  %v806 = vmax.f32 %v486, 0.0
  %v807 = vmax.f32 %v677, 0.0
  %v808 = vmax.f32 %v679, 0.0
  %v809 = vadd.f32 %v681, %v685
  %v810 = vadd.f32 %v809, %v689
  %v811 = vadd.f32 %v810, %v693
  %v812 = vrot.slane %v811, 4
  %v813 = vadd.f32 %v811, %v812
  %v814 = vrot.slane %v813, 2
  %v815 = vadd.f32 %v813, %v814
  %v816 = vrot.slane %v815, 1
  %v817 = vadd.f32 %v815, %v816
  %v818 = vadd.f32 %v682, %v686
  %v819 = vadd.f32 %v818, %v690
  %v820 = vadd.f32 %v819, %v694
  %v821 = vrot.slane %v820, 4
  %v822 = vadd.f32 %v820, %v821
  %v823 = vrot.slane %v822, 2
  %v824 = vadd.f32 %v822, %v823
  %v825 = vrot.slane %v824, 1
  %v826 = vadd.f32 %v824, %v825
  %v827 = vadd.f32 %v683, %v687
  %v828 = vadd.f32 %v827, %v691
  %v829 = vadd.f32 %v828, %v695
  %v830 = vrot.slane %v829, 4
  %v831 = vadd.f32 %v829, %v830
  %v832 = vrot.slane %v831, 2
  %v833 = vadd.f32 %v831, %v832
  %v834 = vrot.slane %v833, 1
  %v835 = vadd.f32 %v833, %v834
  %v836 = vadd.f32 %v684, %v688
  %v837 = vadd.f32 %v836, %v692
  %v838 = vadd.f32 %v837, %v696
  %v839 = vrot.slane %v838, 4
  %v840 = vadd.f32 %v838, %v839
  %v841 = vrot.slane %v840, 2
  %v842 = vadd.f32 %v840, %v841
  %v843 = vrot.slane %v842, 1
  %v844 = vadd.f32 %v842, %v843
  %v845 = vadd.f32 %v697, %v701
  %v846 = vadd.f32 %v845, %v705
  %v847 = vadd.f32 %v846, %v709
  %v848 = vrot.slane %v847, 4
  %v849 = vadd.f32 %v847, %v848
  %v850 = vrot.slane %v849, 2
  %v851 = vadd.f32 %v849, %v850
  %v852 = vrot.slane %v851, 1
  %v853 = vadd.f32 %v851, %v852
  %v854 = vadd.f32 %v698, %v702
  %v855 = vadd.f32 %v854, %v706
  %v856 = vadd.f32 %v855, %v710
  %v857 = vrot.slane %v856, 4
  %v858 = vadd.f32 %v856, %v857
  %v859 = vrot.slane %v858, 2
  %v860 = vadd.f32 %v858, %v859
  %v861 = vrot.slane %v860, 1
  %v862 = vadd.f32 %v860, %v861
  %v863 = vadd.f32 %v699, %v703
  %v864 = vadd.f32 %v863, %v707
  %v865 = vadd.f32 %v864, %v711
  %v866 = vrot.slane %v865, 4
  %v867 = vadd.f32 %v865, %v866
  %v868 = vrot.slane %v867, 2
  %v869 = vadd.f32 %v867, %v868
  %v870 = vrot.slane %v869, 1
  %v871 = vadd.f32 %v869, %v870
  %v872 = vadd.f32 %v700, %v704
  %v873 = vadd.f32 %v872, %v708
  %v874 = vadd.f32 %v873, %v712
  %v875 = vrot.slane %v874, 4
  %v876 = vadd.f32 %v874, %v875
  %v877 = vrot.slane %v876, 2
  %v878 = vadd.f32 %v876, %v877
  %v879 = vrot.slane %v878, 1
  %v880 = vadd.f32 %v878, %v879
  %v881 = vadd.f32 %v713, %v717
  %v882 = vadd.f32 %v881, %v721
  %v883 = vadd.f32 %v882, %v725
  %v884 = vrot.slane %v883, 4
  %v885 = vadd.f32 %v883, %v884
  %v886 = vrot.slane %v885, 2
  %v887 = vadd.f32 %v885, %v886
  %v888 = vrot.slane %v887, 1
  %v889 = vadd.f32 %v887, %v888
  %v890 = vadd.f32 %v714, %v718
  %v891 = vadd.f32 %v890, %v722
  %v892 = vadd.f32 %v891, %v726
  %v893 = vrot.slane %v892, 4
  %v894 = vadd.f32 %v892, %v893
  %v895 = vrot.slane %v894, 2
  %v896 = vadd.f32 %v894, %v895
  %v897 = vrot.slane %v896, 1
  %v898 = vadd.f32 %v896, %v897
  %v899 = vadd.f32 %v715, %v719
  %v900 = vadd.f32 %v899, %v723
  %v901 = vadd.f32 %v900, %v727
  %v902 = vrot.slane %v901, 4
  %v903 = vadd.f32 %v901, %v902
  %v904 = vrot.slane %v903, 2
  %v905 = vadd.f32 %v903, %v904
  %v906 = vrot.slane %v905, 1
  %v907 = vadd.f32 %v905, %v906
  %v908 = vadd.f32 %v716, %v720
  %v909 = vadd.f32 %v908, %v724
  %v910 = vadd.f32 %v909, %v728
  %v911 = vrot.slane %v910, 4
  %v912 = vadd.f32 %v910, %v911
  %v913 = vrot.slane %v912, 2
  %v914 = vadd.f32 %v912, %v913
  %v915 = vrot.slane %v914, 1
  %v916 = vadd.f32 %v914, %v915
  %v917 = vadd.f32 %v729, %v733
  %v918 = vadd.f32 %v917, %v737
  %v919 = vadd.f32 %v918, %v741
  %v920 = vrot.slane %v919, 4
  %v921 = vadd.f32 %v919, %v920
  %v922 = vrot.slane %v921, 2
  %v923 = vadd.f32 %v921, %v922
  %v924 = vrot.slane %v923, 1
  %v925 = vadd.f32 %v923, %v924
  %v926 = vadd.f32 %v730, %v734
  %v927 = vadd.f32 %v926, %v738
  %v928 = vadd.f32 %v927, %v742
  %v929 = vrot.slane %v928, 4
  %v930 = vadd.f32 %v928, %v929
  %v931 = vrot.slane %v930, 2
  %v932 = vadd.f32 %v930, %v931
  %v933 = vrot.slane %v932, 1
  %v934 = vadd.f32 %v932, %v933
  %v935 = vadd.f32 %v731, %v735
  %v936 = vadd.f32 %v935, %v739
  %v937 = vadd.f32 %v936, %v743
  %v938 = vrot.slane %v937, 4
  %v939 = vadd.f32 %v937, %v938
  %v940 = vrot.slane %v939, 2
  %v941 = vadd.f32 %v939, %v940
  %v942 = vrot.slane %v941, 1
  %v943 = vadd.f32 %v941, %v942
  %v944 = vadd.f32 %v732, %v736
  %v945 = vadd.f32 %v944, %v740
  %v946 = vadd.f32 %v945, %v744
  %v947 = vrot.slane %v946, 4
  %v948 = vadd.f32 %v946, %v947
  %v949 = vrot.slane %v948, 2
  %v950 = vadd.f32 %v948, %v949
  %v951 = vrot.slane %v950, 1
  %v952 = vadd.f32 %v950, %v951
  %v953 = vadd.f32 %v745, %v749
  %v954 = vadd.f32 %v953, %v753
  %v955 = vadd.f32 %v954, %v757
  %v956 = vrot.slane %v955, 4
  %v957 = vadd.f32 %v955, %v956
  %v958 = vrot.slane %v957, 2
  %v959 = vadd.f32 %v957, %v958
  %v960 = vrot.slane %v959, 1
  %v961 = vadd.f32 %v959, %v960
  %v962 = vadd.f32 %v746, %v750
  %v963 = vadd.f32 %v962, %v754
  %v964 = vadd.f32 %v963, %v758
  %v965 = vrot.slane %v964, 4
  %v966 = vadd.f32 %v964, %v965
  %v967 = vrot.slane %v966, 2
  %v968 = vadd.f32 %v966, %v967
  %v969 = vrot.slane %v968, 1
  %v970 = vadd.f32 %v968, %v969
  %v971 = vadd.f32 %v747, %v751
  %v972 = vadd.f32 %v971, %v755
  %v973 = vadd.f32 %v972, %v759
  %v974 = vrot.slane %v973, 4
  %v975 = vadd.f32 %v973, %v974
  %v976 = vrot.slane %v975, 2
  %v977 = vadd.f32 %v975, %v976
  %v978 = vrot.slane %v977, 1
  %v979 = vadd.f32 %v977, %v978
  %v980 = vadd.f32 %v748, %v752
  %v981 = vadd.f32 %v980, %v756
  %v982 = vadd.f32 %v981, %v760
  %v983 = vrot.slane %v982, 4
  %v984 = vadd.f32 %v982, %v983
  %v985 = vrot.slane %v984, 2
  %v986 = vadd.f32 %v984, %v985
  %v987 = vrot.slane %v986, 1
  %v988 = vadd.f32 %v986, %v987
  %v989 = vadd.f32 %v761, %v765
  %v990 = vadd.f32 %v989, %v769
  %v991 = vadd.f32 %v990, %v773
  %v992 = vrot.slane %v991, 4
  %v993 = vadd.f32 %v991, %v992
  %v994 = vrot.slane %v993, 2
  %v995 = vadd.f32 %v993, %v994
  %v996 = vrot.slane %v995, 1
  %v997 = vadd.f32 %v995, %v996
  %v998 = vadd.f32 %v762, %v766
  %v999 = vadd.f32 %v998, %v770
  %v1000 = vadd.f32 %v999, %v774
  %v1001 = vrot.slane %v1000, 4
  %v1002 = vadd.f32 %v1000, %v1001
  %v1003 = vrot.slane %v1002, 2
  %v1004 = vadd.f32 %v1002, %v1003
  %v1005 = vrot.slane %v1004, 1
  %v1006 = vadd.f32 %v1004, %v1005
  %v1007 = vadd.f32 %v763, %v767
  %v1008 = vadd.f32 %v1007, %v771
  %v1009 = vadd.f32 %v1008, %v775
  %v1010 = vrot.slane %v1009, 4
  %v1011 = vadd.f32 %v1009, %v1010
  %v1012 = vrot.slane %v1011, 2
  %v1013 = vadd.f32 %v1011, %v1012
  %v1014 = vrot.slane %v1013, 1
  %v1015 = vadd.f32 %v1013, %v1014
  %v1016 = vadd.f32 %v764, %v768
  %v1017 = vadd.f32 %v1016, %v772
  %v1018 = vadd.f32 %v1017, %v776
  %v1019 = vrot.slane %v1018, 4
  %v1020 = vadd.f32 %v1018, %v1019
  %v1021 = vrot.slane %v1020, 2
  %v1022 = vadd.f32 %v1020, %v1021
  %v1023 = vrot.slane %v1022, 1
  %v1024 = vadd.f32 %v1022, %v1023
  %v1025 = vadd.f32 %v777, %v781
  %v1026 = vadd.f32 %v1025, %v785
  %v1027 = vadd.f32 %v1026, %v789
  %v1028 = vrot.slane %v1027, 4
  %v1029 = vadd.f32 %v1027, %v1028
  %v1030 = vrot.slane %v1029, 2
  %v1031 = vadd.f32 %v1029, %v1030
  %v1032 = vrot.slane %v1031, 1
  %v1033 = vadd.f32 %v1031, %v1032
  %v1034 = vadd.f32 %v778, %v782
  %v1035 = vadd.f32 %v1034, %v786
  %v1036 = vadd.f32 %v1035, %v790
  %v1037 = vrot.slane %v1036, 4
  %v1038 = vadd.f32 %v1036, %v1037
  %v1039 = vrot.slane %v1038, 2
  %v1040 = vadd.f32 %v1038, %v1039
  %v1041 = vrot.slane %v1040, 1
  %v1042 = vadd.f32 %v1040, %v1041
  %v1043 = vadd.f32 %v779, %v783
  %v1044 = vadd.f32 %v1043, %v787
  %v1045 = vadd.f32 %v1044, %v791
  %v1046 = vrot.slane %v1045, 4
  %v1047 = vadd.f32 %v1045, %v1046
  %v1048 = vrot.slane %v1047, 2
  %v1049 = vadd.f32 %v1047, %v1048
  %v1050 = vrot.slane %v1049, 1
  %v1051 = vadd.f32 %v1049, %v1050
  %v1052 = vadd.f32 %v780, %v784
  %v1053 = vadd.f32 %v1052, %v788
  %v1054 = vadd.f32 %v1053, %v792
  %v1055 = vrot.slane %v1054, 4
  %v1056 = vadd.f32 %v1054, %v1055
  %v1057 = vrot.slane %v1056, 2
  %v1058 = vadd.f32 %v1056, %v1057
  %v1059 = vrot.slane %v1058, 1
  %v1060 = vadd.f32 %v1058, %v1059
  %v1061 = vadd.f32 %v793, %v797
  %v1062 = vadd.f32 %v1061, %v801
  %v1063 = vadd.f32 %v1062, %v805
  %v1064 = vrot.slane %v1063, 4
  %v1065 = vadd.f32 %v1063, %v1064
  %v1066 = vrot.slane %v1065, 2
  %v1067 = vadd.f32 %v1065, %v1066
  %v1068 = vrot.slane %v1067, 1
  %v1069 = vadd.f32 %v1067, %v1068
  %v1070 = vadd.f32 %v794, %v798
  %v1071 = vadd.f32 %v1070, %v802
  %v1072 = vadd.f32 %v1071, %v806
  %v1073 = vrot.slane %v1072, 4
  %v1074 = vadd.f32 %v1072, %v1073
  %v1075 = vrot.slane %v1074, 2
  %v1076 = vadd.f32 %v1074, %v1075
  %v1077 = vrot.slane %v1076, 1
  %v1078 = vadd.f32 %v1076, %v1077
  %v1079 = vadd.f32 %v795, %v799
  %v1080 = vadd.f32 %v1079, %v803
  %v1081 = vadd.f32 %v1080, %v807
  %v1082 = vrot.slane %v1081, 4
  %v1083 = vadd.f32 %v1081, %v1082
  %v1084 = vrot.slane %v1083, 2
  %v1085 = vadd.f32 %v1083, %v1084
  %v1086 = vrot.slane %v1085, 1
  %v1087 = vadd.f32 %v1085, %v1086
  %v1088 = vadd.f32 %v796, %v800
  %v1089 = vadd.f32 %v1088, %v804
  %v1090 = vadd.f32 %v1089, %v808
  %v1091 = vrot.slane %v1090, 4
  %v1092 = vadd.f32 %v1090, %v1091
  %v1093 = vrot.slane %v1092, 2
  %v1094 = vadd.f32 %v1092, %v1093
  %v1095 = vrot.slane %v1094, 1
  %v1096 = vadd.f32 %v1094, %v1095
  %v1097 = vadd.f32 %v817, 0.0
  %v1098 = vadd.f32 %v826, 0.0
  %v1099 = vadd.f32 %v835, 0.0
  %v1100 = vadd.f32 %v844, 0.0
  %v1101 = vadd.f32 %v853, 0.0
  %v1102 = vadd.f32 %v862, 0.0
  %v1103 = vadd.f32 %v871, 0.0
  %v1104 = vadd.f32 %v880, 0.0
  %v1105 = vadd.f32 %v889, 0.0
  %v1106 = vadd.f32 %v898, 0.0
  %v1107 = vadd.f32 %v907, 0.0
  %v1108 = vadd.f32 %v916, 0.0
  %v1109 = vadd.f32 %v925, 0.0
  %v1110 = vadd.f32 %v934, 0.0
  %v1111 = vadd.f32 %v943, 0.0
  %v1112 = vadd.f32 %v952, 0.0
  %v1113 = vadd.f32 %v961, 0.0
  %v1114 = vadd.f32 %v970, 0.0
  %v1115 = vadd.f32 %v979, 0.0
  %v1116 = vadd.f32 %v988, 0.0
  %v1117 = vadd.f32 %v997, 0.0
  %v1118 = vadd.f32 %v1006, 0.0
  %v1119 = vadd.f32 %v1015, 0.0
  %v1120 = vadd.f32 %v1024, 0.0
  %v1121 = vadd.f32 %v1033, 0.0
  %v1122 = vadd.f32 %v1042, 0.0
  %v1123 = vadd.f32 %v1051, 0.0
  %v1124 = vadd.f32 %v1060, 0.0
  %v1125 = vadd.f32 %v1069, 0.0
  %v1126 = vadd.f32 %v1078, 0.0
  %v1127 = vadd.f32 %v1087, 0.0
  %v1128 = vadd.f32 %v1096, 0.0
  %s1129 = scalar_lea.vmem %s0, 16
  %v1130 = vld [vmem:[%s1129] sm:$0xf]
  %v1131 = vld [vmem:[%s1129 + $0x4] sm:$0xf]
  %v1132 = vld [vmem:[%s1129 + $0x8] sm:$0xf]
  %v1133 = vld [vmem:[%s1129 + $0xc] sm:$0xf]
  %v1134 = vld [vmem:[%s1129 + $0x80] sm:$0xf]
  %v1135 = vld [vmem:[%s1129 + $0x84] sm:$0xf]
  %v1136 = vld [vmem:[%s1129 + $0x88] sm:$0xf]
  %v1137 = vld [vmem:[%s1129 + $0x8c] sm:$0xf]
  %v1138 = vld [vmem:[%s1129 + $0x100] sm:$0xf]
  %v1139 = vld [vmem:[%s1129 + $0x104] sm:$0xf]
  %v1140 = vld [vmem:[%s1129 + $0x108] sm:$0xf]
  %v1141 = vld [vmem:[%s1129 + $0x10c] sm:$0xf]
  %v1142 = vld [vmem:[%s1129 + $0x180] sm:$0xf]
  %v1143 = vld [vmem:[%s1129 + $0x184] sm:$0xf]
  %v1144 = vld [vmem:[%s1129 + $0x188] sm:$0xf]
  %v1145 = vld [vmem:[%s1129 + $0x18c] sm:$0xf]
  %v1146 = vld [vmem:[%s1129 + $0x200] sm:$0xf]
  %v1147 = vld [vmem:[%s1129 + $0x204] sm:$0xf]
  %v1148 = vld [vmem:[%s1129 + $0x208] sm:$0xf]
  %v1149 = vld [vmem:[%s1129 + $0x20c] sm:$0xf]
  %v1150 = vld [vmem:[%s1129 + $0x280] sm:$0xf]
  %v1151 = vld [vmem:[%s1129 + $0x284] sm:$0xf]
  %v1152 = vld [vmem:[%s1129 + $0x288] sm:$0xf]
  %v1153 = vld [vmem:[%s1129 + $0x28c] sm:$0xf]
  %v1154 = vld [vmem:[%s1129 + $0x300] sm:$0xf]
  %v1155 = vld [vmem:[%s1129 + $0x304] sm:$0xf]
  %v1156 = vld [vmem:[%s1129 + $0x308] sm:$0xf]
  %v1157 = vld [vmem:[%s1129 + $0x30c] sm:$0xf]
  %v1158 = vld [vmem:[%s1129 + $0x380] sm:$0xf]
  %v1159 = vld [vmem:[%s1129 + $0x384] sm:$0xf]
  %v1160 = vld [vmem:[%s1129 + $0x388] sm:$0xf]
  %v1161 = vld [vmem:[%s1129 + $0x38c] sm:$0xf]
  %v1194 = vunpack.c.l.b16 %v1130
  %v1195 = vunpack.c.l.b16 %v1131
  %v1196 = vunpack.c.l.b16 %v1132
  %v1197 = vunpack.c.l.b16 %v1133
  %v1198 = vunpack.c.l.b16 %v1134
  %v1199 = vunpack.c.l.b16 %v1135
  %v1200 = vunpack.c.l.b16 %v1136
  %v1201 = vunpack.c.l.b16 %v1137
  %v1202 = vunpack.c.l.b16 %v1138
  %v1203 = vunpack.c.l.b16 %v1139
  %v1204 = vunpack.c.l.b16 %v1140
  %v1205 = vunpack.c.l.b16 %v1141
  %v1206 = vunpack.c.l.b16 %v1142
  %v1207 = vunpack.c.l.b16 %v1143
  %v1208 = vunpack.c.l.b16 %v1144
  %v1209 = vunpack.c.l.b16 %v1145
  %v1210 = vunpack.c.l.b16 %v1146
  %v1211 = vunpack.c.l.b16 %v1147
  %v1212 = vunpack.c.l.b16 %v1148
  %v1213 = vunpack.c.l.b16 %v1149
  %v1214 = vunpack.c.l.b16 %v1150
  %v1215 = vunpack.c.l.b16 %v1151
  %v1216 = vunpack.c.l.b16 %v1152
  %v1217 = vunpack.c.l.b16 %v1153
  %v1218 = vunpack.c.l.b16 %v1154
  %v1219 = vunpack.c.l.b16 %v1155
  %v1220 = vunpack.c.l.b16 %v1156
  %v1221 = vunpack.c.l.b16 %v1157
  %v1222 = vunpack.c.l.b16 %v1158
  %v1223 = vunpack.c.l.b16 %v1159
  %v1224 = vunpack.c.l.b16 %v1160
  %v1225 = vunpack.c.l.b16 %v1161
  %v1226 = vpack.c.b16 %v1195, %v1194
  %v1227 = vpack.c.b16 %v1197, %v1196
  %v1228 = vpack.c.b16 %v1199, %v1198
  %v1229 = vpack.c.b16 %v1201, %v1200
  %v1230 = vpack.c.b16 %v1203, %v1202
  %v1231 = vpack.c.b16 %v1205, %v1204
  %v1232 = vpack.c.b16 %v1207, %v1206
  %v1233 = vpack.c.b16 %v1209, %v1208
  %v1234 = vpack.c.b16 %v1211, %v1210
  %v1235 = vpack.c.b16 %v1213, %v1212
  %v1236 = vpack.c.b16 %v1215, %v1214
  %v1237 = vpack.c.b16 %v1217, %v1216
  %v1238 = vpack.c.b16 %v1219, %v1218
  %v1239 = vpack.c.b16 %v1221, %v1220
  %v1240 = vpack.c.b16 %v1223, %v1222
  %v1241 = vpack.c.b16 %v1225, %v1224
  %v1243 = vsel %vm233, %v1226, 0
  %v1246 = vsel %vm233, %v1227, 0
  %v1249 = vsel %vm233, %v1228, 0
  %v1252 = vsel %vm233, %v1229, 0
  %v1255 = vsel %vm233, %v1230, 0
  %v1258 = vsel %vm233, %v1231, 0
  %v1261 = vsel %vm233, %v1232, 0
  %v1264 = vsel %vm233, %v1233, 0
  %v1267 = vsel %vm233, %v1234, 0
  %v1270 = vsel %vm233, %v1235, 0
  %v1273 = vsel %vm233, %v1236, 0
  %v1276 = vsel %vm233, %v1237, 0
  %v1279 = vsel %vm233, %v1238, 0
  %v1282 = vsel %vm233, %v1239, 0
  %v1285 = vsel %vm233, %v1240, 0
  %v1288 = vsel %vm233, %v1241, 0
  %1290 = vmatprep.subr.bf16.mxu0 0
  %1291 = vmatpush1.bf16.msra.mxu0 0
  %1292 = vmatprep.subr.bf16.mxu0 0
  %1293 = vmatpush1.bf16.msra.mxu0 0
  %1294 = vmatprep.subr.bf16.mxu0 0
  %1295 = vmatpush1.bf16.msra.mxu0 0
  %1296 = vmatprep.subr.bf16.mxu0 0
  %1297 = vmatpush1.bf16.msra.mxu0 0
  %1298 = vmatprep.subr.bf16.mxu0 0
  %1299 = vmatpush1.bf16.msra.mxu0 0
  %1300 = vmatprep.subr.bf16.mxu0 %v287
  %1301 = vmatpush1.bf16.msra.mxu0 %v284
  %1302 = vmatprep.subr.bf16.mxu0 %v218
  %1303 = vmatpush1.bf16.msra.mxu0 %v217
  %1304 = vmatprep.subr.bf16.mxu0 %v214
  %1305 = vmatpush1.bf16.msra.mxu0 %v213
  %1306 = vmatprep.subr.bf16.mxu0 0
  %1307 = vmatpush2.bf16.msra.mxu0 0
  %1308 = vmatprep.subr.bf16.mxu0 0
  %1309 = vmatpush2.bf16.msra.mxu0 0
  %1310 = vmatprep.subr.bf16.mxu0 0
  %1311 = vmatpush2.bf16.msra.mxu0 0
  %1312 = vmatprep.subr.bf16.mxu0 0
  %1313 = vmatpush2.bf16.msra.mxu0 0
  %1314 = vmatprep.subr.bf16.mxu0 0
  %1315 = vmatpush2.bf16.msra.mxu0 0
  %1316 = vmatprep.subr.bf16.mxu0 0
  %1317 = vmatpush2.bf16.msra.mxu0 0
  %1318 = vmatprep.subr.bf16.mxu0 0
  %1319 = vmatpush2.bf16.msra.mxu0 0
  %1320 = vmatprep.subr.bf16.mxu0 0
  %1321 = vmatpush2.bf16.msra.mxu0 0
  %1322 = vmatprep.mubr.bf16.mxu0 0
  %1323 = vmatmul.mubr.bf16.gmra.mxu0 %v1243
  %v1324 = vpop.f32.mrf.mxu0
  %v1325 = vadd.f32 %v86, %v1324
  %v1326 = vpop.f32.mrf.mxu0
  %v1327 = vadd.f32 %v90, %v1326
  %v1328 = vpop.f32.mrf.mxu0
  %v1329 = vadd.f32 %v86, %v1328
  %v1330 = vpop.f32.mrf.mxu0
  %v1331 = vadd.f32 %v90, %v1330
  %1332 = vmatprep.mubr.bf16.mxu0 0
  %1333 = vmatmul.mubr.bf16.gmra.mxu0 %v1246
  %v1334 = vpop.f32.mrf.mxu0
  %v1335 = vadd.f32 %v86, %v1334
  %v1336 = vpop.f32.mrf.mxu0
  %v1337 = vadd.f32 %v90, %v1336
  %v1338 = vpop.f32.mrf.mxu0
  %v1339 = vadd.f32 %v86, %v1338
  %v1340 = vpop.f32.mrf.mxu0
  %v1341 = vadd.f32 %v90, %v1340
  %1342 = vmatprep.mubr.bf16.mxu0 0
  %1343 = vmatmul.mubr.bf16.gmra.mxu0 %v1249
  %v1344 = vpop.f32.mrf.mxu0
  %v1345 = vadd.f32 %v86, %v1344
  %v1346 = vpop.f32.mrf.mxu0
  %v1347 = vadd.f32 %v90, %v1346
  %v1348 = vpop.f32.mrf.mxu0
  %v1349 = vadd.f32 %v86, %v1348
  %v1350 = vpop.f32.mrf.mxu0
  %v1351 = vadd.f32 %v90, %v1350
  %1352 = vmatprep.mubr.bf16.mxu0 0
  %1353 = vmatmul.mubr.bf16.gmra.mxu0 %v1252
  %v1354 = vpop.f32.mrf.mxu0
  %v1355 = vadd.f32 %v86, %v1354
  %v1356 = vpop.f32.mrf.mxu0
  %v1357 = vadd.f32 %v90, %v1356
  %v1358 = vpop.f32.mrf.mxu0
  %v1359 = vadd.f32 %v86, %v1358
  %v1360 = vpop.f32.mrf.mxu0
  %v1361 = vadd.f32 %v90, %v1360
  %1362 = vmatprep.mubr.bf16.mxu0 0
  %1363 = vmatmul.mubr.bf16.gmra.mxu0 %v1255
  %v1364 = vpop.f32.mrf.mxu0
  %v1365 = vadd.f32 %v86, %v1364
  %v1366 = vpop.f32.mrf.mxu0
  %v1367 = vadd.f32 %v90, %v1366
  %v1368 = vpop.f32.mrf.mxu0
  %v1369 = vadd.f32 %v86, %v1368
  %v1370 = vpop.f32.mrf.mxu0
  %v1371 = vadd.f32 %v90, %v1370
  %1372 = vmatprep.mubr.bf16.mxu0 0
  %1373 = vmatmul.mubr.bf16.gmra.mxu0 %v1258
  %v1374 = vpop.f32.mrf.mxu0
  %v1375 = vadd.f32 %v86, %v1374
  %v1376 = vpop.f32.mrf.mxu0
  %v1377 = vadd.f32 %v90, %v1376
  %v1378 = vpop.f32.mrf.mxu0
  %v1379 = vadd.f32 %v86, %v1378
  %v1380 = vpop.f32.mrf.mxu0
  %v1381 = vadd.f32 %v90, %v1380
  %1382 = vmatprep.mubr.bf16.mxu0 0
  %1383 = vmatmul.mubr.bf16.gmra.mxu0 %v1261
  %v1384 = vpop.f32.mrf.mxu0
  %v1385 = vadd.f32 %v86, %v1384
  %v1386 = vpop.f32.mrf.mxu0
  %v1387 = vadd.f32 %v90, %v1386
  %v1388 = vpop.f32.mrf.mxu0
  %v1389 = vadd.f32 %v86, %v1388
  %v1390 = vpop.f32.mrf.mxu0
  %v1391 = vadd.f32 %v90, %v1390
  %1392 = vmatprep.mubr.bf16.mxu0 0
  %1393 = vmatmul.mubr.bf16.gmra.mxu0 %v1264
  %v1394 = vpop.f32.mrf.mxu0
  %v1395 = vadd.f32 %v86, %v1394
  %v1396 = vpop.f32.mrf.mxu0
  %v1397 = vadd.f32 %v90, %v1396
  %v1398 = vpop.f32.mrf.mxu0
  %v1399 = vadd.f32 %v86, %v1398
  %v1400 = vpop.f32.mrf.mxu0
  %v1401 = vadd.f32 %v90, %v1400
  %1402 = vmatprep.mubr.bf16.mxu0 0
  %1403 = vmatmul.mubr.bf16.gmra.mxu0 %v1267
  %v1404 = vpop.f32.mrf.mxu0
  %v1405 = vadd.f32 %v86, %v1404
  %v1406 = vpop.f32.mrf.mxu0
  %v1407 = vadd.f32 %v90, %v1406
  %v1408 = vpop.f32.mrf.mxu0
  %v1409 = vadd.f32 %v86, %v1408
  %v1410 = vpop.f32.mrf.mxu0
  %v1411 = vadd.f32 %v90, %v1410
  %1412 = vmatprep.mubr.bf16.mxu0 0
  %1413 = vmatmul.mubr.bf16.gmra.mxu0 %v1270
  %v1414 = vpop.f32.mrf.mxu0
  %v1415 = vadd.f32 %v86, %v1414
  %v1416 = vpop.f32.mrf.mxu0
  %v1417 = vadd.f32 %v90, %v1416
  %v1418 = vpop.f32.mrf.mxu0
  %v1419 = vadd.f32 %v86, %v1418
  %v1420 = vpop.f32.mrf.mxu0
  %v1421 = vadd.f32 %v90, %v1420
  %1422 = vmatprep.mubr.bf16.mxu0 0
  %1423 = vmatmul.mubr.bf16.gmra.mxu0 %v1273
  %v1424 = vpop.f32.mrf.mxu0
  %v1425 = vadd.f32 %v86, %v1424
  %v1426 = vpop.f32.mrf.mxu0
  %v1427 = vadd.f32 %v90, %v1426
  %v1428 = vpop.f32.mrf.mxu0
  %v1429 = vadd.f32 %v86, %v1428
  %v1430 = vpop.f32.mrf.mxu0
  %v1431 = vadd.f32 %v90, %v1430
  %1432 = vmatprep.mubr.bf16.mxu0 0
  %1433 = vmatmul.mubr.bf16.gmra.mxu0 %v1276
  %v1434 = vpop.f32.mrf.mxu0
  %v1435 = vadd.f32 %v86, %v1434
  %v1436 = vpop.f32.mrf.mxu0
  %v1437 = vadd.f32 %v90, %v1436
  %v1438 = vpop.f32.mrf.mxu0
  %v1439 = vadd.f32 %v86, %v1438
  %v1440 = vpop.f32.mrf.mxu0
  %v1441 = vadd.f32 %v90, %v1440
  %1442 = vmatprep.mubr.bf16.mxu0 0
  %1443 = vmatmul.mubr.bf16.gmra.mxu0 %v1279
  %v1444 = vpop.f32.mrf.mxu0
  %v1445 = vadd.f32 %v86, %v1444
  %v1446 = vpop.f32.mrf.mxu0
  %v1447 = vadd.f32 %v90, %v1446
  %v1448 = vpop.f32.mrf.mxu0
  %v1449 = vadd.f32 %v86, %v1448
  %v1450 = vpop.f32.mrf.mxu0
  %v1451 = vadd.f32 %v90, %v1450
  %1452 = vmatprep.mubr.bf16.mxu0 0
  %1453 = vmatmul.mubr.bf16.gmra.mxu0 %v1282
  %v1454 = vpop.f32.mrf.mxu0
  %v1455 = vadd.f32 %v86, %v1454
  %v1456 = vpop.f32.mrf.mxu0
  %v1457 = vadd.f32 %v90, %v1456
  %v1458 = vpop.f32.mrf.mxu0
  %v1459 = vadd.f32 %v86, %v1458
  %v1460 = vpop.f32.mrf.mxu0
  %v1461 = vadd.f32 %v90, %v1460
  %1462 = vmatprep.mubr.bf16.mxu0 0
  %1463 = vmatmul.mubr.bf16.gmra.mxu0 %v1285
  %v1464 = vpop.f32.mrf.mxu0
  %v1465 = vadd.f32 %v86, %v1464
  %v1466 = vpop.f32.mrf.mxu0
  %v1467 = vadd.f32 %v90, %v1466
  %v1468 = vpop.f32.mrf.mxu0
  %v1469 = vadd.f32 %v86, %v1468
  %v1470 = vpop.f32.mrf.mxu0
  %v1471 = vadd.f32 %v90, %v1470
  %1472 = vmatprep.mubr.bf16.mxu0 0
  %1473 = vmatmul.mubr.bf16.gmra.mxu0 %v1288
  %v1474 = vpop.f32.mrf.mxu0
  %v1475 = vadd.f32 %v86, %v1474
  %v1476 = vpop.f32.mrf.mxu0
  %v1477 = vadd.f32 %v90, %v1476
  %v1478 = vpop.f32.mrf.mxu0
  %v1479 = vadd.f32 %v86, %v1478
  %v1480 = vpop.f32.mrf.mxu0
  %v1481 = vadd.f32 %v90, %v1480
  %1482 = vdwg.mxu0
  %1483 = vmatprep.subr.bf16.mxu0 0
  %1484 = vmatpush1.bf16.msra.mxu0 0
  %1485 = vmatprep.subr.bf16.mxu0 0
  %1486 = vmatpush1.bf16.msra.mxu0 0
  %1487 = vmatprep.subr.bf16.mxu0 0
  %1488 = vmatpush1.bf16.msra.mxu0 0
  %1489 = vmatprep.subr.bf16.mxu0 0
  %1490 = vmatpush1.bf16.msra.mxu0 0
  %1491 = vmatprep.subr.bf16.mxu0 0
  %1492 = vmatpush1.bf16.msra.mxu0 0
  %1493 = vmatprep.subr.bf16.mxu0 %v293
  %1494 = vmatpush1.bf16.msra.mxu0 %v290
  %1495 = vmatprep.subr.bf16.mxu0 %v220
  %1496 = vmatpush1.bf16.msra.mxu0 %v219
  %1497 = vmatprep.subr.bf16.mxu0 %v216
  %1498 = vmatpush1.bf16.msra.mxu0 %v215
  %1499 = vmatprep.subr.bf16.mxu0 0
  %1500 = vmatpush2.bf16.msra.mxu0 0
  %1501 = vmatprep.subr.bf16.mxu0 0
  %1502 = vmatpush2.bf16.msra.mxu0 0
  %1503 = vmatprep.subr.bf16.mxu0 0
  %1504 = vmatpush2.bf16.msra.mxu0 0
  %1505 = vmatprep.subr.bf16.mxu0 0
  %1506 = vmatpush2.bf16.msra.mxu0 0
  %1507 = vmatprep.subr.bf16.mxu0 0
  %1508 = vmatpush2.bf16.msra.mxu0 0
  %1509 = vmatprep.subr.bf16.mxu0 0
  %1510 = vmatpush2.bf16.msra.mxu0 0
  %1511 = vmatprep.subr.bf16.mxu0 0
  %1512 = vmatpush2.bf16.msra.mxu0 0
  %1513 = vmatprep.subr.bf16.mxu0 0
  %1514 = vmatpush2.bf16.msra.mxu0 0
  %1515 = vmatprep.mubr.bf16.mxu0 0
  %1516 = vmatmul.mubr.bf16.gmra.mxu0 %v1243
  %v1517 = vpop.f32.mrf.mxu0
  %v1518 = vadd.f32 %v94, %v1517
  %v1519 = vpop.f32.mrf.mxu0
  %v1520 = vadd.f32 %v98, %v1519
  %v1521 = vpop.f32.mrf.mxu0
  %v1522 = vadd.f32 %v94, %v1521
  %v1523 = vpop.f32.mrf.mxu0
  %v1524 = vadd.f32 %v98, %v1523
  %1525 = vmatprep.mubr.bf16.mxu0 0
  %1526 = vmatmul.mubr.bf16.gmra.mxu0 %v1246
  %v1527 = vpop.f32.mrf.mxu0
  %v1528 = vadd.f32 %v94, %v1527
  %v1529 = vpop.f32.mrf.mxu0
  %v1530 = vadd.f32 %v98, %v1529
  %v1531 = vpop.f32.mrf.mxu0
  %v1532 = vadd.f32 %v94, %v1531
  %v1533 = vpop.f32.mrf.mxu0
  %v1534 = vadd.f32 %v98, %v1533
  %1535 = vmatprep.mubr.bf16.mxu0 0
  %1536 = vmatmul.mubr.bf16.gmra.mxu0 %v1249
  %v1537 = vpop.f32.mrf.mxu0
  %v1538 = vadd.f32 %v94, %v1537
  %v1539 = vpop.f32.mrf.mxu0
  %v1540 = vadd.f32 %v98, %v1539
  %v1541 = vpop.f32.mrf.mxu0
  %v1542 = vadd.f32 %v94, %v1541
  %v1543 = vpop.f32.mrf.mxu0
  %v1544 = vadd.f32 %v98, %v1543
  %1545 = vmatprep.mubr.bf16.mxu0 0
  %1546 = vmatmul.mubr.bf16.gmra.mxu0 %v1252
  %v1547 = vpop.f32.mrf.mxu0
  %v1548 = vadd.f32 %v94, %v1547
  %v1549 = vpop.f32.mrf.mxu0
  %v1550 = vadd.f32 %v98, %v1549
  %v1551 = vpop.f32.mrf.mxu0
  %v1552 = vadd.f32 %v94, %v1551
  %v1553 = vpop.f32.mrf.mxu0
  %v1554 = vadd.f32 %v98, %v1553
  %1555 = vmatprep.mubr.bf16.mxu0 0
  %1556 = vmatmul.mubr.bf16.gmra.mxu0 %v1255
  %v1557 = vpop.f32.mrf.mxu0
  %v1558 = vadd.f32 %v94, %v1557
  %v1559 = vpop.f32.mrf.mxu0
  %v1560 = vadd.f32 %v98, %v1559
  %v1561 = vpop.f32.mrf.mxu0
  %v1562 = vadd.f32 %v94, %v1561
  %v1563 = vpop.f32.mrf.mxu0
  %v1564 = vadd.f32 %v98, %v1563
  %1565 = vmatprep.mubr.bf16.mxu0 0
  %1566 = vmatmul.mubr.bf16.gmra.mxu0 %v1258
  %v1567 = vpop.f32.mrf.mxu0
  %v1568 = vadd.f32 %v94, %v1567
  %v1569 = vpop.f32.mrf.mxu0
  %v1570 = vadd.f32 %v98, %v1569
  %v1571 = vpop.f32.mrf.mxu0
  %v1572 = vadd.f32 %v94, %v1571
  %v1573 = vpop.f32.mrf.mxu0
  %v1574 = vadd.f32 %v98, %v1573
  %1575 = vmatprep.mubr.bf16.mxu0 0
  %1576 = vmatmul.mubr.bf16.gmra.mxu0 %v1261
  %v1577 = vpop.f32.mrf.mxu0
  %v1578 = vadd.f32 %v94, %v1577
  %v1579 = vpop.f32.mrf.mxu0
  %v1580 = vadd.f32 %v98, %v1579
  %v1581 = vpop.f32.mrf.mxu0
  %v1582 = vadd.f32 %v94, %v1581
  %v1583 = vpop.f32.mrf.mxu0
  %v1584 = vadd.f32 %v98, %v1583
  %1585 = vmatprep.mubr.bf16.mxu0 0
  %1586 = vmatmul.mubr.bf16.gmra.mxu0 %v1264
  %v1587 = vpop.f32.mrf.mxu0
  %v1588 = vadd.f32 %v94, %v1587
  %v1589 = vpop.f32.mrf.mxu0
  %v1590 = vadd.f32 %v98, %v1589
  %v1591 = vpop.f32.mrf.mxu0
  %v1592 = vadd.f32 %v94, %v1591
  %v1593 = vpop.f32.mrf.mxu0
  %v1594 = vadd.f32 %v98, %v1593
  %1595 = vmatprep.mubr.bf16.mxu0 0
  %1596 = vmatmul.mubr.bf16.gmra.mxu0 %v1267
  %v1597 = vpop.f32.mrf.mxu0
  %v1598 = vadd.f32 %v94, %v1597
  %v1599 = vpop.f32.mrf.mxu0
  %v1600 = vadd.f32 %v98, %v1599
  %v1601 = vpop.f32.mrf.mxu0
  %v1602 = vadd.f32 %v94, %v1601
  %v1603 = vpop.f32.mrf.mxu0
  %v1604 = vadd.f32 %v98, %v1603
  %1605 = vmatprep.mubr.bf16.mxu0 0
  %1606 = vmatmul.mubr.bf16.gmra.mxu0 %v1270
  %v1607 = vpop.f32.mrf.mxu0
  %v1608 = vadd.f32 %v94, %v1607
  %v1609 = vpop.f32.mrf.mxu0
  %v1610 = vadd.f32 %v98, %v1609
  %v1611 = vpop.f32.mrf.mxu0
  %v1612 = vadd.f32 %v94, %v1611
  %v1613 = vpop.f32.mrf.mxu0
  %v1614 = vadd.f32 %v98, %v1613
  %1615 = vmatprep.mubr.bf16.mxu0 0
  %1616 = vmatmul.mubr.bf16.gmra.mxu0 %v1273
  %v1617 = vpop.f32.mrf.mxu0
  %v1618 = vadd.f32 %v94, %v1617
  %v1619 = vpop.f32.mrf.mxu0
  %v1620 = vadd.f32 %v98, %v1619
  %v1621 = vpop.f32.mrf.mxu0
  %v1622 = vadd.f32 %v94, %v1621
  %v1623 = vpop.f32.mrf.mxu0
  %v1624 = vadd.f32 %v98, %v1623
  %1625 = vmatprep.mubr.bf16.mxu0 0
  %1626 = vmatmul.mubr.bf16.gmra.mxu0 %v1276
  %v1627 = vpop.f32.mrf.mxu0
  %v1628 = vadd.f32 %v94, %v1627
  %v1629 = vpop.f32.mrf.mxu0
  %v1630 = vadd.f32 %v98, %v1629
  %v1631 = vpop.f32.mrf.mxu0
  %v1632 = vadd.f32 %v94, %v1631
  %v1633 = vpop.f32.mrf.mxu0
  %v1634 = vadd.f32 %v98, %v1633
  %1635 = vmatprep.mubr.bf16.mxu0 0
  %1636 = vmatmul.mubr.bf16.gmra.mxu0 %v1279
  %v1637 = vpop.f32.mrf.mxu0
  %v1638 = vadd.f32 %v94, %v1637
  %v1639 = vpop.f32.mrf.mxu0
  %v1640 = vadd.f32 %v98, %v1639
  %v1641 = vpop.f32.mrf.mxu0
  %v1642 = vadd.f32 %v94, %v1641
  %v1643 = vpop.f32.mrf.mxu0
  %v1644 = vadd.f32 %v98, %v1643
  %1645 = vmatprep.mubr.bf16.mxu0 0
  %1646 = vmatmul.mubr.bf16.gmra.mxu0 %v1282
  %v1647 = vpop.f32.mrf.mxu0
  %v1648 = vadd.f32 %v94, %v1647
  %v1649 = vpop.f32.mrf.mxu0
  %v1650 = vadd.f32 %v98, %v1649
  %v1651 = vpop.f32.mrf.mxu0
  %v1652 = vadd.f32 %v94, %v1651
  %v1653 = vpop.f32.mrf.mxu0
  %v1654 = vadd.f32 %v98, %v1653
  %1655 = vmatprep.mubr.bf16.mxu0 0
  %1656 = vmatmul.mubr.bf16.gmra.mxu0 %v1285
  %v1657 = vpop.f32.mrf.mxu0
  %v1658 = vadd.f32 %v94, %v1657
  %v1659 = vpop.f32.mrf.mxu0
  %v1660 = vadd.f32 %v98, %v1659
  %v1661 = vpop.f32.mrf.mxu0
  %v1662 = vadd.f32 %v94, %v1661
  %v1663 = vpop.f32.mrf.mxu0
  %v1664 = vadd.f32 %v98, %v1663
  %1665 = vmatprep.mubr.bf16.mxu0 0
  %1666 = vmatmul.mubr.bf16.gmra.mxu0 %v1288
  %v1667 = vpop.f32.mrf.mxu0
  %v1668 = vadd.f32 %v94, %v1667
  %v1669 = vpop.f32.mrf.mxu0
  %v1670 = vadd.f32 %v98, %v1669
  %v1671 = vpop.f32.mrf.mxu0
  %v1672 = vadd.f32 %v94, %v1671
  %v1673 = vpop.f32.mrf.mxu0
  %v1674 = vadd.f32 %v98, %v1673
  %1675 = vdwg.mxu0
  %v1676 = vmax.f32 %v1325, 0.0
  %v1677 = vmax.f32 %v1327, 0.0
  %v1678 = vmax.f32 %v1518, 0.0
  %v1679 = vmax.f32 %v1520, 0.0
  %v1680 = vmax.f32 %v1329, 0.0
  %v1681 = vmax.f32 %v1331, 0.0
  %v1682 = vmax.f32 %v1522, 0.0
  %v1683 = vmax.f32 %v1524, 0.0
  %v1684 = vmax.f32 %v1335, 0.0
  %v1685 = vmax.f32 %v1337, 0.0
  %v1686 = vmax.f32 %v1528, 0.0
  %v1687 = vmax.f32 %v1530, 0.0
  %v1688 = vmax.f32 %v1339, 0.0
  %v1689 = vmax.f32 %v1341, 0.0
  %v1690 = vmax.f32 %v1532, 0.0
  %v1691 = vmax.f32 %v1534, 0.0
  %v1692 = vmax.f32 %v1345, 0.0
  %v1693 = vmax.f32 %v1347, 0.0
  %v1694 = vmax.f32 %v1538, 0.0
  %v1695 = vmax.f32 %v1540, 0.0
  %v1696 = vmax.f32 %v1349, 0.0
  %v1697 = vmax.f32 %v1351, 0.0
  %v1698 = vmax.f32 %v1542, 0.0
  %v1699 = vmax.f32 %v1544, 0.0
  %v1700 = vmax.f32 %v1355, 0.0
  %v1701 = vmax.f32 %v1357, 0.0
  %v1702 = vmax.f32 %v1548, 0.0
  %v1703 = vmax.f32 %v1550, 0.0
  %v1704 = vmax.f32 %v1359, 0.0
  %v1705 = vmax.f32 %v1361, 0.0
  %v1706 = vmax.f32 %v1552, 0.0
  %v1707 = vmax.f32 %v1554, 0.0
  %v1708 = vmax.f32 %v1365, 0.0
  %v1709 = vmax.f32 %v1367, 0.0
  %v1710 = vmax.f32 %v1558, 0.0
  %v1711 = vmax.f32 %v1560, 0.0
  %v1712 = vmax.f32 %v1369, 0.0
  %v1713 = vmax.f32 %v1371, 0.0
  %v1714 = vmax.f32 %v1562, 0.0
  %v1715 = vmax.f32 %v1564, 0.0
  %v1716 = vmax.f32 %v1375, 0.0
  %v1717 = vmax.f32 %v1377, 0.0
  %v1718 = vmax.f32 %v1568, 0.0
  %v1719 = vmax.f32 %v1570, 0.0
  %v1720 = vmax.f32 %v1379, 0.0
  %v1721 = vmax.f32 %v1381, 0.0
  %v1722 = vmax.f32 %v1572, 0.0
  %v1723 = vmax.f32 %v1574, 0.0
  %v1724 = vmax.f32 %v1385, 0.0
  %v1725 = vmax.f32 %v1387, 0.0
  %v1726 = vmax.f32 %v1578, 0.0
  %v1727 = vmax.f32 %v1580, 0.0
  %v1728 = vmax.f32 %v1389, 0.0
  %v1729 = vmax.f32 %v1391, 0.0
  %v1730 = vmax.f32 %v1582, 0.0
  %v1731 = vmax.f32 %v1584, 0.0
  %v1732 = vmax.f32 %v1395, 0.0
  %v1733 = vmax.f32 %v1397, 0.0
  %v1734 = vmax.f32 %v1588, 0.0
  %v1735 = vmax.f32 %v1590, 0.0
  %v1736 = vmax.f32 %v1399, 0.0
  %v1737 = vmax.f32 %v1401, 0.0
  %v1738 = vmax.f32 %v1592, 0.0
  %v1739 = vmax.f32 %v1594, 0.0
  %v1740 = vmax.f32 %v1405, 0.0
  %v1741 = vmax.f32 %v1407, 0.0
  %v1742 = vmax.f32 %v1598, 0.0
  %v1743 = vmax.f32 %v1600, 0.0
  %v1744 = vmax.f32 %v1409, 0.0
  %v1745 = vmax.f32 %v1411, 0.0
  %v1746 = vmax.f32 %v1602, 0.0
  %v1747 = vmax.f32 %v1604, 0.0
  %v1748 = vmax.f32 %v1415, 0.0
  %v1749 = vmax.f32 %v1417, 0.0
  %v1750 = vmax.f32 %v1608, 0.0
  %v1751 = vmax.f32 %v1610, 0.0
  %v1752 = vmax.f32 %v1419, 0.0
  %v1753 = vmax.f32 %v1421, 0.0
  %v1754 = vmax.f32 %v1612, 0.0
  %v1755 = vmax.f32 %v1614, 0.0
  %v1756 = vmax.f32 %v1425, 0.0
  %v1757 = vmax.f32 %v1427, 0.0
  %v1758 = vmax.f32 %v1618, 0.0
  %v1759 = vmax.f32 %v1620, 0.0
  %v1760 = vmax.f32 %v1429, 0.0
  %v1761 = vmax.f32 %v1431, 0.0
  %v1762 = vmax.f32 %v1622, 0.0
  %v1763 = vmax.f32 %v1624, 0.0
  %v1764 = vmax.f32 %v1435, 0.0
  %v1765 = vmax.f32 %v1437, 0.0
  %v1766 = vmax.f32 %v1628, 0.0
  %v1767 = vmax.f32 %v1630, 0.0
  %v1768 = vmax.f32 %v1439, 0.0
  %v1769 = vmax.f32 %v1441, 0.0
  %v1770 = vmax.f32 %v1632, 0.0
  %v1771 = vmax.f32 %v1634, 0.0
  %v1772 = vmax.f32 %v1445, 0.0
  %v1773 = vmax.f32 %v1447, 0.0
  %v1774 = vmax.f32 %v1638, 0.0
  %v1775 = vmax.f32 %v1640, 0.0
  %v1776 = vmax.f32 %v1449, 0.0
  %v1777 = vmax.f32 %v1451, 0.0
  %v1778 = vmax.f32 %v1642, 0.0
  %v1779 = vmax.f32 %v1644, 0.0
  %v1780 = vmax.f32 %v1455, 0.0
  %v1781 = vmax.f32 %v1457, 0.0
  %v1782 = vmax.f32 %v1648, 0.0
  %v1783 = vmax.f32 %v1650, 0.0
  %v1784 = vmax.f32 %v1459, 0.0
  %v1785 = vmax.f32 %v1461, 0.0
  %v1786 = vmax.f32 %v1652, 0.0
  %v1787 = vmax.f32 %v1654, 0.0
  %v1788 = vmax.f32 %v1465, 0.0
  %v1789 = vmax.f32 %v1467, 0.0
  %v1790 = vmax.f32 %v1658, 0.0
  %v1791 = vmax.f32 %v1660, 0.0
  %v1792 = vmax.f32 %v1469, 0.0
  %v1793 = vmax.f32 %v1471, 0.0
  %v1794 = vmax.f32 %v1662, 0.0
  %v1795 = vmax.f32 %v1664, 0.0
  %v1796 = vmax.f32 %v1475, 0.0
  %v1797 = vmax.f32 %v1477, 0.0
  %v1798 = vmax.f32 %v1668, 0.0
  %v1799 = vmax.f32 %v1670, 0.0
  %v1800 = vmax.f32 %v1479, 0.0
  %v1801 = vmax.f32 %v1481, 0.0
  %v1802 = vmax.f32 %v1672, 0.0
  %v1803 = vmax.f32 %v1674, 0.0
  %v1804 = vadd.f32 %v1676, %v1680
  %v1805 = vadd.f32 %v1804, %v1684
  %v1806 = vadd.f32 %v1805, %v1688
  %v1807 = vrot.slane %v1806, 4
  %v1808 = vadd.f32 %v1806, %v1807
  %v1809 = vrot.slane %v1808, 2
  %v1810 = vadd.f32 %v1808, %v1809
  %v1811 = vrot.slane %v1810, 1
  %v1812 = vadd.f32 %v1810, %v1811
  %v1813 = vadd.f32 %v1677, %v1681
  %v1814 = vadd.f32 %v1813, %v1685
  %v1815 = vadd.f32 %v1814, %v1689
  %v1816 = vrot.slane %v1815, 4
  %v1817 = vadd.f32 %v1815, %v1816
  %v1818 = vrot.slane %v1817, 2
  %v1819 = vadd.f32 %v1817, %v1818
  %v1820 = vrot.slane %v1819, 1
  %v1821 = vadd.f32 %v1819, %v1820
  %v1822 = vadd.f32 %v1678, %v1682
  %v1823 = vadd.f32 %v1822, %v1686
  %v1824 = vadd.f32 %v1823, %v1690
  %v1825 = vrot.slane %v1824, 4
  %v1826 = vadd.f32 %v1824, %v1825
  %v1827 = vrot.slane %v1826, 2
  %v1828 = vadd.f32 %v1826, %v1827
  %v1829 = vrot.slane %v1828, 1
  %v1830 = vadd.f32 %v1828, %v1829
  %v1831 = vadd.f32 %v1679, %v1683
  %v1832 = vadd.f32 %v1831, %v1687
  %v1833 = vadd.f32 %v1832, %v1691
  %v1834 = vrot.slane %v1833, 4
  %v1835 = vadd.f32 %v1833, %v1834
  %v1836 = vrot.slane %v1835, 2
  %v1837 = vadd.f32 %v1835, %v1836
  %v1838 = vrot.slane %v1837, 1
  %v1839 = vadd.f32 %v1837, %v1838
  %v1840 = vadd.f32 %v1692, %v1696
  %v1841 = vadd.f32 %v1840, %v1700
  %v1842 = vadd.f32 %v1841, %v1704
  %v1843 = vrot.slane %v1842, 4
  %v1844 = vadd.f32 %v1842, %v1843
  %v1845 = vrot.slane %v1844, 2
  %v1846 = vadd.f32 %v1844, %v1845
  %v1847 = vrot.slane %v1846, 1
  %v1848 = vadd.f32 %v1846, %v1847
  %v1849 = vadd.f32 %v1693, %v1697
  %v1850 = vadd.f32 %v1849, %v1701
  %v1851 = vadd.f32 %v1850, %v1705
  %v1852 = vrot.slane %v1851, 4
  %v1853 = vadd.f32 %v1851, %v1852
  %v1854 = vrot.slane %v1853, 2
  %v1855 = vadd.f32 %v1853, %v1854
  %v1856 = vrot.slane %v1855, 1
  %v1857 = vadd.f32 %v1855, %v1856
  %v1858 = vadd.f32 %v1694, %v1698
  %v1859 = vadd.f32 %v1858, %v1702
  %v1860 = vadd.f32 %v1859, %v1706
  %v1861 = vrot.slane %v1860, 4
  %v1862 = vadd.f32 %v1860, %v1861
  %v1863 = vrot.slane %v1862, 2
  %v1864 = vadd.f32 %v1862, %v1863
  %v1865 = vrot.slane %v1864, 1
  %v1866 = vadd.f32 %v1864, %v1865
  %v1867 = vadd.f32 %v1695, %v1699
  %v1868 = vadd.f32 %v1867, %v1703
  %v1869 = vadd.f32 %v1868, %v1707
  %v1870 = vrot.slane %v1869, 4
  %v1871 = vadd.f32 %v1869, %v1870
  %v1872 = vrot.slane %v1871, 2
  %v1873 = vadd.f32 %v1871, %v1872
  %v1874 = vrot.slane %v1873, 1
  %v1875 = vadd.f32 %v1873, %v1874
  %v1876 = vadd.f32 %v1708, %v1712
  %v1877 = vadd.f32 %v1876, %v1716
  %v1878 = vadd.f32 %v1877, %v1720
  %v1879 = vrot.slane %v1878, 4
  %v1880 = vadd.f32 %v1878, %v1879
  %v1881 = vrot.slane %v1880, 2
  %v1882 = vadd.f32 %v1880, %v1881
  %v1883 = vrot.slane %v1882, 1
  %v1884 = vadd.f32 %v1882, %v1883
  %v1885 = vadd.f32 %v1709, %v1713
  %v1886 = vadd.f32 %v1885, %v1717
  %v1887 = vadd.f32 %v1886, %v1721
  %v1888 = vrot.slane %v1887, 4
  %v1889 = vadd.f32 %v1887, %v1888
  %v1890 = vrot.slane %v1889, 2
  %v1891 = vadd.f32 %v1889, %v1890
  %v1892 = vrot.slane %v1891, 1
  %v1893 = vadd.f32 %v1891, %v1892
  %v1894 = vadd.f32 %v1710, %v1714
  %v1895 = vadd.f32 %v1894, %v1718
  %v1896 = vadd.f32 %v1895, %v1722
  %v1897 = vrot.slane %v1896, 4
  %v1898 = vadd.f32 %v1896, %v1897
  %v1899 = vrot.slane %v1898, 2
  %v1900 = vadd.f32 %v1898, %v1899
  %v1901 = vrot.slane %v1900, 1
  %v1902 = vadd.f32 %v1900, %v1901
  %v1903 = vadd.f32 %v1711, %v1715
  %v1904 = vadd.f32 %v1903, %v1719
  %v1905 = vadd.f32 %v1904, %v1723
  %v1906 = vrot.slane %v1905, 4
  %v1907 = vadd.f32 %v1905, %v1906
  %v1908 = vrot.slane %v1907, 2
  %v1909 = vadd.f32 %v1907, %v1908
  %v1910 = vrot.slane %v1909, 1
  %v1911 = vadd.f32 %v1909, %v1910
  %v1912 = vadd.f32 %v1724, %v1728
  %v1913 = vadd.f32 %v1912, %v1732
  %v1914 = vadd.f32 %v1913, %v1736
  %v1915 = vrot.slane %v1914, 4
  %v1916 = vadd.f32 %v1914, %v1915
  %v1917 = vrot.slane %v1916, 2
  %v1918 = vadd.f32 %v1916, %v1917
  %v1919 = vrot.slane %v1918, 1
  %v1920 = vadd.f32 %v1918, %v1919
  %v1921 = vadd.f32 %v1725, %v1729
  %v1922 = vadd.f32 %v1921, %v1733
  %v1923 = vadd.f32 %v1922, %v1737
  %v1924 = vrot.slane %v1923, 4
  %v1925 = vadd.f32 %v1923, %v1924
  %v1926 = vrot.slane %v1925, 2
  %v1927 = vadd.f32 %v1925, %v1926
  %v1928 = vrot.slane %v1927, 1
  %v1929 = vadd.f32 %v1927, %v1928
  %v1930 = vadd.f32 %v1726, %v1730
  %v1931 = vadd.f32 %v1930, %v1734
  %v1932 = vadd.f32 %v1931, %v1738
  %v1933 = vrot.slane %v1932, 4
  %v1934 = vadd.f32 %v1932, %v1933
  %v1935 = vrot.slane %v1934, 2
  %v1936 = vadd.f32 %v1934, %v1935
  %v1937 = vrot.slane %v1936, 1
  %v1938 = vadd.f32 %v1936, %v1937
  %v1939 = vadd.f32 %v1727, %v1731
  %v1940 = vadd.f32 %v1939, %v1735
  %v1941 = vadd.f32 %v1940, %v1739
  %v1942 = vrot.slane %v1941, 4
  %v1943 = vadd.f32 %v1941, %v1942
  %v1944 = vrot.slane %v1943, 2
  %v1945 = vadd.f32 %v1943, %v1944
  %v1946 = vrot.slane %v1945, 1
  %v1947 = vadd.f32 %v1945, %v1946
  %v1948 = vadd.f32 %v1740, %v1744
  %v1949 = vadd.f32 %v1948, %v1748
  %v1950 = vadd.f32 %v1949, %v1752
  %v1951 = vrot.slane %v1950, 4
  %v1952 = vadd.f32 %v1950, %v1951
  %v1953 = vrot.slane %v1952, 2
  %v1954 = vadd.f32 %v1952, %v1953
  %v1955 = vrot.slane %v1954, 1
  %v1956 = vadd.f32 %v1954, %v1955
  %v1957 = vadd.f32 %v1741, %v1745
  %v1958 = vadd.f32 %v1957, %v1749
  %v1959 = vadd.f32 %v1958, %v1753
  %v1960 = vrot.slane %v1959, 4
  %v1961 = vadd.f32 %v1959, %v1960
  %v1962 = vrot.slane %v1961, 2
  %v1963 = vadd.f32 %v1961, %v1962
  %v1964 = vrot.slane %v1963, 1
  %v1965 = vadd.f32 %v1963, %v1964
  %v1966 = vadd.f32 %v1742, %v1746
  %v1967 = vadd.f32 %v1966, %v1750
  %v1968 = vadd.f32 %v1967, %v1754
  %v1969 = vrot.slane %v1968, 4
  %v1970 = vadd.f32 %v1968, %v1969
  %v1971 = vrot.slane %v1970, 2
  %v1972 = vadd.f32 %v1970, %v1971
  %v1973 = vrot.slane %v1972, 1
  %v1974 = vadd.f32 %v1972, %v1973
  %v1975 = vadd.f32 %v1743, %v1747
  %v1976 = vadd.f32 %v1975, %v1751
  %v1977 = vadd.f32 %v1976, %v1755
  %v1978 = vrot.slane %v1977, 4
  %v1979 = vadd.f32 %v1977, %v1978
  %v1980 = vrot.slane %v1979, 2
  %v1981 = vadd.f32 %v1979, %v1980
  %v1982 = vrot.slane %v1981, 1
  %v1983 = vadd.f32 %v1981, %v1982
  %v1984 = vadd.f32 %v1756, %v1760
  %v1985 = vadd.f32 %v1984, %v1764
  %v1986 = vadd.f32 %v1985, %v1768
  %v1987 = vrot.slane %v1986, 4
  %v1988 = vadd.f32 %v1986, %v1987
  %v1989 = vrot.slane %v1988, 2
  %v1990 = vadd.f32 %v1988, %v1989
  %v1991 = vrot.slane %v1990, 1
  %v1992 = vadd.f32 %v1990, %v1991
  %v1993 = vadd.f32 %v1757, %v1761
  %v1994 = vadd.f32 %v1993, %v1765
  %v1995 = vadd.f32 %v1994, %v1769
  %v1996 = vrot.slane %v1995, 4
  %v1997 = vadd.f32 %v1995, %v1996
  %v1998 = vrot.slane %v1997, 2
  %v1999 = vadd.f32 %v1997, %v1998
  %v2000 = vrot.slane %v1999, 1
  %v2001 = vadd.f32 %v1999, %v2000
  %v2002 = vadd.f32 %v1758, %v1762
  %v2003 = vadd.f32 %v2002, %v1766
  %v2004 = vadd.f32 %v2003, %v1770
  %v2005 = vrot.slane %v2004, 4
  %v2006 = vadd.f32 %v2004, %v2005
  %v2007 = vrot.slane %v2006, 2
  %v2008 = vadd.f32 %v2006, %v2007
  %v2009 = vrot.slane %v2008, 1
  %v2010 = vadd.f32 %v2008, %v2009
  %v2011 = vadd.f32 %v1759, %v1763
  %v2012 = vadd.f32 %v2011, %v1767
  %v2013 = vadd.f32 %v2012, %v1771
  %v2014 = vrot.slane %v2013, 4
  %v2015 = vadd.f32 %v2013, %v2014
  %v2016 = vrot.slane %v2015, 2
  %v2017 = vadd.f32 %v2015, %v2016
  %v2018 = vrot.slane %v2017, 1
  %v2019 = vadd.f32 %v2017, %v2018
  %v2020 = vadd.f32 %v1772, %v1776
  %v2021 = vadd.f32 %v2020, %v1780
  %v2022 = vadd.f32 %v2021, %v1784
  %v2023 = vrot.slane %v2022, 4
  %v2024 = vadd.f32 %v2022, %v2023
  %v2025 = vrot.slane %v2024, 2
  %v2026 = vadd.f32 %v2024, %v2025
  %v2027 = vrot.slane %v2026, 1
  %v2028 = vadd.f32 %v2026, %v2027
  %v2029 = vadd.f32 %v1773, %v1777
  %v2030 = vadd.f32 %v2029, %v1781
  %v2031 = vadd.f32 %v2030, %v1785
  %v2032 = vrot.slane %v2031, 4
  %v2033 = vadd.f32 %v2031, %v2032
  %v2034 = vrot.slane %v2033, 2
  %v2035 = vadd.f32 %v2033, %v2034
  %v2036 = vrot.slane %v2035, 1
  %v2037 = vadd.f32 %v2035, %v2036
  %v2038 = vadd.f32 %v1774, %v1778
  %v2039 = vadd.f32 %v2038, %v1782
  %v2040 = vadd.f32 %v2039, %v1786
  %v2041 = vrot.slane %v2040, 4
  %v2042 = vadd.f32 %v2040, %v2041
  %v2043 = vrot.slane %v2042, 2
  %v2044 = vadd.f32 %v2042, %v2043
  %v2045 = vrot.slane %v2044, 1
  %v2046 = vadd.f32 %v2044, %v2045
  %v2047 = vadd.f32 %v1775, %v1779
  %v2048 = vadd.f32 %v2047, %v1783
  %v2049 = vadd.f32 %v2048, %v1787
  %v2050 = vrot.slane %v2049, 4
  %v2051 = vadd.f32 %v2049, %v2050
  %v2052 = vrot.slane %v2051, 2
  %v2053 = vadd.f32 %v2051, %v2052
  %v2054 = vrot.slane %v2053, 1
  %v2055 = vadd.f32 %v2053, %v2054
  %v2056 = vadd.f32 %v1788, %v1792
  %v2057 = vadd.f32 %v2056, %v1796
  %v2058 = vadd.f32 %v2057, %v1800
  %v2059 = vrot.slane %v2058, 4
  %v2060 = vadd.f32 %v2058, %v2059
  %v2061 = vrot.slane %v2060, 2
  %v2062 = vadd.f32 %v2060, %v2061
  %v2063 = vrot.slane %v2062, 1
  %v2064 = vadd.f32 %v2062, %v2063
  %v2065 = vadd.f32 %v1789, %v1793
  %v2066 = vadd.f32 %v2065, %v1797
  %v2067 = vadd.f32 %v2066, %v1801
  %v2068 = vrot.slane %v2067, 4
  %v2069 = vadd.f32 %v2067, %v2068
  %v2070 = vrot.slane %v2069, 2
  %v2071 = vadd.f32 %v2069, %v2070
  %v2072 = vrot.slane %v2071, 1
  %v2073 = vadd.f32 %v2071, %v2072
  %v2074 = vadd.f32 %v1790, %v1794
  %v2075 = vadd.f32 %v2074, %v1798
  %v2076 = vadd.f32 %v2075, %v1802
  %v2077 = vrot.slane %v2076, 4
  %v2078 = vadd.f32 %v2076, %v2077
  %v2079 = vrot.slane %v2078, 2
  %v2080 = vadd.f32 %v2078, %v2079
  %v2081 = vrot.slane %v2080, 1
  %v2082 = vadd.f32 %v2080, %v2081
  %v2083 = vadd.f32 %v1791, %v1795
  %v2084 = vadd.f32 %v2083, %v1799
  %v2085 = vadd.f32 %v2084, %v1803
  %v2086 = vrot.slane %v2085, 4
  %v2087 = vadd.f32 %v2085, %v2086
  %v2088 = vrot.slane %v2087, 2
  %v2089 = vadd.f32 %v2087, %v2088
  %v2090 = vrot.slane %v2089, 1
  %v2091 = vadd.f32 %v2089, %v2090
  %v2092 = vadd.f32 %v1097, %v1812
  %v2093 = vadd.f32 %v1098, %v1821
  %v2094 = vadd.f32 %v1099, %v1830
  %v2095 = vadd.f32 %v1100, %v1839
  %v2096 = vadd.f32 %v1101, %v1848
  %v2097 = vadd.f32 %v1102, %v1857
  %v2098 = vadd.f32 %v1103, %v1866
  %v2099 = vadd.f32 %v1104, %v1875
  %v2100 = vadd.f32 %v1105, %v1884
  %v2101 = vadd.f32 %v1106, %v1893
  %v2102 = vadd.f32 %v1107, %v1902
  %v2103 = vadd.f32 %v1108, %v1911
  %v2104 = vadd.f32 %v1109, %v1920
  %v2105 = vadd.f32 %v1110, %v1929
  %v2106 = vadd.f32 %v1111, %v1938
  %v2107 = vadd.f32 %v1112, %v1947
  %v2108 = vadd.f32 %v1113, %v1956
  %v2109 = vadd.f32 %v1114, %v1965
  %v2110 = vadd.f32 %v1115, %v1974
  %v2111 = vadd.f32 %v1116, %v1983
  %v2112 = vadd.f32 %v1117, %v1992
  %v2113 = vadd.f32 %v1118, %v2001
  %v2114 = vadd.f32 %v1119, %v2010
  %v2115 = vadd.f32 %v1120, %v2019
  %v2116 = vadd.f32 %v1121, %v2028
  %v2117 = vadd.f32 %v1122, %v2037
  %v2118 = vadd.f32 %v1123, %v2046
  %v2119 = vadd.f32 %v1124, %v2055
  %v2120 = vadd.f32 %v1125, %v2064
  %v2121 = vadd.f32 %v1126, %v2073
  %v2122 = vadd.f32 %v1127, %v2082
  %v2123 = vadd.f32 %v1128, %v2091
  %s2124 = scalar_lea.vmem %s0, 32
  %v2125 = vld [vmem:[%s2124] sm:$0xf]
  %v2126 = vld [vmem:[%s2124 + $0x4] sm:$0xf]
  %v2127 = vld [vmem:[%s2124 + $0x8] sm:$0xf]
  %v2128 = vld [vmem:[%s2124 + $0xc] sm:$0xf]
  %v2129 = vld [vmem:[%s2124 + $0x80] sm:$0xf]
  %v2130 = vld [vmem:[%s2124 + $0x84] sm:$0xf]
  %v2131 = vld [vmem:[%s2124 + $0x88] sm:$0xf]
  %v2132 = vld [vmem:[%s2124 + $0x8c] sm:$0xf]
  %v2133 = vld [vmem:[%s2124 + $0x100] sm:$0xf]
  %v2134 = vld [vmem:[%s2124 + $0x104] sm:$0xf]
  %v2135 = vld [vmem:[%s2124 + $0x108] sm:$0xf]
  %v2136 = vld [vmem:[%s2124 + $0x10c] sm:$0xf]
  %v2137 = vld [vmem:[%s2124 + $0x180] sm:$0xf]
  %v2138 = vld [vmem:[%s2124 + $0x184] sm:$0xf]
  %v2139 = vld [vmem:[%s2124 + $0x188] sm:$0xf]
  %v2140 = vld [vmem:[%s2124 + $0x18c] sm:$0xf]
  %v2141 = vld [vmem:[%s2124 + $0x200] sm:$0xf]
  %v2142 = vld [vmem:[%s2124 + $0x204] sm:$0xf]
  %v2143 = vld [vmem:[%s2124 + $0x208] sm:$0xf]
  %v2144 = vld [vmem:[%s2124 + $0x20c] sm:$0xf]
  %v2145 = vld [vmem:[%s2124 + $0x280] sm:$0xf]
  %v2146 = vld [vmem:[%s2124 + $0x284] sm:$0xf]
  %v2147 = vld [vmem:[%s2124 + $0x288] sm:$0xf]
  %v2148 = vld [vmem:[%s2124 + $0x28c] sm:$0xf]
  %v2149 = vld [vmem:[%s2124 + $0x300] sm:$0xf]
  %v2150 = vld [vmem:[%s2124 + $0x304] sm:$0xf]
  %v2151 = vld [vmem:[%s2124 + $0x308] sm:$0xf]
  %v2152 = vld [vmem:[%s2124 + $0x30c] sm:$0xf]
  %v2153 = vld [vmem:[%s2124 + $0x380] sm:$0xf]
  %v2154 = vld [vmem:[%s2124 + $0x384] sm:$0xf]
  %v2155 = vld [vmem:[%s2124 + $0x388] sm:$0xf]
  %v2156 = vld [vmem:[%s2124 + $0x38c] sm:$0xf]
  %v2189 = vunpack.c.l.b16 %v2125
  %v2190 = vunpack.c.l.b16 %v2126
  %v2191 = vunpack.c.l.b16 %v2127
  %v2192 = vunpack.c.l.b16 %v2128
  %v2193 = vunpack.c.l.b16 %v2129
  %v2194 = vunpack.c.l.b16 %v2130
  %v2195 = vunpack.c.l.b16 %v2131
  %v2196 = vunpack.c.l.b16 %v2132
  %v2197 = vunpack.c.l.b16 %v2133
  %v2198 = vunpack.c.l.b16 %v2134
  %v2199 = vunpack.c.l.b16 %v2135
  %v2200 = vunpack.c.l.b16 %v2136
  %v2201 = vunpack.c.l.b16 %v2137
  %v2202 = vunpack.c.l.b16 %v2138
  %v2203 = vunpack.c.l.b16 %v2139
  %v2204 = vunpack.c.l.b16 %v2140
  %v2205 = vunpack.c.l.b16 %v2141
  %v2206 = vunpack.c.l.b16 %v2142
  %v2207 = vunpack.c.l.b16 %v2143
  %v2208 = vunpack.c.l.b16 %v2144
  %v2209 = vunpack.c.l.b16 %v2145
  %v2210 = vunpack.c.l.b16 %v2146
  %v2211 = vunpack.c.l.b16 %v2147
  %v2212 = vunpack.c.l.b16 %v2148
  %v2213 = vunpack.c.l.b16 %v2149
  %v2214 = vunpack.c.l.b16 %v2150
  %v2215 = vunpack.c.l.b16 %v2151
  %v2216 = vunpack.c.l.b16 %v2152
  %v2217 = vunpack.c.l.b16 %v2153
  %v2218 = vunpack.c.l.b16 %v2154
  %v2219 = vunpack.c.l.b16 %v2155
  %v2220 = vunpack.c.l.b16 %v2156
  %v2221 = vpack.c.b16 %v2190, %v2189
  %v2222 = vpack.c.b16 %v2192, %v2191
  %v2223 = vpack.c.b16 %v2194, %v2193
  %v2224 = vpack.c.b16 %v2196, %v2195
  %v2225 = vpack.c.b16 %v2198, %v2197
  %v2226 = vpack.c.b16 %v2200, %v2199
  %v2227 = vpack.c.b16 %v2202, %v2201
  %v2228 = vpack.c.b16 %v2204, %v2203
  %v2229 = vpack.c.b16 %v2206, %v2205
  %v2230 = vpack.c.b16 %v2208, %v2207
  %v2231 = vpack.c.b16 %v2210, %v2209
  %v2232 = vpack.c.b16 %v2212, %v2211
  %v2233 = vpack.c.b16 %v2214, %v2213
  %v2234 = vpack.c.b16 %v2216, %v2215
  %v2235 = vpack.c.b16 %v2218, %v2217
  %v2236 = vpack.c.b16 %v2220, %v2219
  %v2238 = vsel %vm233, %v2221, 0
  %v2241 = vsel %vm233, %v2222, 0
  %v2244 = vsel %vm233, %v2223, 0
  %v2247 = vsel %vm233, %v2224, 0
  %v2250 = vsel %vm233, %v2225, 0
  %v2253 = vsel %vm233, %v2226, 0
  %v2256 = vsel %vm233, %v2227, 0
  %v2259 = vsel %vm233, %v2228, 0
  %v2262 = vsel %vm233, %v2229, 0
  %v2265 = vsel %vm233, %v2230, 0
  %v2268 = vsel %vm233, %v2231, 0
  %v2271 = vsel %vm233, %v2232, 0
  %v2274 = vsel %vm233, %v2233, 0
  %v2277 = vsel %vm233, %v2234, 0
  %v2280 = vsel %vm233, %v2235, 0
  %v2283 = vsel %vm233, %v2236, 0
  %2285 = vmatprep.subr.bf16.mxu0 0
  %2286 = vmatpush1.bf16.msra.mxu0 0
  %2287 = vmatprep.subr.bf16.mxu0 0
  %2288 = vmatpush1.bf16.msra.mxu0 0
  %2289 = vmatprep.subr.bf16.mxu0 0
  %2290 = vmatpush1.bf16.msra.mxu0 0
  %2291 = vmatprep.subr.bf16.mxu0 0
  %2292 = vmatpush1.bf16.msra.mxu0 0
  %2293 = vmatprep.subr.bf16.mxu0 0
  %2294 = vmatpush1.bf16.msra.mxu0 0
  %2295 = vmatprep.subr.bf16.mxu0 %v287
  %2296 = vmatpush1.bf16.msra.mxu0 %v284
  %2297 = vmatprep.subr.bf16.mxu0 %v218
  %2298 = vmatpush1.bf16.msra.mxu0 %v217
  %2299 = vmatprep.subr.bf16.mxu0 %v214
  %2300 = vmatpush1.bf16.msra.mxu0 %v213
  %2301 = vmatprep.subr.bf16.mxu0 0
  %2302 = vmatpush2.bf16.msra.mxu0 0
  %2303 = vmatprep.subr.bf16.mxu0 0
  %2304 = vmatpush2.bf16.msra.mxu0 0
  %2305 = vmatprep.subr.bf16.mxu0 0
  %2306 = vmatpush2.bf16.msra.mxu0 0
  %2307 = vmatprep.subr.bf16.mxu0 0
  %2308 = vmatpush2.bf16.msra.mxu0 0
  %2309 = vmatprep.subr.bf16.mxu0 0
  %2310 = vmatpush2.bf16.msra.mxu0 0
  %2311 = vmatprep.subr.bf16.mxu0 0
  %2312 = vmatpush2.bf16.msra.mxu0 0
  %2313 = vmatprep.subr.bf16.mxu0 0
  %2314 = vmatpush2.bf16.msra.mxu0 0
  %2315 = vmatprep.subr.bf16.mxu0 0
  %2316 = vmatpush2.bf16.msra.mxu0 0
  %2317 = vmatprep.mubr.bf16.mxu0 0
  %2318 = vmatmul.mubr.bf16.gmra.mxu0 %v2238
  %v2319 = vpop.f32.mrf.mxu0
  %v2320 = vadd.f32 %v86, %v2319
  %v2321 = vpop.f32.mrf.mxu0
  %v2322 = vadd.f32 %v90, %v2321
  %v2323 = vpop.f32.mrf.mxu0
  %v2324 = vadd.f32 %v86, %v2323
  %v2325 = vpop.f32.mrf.mxu0
  %v2326 = vadd.f32 %v90, %v2325
  %2327 = vmatprep.mubr.bf16.mxu0 0
  %2328 = vmatmul.mubr.bf16.gmra.mxu0 %v2241
  %v2329 = vpop.f32.mrf.mxu0
  %v2330 = vadd.f32 %v86, %v2329
  %v2331 = vpop.f32.mrf.mxu0
  %v2332 = vadd.f32 %v90, %v2331
  %v2333 = vpop.f32.mrf.mxu0
  %v2334 = vadd.f32 %v86, %v2333
  %v2335 = vpop.f32.mrf.mxu0
  %v2336 = vadd.f32 %v90, %v2335
  %2337 = vmatprep.mubr.bf16.mxu0 0
  %2338 = vmatmul.mubr.bf16.gmra.mxu0 %v2244
  %v2339 = vpop.f32.mrf.mxu0
  %v2340 = vadd.f32 %v86, %v2339
  %v2341 = vpop.f32.mrf.mxu0
  %v2342 = vadd.f32 %v90, %v2341
  %v2343 = vpop.f32.mrf.mxu0
  %v2344 = vadd.f32 %v86, %v2343
  %v2345 = vpop.f32.mrf.mxu0
  %v2346 = vadd.f32 %v90, %v2345
  %2347 = vmatprep.mubr.bf16.mxu0 0
  %2348 = vmatmul.mubr.bf16.gmra.mxu0 %v2247
  %v2349 = vpop.f32.mrf.mxu0
  %v2350 = vadd.f32 %v86, %v2349
  %v2351 = vpop.f32.mrf.mxu0
  %v2352 = vadd.f32 %v90, %v2351
  %v2353 = vpop.f32.mrf.mxu0
  %v2354 = vadd.f32 %v86, %v2353
  %v2355 = vpop.f32.mrf.mxu0
  %v2356 = vadd.f32 %v90, %v2355
  %2357 = vmatprep.mubr.bf16.mxu0 0
  %2358 = vmatmul.mubr.bf16.gmra.mxu0 %v2250
  %v2359 = vpop.f32.mrf.mxu0
  %v2360 = vadd.f32 %v86, %v2359
  %v2361 = vpop.f32.mrf.mxu0
  %v2362 = vadd.f32 %v90, %v2361
  %v2363 = vpop.f32.mrf.mxu0
  %v2364 = vadd.f32 %v86, %v2363
  %v2365 = vpop.f32.mrf.mxu0
  %v2366 = vadd.f32 %v90, %v2365
  %2367 = vmatprep.mubr.bf16.mxu0 0
  %2368 = vmatmul.mubr.bf16.gmra.mxu0 %v2253
  %v2369 = vpop.f32.mrf.mxu0
  %v2370 = vadd.f32 %v86, %v2369
  %v2371 = vpop.f32.mrf.mxu0
  %v2372 = vadd.f32 %v90, %v2371
  %v2373 = vpop.f32.mrf.mxu0
  %v2374 = vadd.f32 %v86, %v2373
  %v2375 = vpop.f32.mrf.mxu0
  %v2376 = vadd.f32 %v90, %v2375
  %2377 = vmatprep.mubr.bf16.mxu0 0
  %2378 = vmatmul.mubr.bf16.gmra.mxu0 %v2256
  %v2379 = vpop.f32.mrf.mxu0
  %v2380 = vadd.f32 %v86, %v2379
  %v2381 = vpop.f32.mrf.mxu0
  %v2382 = vadd.f32 %v90, %v2381
  %v2383 = vpop.f32.mrf.mxu0
  %v2384 = vadd.f32 %v86, %v2383
  %v2385 = vpop.f32.mrf.mxu0
  %v2386 = vadd.f32 %v90, %v2385
  %2387 = vmatprep.mubr.bf16.mxu0 0
  %2388 = vmatmul.mubr.bf16.gmra.mxu0 %v2259
  %v2389 = vpop.f32.mrf.mxu0
  %v2390 = vadd.f32 %v86, %v2389
  %v2391 = vpop.f32.mrf.mxu0
  %v2392 = vadd.f32 %v90, %v2391
  %v2393 = vpop.f32.mrf.mxu0
  %v2394 = vadd.f32 %v86, %v2393
  %v2395 = vpop.f32.mrf.mxu0
  %v2396 = vadd.f32 %v90, %v2395
  %2397 = vmatprep.mubr.bf16.mxu0 0
  %2398 = vmatmul.mubr.bf16.gmra.mxu0 %v2262
  %v2399 = vpop.f32.mrf.mxu0
  %v2400 = vadd.f32 %v86, %v2399
  %v2401 = vpop.f32.mrf.mxu0
  %v2402 = vadd.f32 %v90, %v2401
  %v2403 = vpop.f32.mrf.mxu0
  %v2404 = vadd.f32 %v86, %v2403
  %v2405 = vpop.f32.mrf.mxu0
  %v2406 = vadd.f32 %v90, %v2405
  %2407 = vmatprep.mubr.bf16.mxu0 0
  %2408 = vmatmul.mubr.bf16.gmra.mxu0 %v2265
  %v2409 = vpop.f32.mrf.mxu0
  %v2410 = vadd.f32 %v86, %v2409
  %v2411 = vpop.f32.mrf.mxu0
  %v2412 = vadd.f32 %v90, %v2411
  %v2413 = vpop.f32.mrf.mxu0
  %v2414 = vadd.f32 %v86, %v2413
  %v2415 = vpop.f32.mrf.mxu0
  %v2416 = vadd.f32 %v90, %v2415
  %2417 = vmatprep.mubr.bf16.mxu0 0
  %2418 = vmatmul.mubr.bf16.gmra.mxu0 %v2268
  %v2419 = vpop.f32.mrf.mxu0
  %v2420 = vadd.f32 %v86, %v2419
  %v2421 = vpop.f32.mrf.mxu0
  %v2422 = vadd.f32 %v90, %v2421
  %v2423 = vpop.f32.mrf.mxu0
  %v2424 = vadd.f32 %v86, %v2423
  %v2425 = vpop.f32.mrf.mxu0
  %v2426 = vadd.f32 %v90, %v2425
  %2427 = vmatprep.mubr.bf16.mxu0 0
  %2428 = vmatmul.mubr.bf16.gmra.mxu0 %v2271
  %v2429 = vpop.f32.mrf.mxu0
  %v2430 = vadd.f32 %v86, %v2429
  %v2431 = vpop.f32.mrf.mxu0
  %v2432 = vadd.f32 %v90, %v2431
  %v2433 = vpop.f32.mrf.mxu0
  %v2434 = vadd.f32 %v86, %v2433
  %v2435 = vpop.f32.mrf.mxu0
  %v2436 = vadd.f32 %v90, %v2435
  %2437 = vmatprep.mubr.bf16.mxu0 0
  %2438 = vmatmul.mubr.bf16.gmra.mxu0 %v2274
  %v2439 = vpop.f32.mrf.mxu0
  %v2440 = vadd.f32 %v86, %v2439
  %v2441 = vpop.f32.mrf.mxu0
  %v2442 = vadd.f32 %v90, %v2441
  %v2443 = vpop.f32.mrf.mxu0
  %v2444 = vadd.f32 %v86, %v2443
  %v2445 = vpop.f32.mrf.mxu0
  %v2446 = vadd.f32 %v90, %v2445
  %2447 = vmatprep.mubr.bf16.mxu0 0
  %2448 = vmatmul.mubr.bf16.gmra.mxu0 %v2277
  %v2449 = vpop.f32.mrf.mxu0
  %v2450 = vadd.f32 %v86, %v2449
  %v2451 = vpop.f32.mrf.mxu0
  %v2452 = vadd.f32 %v90, %v2451
  %v2453 = vpop.f32.mrf.mxu0
  %v2454 = vadd.f32 %v86, %v2453
  %v2455 = vpop.f32.mrf.mxu0
  %v2456 = vadd.f32 %v90, %v2455
  %2457 = vmatprep.mubr.bf16.mxu0 0
  %2458 = vmatmul.mubr.bf16.gmra.mxu0 %v2280
  %v2459 = vpop.f32.mrf.mxu0
  %v2460 = vadd.f32 %v86, %v2459
  %v2461 = vpop.f32.mrf.mxu0
  %v2462 = vadd.f32 %v90, %v2461
  %v2463 = vpop.f32.mrf.mxu0
  %v2464 = vadd.f32 %v86, %v2463
  %v2465 = vpop.f32.mrf.mxu0
  %v2466 = vadd.f32 %v90, %v2465
  %2467 = vmatprep.mubr.bf16.mxu0 0
  %2468 = vmatmul.mubr.bf16.gmra.mxu0 %v2283
  %v2469 = vpop.f32.mrf.mxu0
  %v2470 = vadd.f32 %v86, %v2469
  %v2471 = vpop.f32.mrf.mxu0
  %v2472 = vadd.f32 %v90, %v2471
  %v2473 = vpop.f32.mrf.mxu0
  %v2474 = vadd.f32 %v86, %v2473
  %v2475 = vpop.f32.mrf.mxu0
  %v2476 = vadd.f32 %v90, %v2475
  %2477 = vdwg.mxu0
  %2478 = vmatprep.subr.bf16.mxu0 0
  %2479 = vmatpush1.bf16.msra.mxu0 0
  %2480 = vmatprep.subr.bf16.mxu0 0
  %2481 = vmatpush1.bf16.msra.mxu0 0
  %2482 = vmatprep.subr.bf16.mxu0 0
  %2483 = vmatpush1.bf16.msra.mxu0 0
  %2484 = vmatprep.subr.bf16.mxu0 0
  %2485 = vmatpush1.bf16.msra.mxu0 0
  %2486 = vmatprep.subr.bf16.mxu0 0
  %2487 = vmatpush1.bf16.msra.mxu0 0
  %2488 = vmatprep.subr.bf16.mxu0 %v293
  %2489 = vmatpush1.bf16.msra.mxu0 %v290
  %2490 = vmatprep.subr.bf16.mxu0 %v220
  %2491 = vmatpush1.bf16.msra.mxu0 %v219
  %2492 = vmatprep.subr.bf16.mxu0 %v216
  %2493 = vmatpush1.bf16.msra.mxu0 %v215
  %2494 = vmatprep.subr.bf16.mxu0 0
  %2495 = vmatpush2.bf16.msra.mxu0 0
  %2496 = vmatprep.subr.bf16.mxu0 0
  %2497 = vmatpush2.bf16.msra.mxu0 0
  %2498 = vmatprep.subr.bf16.mxu0 0
  %2499 = vmatpush2.bf16.msra.mxu0 0
  %2500 = vmatprep.subr.bf16.mxu0 0
  %2501 = vmatpush2.bf16.msra.mxu0 0
  %2502 = vmatprep.subr.bf16.mxu0 0
  %2503 = vmatpush2.bf16.msra.mxu0 0
  %2504 = vmatprep.subr.bf16.mxu0 0
  %2505 = vmatpush2.bf16.msra.mxu0 0
  %2506 = vmatprep.subr.bf16.mxu0 0
  %2507 = vmatpush2.bf16.msra.mxu0 0
  %2508 = vmatprep.subr.bf16.mxu0 0
  %2509 = vmatpush2.bf16.msra.mxu0 0
  %2510 = vmatprep.mubr.bf16.mxu0 0
  %2511 = vmatmul.mubr.bf16.gmra.mxu0 %v2238
  %v2512 = vpop.f32.mrf.mxu0
  %v2513 = vadd.f32 %v94, %v2512
  %v2514 = vpop.f32.mrf.mxu0
  %v2515 = vadd.f32 %v98, %v2514
  %v2516 = vpop.f32.mrf.mxu0
  %v2517 = vadd.f32 %v94, %v2516
  %v2518 = vpop.f32.mrf.mxu0
  %v2519 = vadd.f32 %v98, %v2518
  %2520 = vmatprep.mubr.bf16.mxu0 0
  %2521 = vmatmul.mubr.bf16.gmra.mxu0 %v2241
  %v2522 = vpop.f32.mrf.mxu0
  %v2523 = vadd.f32 %v94, %v2522
  %v2524 = vpop.f32.mrf.mxu0
  %v2525 = vadd.f32 %v98, %v2524
  %v2526 = vpop.f32.mrf.mxu0
  %v2527 = vadd.f32 %v94, %v2526
  %v2528 = vpop.f32.mrf.mxu0
  %v2529 = vadd.f32 %v98, %v2528
  %2530 = vmatprep.mubr.bf16.mxu0 0
  %2531 = vmatmul.mubr.bf16.gmra.mxu0 %v2244
  %v2532 = vpop.f32.mrf.mxu0
  %v2533 = vadd.f32 %v94, %v2532
  %v2534 = vpop.f32.mrf.mxu0
  %v2535 = vadd.f32 %v98, %v2534
  %v2536 = vpop.f32.mrf.mxu0
  %v2537 = vadd.f32 %v94, %v2536
  %v2538 = vpop.f32.mrf.mxu0
  %v2539 = vadd.f32 %v98, %v2538
  %2540 = vmatprep.mubr.bf16.mxu0 0
  %2541 = vmatmul.mubr.bf16.gmra.mxu0 %v2247
  %v2542 = vpop.f32.mrf.mxu0
  %v2543 = vadd.f32 %v94, %v2542
  %v2544 = vpop.f32.mrf.mxu0
  %v2545 = vadd.f32 %v98, %v2544
  %v2546 = vpop.f32.mrf.mxu0
  %v2547 = vadd.f32 %v94, %v2546
  %v2548 = vpop.f32.mrf.mxu0
  %v2549 = vadd.f32 %v98, %v2548
  %2550 = vmatprep.mubr.bf16.mxu0 0
  %2551 = vmatmul.mubr.bf16.gmra.mxu0 %v2250
  %v2552 = vpop.f32.mrf.mxu0
  %v2553 = vadd.f32 %v94, %v2552
  %v2554 = vpop.f32.mrf.mxu0
  %v2555 = vadd.f32 %v98, %v2554
  %v2556 = vpop.f32.mrf.mxu0
  %v2557 = vadd.f32 %v94, %v2556
  %v2558 = vpop.f32.mrf.mxu0
  %v2559 = vadd.f32 %v98, %v2558
  %2560 = vmatprep.mubr.bf16.mxu0 0
  %2561 = vmatmul.mubr.bf16.gmra.mxu0 %v2253
  %v2562 = vpop.f32.mrf.mxu0
  %v2563 = vadd.f32 %v94, %v2562
  %v2564 = vpop.f32.mrf.mxu0
  %v2565 = vadd.f32 %v98, %v2564
  %v2566 = vpop.f32.mrf.mxu0
  %v2567 = vadd.f32 %v94, %v2566
  %v2568 = vpop.f32.mrf.mxu0
  %v2569 = vadd.f32 %v98, %v2568
  %2570 = vmatprep.mubr.bf16.mxu0 0
  %2571 = vmatmul.mubr.bf16.gmra.mxu0 %v2256
  %v2572 = vpop.f32.mrf.mxu0
  %v2573 = vadd.f32 %v94, %v2572
  %v2574 = vpop.f32.mrf.mxu0
  %v2575 = vadd.f32 %v98, %v2574
  %v2576 = vpop.f32.mrf.mxu0
  %v2577 = vadd.f32 %v94, %v2576
  %v2578 = vpop.f32.mrf.mxu0
  %v2579 = vadd.f32 %v98, %v2578
  %2580 = vmatprep.mubr.bf16.mxu0 0
  %2581 = vmatmul.mubr.bf16.gmra.mxu0 %v2259
  %v2582 = vpop.f32.mrf.mxu0
  %v2583 = vadd.f32 %v94, %v2582
  %v2584 = vpop.f32.mrf.mxu0
  %v2585 = vadd.f32 %v98, %v2584
  %v2586 = vpop.f32.mrf.mxu0
  %v2587 = vadd.f32 %v94, %v2586
  %v2588 = vpop.f32.mrf.mxu0
  %v2589 = vadd.f32 %v98, %v2588
  %2590 = vmatprep.mubr.bf16.mxu0 0
  %2591 = vmatmul.mubr.bf16.gmra.mxu0 %v2262
  %v2592 = vpop.f32.mrf.mxu0
  %v2593 = vadd.f32 %v94, %v2592
  %v2594 = vpop.f32.mrf.mxu0
  %v2595 = vadd.f32 %v98, %v2594
  %v2596 = vpop.f32.mrf.mxu0
  %v2597 = vadd.f32 %v94, %v2596
  %v2598 = vpop.f32.mrf.mxu0
  %v2599 = vadd.f32 %v98, %v2598
  %2600 = vmatprep.mubr.bf16.mxu0 0
  %2601 = vmatmul.mubr.bf16.gmra.mxu0 %v2265
  %v2602 = vpop.f32.mrf.mxu0
  %v2603 = vadd.f32 %v94, %v2602
  %v2604 = vpop.f32.mrf.mxu0
  %v2605 = vadd.f32 %v98, %v2604
  %v2606 = vpop.f32.mrf.mxu0
  %v2607 = vadd.f32 %v94, %v2606
  %v2608 = vpop.f32.mrf.mxu0
  %v2609 = vadd.f32 %v98, %v2608
  %2610 = vmatprep.mubr.bf16.mxu0 0
  %2611 = vmatmul.mubr.bf16.gmra.mxu0 %v2268
  %v2612 = vpop.f32.mrf.mxu0
  %v2613 = vadd.f32 %v94, %v2612
  %v2614 = vpop.f32.mrf.mxu0
  %v2615 = vadd.f32 %v98, %v2614
  %v2616 = vpop.f32.mrf.mxu0
  %v2617 = vadd.f32 %v94, %v2616
  %v2618 = vpop.f32.mrf.mxu0
  %v2619 = vadd.f32 %v98, %v2618
  %2620 = vmatprep.mubr.bf16.mxu0 0
  %2621 = vmatmul.mubr.bf16.gmra.mxu0 %v2271
  %v2622 = vpop.f32.mrf.mxu0
  %v2623 = vadd.f32 %v94, %v2622
  %v2624 = vpop.f32.mrf.mxu0
  %v2625 = vadd.f32 %v98, %v2624
  %v2626 = vpop.f32.mrf.mxu0
  %v2627 = vadd.f32 %v94, %v2626
  %v2628 = vpop.f32.mrf.mxu0
  %v2629 = vadd.f32 %v98, %v2628
  %2630 = vmatprep.mubr.bf16.mxu0 0
  %2631 = vmatmul.mubr.bf16.gmra.mxu0 %v2274
  %v2632 = vpop.f32.mrf.mxu0
  %v2633 = vadd.f32 %v94, %v2632
  %v2634 = vpop.f32.mrf.mxu0
  %v2635 = vadd.f32 %v98, %v2634
  %v2636 = vpop.f32.mrf.mxu0
  %v2637 = vadd.f32 %v94, %v2636
  %v2638 = vpop.f32.mrf.mxu0
  %v2639 = vadd.f32 %v98, %v2638
  %2640 = vmatprep.mubr.bf16.mxu0 0
  %2641 = vmatmul.mubr.bf16.gmra.mxu0 %v2277
  %v2642 = vpop.f32.mrf.mxu0
  %v2643 = vadd.f32 %v94, %v2642
  %v2644 = vpop.f32.mrf.mxu0
  %v2645 = vadd.f32 %v98, %v2644
  %v2646 = vpop.f32.mrf.mxu0
  %v2647 = vadd.f32 %v94, %v2646
  %v2648 = vpop.f32.mrf.mxu0
  %v2649 = vadd.f32 %v98, %v2648
  %2650 = vmatprep.mubr.bf16.mxu0 0
  %2651 = vmatmul.mubr.bf16.gmra.mxu0 %v2280
  %v2652 = vpop.f32.mrf.mxu0
  %v2653 = vadd.f32 %v94, %v2652
  %v2654 = vpop.f32.mrf.mxu0
  %v2655 = vadd.f32 %v98, %v2654
  %v2656 = vpop.f32.mrf.mxu0
  %v2657 = vadd.f32 %v94, %v2656
  %v2658 = vpop.f32.mrf.mxu0
  %v2659 = vadd.f32 %v98, %v2658
  %2660 = vmatprep.mubr.bf16.mxu0 0
  %2661 = vmatmul.mubr.bf16.gmra.mxu0 %v2283
  %v2662 = vpop.f32.mrf.mxu0
  %v2663 = vadd.f32 %v94, %v2662
  %v2664 = vpop.f32.mrf.mxu0
  %v2665 = vadd.f32 %v98, %v2664
  %v2666 = vpop.f32.mrf.mxu0
  %v2667 = vadd.f32 %v94, %v2666
  %v2668 = vpop.f32.mrf.mxu0
  %v2669 = vadd.f32 %v98, %v2668
  %2670 = vdwg.mxu0
  %v2671 = vmax.f32 %v2320, 0.0
  %v2672 = vmax.f32 %v2322, 0.0
  %v2673 = vmax.f32 %v2513, 0.0
  %v2674 = vmax.f32 %v2515, 0.0
  %v2675 = vmax.f32 %v2324, 0.0
  %v2676 = vmax.f32 %v2326, 0.0
  %v2677 = vmax.f32 %v2517, 0.0
  %v2678 = vmax.f32 %v2519, 0.0
  %v2679 = vmax.f32 %v2330, 0.0
  %v2680 = vmax.f32 %v2332, 0.0
  %v2681 = vmax.f32 %v2523, 0.0
  %v2682 = vmax.f32 %v2525, 0.0
  %v2683 = vmax.f32 %v2334, 0.0
  %v2684 = vmax.f32 %v2336, 0.0
  %v2685 = vmax.f32 %v2527, 0.0
  %v2686 = vmax.f32 %v2529, 0.0
  %v2687 = vmax.f32 %v2340, 0.0
  %v2688 = vmax.f32 %v2342, 0.0
  %v2689 = vmax.f32 %v2533, 0.0
  %v2690 = vmax.f32 %v2535, 0.0
  %v2691 = vmax.f32 %v2344, 0.0
  %v2692 = vmax.f32 %v2346, 0.0
  %v2693 = vmax.f32 %v2537, 0.0
  %v2694 = vmax.f32 %v2539, 0.0
  %v2695 = vmax.f32 %v2350, 0.0
  %v2696 = vmax.f32 %v2352, 0.0
  %v2697 = vmax.f32 %v2543, 0.0
  %v2698 = vmax.f32 %v2545, 0.0
  %v2699 = vmax.f32 %v2354, 0.0
  %v2700 = vmax.f32 %v2356, 0.0
  %v2701 = vmax.f32 %v2547, 0.0
  %v2702 = vmax.f32 %v2549, 0.0
  %v2703 = vmax.f32 %v2360, 0.0
  %v2704 = vmax.f32 %v2362, 0.0
  %v2705 = vmax.f32 %v2553, 0.0
  %v2706 = vmax.f32 %v2555, 0.0
  %v2707 = vmax.f32 %v2364, 0.0
  %v2708 = vmax.f32 %v2366, 0.0
  %v2709 = vmax.f32 %v2557, 0.0
  %v2710 = vmax.f32 %v2559, 0.0
  %v2711 = vmax.f32 %v2370, 0.0
  %v2712 = vmax.f32 %v2372, 0.0
  %v2713 = vmax.f32 %v2563, 0.0
  %v2714 = vmax.f32 %v2565, 0.0
  %v2715 = vmax.f32 %v2374, 0.0
  %v2716 = vmax.f32 %v2376, 0.0
  %v2717 = vmax.f32 %v2567, 0.0
  %v2718 = vmax.f32 %v2569, 0.0
  %v2719 = vmax.f32 %v2380, 0.0
  %v2720 = vmax.f32 %v2382, 0.0
  %v2721 = vmax.f32 %v2573, 0.0
  %v2722 = vmax.f32 %v2575, 0.0
  %v2723 = vmax.f32 %v2384, 0.0
  %v2724 = vmax.f32 %v2386, 0.0
  %v2725 = vmax.f32 %v2577, 0.0
  %v2726 = vmax.f32 %v2579, 0.0
  %v2727 = vmax.f32 %v2390, 0.0
  %v2728 = vmax.f32 %v2392, 0.0
  %v2729 = vmax.f32 %v2583, 0.0
  %v2730 = vmax.f32 %v2585, 0.0
  %v2731 = vmax.f32 %v2394, 0.0
  %v2732 = vmax.f32 %v2396, 0.0
  %v2733 = vmax.f32 %v2587, 0.0
  %v2734 = vmax.f32 %v2589, 0.0
  %v2735 = vmax.f32 %v2400, 0.0
  %v2736 = vmax.f32 %v2402, 0.0
  %v2737 = vmax.f32 %v2593, 0.0
  %v2738 = vmax.f32 %v2595, 0.0
  %v2739 = vmax.f32 %v2404, 0.0
  %v2740 = vmax.f32 %v2406, 0.0
  %v2741 = vmax.f32 %v2597, 0.0
  %v2742 = vmax.f32 %v2599, 0.0
  %v2743 = vmax.f32 %v2410, 0.0
  %v2744 = vmax.f32 %v2412, 0.0
  %v2745 = vmax.f32 %v2603, 0.0
  %v2746 = vmax.f32 %v2605, 0.0
  %v2747 = vmax.f32 %v2414, 0.0
  %v2748 = vmax.f32 %v2416, 0.0
  %v2749 = vmax.f32 %v2607, 0.0
  %v2750 = vmax.f32 %v2609, 0.0
  %v2751 = vmax.f32 %v2420, 0.0
  %v2752 = vmax.f32 %v2422, 0.0
  %v2753 = vmax.f32 %v2613, 0.0
  %v2754 = vmax.f32 %v2615, 0.0
  %v2755 = vmax.f32 %v2424, 0.0
  %v2756 = vmax.f32 %v2426, 0.0
  %v2757 = vmax.f32 %v2617, 0.0
  %v2758 = vmax.f32 %v2619, 0.0
  %v2759 = vmax.f32 %v2430, 0.0
  %v2760 = vmax.f32 %v2432, 0.0
  %v2761 = vmax.f32 %v2623, 0.0
  %v2762 = vmax.f32 %v2625, 0.0
  %v2763 = vmax.f32 %v2434, 0.0
  %v2764 = vmax.f32 %v2436, 0.0
  %v2765 = vmax.f32 %v2627, 0.0
  %v2766 = vmax.f32 %v2629, 0.0
  %v2767 = vmax.f32 %v2440, 0.0
  %v2768 = vmax.f32 %v2442, 0.0
  %v2769 = vmax.f32 %v2633, 0.0
  %v2770 = vmax.f32 %v2635, 0.0
  %v2771 = vmax.f32 %v2444, 0.0
  %v2772 = vmax.f32 %v2446, 0.0
  %v2773 = vmax.f32 %v2637, 0.0
  %v2774 = vmax.f32 %v2639, 0.0
  %v2775 = vmax.f32 %v2450, 0.0
  %v2776 = vmax.f32 %v2452, 0.0
  %v2777 = vmax.f32 %v2643, 0.0
  %v2778 = vmax.f32 %v2645, 0.0
  %v2779 = vmax.f32 %v2454, 0.0
  %v2780 = vmax.f32 %v2456, 0.0
  %v2781 = vmax.f32 %v2647, 0.0
  %v2782 = vmax.f32 %v2649, 0.0
  %v2783 = vmax.f32 %v2460, 0.0
  %v2784 = vmax.f32 %v2462, 0.0
  %v2785 = vmax.f32 %v2653, 0.0
  %v2786 = vmax.f32 %v2655, 0.0
  %v2787 = vmax.f32 %v2464, 0.0
  %v2788 = vmax.f32 %v2466, 0.0
  %v2789 = vmax.f32 %v2657, 0.0
  %v2790 = vmax.f32 %v2659, 0.0
  %v2791 = vmax.f32 %v2470, 0.0
  %v2792 = vmax.f32 %v2472, 0.0
  %v2793 = vmax.f32 %v2663, 0.0
  %v2794 = vmax.f32 %v2665, 0.0
  %v2795 = vmax.f32 %v2474, 0.0
  %v2796 = vmax.f32 %v2476, 0.0
  %v2797 = vmax.f32 %v2667, 0.0
  %v2798 = vmax.f32 %v2669, 0.0
  %v2799 = vadd.f32 %v2671, %v2675
  %v2800 = vadd.f32 %v2799, %v2679
  %v2801 = vadd.f32 %v2800, %v2683
  %v2802 = vrot.slane %v2801, 4
  %v2803 = vadd.f32 %v2801, %v2802
  %v2804 = vrot.slane %v2803, 2
  %v2805 = vadd.f32 %v2803, %v2804
  %v2806 = vrot.slane %v2805, 1
  %v2807 = vadd.f32 %v2805, %v2806
  %v2808 = vadd.f32 %v2672, %v2676
  %v2809 = vadd.f32 %v2808, %v2680
  %v2810 = vadd.f32 %v2809, %v2684
  %v2811 = vrot.slane %v2810, 4
  %v2812 = vadd.f32 %v2810, %v2811
  %v2813 = vrot.slane %v2812, 2
  %v2814 = vadd.f32 %v2812, %v2813
  %v2815 = vrot.slane %v2814, 1
  %v2816 = vadd.f32 %v2814, %v2815
  %v2817 = vadd.f32 %v2673, %v2677
  %v2818 = vadd.f32 %v2817, %v2681
  %v2819 = vadd.f32 %v2818, %v2685
  %v2820 = vrot.slane %v2819, 4
  %v2821 = vadd.f32 %v2819, %v2820
  %v2822 = vrot.slane %v2821, 2
  %v2823 = vadd.f32 %v2821, %v2822
  %v2824 = vrot.slane %v2823, 1
  %v2825 = vadd.f32 %v2823, %v2824
  %v2826 = vadd.f32 %v2674, %v2678
  %v2827 = vadd.f32 %v2826, %v2682
  %v2828 = vadd.f32 %v2827, %v2686
  %v2829 = vrot.slane %v2828, 4
  %v2830 = vadd.f32 %v2828, %v2829
  %v2831 = vrot.slane %v2830, 2
  %v2832 = vadd.f32 %v2830, %v2831
  %v2833 = vrot.slane %v2832, 1
  %v2834 = vadd.f32 %v2832, %v2833
  %v2835 = vadd.f32 %v2687, %v2691
  %v2836 = vadd.f32 %v2835, %v2695
  %v2837 = vadd.f32 %v2836, %v2699
  %v2838 = vrot.slane %v2837, 4
  %v2839 = vadd.f32 %v2837, %v2838
  %v2840 = vrot.slane %v2839, 2
  %v2841 = vadd.f32 %v2839, %v2840
  %v2842 = vrot.slane %v2841, 1
  %v2843 = vadd.f32 %v2841, %v2842
  %v2844 = vadd.f32 %v2688, %v2692
  %v2845 = vadd.f32 %v2844, %v2696
  %v2846 = vadd.f32 %v2845, %v2700
  %v2847 = vrot.slane %v2846, 4
  %v2848 = vadd.f32 %v2846, %v2847
  %v2849 = vrot.slane %v2848, 2
  %v2850 = vadd.f32 %v2848, %v2849
  %v2851 = vrot.slane %v2850, 1
  %v2852 = vadd.f32 %v2850, %v2851
  %v2853 = vadd.f32 %v2689, %v2693
  %v2854 = vadd.f32 %v2853, %v2697
  %v2855 = vadd.f32 %v2854, %v2701
  %v2856 = vrot.slane %v2855, 4
  %v2857 = vadd.f32 %v2855, %v2856
  %v2858 = vrot.slane %v2857, 2
  %v2859 = vadd.f32 %v2857, %v2858
  %v2860 = vrot.slane %v2859, 1
  %v2861 = vadd.f32 %v2859, %v2860
  %v2862 = vadd.f32 %v2690, %v2694
  %v2863 = vadd.f32 %v2862, %v2698
  %v2864 = vadd.f32 %v2863, %v2702
  %v2865 = vrot.slane %v2864, 4
  %v2866 = vadd.f32 %v2864, %v2865
  %v2867 = vrot.slane %v2866, 2
  %v2868 = vadd.f32 %v2866, %v2867
  %v2869 = vrot.slane %v2868, 1
  %v2870 = vadd.f32 %v2868, %v2869
  %v2871 = vadd.f32 %v2703, %v2707
  %v2872 = vadd.f32 %v2871, %v2711
  %v2873 = vadd.f32 %v2872, %v2715
  %v2874 = vrot.slane %v2873, 4
  %v2875 = vadd.f32 %v2873, %v2874
  %v2876 = vrot.slane %v2875, 2
  %v2877 = vadd.f32 %v2875, %v2876
  %v2878 = vrot.slane %v2877, 1
  %v2879 = vadd.f32 %v2877, %v2878
  %v2880 = vadd.f32 %v2704, %v2708
  %v2881 = vadd.f32 %v2880, %v2712
  %v2882 = vadd.f32 %v2881, %v2716
  %v2883 = vrot.slane %v2882, 4
  %v2884 = vadd.f32 %v2882, %v2883
  %v2885 = vrot.slane %v2884, 2
  %v2886 = vadd.f32 %v2884, %v2885
  %v2887 = vrot.slane %v2886, 1
  %v2888 = vadd.f32 %v2886, %v2887
  %v2889 = vadd.f32 %v2705, %v2709
  %v2890 = vadd.f32 %v2889, %v2713
  %v2891 = vadd.f32 %v2890, %v2717
  %v2892 = vrot.slane %v2891, 4
  %v2893 = vadd.f32 %v2891, %v2892
  %v2894 = vrot.slane %v2893, 2
  %v2895 = vadd.f32 %v2893, %v2894
  %v2896 = vrot.slane %v2895, 1
  %v2897 = vadd.f32 %v2895, %v2896
  %v2898 = vadd.f32 %v2706, %v2710
  %v2899 = vadd.f32 %v2898, %v2714
  %v2900 = vadd.f32 %v2899, %v2718
  %v2901 = vrot.slane %v2900, 4
  %v2902 = vadd.f32 %v2900, %v2901
  %v2903 = vrot.slane %v2902, 2
  %v2904 = vadd.f32 %v2902, %v2903
  %v2905 = vrot.slane %v2904, 1
  %v2906 = vadd.f32 %v2904, %v2905
  %v2907 = vadd.f32 %v2719, %v2723
  %v2908 = vadd.f32 %v2907, %v2727
  %v2909 = vadd.f32 %v2908, %v2731
  %v2910 = vrot.slane %v2909, 4
  %v2911 = vadd.f32 %v2909, %v2910
  %v2912 = vrot.slane %v2911, 2
  %v2913 = vadd.f32 %v2911, %v2912
  %v2914 = vrot.slane %v2913, 1
  %v2915 = vadd.f32 %v2913, %v2914
  %v2916 = vadd.f32 %v2720, %v2724
  %v2917 = vadd.f32 %v2916, %v2728
  %v2918 = vadd.f32 %v2917, %v2732
  %v2919 = vrot.slane %v2918, 4
  %v2920 = vadd.f32 %v2918, %v2919
  %v2921 = vrot.slane %v2920, 2
  %v2922 = vadd.f32 %v2920, %v2921
  %v2923 = vrot.slane %v2922, 1
  %v2924 = vadd.f32 %v2922, %v2923
  %v2925 = vadd.f32 %v2721, %v2725
  %v2926 = vadd.f32 %v2925, %v2729
  %v2927 = vadd.f32 %v2926, %v2733
  %v2928 = vrot.slane %v2927, 4
  %v2929 = vadd.f32 %v2927, %v2928
  %v2930 = vrot.slane %v2929, 2
  %v2931 = vadd.f32 %v2929, %v2930
  %v2932 = vrot.slane %v2931, 1
  %v2933 = vadd.f32 %v2931, %v2932
  %v2934 = vadd.f32 %v2722, %v2726
  %v2935 = vadd.f32 %v2934, %v2730
  %v2936 = vadd.f32 %v2935, %v2734
  %v2937 = vrot.slane %v2936, 4
  %v2938 = vadd.f32 %v2936, %v2937
  %v2939 = vrot.slane %v2938, 2
  %v2940 = vadd.f32 %v2938, %v2939
  %v2941 = vrot.slane %v2940, 1
  %v2942 = vadd.f32 %v2940, %v2941
  %v2943 = vadd.f32 %v2735, %v2739
  %v2944 = vadd.f32 %v2943, %v2743
  %v2945 = vadd.f32 %v2944, %v2747
  %v2946 = vrot.slane %v2945, 4
  %v2947 = vadd.f32 %v2945, %v2946
  %v2948 = vrot.slane %v2947, 2
  %v2949 = vadd.f32 %v2947, %v2948
  %v2950 = vrot.slane %v2949, 1
  %v2951 = vadd.f32 %v2949, %v2950
  %v2952 = vadd.f32 %v2736, %v2740
  %v2953 = vadd.f32 %v2952, %v2744
  %v2954 = vadd.f32 %v2953, %v2748
  %v2955 = vrot.slane %v2954, 4
  %v2956 = vadd.f32 %v2954, %v2955
  %v2957 = vrot.slane %v2956, 2
  %v2958 = vadd.f32 %v2956, %v2957
  %v2959 = vrot.slane %v2958, 1
  %v2960 = vadd.f32 %v2958, %v2959
  %v2961 = vadd.f32 %v2737, %v2741
  %v2962 = vadd.f32 %v2961, %v2745
  %v2963 = vadd.f32 %v2962, %v2749
  %v2964 = vrot.slane %v2963, 4
  %v2965 = vadd.f32 %v2963, %v2964
  %v2966 = vrot.slane %v2965, 2
  %v2967 = vadd.f32 %v2965, %v2966
  %v2968 = vrot.slane %v2967, 1
  %v2969 = vadd.f32 %v2967, %v2968
  %v2970 = vadd.f32 %v2738, %v2742
  %v2971 = vadd.f32 %v2970, %v2746
  %v2972 = vadd.f32 %v2971, %v2750
  %v2973 = vrot.slane %v2972, 4
  %v2974 = vadd.f32 %v2972, %v2973
  %v2975 = vrot.slane %v2974, 2
  %v2976 = vadd.f32 %v2974, %v2975
  %v2977 = vrot.slane %v2976, 1
  %v2978 = vadd.f32 %v2976, %v2977
  %v2979 = vadd.f32 %v2751, %v2755
  %v2980 = vadd.f32 %v2979, %v2759
  %v2981 = vadd.f32 %v2980, %v2763
  %v2982 = vrot.slane %v2981, 4
  %v2983 = vadd.f32 %v2981, %v2982
  %v2984 = vrot.slane %v2983, 2
  %v2985 = vadd.f32 %v2983, %v2984
  %v2986 = vrot.slane %v2985, 1
  %v2987 = vadd.f32 %v2985, %v2986
  %v2988 = vadd.f32 %v2752, %v2756
  %v2989 = vadd.f32 %v2988, %v2760
  %v2990 = vadd.f32 %v2989, %v2764
  %v2991 = vrot.slane %v2990, 4
  %v2992 = vadd.f32 %v2990, %v2991
  %v2993 = vrot.slane %v2992, 2
  %v2994 = vadd.f32 %v2992, %v2993
  %v2995 = vrot.slane %v2994, 1
  %v2996 = vadd.f32 %v2994, %v2995
  %v2997 = vadd.f32 %v2753, %v2757
  %v2998 = vadd.f32 %v2997, %v2761
  %v2999 = vadd.f32 %v2998, %v2765
  %v3000 = vrot.slane %v2999, 4
  %v3001 = vadd.f32 %v2999, %v3000
  %v3002 = vrot.slane %v3001, 2
  %v3003 = vadd.f32 %v3001, %v3002
  %v3004 = vrot.slane %v3003, 1
  %v3005 = vadd.f32 %v3003, %v3004
  %v3006 = vadd.f32 %v2754, %v2758
  %v3007 = vadd.f32 %v3006, %v2762
  %v3008 = vadd.f32 %v3007, %v2766
  %v3009 = vrot.slane %v3008, 4
  %v3010 = vadd.f32 %v3008, %v3009
  %v3011 = vrot.slane %v3010, 2
  %v3012 = vadd.f32 %v3010, %v3011
  %v3013 = vrot.slane %v3012, 1
  %v3014 = vadd.f32 %v3012, %v3013
  %v3015 = vadd.f32 %v2767, %v2771
  %v3016 = vadd.f32 %v3015, %v2775
  %v3017 = vadd.f32 %v3016, %v2779
  %v3018 = vrot.slane %v3017, 4
  %v3019 = vadd.f32 %v3017, %v3018
  %v3020 = vrot.slane %v3019, 2
  %v3021 = vadd.f32 %v3019, %v3020
  %v3022 = vrot.slane %v3021, 1
  %v3023 = vadd.f32 %v3021, %v3022
  %v3024 = vadd.f32 %v2768, %v2772
  %v3025 = vadd.f32 %v3024, %v2776
  %v3026 = vadd.f32 %v3025, %v2780
  %v3027 = vrot.slane %v3026, 4
  %v3028 = vadd.f32 %v3026, %v3027
  %v3029 = vrot.slane %v3028, 2
  %v3030 = vadd.f32 %v3028, %v3029
  %v3031 = vrot.slane %v3030, 1
  %v3032 = vadd.f32 %v3030, %v3031
  %v3033 = vadd.f32 %v2769, %v2773
  %v3034 = vadd.f32 %v3033, %v2777
  %v3035 = vadd.f32 %v3034, %v2781
  %v3036 = vrot.slane %v3035, 4
  %v3037 = vadd.f32 %v3035, %v3036
  %v3038 = vrot.slane %v3037, 2
  %v3039 = vadd.f32 %v3037, %v3038
  %v3040 = vrot.slane %v3039, 1
  %v3041 = vadd.f32 %v3039, %v3040
  %v3042 = vadd.f32 %v2770, %v2774
  %v3043 = vadd.f32 %v3042, %v2778
  %v3044 = vadd.f32 %v3043, %v2782
  %v3045 = vrot.slane %v3044, 4
  %v3046 = vadd.f32 %v3044, %v3045
  %v3047 = vrot.slane %v3046, 2
  %v3048 = vadd.f32 %v3046, %v3047
  %v3049 = vrot.slane %v3048, 1
  %v3050 = vadd.f32 %v3048, %v3049
  %v3051 = vadd.f32 %v2783, %v2787
  %v3052 = vadd.f32 %v3051, %v2791
  %v3053 = vadd.f32 %v3052, %v2795
  %v3054 = vrot.slane %v3053, 4
  %v3055 = vadd.f32 %v3053, %v3054
  %v3056 = vrot.slane %v3055, 2
  %v3057 = vadd.f32 %v3055, %v3056
  %v3058 = vrot.slane %v3057, 1
  %v3059 = vadd.f32 %v3057, %v3058
  %v3060 = vadd.f32 %v2784, %v2788
  %v3061 = vadd.f32 %v3060, %v2792
  %v3062 = vadd.f32 %v3061, %v2796
  %v3063 = vrot.slane %v3062, 4
  %v3064 = vadd.f32 %v3062, %v3063
  %v3065 = vrot.slane %v3064, 2
  %v3066 = vadd.f32 %v3064, %v3065
  %v3067 = vrot.slane %v3066, 1
  %v3068 = vadd.f32 %v3066, %v3067
  %v3069 = vadd.f32 %v2785, %v2789
  %v3070 = vadd.f32 %v3069, %v2793
  %v3071 = vadd.f32 %v3070, %v2797
  %v3072 = vrot.slane %v3071, 4
  %v3073 = vadd.f32 %v3071, %v3072
  %v3074 = vrot.slane %v3073, 2
  %v3075 = vadd.f32 %v3073, %v3074
  %v3076 = vrot.slane %v3075, 1
  %v3077 = vadd.f32 %v3075, %v3076
  %v3078 = vadd.f32 %v2786, %v2790
  %v3079 = vadd.f32 %v3078, %v2794
  %v3080 = vadd.f32 %v3079, %v2798
  %v3081 = vrot.slane %v3080, 4
  %v3082 = vadd.f32 %v3080, %v3081
  %v3083 = vrot.slane %v3082, 2
  %v3084 = vadd.f32 %v3082, %v3083
  %v3085 = vrot.slane %v3084, 1
  %v3086 = vadd.f32 %v3084, %v3085
  %v3087 = vadd.f32 %v2092, %v2807
  %v3088 = vadd.f32 %v2093, %v2816
  %v3089 = vadd.f32 %v2094, %v2825
  %v3090 = vadd.f32 %v2095, %v2834
  %v3091 = vadd.f32 %v2096, %v2843
  %v3092 = vadd.f32 %v2097, %v2852
  %v3093 = vadd.f32 %v2098, %v2861
  %v3094 = vadd.f32 %v2099, %v2870
  %v3095 = vadd.f32 %v2100, %v2879
  %v3096 = vadd.f32 %v2101, %v2888
  %v3097 = vadd.f32 %v2102, %v2897
  %v3098 = vadd.f32 %v2103, %v2906
  %v3099 = vadd.f32 %v2104, %v2915
  %v3100 = vadd.f32 %v2105, %v2924
  %v3101 = vadd.f32 %v2106, %v2933
  %v3102 = vadd.f32 %v2107, %v2942
  %v3103 = vadd.f32 %v2108, %v2951
  %v3104 = vadd.f32 %v2109, %v2960
  %v3105 = vadd.f32 %v2110, %v2969
  %v3106 = vadd.f32 %v2111, %v2978
  %v3107 = vadd.f32 %v2112, %v2987
  %v3108 = vadd.f32 %v2113, %v2996
  %v3109 = vadd.f32 %v2114, %v3005
  %v3110 = vadd.f32 %v2115, %v3014
  %v3111 = vadd.f32 %v2116, %v3023
  %v3112 = vadd.f32 %v2117, %v3032
  %v3113 = vadd.f32 %v2118, %v3041
  %v3114 = vadd.f32 %v2119, %v3050
  %v3115 = vadd.f32 %v2120, %v3059
  %v3116 = vadd.f32 %v2121, %v3068
  %v3117 = vadd.f32 %v2122, %v3077
  %v3118 = vadd.f32 %v2123, %v3086
  %s3119 = scalar_lea.vmem %s0, 48
  %v3120 = vld [vmem:[%s3119] sm:$0xf]
  %v3121 = vld [vmem:[%s3119 + $0x4] sm:$0xf]
  %v3122 = vld [vmem:[%s3119 + $0x8] sm:$0xf]
  %v3123 = vld [vmem:[%s3119 + $0xc] sm:$0xf]
  %v3124 = vld [vmem:[%s3119 + $0x80] sm:$0xf]
  %v3125 = vld [vmem:[%s3119 + $0x84] sm:$0xf]
  %v3126 = vld [vmem:[%s3119 + $0x88] sm:$0xf]
  %v3127 = vld [vmem:[%s3119 + $0x8c] sm:$0xf]
  %v3128 = vld [vmem:[%s3119 + $0x100] sm:$0xf]
  %v3129 = vld [vmem:[%s3119 + $0x104] sm:$0xf]
  %v3130 = vld [vmem:[%s3119 + $0x108] sm:$0xf]
  %v3131 = vld [vmem:[%s3119 + $0x10c] sm:$0xf]
  %v3132 = vld [vmem:[%s3119 + $0x180] sm:$0xf]
  %v3133 = vld [vmem:[%s3119 + $0x184] sm:$0xf]
  %v3134 = vld [vmem:[%s3119 + $0x188] sm:$0xf]
  %v3135 = vld [vmem:[%s3119 + $0x18c] sm:$0xf]
  %v3136 = vld [vmem:[%s3119 + $0x200] sm:$0xf]
  %v3137 = vld [vmem:[%s3119 + $0x204] sm:$0xf]
  %v3138 = vld [vmem:[%s3119 + $0x208] sm:$0xf]
  %v3139 = vld [vmem:[%s3119 + $0x20c] sm:$0xf]
  %v3140 = vld [vmem:[%s3119 + $0x280] sm:$0xf]
  %v3141 = vld [vmem:[%s3119 + $0x284] sm:$0xf]
  %v3142 = vld [vmem:[%s3119 + $0x288] sm:$0xf]
  %v3143 = vld [vmem:[%s3119 + $0x28c] sm:$0xf]
  %v3144 = vld [vmem:[%s3119 + $0x300] sm:$0xf]
  %v3145 = vld [vmem:[%s3119 + $0x304] sm:$0xf]
  %v3146 = vld [vmem:[%s3119 + $0x308] sm:$0xf]
  %v3147 = vld [vmem:[%s3119 + $0x30c] sm:$0xf]
  %v3148 = vld [vmem:[%s3119 + $0x380] sm:$0xf]
  %v3149 = vld [vmem:[%s3119 + $0x384] sm:$0xf]
  %v3150 = vld [vmem:[%s3119 + $0x388] sm:$0xf]
  %v3151 = vld [vmem:[%s3119 + $0x38c] sm:$0xf]
  %v3184 = vunpack.c.l.b16 %v3120
  %v3185 = vunpack.c.l.b16 %v3121
  %v3186 = vunpack.c.l.b16 %v3122
  %v3187 = vunpack.c.l.b16 %v3123
  %v3188 = vunpack.c.l.b16 %v3124
  %v3189 = vunpack.c.l.b16 %v3125
  %v3190 = vunpack.c.l.b16 %v3126
  %v3191 = vunpack.c.l.b16 %v3127
  %v3192 = vunpack.c.l.b16 %v3128
  %v3193 = vunpack.c.l.b16 %v3129
  %v3194 = vunpack.c.l.b16 %v3130
  %v3195 = vunpack.c.l.b16 %v3131
  %v3196 = vunpack.c.l.b16 %v3132
  %v3197 = vunpack.c.l.b16 %v3133
  %v3198 = vunpack.c.l.b16 %v3134
  %v3199 = vunpack.c.l.b16 %v3135
  %v3200 = vunpack.c.l.b16 %v3136
  %v3201 = vunpack.c.l.b16 %v3137
  %v3202 = vunpack.c.l.b16 %v3138
  %v3203 = vunpack.c.l.b16 %v3139
  %v3204 = vunpack.c.l.b16 %v3140
  %v3205 = vunpack.c.l.b16 %v3141
  %v3206 = vunpack.c.l.b16 %v3142
  %v3207 = vunpack.c.l.b16 %v3143
  %v3208 = vunpack.c.l.b16 %v3144
  %v3209 = vunpack.c.l.b16 %v3145
  %v3210 = vunpack.c.l.b16 %v3146
  %v3211 = vunpack.c.l.b16 %v3147
  %v3212 = vunpack.c.l.b16 %v3148
  %v3213 = vunpack.c.l.b16 %v3149
  %v3214 = vunpack.c.l.b16 %v3150
  %v3215 = vunpack.c.l.b16 %v3151
  %v3216 = vpack.c.b16 %v3185, %v3184
  %v3217 = vpack.c.b16 %v3187, %v3186
  %v3218 = vpack.c.b16 %v3189, %v3188
  %v3219 = vpack.c.b16 %v3191, %v3190
  %v3220 = vpack.c.b16 %v3193, %v3192
  %v3221 = vpack.c.b16 %v3195, %v3194
  %v3222 = vpack.c.b16 %v3197, %v3196
  %v3223 = vpack.c.b16 %v3199, %v3198
  %v3224 = vpack.c.b16 %v3201, %v3200
  %v3225 = vpack.c.b16 %v3203, %v3202
  %v3226 = vpack.c.b16 %v3205, %v3204
  %v3227 = vpack.c.b16 %v3207, %v3206
  %v3228 = vpack.c.b16 %v3209, %v3208
  %v3229 = vpack.c.b16 %v3211, %v3210
  %v3230 = vpack.c.b16 %v3213, %v3212
  %v3231 = vpack.c.b16 %v3215, %v3214
  %v3233 = vsel %vm233, %v3216, 0
  %v3236 = vsel %vm233, %v3217, 0
  %v3239 = vsel %vm233, %v3218, 0
  %v3242 = vsel %vm233, %v3219, 0
  %v3245 = vsel %vm233, %v3220, 0
  %v3248 = vsel %vm233, %v3221, 0
  %v3251 = vsel %vm233, %v3222, 0
  %v3254 = vsel %vm233, %v3223, 0
  %v3257 = vsel %vm233, %v3224, 0
  %v3260 = vsel %vm233, %v3225, 0
  %v3263 = vsel %vm233, %v3226, 0
  %v3266 = vsel %vm233, %v3227, 0
  %v3269 = vsel %vm233, %v3228, 0
  %v3272 = vsel %vm233, %v3229, 0
  %v3275 = vsel %vm233, %v3230, 0
  %v3278 = vsel %vm233, %v3231, 0
  %3280 = vmatprep.subr.bf16.mxu0 0
  %3281 = vmatpush1.bf16.msra.mxu0 0
  %3282 = vmatprep.subr.bf16.mxu0 0
  %3283 = vmatpush1.bf16.msra.mxu0 0
  %3284 = vmatprep.subr.bf16.mxu0 0
  %3285 = vmatpush1.bf16.msra.mxu0 0
  %3286 = vmatprep.subr.bf16.mxu0 0
  %3287 = vmatpush1.bf16.msra.mxu0 0
  %3288 = vmatprep.subr.bf16.mxu0 0
  %3289 = vmatpush1.bf16.msra.mxu0 0
  %3290 = vmatprep.subr.bf16.mxu0 %v287
  %3291 = vmatpush1.bf16.msra.mxu0 %v284
  %3292 = vmatprep.subr.bf16.mxu0 %v218
  %3293 = vmatpush1.bf16.msra.mxu0 %v217
  %3294 = vmatprep.subr.bf16.mxu0 %v214
  %3295 = vmatpush1.bf16.msra.mxu0 %v213
  %3296 = vmatprep.subr.bf16.mxu0 0
  %3297 = vmatpush2.bf16.msra.mxu0 0
  %3298 = vmatprep.subr.bf16.mxu0 0
  %3299 = vmatpush2.bf16.msra.mxu0 0
  %3300 = vmatprep.subr.bf16.mxu0 0
  %3301 = vmatpush2.bf16.msra.mxu0 0
  %3302 = vmatprep.subr.bf16.mxu0 0
  %3303 = vmatpush2.bf16.msra.mxu0 0
  %3304 = vmatprep.subr.bf16.mxu0 0
  %3305 = vmatpush2.bf16.msra.mxu0 0
  %3306 = vmatprep.subr.bf16.mxu0 0
  %3307 = vmatpush2.bf16.msra.mxu0 0
  %3308 = vmatprep.subr.bf16.mxu0 0
  %3309 = vmatpush2.bf16.msra.mxu0 0
  %3310 = vmatprep.subr.bf16.mxu0 0
  %3311 = vmatpush2.bf16.msra.mxu0 0
  %3312 = vmatprep.mubr.bf16.mxu0 0
  %3313 = vmatmul.mubr.bf16.gmra.mxu0 %v3233
  %v3314 = vpop.f32.mrf.mxu0
  %v3315 = vadd.f32 %v86, %v3314
  %v3316 = vpop.f32.mrf.mxu0
  %v3317 = vadd.f32 %v90, %v3316
  %v3318 = vpop.f32.mrf.mxu0
  %v3319 = vadd.f32 %v86, %v3318
  %v3320 = vpop.f32.mrf.mxu0
  %v3321 = vadd.f32 %v90, %v3320
  %3322 = vmatprep.mubr.bf16.mxu0 0
  %3323 = vmatmul.mubr.bf16.gmra.mxu0 %v3236
  %v3324 = vpop.f32.mrf.mxu0
  %v3325 = vadd.f32 %v86, %v3324
  %v3326 = vpop.f32.mrf.mxu0
  %v3327 = vadd.f32 %v90, %v3326
  %v3328 = vpop.f32.mrf.mxu0
  %v3329 = vadd.f32 %v86, %v3328
  %v3330 = vpop.f32.mrf.mxu0
  %v3331 = vadd.f32 %v90, %v3330
  %3332 = vmatprep.mubr.bf16.mxu0 0
  %3333 = vmatmul.mubr.bf16.gmra.mxu0 %v3239
  %v3334 = vpop.f32.mrf.mxu0
  %v3335 = vadd.f32 %v86, %v3334
  %v3336 = vpop.f32.mrf.mxu0
  %v3337 = vadd.f32 %v90, %v3336
  %v3338 = vpop.f32.mrf.mxu0
  %v3339 = vadd.f32 %v86, %v3338
  %v3340 = vpop.f32.mrf.mxu0
  %v3341 = vadd.f32 %v90, %v3340
  %3342 = vmatprep.mubr.bf16.mxu0 0
  %3343 = vmatmul.mubr.bf16.gmra.mxu0 %v3242
  %v3344 = vpop.f32.mrf.mxu0
  %v3345 = vadd.f32 %v86, %v3344
  %v3346 = vpop.f32.mrf.mxu0
  %v3347 = vadd.f32 %v90, %v3346
  %v3348 = vpop.f32.mrf.mxu0
  %v3349 = vadd.f32 %v86, %v3348
  %v3350 = vpop.f32.mrf.mxu0
  %v3351 = vadd.f32 %v90, %v3350
  %3352 = vmatprep.mubr.bf16.mxu0 0
  %3353 = vmatmul.mubr.bf16.gmra.mxu0 %v3245
  %v3354 = vpop.f32.mrf.mxu0
  %v3355 = vadd.f32 %v86, %v3354
  %v3356 = vpop.f32.mrf.mxu0
  %v3357 = vadd.f32 %v90, %v3356
  %v3358 = vpop.f32.mrf.mxu0
  %v3359 = vadd.f32 %v86, %v3358
  %v3360 = vpop.f32.mrf.mxu0
  %v3361 = vadd.f32 %v90, %v3360
  %3362 = vmatprep.mubr.bf16.mxu0 0
  %3363 = vmatmul.mubr.bf16.gmra.mxu0 %v3248
  %v3364 = vpop.f32.mrf.mxu0
  %v3365 = vadd.f32 %v86, %v3364
  %v3366 = vpop.f32.mrf.mxu0
  %v3367 = vadd.f32 %v90, %v3366
  %v3368 = vpop.f32.mrf.mxu0
  %v3369 = vadd.f32 %v86, %v3368
  %v3370 = vpop.f32.mrf.mxu0
  %v3371 = vadd.f32 %v90, %v3370
  %3372 = vmatprep.mubr.bf16.mxu0 0
  %3373 = vmatmul.mubr.bf16.gmra.mxu0 %v3251
  %v3374 = vpop.f32.mrf.mxu0
  %v3375 = vadd.f32 %v86, %v3374
  %v3376 = vpop.f32.mrf.mxu0
  %v3377 = vadd.f32 %v90, %v3376
  %v3378 = vpop.f32.mrf.mxu0
  %v3379 = vadd.f32 %v86, %v3378
  %v3380 = vpop.f32.mrf.mxu0
  %v3381 = vadd.f32 %v90, %v3380
  %3382 = vmatprep.mubr.bf16.mxu0 0
  %3383 = vmatmul.mubr.bf16.gmra.mxu0 %v3254
  %v3384 = vpop.f32.mrf.mxu0
  %v3385 = vadd.f32 %v86, %v3384
  %v3386 = vpop.f32.mrf.mxu0
  %v3387 = vadd.f32 %v90, %v3386
  %v3388 = vpop.f32.mrf.mxu0
  %v3389 = vadd.f32 %v86, %v3388
  %v3390 = vpop.f32.mrf.mxu0
  %v3391 = vadd.f32 %v90, %v3390
  %3392 = vmatprep.mubr.bf16.mxu0 0
  %3393 = vmatmul.mubr.bf16.gmra.mxu0 %v3257
  %v3394 = vpop.f32.mrf.mxu0
  %v3395 = vadd.f32 %v86, %v3394
  %v3396 = vpop.f32.mrf.mxu0
  %v3397 = vadd.f32 %v90, %v3396
  %v3398 = vpop.f32.mrf.mxu0
  %v3399 = vadd.f32 %v86, %v3398
  %v3400 = vpop.f32.mrf.mxu0
  %v3401 = vadd.f32 %v90, %v3400
  %3402 = vmatprep.mubr.bf16.mxu0 0
  %3403 = vmatmul.mubr.bf16.gmra.mxu0 %v3260
  %v3404 = vpop.f32.mrf.mxu0
  %v3405 = vadd.f32 %v86, %v3404
  %v3406 = vpop.f32.mrf.mxu0
  %v3407 = vadd.f32 %v90, %v3406
  %v3408 = vpop.f32.mrf.mxu0
  %v3409 = vadd.f32 %v86, %v3408
  %v3410 = vpop.f32.mrf.mxu0
  %v3411 = vadd.f32 %v90, %v3410
  %3412 = vmatprep.mubr.bf16.mxu0 0
  %3413 = vmatmul.mubr.bf16.gmra.mxu0 %v3263
  %v3414 = vpop.f32.mrf.mxu0
  %v3415 = vadd.f32 %v86, %v3414
  %v3416 = vpop.f32.mrf.mxu0
  %v3417 = vadd.f32 %v90, %v3416
  %v3418 = vpop.f32.mrf.mxu0
  %v3419 = vadd.f32 %v86, %v3418
  %v3420 = vpop.f32.mrf.mxu0
  %v3421 = vadd.f32 %v90, %v3420
  %3422 = vmatprep.mubr.bf16.mxu0 0
  %3423 = vmatmul.mubr.bf16.gmra.mxu0 %v3266
  %v3424 = vpop.f32.mrf.mxu0
  %v3425 = vadd.f32 %v86, %v3424
  %v3426 = vpop.f32.mrf.mxu0
  %v3427 = vadd.f32 %v90, %v3426
  %v3428 = vpop.f32.mrf.mxu0
  %v3429 = vadd.f32 %v86, %v3428
  %v3430 = vpop.f32.mrf.mxu0
  %v3431 = vadd.f32 %v90, %v3430
  %3432 = vmatprep.mubr.bf16.mxu0 0
  %3433 = vmatmul.mubr.bf16.gmra.mxu0 %v3269
  %v3434 = vpop.f32.mrf.mxu0
  %v3435 = vadd.f32 %v86, %v3434
  %v3436 = vpop.f32.mrf.mxu0
  %v3437 = vadd.f32 %v90, %v3436
  %v3438 = vpop.f32.mrf.mxu0
  %v3439 = vadd.f32 %v86, %v3438
  %v3440 = vpop.f32.mrf.mxu0
  %v3441 = vadd.f32 %v90, %v3440
  %3442 = vmatprep.mubr.bf16.mxu0 0
  %3443 = vmatmul.mubr.bf16.gmra.mxu0 %v3272
  %v3444 = vpop.f32.mrf.mxu0
  %v3445 = vadd.f32 %v86, %v3444
  %v3446 = vpop.f32.mrf.mxu0
  %v3447 = vadd.f32 %v90, %v3446
  %v3448 = vpop.f32.mrf.mxu0
  %v3449 = vadd.f32 %v86, %v3448
  %v3450 = vpop.f32.mrf.mxu0
  %v3451 = vadd.f32 %v90, %v3450
  %3452 = vmatprep.mubr.bf16.mxu0 0
  %3453 = vmatmul.mubr.bf16.gmra.mxu0 %v3275
  %v3454 = vpop.f32.mrf.mxu0
  %v3455 = vadd.f32 %v86, %v3454
  %v3456 = vpop.f32.mrf.mxu0
  %v3457 = vadd.f32 %v90, %v3456
  %v3458 = vpop.f32.mrf.mxu0
  %v3459 = vadd.f32 %v86, %v3458
  %v3460 = vpop.f32.mrf.mxu0
  %v3461 = vadd.f32 %v90, %v3460
  %3462 = vmatprep.mubr.bf16.mxu0 0
  %3463 = vmatmul.mubr.bf16.gmra.mxu0 %v3278
  %v3464 = vpop.f32.mrf.mxu0
  %v3465 = vadd.f32 %v86, %v3464
  %v3466 = vpop.f32.mrf.mxu0
  %v3467 = vadd.f32 %v90, %v3466
  %v3468 = vpop.f32.mrf.mxu0
  %v3469 = vadd.f32 %v86, %v3468
  %v3470 = vpop.f32.mrf.mxu0
  %v3471 = vadd.f32 %v90, %v3470
  %3472 = vdwg.mxu0
  %3473 = vmatprep.subr.bf16.mxu0 0
  %3474 = vmatpush1.bf16.msra.mxu0 0
  %3475 = vmatprep.subr.bf16.mxu0 0
  %3476 = vmatpush1.bf16.msra.mxu0 0
  %3477 = vmatprep.subr.bf16.mxu0 0
  %3478 = vmatpush1.bf16.msra.mxu0 0
  %3479 = vmatprep.subr.bf16.mxu0 0
  %3480 = vmatpush1.bf16.msra.mxu0 0
  %3481 = vmatprep.subr.bf16.mxu0 0
  %3482 = vmatpush1.bf16.msra.mxu0 0
  %3483 = vmatprep.subr.bf16.mxu0 %v293
  %3484 = vmatpush1.bf16.msra.mxu0 %v290
  %3485 = vmatprep.subr.bf16.mxu0 %v220
  %3486 = vmatpush1.bf16.msra.mxu0 %v219
  %3487 = vmatprep.subr.bf16.mxu0 %v216
  %3488 = vmatpush1.bf16.msra.mxu0 %v215
  %3489 = vmatprep.subr.bf16.mxu0 0
  %3490 = vmatpush2.bf16.msra.mxu0 0
  %3491 = vmatprep.subr.bf16.mxu0 0
  %3492 = vmatpush2.bf16.msra.mxu0 0
  %3493 = vmatprep.subr.bf16.mxu0 0
  %3494 = vmatpush2.bf16.msra.mxu0 0
  %3495 = vmatprep.subr.bf16.mxu0 0
  %3496 = vmatpush2.bf16.msra.mxu0 0
  %3497 = vmatprep.subr.bf16.mxu0 0
  %3498 = vmatpush2.bf16.msra.mxu0 0
  %3499 = vmatprep.subr.bf16.mxu0 0
  %3500 = vmatpush2.bf16.msra.mxu0 0
  %3501 = vmatprep.subr.bf16.mxu0 0
  %3502 = vmatpush2.bf16.msra.mxu0 0
  %3503 = vmatprep.subr.bf16.mxu0 0
  %3504 = vmatpush2.bf16.msra.mxu0 0
  %3505 = vmatprep.mubr.bf16.mxu0 0
  %3506 = vmatmul.mubr.bf16.gmra.mxu0 %v3233
  %v3507 = vpop.f32.mrf.mxu0
  %v3508 = vadd.f32 %v94, %v3507
  %v3509 = vpop.f32.mrf.mxu0
  %v3510 = vadd.f32 %v98, %v3509
  %v3511 = vpop.f32.mrf.mxu0
  %v3512 = vadd.f32 %v94, %v3511
  %v3513 = vpop.f32.mrf.mxu0
  %v3514 = vadd.f32 %v98, %v3513
  %3515 = vmatprep.mubr.bf16.mxu0 0
  %3516 = vmatmul.mubr.bf16.gmra.mxu0 %v3236
  %v3517 = vpop.f32.mrf.mxu0
  %v3518 = vadd.f32 %v94, %v3517
  %v3519 = vpop.f32.mrf.mxu0
  %v3520 = vadd.f32 %v98, %v3519
  %v3521 = vpop.f32.mrf.mxu0
  %v3522 = vadd.f32 %v94, %v3521
  %v3523 = vpop.f32.mrf.mxu0
  %v3524 = vadd.f32 %v98, %v3523
  %3525 = vmatprep.mubr.bf16.mxu0 0
  %3526 = vmatmul.mubr.bf16.gmra.mxu0 %v3239
  %v3527 = vpop.f32.mrf.mxu0
  %v3528 = vadd.f32 %v94, %v3527
  %v3529 = vpop.f32.mrf.mxu0
  %v3530 = vadd.f32 %v98, %v3529
  %v3531 = vpop.f32.mrf.mxu0
  %v3532 = vadd.f32 %v94, %v3531
  %v3533 = vpop.f32.mrf.mxu0
  %v3534 = vadd.f32 %v98, %v3533
  %3535 = vmatprep.mubr.bf16.mxu0 0
  %3536 = vmatmul.mubr.bf16.gmra.mxu0 %v3242
  %v3537 = vpop.f32.mrf.mxu0
  %v3538 = vadd.f32 %v94, %v3537
  %v3539 = vpop.f32.mrf.mxu0
  %v3540 = vadd.f32 %v98, %v3539
  %v3541 = vpop.f32.mrf.mxu0
  %v3542 = vadd.f32 %v94, %v3541
  %v3543 = vpop.f32.mrf.mxu0
  %v3544 = vadd.f32 %v98, %v3543
  %3545 = vmatprep.mubr.bf16.mxu0 0
  %3546 = vmatmul.mubr.bf16.gmra.mxu0 %v3245
  %v3547 = vpop.f32.mrf.mxu0
  %v3548 = vadd.f32 %v94, %v3547
  %v3549 = vpop.f32.mrf.mxu0
  %v3550 = vadd.f32 %v98, %v3549
  %v3551 = vpop.f32.mrf.mxu0
  %v3552 = vadd.f32 %v94, %v3551
  %v3553 = vpop.f32.mrf.mxu0
  %v3554 = vadd.f32 %v98, %v3553
  %3555 = vmatprep.mubr.bf16.mxu0 0
  %3556 = vmatmul.mubr.bf16.gmra.mxu0 %v3248
  %v3557 = vpop.f32.mrf.mxu0
  %v3558 = vadd.f32 %v94, %v3557
  %v3559 = vpop.f32.mrf.mxu0
  %v3560 = vadd.f32 %v98, %v3559
  %v3561 = vpop.f32.mrf.mxu0
  %v3562 = vadd.f32 %v94, %v3561
  %v3563 = vpop.f32.mrf.mxu0
  %v3564 = vadd.f32 %v98, %v3563
  %3565 = vmatprep.mubr.bf16.mxu0 0
  %3566 = vmatmul.mubr.bf16.gmra.mxu0 %v3251
  %v3567 = vpop.f32.mrf.mxu0
  %v3568 = vadd.f32 %v94, %v3567
  %v3569 = vpop.f32.mrf.mxu0
  %v3570 = vadd.f32 %v98, %v3569
  %v3571 = vpop.f32.mrf.mxu0
  %v3572 = vadd.f32 %v94, %v3571
  %v3573 = vpop.f32.mrf.mxu0
  %v3574 = vadd.f32 %v98, %v3573
  %3575 = vmatprep.mubr.bf16.mxu0 0
  %3576 = vmatmul.mubr.bf16.gmra.mxu0 %v3254
  %v3577 = vpop.f32.mrf.mxu0
  %v3578 = vadd.f32 %v94, %v3577
  %v3579 = vpop.f32.mrf.mxu0
  %v3580 = vadd.f32 %v98, %v3579
  %v3581 = vpop.f32.mrf.mxu0
  %v3582 = vadd.f32 %v94, %v3581
  %v3583 = vpop.f32.mrf.mxu0
  %v3584 = vadd.f32 %v98, %v3583
  %3585 = vmatprep.mubr.bf16.mxu0 0
  %3586 = vmatmul.mubr.bf16.gmra.mxu0 %v3257
  %v3587 = vpop.f32.mrf.mxu0
  %v3588 = vadd.f32 %v94, %v3587
  %v3589 = vpop.f32.mrf.mxu0
  %v3590 = vadd.f32 %v98, %v3589
  %v3591 = vpop.f32.mrf.mxu0
  %v3592 = vadd.f32 %v94, %v3591
  %v3593 = vpop.f32.mrf.mxu0
  %v3594 = vadd.f32 %v98, %v3593
  %3595 = vmatprep.mubr.bf16.mxu0 0
  %3596 = vmatmul.mubr.bf16.gmra.mxu0 %v3260
  %v3597 = vpop.f32.mrf.mxu0
  %v3598 = vadd.f32 %v94, %v3597
  %v3599 = vpop.f32.mrf.mxu0
  %v3600 = vadd.f32 %v98, %v3599
  %v3601 = vpop.f32.mrf.mxu0
  %v3602 = vadd.f32 %v94, %v3601
  %v3603 = vpop.f32.mrf.mxu0
  %v3604 = vadd.f32 %v98, %v3603
  %3605 = vmatprep.mubr.bf16.mxu0 0
  %3606 = vmatmul.mubr.bf16.gmra.mxu0 %v3263
  %v3607 = vpop.f32.mrf.mxu0
  %v3608 = vadd.f32 %v94, %v3607
  %v3609 = vpop.f32.mrf.mxu0
  %v3610 = vadd.f32 %v98, %v3609
  %v3611 = vpop.f32.mrf.mxu0
  %v3612 = vadd.f32 %v94, %v3611
  %v3613 = vpop.f32.mrf.mxu0
  %v3614 = vadd.f32 %v98, %v3613
  %3615 = vmatprep.mubr.bf16.mxu0 0
  %3616 = vmatmul.mubr.bf16.gmra.mxu0 %v3266
  %v3617 = vpop.f32.mrf.mxu0
  %v3618 = vadd.f32 %v94, %v3617
  %v3619 = vpop.f32.mrf.mxu0
  %v3620 = vadd.f32 %v98, %v3619
  %v3621 = vpop.f32.mrf.mxu0
  %v3622 = vadd.f32 %v94, %v3621
  %v3623 = vpop.f32.mrf.mxu0
  %v3624 = vadd.f32 %v98, %v3623
  %3625 = vmatprep.mubr.bf16.mxu0 0
  %3626 = vmatmul.mubr.bf16.gmra.mxu0 %v3269
  %v3627 = vpop.f32.mrf.mxu0
  %v3628 = vadd.f32 %v94, %v3627
  %v3629 = vpop.f32.mrf.mxu0
  %v3630 = vadd.f32 %v98, %v3629
  %v3631 = vpop.f32.mrf.mxu0
  %v3632 = vadd.f32 %v94, %v3631
  %v3633 = vpop.f32.mrf.mxu0
  %v3634 = vadd.f32 %v98, %v3633
  %3635 = vmatprep.mubr.bf16.mxu0 0
  %3636 = vmatmul.mubr.bf16.gmra.mxu0 %v3272
  %v3637 = vpop.f32.mrf.mxu0
  %v3638 = vadd.f32 %v94, %v3637
  %v3639 = vpop.f32.mrf.mxu0
  %v3640 = vadd.f32 %v98, %v3639
  %v3641 = vpop.f32.mrf.mxu0
  %v3642 = vadd.f32 %v94, %v3641
  %v3643 = vpop.f32.mrf.mxu0
  %v3644 = vadd.f32 %v98, %v3643
  %3645 = vmatprep.mubr.bf16.mxu0 0
  %3646 = vmatmul.mubr.bf16.gmra.mxu0 %v3275
  %v3647 = vpop.f32.mrf.mxu0
  %v3648 = vadd.f32 %v94, %v3647
  %v3649 = vpop.f32.mrf.mxu0
  %v3650 = vadd.f32 %v98, %v3649
  %v3651 = vpop.f32.mrf.mxu0
  %v3652 = vadd.f32 %v94, %v3651
  %v3653 = vpop.f32.mrf.mxu0
  %v3654 = vadd.f32 %v98, %v3653
  %3655 = vmatprep.mubr.bf16.mxu0 0
  %3656 = vmatmul.mubr.bf16.gmra.mxu0 %v3278
  %v3657 = vpop.f32.mrf.mxu0
  %v3658 = vadd.f32 %v94, %v3657
  %v3659 = vpop.f32.mrf.mxu0
  %v3660 = vadd.f32 %v98, %v3659
  %v3661 = vpop.f32.mrf.mxu0
  %v3662 = vadd.f32 %v94, %v3661
  %v3663 = vpop.f32.mrf.mxu0
  %v3664 = vadd.f32 %v98, %v3663
  %3665 = vdwg.mxu0
  %v3666 = vmax.f32 %v3315, 0.0
  %v3667 = vmax.f32 %v3317, 0.0
  %v3668 = vmax.f32 %v3508, 0.0
  %v3669 = vmax.f32 %v3510, 0.0
  %v3670 = vmax.f32 %v3319, 0.0
  %v3671 = vmax.f32 %v3321, 0.0
  %v3672 = vmax.f32 %v3512, 0.0
  %v3673 = vmax.f32 %v3514, 0.0
  %v3674 = vmax.f32 %v3325, 0.0
  %v3675 = vmax.f32 %v3327, 0.0
  %v3676 = vmax.f32 %v3518, 0.0
  %v3677 = vmax.f32 %v3520, 0.0
  %v3678 = vmax.f32 %v3329, 0.0
  %v3679 = vmax.f32 %v3331, 0.0
  %v3680 = vmax.f32 %v3522, 0.0
  %v3681 = vmax.f32 %v3524, 0.0
  %v3682 = vmax.f32 %v3335, 0.0
  %v3683 = vmax.f32 %v3337, 0.0
  %v3684 = vmax.f32 %v3528, 0.0
  %v3685 = vmax.f32 %v3530, 0.0
  %v3686 = vmax.f32 %v3339, 0.0
  %v3687 = vmax.f32 %v3341, 0.0
  %v3688 = vmax.f32 %v3532, 0.0
  %v3689 = vmax.f32 %v3534, 0.0
  %v3690 = vmax.f32 %v3345, 0.0
  %v3691 = vmax.f32 %v3347, 0.0
  %v3692 = vmax.f32 %v3538, 0.0
  %v3693 = vmax.f32 %v3540, 0.0
  %v3694 = vmax.f32 %v3349, 0.0
  %v3695 = vmax.f32 %v3351, 0.0
  %v3696 = vmax.f32 %v3542, 0.0
  %v3697 = vmax.f32 %v3544, 0.0
  %v3698 = vmax.f32 %v3355, 0.0
  %v3699 = vmax.f32 %v3357, 0.0
  %v3700 = vmax.f32 %v3548, 0.0
  %v3701 = vmax.f32 %v3550, 0.0
  %v3702 = vmax.f32 %v3359, 0.0
  %v3703 = vmax.f32 %v3361, 0.0
  %v3704 = vmax.f32 %v3552, 0.0
  %v3705 = vmax.f32 %v3554, 0.0
  %v3706 = vmax.f32 %v3365, 0.0
  %v3707 = vmax.f32 %v3367, 0.0
  %v3708 = vmax.f32 %v3558, 0.0
  %v3709 = vmax.f32 %v3560, 0.0
  %v3710 = vmax.f32 %v3369, 0.0
  %v3711 = vmax.f32 %v3371, 0.0
  %v3712 = vmax.f32 %v3562, 0.0
  %v3713 = vmax.f32 %v3564, 0.0
  %v3714 = vmax.f32 %v3375, 0.0
  %v3715 = vmax.f32 %v3377, 0.0
  %v3716 = vmax.f32 %v3568, 0.0
  %v3717 = vmax.f32 %v3570, 0.0
  %v3718 = vmax.f32 %v3379, 0.0
  %v3719 = vmax.f32 %v3381, 0.0
  %v3720 = vmax.f32 %v3572, 0.0
  %v3721 = vmax.f32 %v3574, 0.0
  %v3722 = vmax.f32 %v3385, 0.0
  %v3723 = vmax.f32 %v3387, 0.0
  %v3724 = vmax.f32 %v3578, 0.0
  %v3725 = vmax.f32 %v3580, 0.0
  %v3726 = vmax.f32 %v3389, 0.0
  %v3727 = vmax.f32 %v3391, 0.0
  %v3728 = vmax.f32 %v3582, 0.0
  %v3729 = vmax.f32 %v3584, 0.0
  %v3730 = vmax.f32 %v3395, 0.0
  %v3731 = vmax.f32 %v3397, 0.0
  %v3732 = vmax.f32 %v3588, 0.0
  %v3733 = vmax.f32 %v3590, 0.0
  %v3734 = vmax.f32 %v3399, 0.0
  %v3735 = vmax.f32 %v3401, 0.0
  %v3736 = vmax.f32 %v3592, 0.0
  %v3737 = vmax.f32 %v3594, 0.0
  %v3738 = vmax.f32 %v3405, 0.0
  %v3739 = vmax.f32 %v3407, 0.0
  %v3740 = vmax.f32 %v3598, 0.0
  %v3741 = vmax.f32 %v3600, 0.0
  %v3742 = vmax.f32 %v3409, 0.0
  %v3743 = vmax.f32 %v3411, 0.0
  %v3744 = vmax.f32 %v3602, 0.0
  %v3745 = vmax.f32 %v3604, 0.0
  %v3746 = vmax.f32 %v3415, 0.0
  %v3747 = vmax.f32 %v3417, 0.0
  %v3748 = vmax.f32 %v3608, 0.0
  %v3749 = vmax.f32 %v3610, 0.0
  %v3750 = vmax.f32 %v3419, 0.0
  %v3751 = vmax.f32 %v3421, 0.0
  %v3752 = vmax.f32 %v3612, 0.0
  %v3753 = vmax.f32 %v3614, 0.0
  %v3754 = vmax.f32 %v3425, 0.0
  %v3755 = vmax.f32 %v3427, 0.0
  %v3756 = vmax.f32 %v3618, 0.0
  %v3757 = vmax.f32 %v3620, 0.0
  %v3758 = vmax.f32 %v3429, 0.0
  %v3759 = vmax.f32 %v3431, 0.0
  %v3760 = vmax.f32 %v3622, 0.0
  %v3761 = vmax.f32 %v3624, 0.0
  %v3762 = vmax.f32 %v3435, 0.0
  %v3763 = vmax.f32 %v3437, 0.0
  %v3764 = vmax.f32 %v3628, 0.0
  %v3765 = vmax.f32 %v3630, 0.0
  %v3766 = vmax.f32 %v3439, 0.0
  %v3767 = vmax.f32 %v3441, 0.0
  %v3768 = vmax.f32 %v3632, 0.0
  %v3769 = vmax.f32 %v3634, 0.0
  %v3770 = vmax.f32 %v3445, 0.0
  %v3771 = vmax.f32 %v3447, 0.0
  %v3772 = vmax.f32 %v3638, 0.0
  %v3773 = vmax.f32 %v3640, 0.0
  %v3774 = vmax.f32 %v3449, 0.0
  %v3775 = vmax.f32 %v3451, 0.0
  %v3776 = vmax.f32 %v3642, 0.0
  %v3777 = vmax.f32 %v3644, 0.0
  %v3778 = vmax.f32 %v3455, 0.0
  %v3779 = vmax.f32 %v3457, 0.0
  %v3780 = vmax.f32 %v3648, 0.0
  %v3781 = vmax.f32 %v3650, 0.0
  %v3782 = vmax.f32 %v3459, 0.0
  %v3783 = vmax.f32 %v3461, 0.0
  %v3784 = vmax.f32 %v3652, 0.0
  %v3785 = vmax.f32 %v3654, 0.0
  %v3786 = vmax.f32 %v3465, 0.0
  %v3787 = vmax.f32 %v3467, 0.0
  %v3788 = vmax.f32 %v3658, 0.0
  %v3789 = vmax.f32 %v3660, 0.0
  %v3790 = vmax.f32 %v3469, 0.0
  %v3791 = vmax.f32 %v3471, 0.0
  %v3792 = vmax.f32 %v3662, 0.0
  %v3793 = vmax.f32 %v3664, 0.0
  %v3794 = vadd.f32 %v3666, %v3670
  %v3795 = vadd.f32 %v3794, %v3674
  %v3796 = vadd.f32 %v3795, %v3678
  %v3797 = vrot.slane %v3796, 4
  %v3798 = vadd.f32 %v3796, %v3797
  %v3799 = vrot.slane %v3798, 2
  %v3800 = vadd.f32 %v3798, %v3799
  %v3801 = vrot.slane %v3800, 1
  %v3802 = vadd.f32 %v3800, %v3801
  %v3803 = vadd.f32 %v3667, %v3671
  %v3804 = vadd.f32 %v3803, %v3675
  %v3805 = vadd.f32 %v3804, %v3679
  %v3806 = vrot.slane %v3805, 4
  %v3807 = vadd.f32 %v3805, %v3806
  %v3808 = vrot.slane %v3807, 2
  %v3809 = vadd.f32 %v3807, %v3808
  %v3810 = vrot.slane %v3809, 1
  %v3811 = vadd.f32 %v3809, %v3810
  %v3812 = vadd.f32 %v3668, %v3672
  %v3813 = vadd.f32 %v3812, %v3676
  %v3814 = vadd.f32 %v3813, %v3680
  %v3815 = vrot.slane %v3814, 4
  %v3816 = vadd.f32 %v3814, %v3815
  %v3817 = vrot.slane %v3816, 2
  %v3818 = vadd.f32 %v3816, %v3817
  %v3819 = vrot.slane %v3818, 1
  %v3820 = vadd.f32 %v3818, %v3819
  %v3821 = vadd.f32 %v3669, %v3673
  %v3822 = vadd.f32 %v3821, %v3677
  %v3823 = vadd.f32 %v3822, %v3681
  %v3824 = vrot.slane %v3823, 4
  %v3825 = vadd.f32 %v3823, %v3824
  %v3826 = vrot.slane %v3825, 2
  %v3827 = vadd.f32 %v3825, %v3826
  %v3828 = vrot.slane %v3827, 1
  %v3829 = vadd.f32 %v3827, %v3828
  %v3830 = vadd.f32 %v3682, %v3686
  %v3831 = vadd.f32 %v3830, %v3690
  %v3832 = vadd.f32 %v3831, %v3694
  %v3833 = vrot.slane %v3832, 4
  %v3834 = vadd.f32 %v3832, %v3833
  %v3835 = vrot.slane %v3834, 2
  %v3836 = vadd.f32 %v3834, %v3835
  %v3837 = vrot.slane %v3836, 1
  %v3838 = vadd.f32 %v3836, %v3837
  %v3839 = vadd.f32 %v3683, %v3687
  %v3840 = vadd.f32 %v3839, %v3691
  %v3841 = vadd.f32 %v3840, %v3695
  %v3842 = vrot.slane %v3841, 4
  %v3843 = vadd.f32 %v3841, %v3842
  %v3844 = vrot.slane %v3843, 2
  %v3845 = vadd.f32 %v3843, %v3844
  %v3846 = vrot.slane %v3845, 1
  %v3847 = vadd.f32 %v3845, %v3846
  %v3848 = vadd.f32 %v3684, %v3688
  %v3849 = vadd.f32 %v3848, %v3692
  %v3850 = vadd.f32 %v3849, %v3696
  %v3851 = vrot.slane %v3850, 4
  %v3852 = vadd.f32 %v3850, %v3851
  %v3853 = vrot.slane %v3852, 2
  %v3854 = vadd.f32 %v3852, %v3853
  %v3855 = vrot.slane %v3854, 1
  %v3856 = vadd.f32 %v3854, %v3855
  %v3857 = vadd.f32 %v3685, %v3689
  %v3858 = vadd.f32 %v3857, %v3693
  %v3859 = vadd.f32 %v3858, %v3697
  %v3860 = vrot.slane %v3859, 4
  %v3861 = vadd.f32 %v3859, %v3860
  %v3862 = vrot.slane %v3861, 2
  %v3863 = vadd.f32 %v3861, %v3862
  %v3864 = vrot.slane %v3863, 1
  %v3865 = vadd.f32 %v3863, %v3864
  %v3866 = vadd.f32 %v3698, %v3702
  %v3867 = vadd.f32 %v3866, %v3706
  %v3868 = vadd.f32 %v3867, %v3710
  %v3869 = vrot.slane %v3868, 4
  %v3870 = vadd.f32 %v3868, %v3869
  %v3871 = vrot.slane %v3870, 2
  %v3872 = vadd.f32 %v3870, %v3871
  %v3873 = vrot.slane %v3872, 1
  %v3874 = vadd.f32 %v3872, %v3873
  %v3875 = vadd.f32 %v3699, %v3703
  %v3876 = vadd.f32 %v3875, %v3707
  %v3877 = vadd.f32 %v3876, %v3711
  %v3878 = vrot.slane %v3877, 4
  %v3879 = vadd.f32 %v3877, %v3878
  %v3880 = vrot.slane %v3879, 2
  %v3881 = vadd.f32 %v3879, %v3880
  %v3882 = vrot.slane %v3881, 1
  %v3883 = vadd.f32 %v3881, %v3882
  %v3884 = vadd.f32 %v3700, %v3704
  %v3885 = vadd.f32 %v3884, %v3708
  %v3886 = vadd.f32 %v3885, %v3712
  %v3887 = vrot.slane %v3886, 4
  %v3888 = vadd.f32 %v3886, %v3887
  %v3889 = vrot.slane %v3888, 2
  %v3890 = vadd.f32 %v3888, %v3889
  %v3891 = vrot.slane %v3890, 1
  %v3892 = vadd.f32 %v3890, %v3891
  %v3893 = vadd.f32 %v3701, %v3705
  %v3894 = vadd.f32 %v3893, %v3709
  %v3895 = vadd.f32 %v3894, %v3713
  %v3896 = vrot.slane %v3895, 4
  %v3897 = vadd.f32 %v3895, %v3896
  %v3898 = vrot.slane %v3897, 2
  %v3899 = vadd.f32 %v3897, %v3898
  %v3900 = vrot.slane %v3899, 1
  %v3901 = vadd.f32 %v3899, %v3900
  %v3902 = vadd.f32 %v3714, %v3718
  %v3903 = vadd.f32 %v3902, %v3722
  %v3904 = vadd.f32 %v3903, %v3726
  %v3905 = vrot.slane %v3904, 4
  %v3906 = vadd.f32 %v3904, %v3905
  %v3907 = vrot.slane %v3906, 2
  %v3908 = vadd.f32 %v3906, %v3907
  %v3909 = vrot.slane %v3908, 1
  %v3910 = vadd.f32 %v3908, %v3909
  %v3911 = vadd.f32 %v3715, %v3719
  %v3912 = vadd.f32 %v3911, %v3723
  %v3913 = vadd.f32 %v3912, %v3727
  %v3914 = vrot.slane %v3913, 4
  %v3915 = vadd.f32 %v3913, %v3914
  %v3916 = vrot.slane %v3915, 2
  %v3917 = vadd.f32 %v3915, %v3916
  %v3918 = vrot.slane %v3917, 1
  %v3919 = vadd.f32 %v3917, %v3918
  %v3920 = vadd.f32 %v3716, %v3720
  %v3921 = vadd.f32 %v3920, %v3724
  %v3922 = vadd.f32 %v3921, %v3728
  %v3923 = vrot.slane %v3922, 4
  %v3924 = vadd.f32 %v3922, %v3923
  %v3925 = vrot.slane %v3924, 2
  %v3926 = vadd.f32 %v3924, %v3925
  %v3927 = vrot.slane %v3926, 1
  %v3928 = vadd.f32 %v3926, %v3927
  %v3929 = vadd.f32 %v3717, %v3721
  %v3930 = vadd.f32 %v3929, %v3725
  %v3931 = vadd.f32 %v3930, %v3729
  %v3932 = vrot.slane %v3931, 4
  %v3933 = vadd.f32 %v3931, %v3932
  %v3934 = vrot.slane %v3933, 2
  %v3935 = vadd.f32 %v3933, %v3934
  %v3936 = vrot.slane %v3935, 1
  %v3937 = vadd.f32 %v3935, %v3936
  %v3938 = vadd.f32 %v3730, %v3734
  %v3939 = vadd.f32 %v3938, %v3738
  %v3940 = vadd.f32 %v3939, %v3742
  %v3941 = vrot.slane %v3940, 4
  %v3942 = vadd.f32 %v3940, %v3941
  %v3943 = vrot.slane %v3942, 2
  %v3944 = vadd.f32 %v3942, %v3943
  %v3945 = vrot.slane %v3944, 1
  %v3946 = vadd.f32 %v3944, %v3945
  %v3947 = vadd.f32 %v3731, %v3735
  %v3948 = vadd.f32 %v3947, %v3739
  %v3949 = vadd.f32 %v3948, %v3743
  %v3950 = vrot.slane %v3949, 4
  %v3951 = vadd.f32 %v3949, %v3950
  %v3952 = vrot.slane %v3951, 2
  %v3953 = vadd.f32 %v3951, %v3952
  %v3954 = vrot.slane %v3953, 1
  %v3955 = vadd.f32 %v3953, %v3954
  %v3956 = vadd.f32 %v3732, %v3736
  %v3957 = vadd.f32 %v3956, %v3740
  %v3958 = vadd.f32 %v3957, %v3744
  %v3959 = vrot.slane %v3958, 4
  %v3960 = vadd.f32 %v3958, %v3959
  %v3961 = vrot.slane %v3960, 2
  %v3962 = vadd.f32 %v3960, %v3961
  %v3963 = vrot.slane %v3962, 1
  %v3964 = vadd.f32 %v3962, %v3963
  %v3965 = vadd.f32 %v3733, %v3737
  %v3966 = vadd.f32 %v3965, %v3741
  %v3967 = vadd.f32 %v3966, %v3745
  %v3968 = vrot.slane %v3967, 4
  %v3969 = vadd.f32 %v3967, %v3968
  %v3970 = vrot.slane %v3969, 2
  %v3971 = vadd.f32 %v3969, %v3970
  %v3972 = vrot.slane %v3971, 1
  %v3973 = vadd.f32 %v3971, %v3972
  %v3974 = vadd.f32 %v3746, %v3750
  %v3975 = vadd.f32 %v3974, %v3754
  %v3976 = vadd.f32 %v3975, %v3758
  %v3977 = vrot.slane %v3976, 4
  %v3978 = vadd.f32 %v3976, %v3977
  %v3979 = vrot.slane %v3978, 2
  %v3980 = vadd.f32 %v3978, %v3979
  %v3981 = vrot.slane %v3980, 1
  %v3982 = vadd.f32 %v3980, %v3981
  %v3983 = vadd.f32 %v3747, %v3751
  %v3984 = vadd.f32 %v3983, %v3755
  %v3985 = vadd.f32 %v3984, %v3759
  %v3986 = vrot.slane %v3985, 4
  %v3987 = vadd.f32 %v3985, %v3986
  %v3988 = vrot.slane %v3987, 2
  %v3989 = vadd.f32 %v3987, %v3988
  %v3990 = vrot.slane %v3989, 1
  %v3991 = vadd.f32 %v3989, %v3990
  %v3992 = vadd.f32 %v3748, %v3752
  %v3993 = vadd.f32 %v3992, %v3756
  %v3994 = vadd.f32 %v3993, %v3760
  %v3995 = vrot.slane %v3994, 4
  %v3996 = vadd.f32 %v3994, %v3995
  %v3997 = vrot.slane %v3996, 2
  %v3998 = vadd.f32 %v3996, %v3997
  %v3999 = vrot.slane %v3998, 1
  %v4000 = vadd.f32 %v3998, %v3999
  %v4001 = vadd.f32 %v3749, %v3753
  %v4002 = vadd.f32 %v4001, %v3757
  %v4003 = vadd.f32 %v4002, %v3761
  %v4004 = vrot.slane %v4003, 4
  %v4005 = vadd.f32 %v4003, %v4004
  %v4006 = vrot.slane %v4005, 2
  %v4007 = vadd.f32 %v4005, %v4006
  %v4008 = vrot.slane %v4007, 1
  %v4009 = vadd.f32 %v4007, %v4008
  %v4010 = vadd.f32 %v3762, %v3766
  %v4011 = vadd.f32 %v4010, %v3770
  %v4012 = vadd.f32 %v4011, %v3774
  %v4013 = vrot.slane %v4012, 4
  %v4014 = vadd.f32 %v4012, %v4013
  %v4015 = vrot.slane %v4014, 2
  %v4016 = vadd.f32 %v4014, %v4015
  %v4017 = vrot.slane %v4016, 1
  %v4018 = vadd.f32 %v4016, %v4017
  %v4019 = vadd.f32 %v3763, %v3767
  %v4020 = vadd.f32 %v4019, %v3771
  %v4021 = vadd.f32 %v4020, %v3775
  %v4022 = vrot.slane %v4021, 4
  %v4023 = vadd.f32 %v4021, %v4022
  %v4024 = vrot.slane %v4023, 2
  %v4025 = vadd.f32 %v4023, %v4024
  %v4026 = vrot.slane %v4025, 1
  %v4027 = vadd.f32 %v4025, %v4026
  %v4028 = vadd.f32 %v3764, %v3768
  %v4029 = vadd.f32 %v4028, %v3772
  %v4030 = vadd.f32 %v4029, %v3776
  %v4031 = vrot.slane %v4030, 4
  %v4032 = vadd.f32 %v4030, %v4031
  %v4033 = vrot.slane %v4032, 2
  %v4034 = vadd.f32 %v4032, %v4033
  %v4035 = vrot.slane %v4034, 1
  %v4036 = vadd.f32 %v4034, %v4035
  %v4037 = vadd.f32 %v3765, %v3769
  %v4038 = vadd.f32 %v4037, %v3773
  %v4039 = vadd.f32 %v4038, %v3777
  %v4040 = vrot.slane %v4039, 4
  %v4041 = vadd.f32 %v4039, %v4040
  %v4042 = vrot.slane %v4041, 2
  %v4043 = vadd.f32 %v4041, %v4042
  %v4044 = vrot.slane %v4043, 1
  %v4045 = vadd.f32 %v4043, %v4044
  %v4046 = vadd.f32 %v3778, %v3782
  %v4047 = vadd.f32 %v4046, %v3786
  %v4048 = vadd.f32 %v4047, %v3790
  %v4049 = vrot.slane %v4048, 4
  %v4050 = vadd.f32 %v4048, %v4049
  %v4051 = vrot.slane %v4050, 2
  %v4052 = vadd.f32 %v4050, %v4051
  %v4053 = vrot.slane %v4052, 1
  %v4054 = vadd.f32 %v4052, %v4053
  %v4055 = vadd.f32 %v3779, %v3783
  %v4056 = vadd.f32 %v4055, %v3787
  %v4057 = vadd.f32 %v4056, %v3791
  %v4058 = vrot.slane %v4057, 4
  %v4059 = vadd.f32 %v4057, %v4058
  %v4060 = vrot.slane %v4059, 2
  %v4061 = vadd.f32 %v4059, %v4060
  %v4062 = vrot.slane %v4061, 1
  %v4063 = vadd.f32 %v4061, %v4062
  %v4064 = vadd.f32 %v3780, %v3784
  %v4065 = vadd.f32 %v4064, %v3788
  %v4066 = vadd.f32 %v4065, %v3792
  %v4067 = vrot.slane %v4066, 4
  %v4068 = vadd.f32 %v4066, %v4067
  %v4069 = vrot.slane %v4068, 2
  %v4070 = vadd.f32 %v4068, %v4069
  %v4071 = vrot.slane %v4070, 1
  %v4072 = vadd.f32 %v4070, %v4071
  %v4073 = vadd.f32 %v3781, %v3785
  %v4074 = vadd.f32 %v4073, %v3789
  %v4075 = vadd.f32 %v4074, %v3793
  %v4076 = vrot.slane %v4075, 4
  %v4077 = vadd.f32 %v4075, %v4076
  %v4078 = vrot.slane %v4077, 2
  %v4079 = vadd.f32 %v4077, %v4078
  %v4080 = vrot.slane %v4079, 1
  %v4081 = vadd.f32 %v4079, %v4080
  %v4082 = vadd.f32 %v3087, %v3802
  %v4083 = vadd.f32 %v3088, %v3811
  %v4084 = vadd.f32 %v3089, %v3820
  %v4085 = vadd.f32 %v3090, %v3829
  %v4086 = vadd.f32 %v3091, %v3838
  %v4087 = vadd.f32 %v3092, %v3847
  %v4088 = vadd.f32 %v3093, %v3856
  %v4089 = vadd.f32 %v3094, %v3865
  %v4090 = vadd.f32 %v3095, %v3874
  %v4091 = vadd.f32 %v3096, %v3883
  %v4092 = vadd.f32 %v3097, %v3892
  %v4093 = vadd.f32 %v3098, %v3901
  %v4094 = vadd.f32 %v3099, %v3910
  %v4095 = vadd.f32 %v3100, %v3919
  %v4096 = vadd.f32 %v3101, %v3928
  %v4097 = vadd.f32 %v3102, %v3937
  %v4098 = vadd.f32 %v3103, %v3946
  %v4099 = vadd.f32 %v3104, %v3955
  %v4100 = vadd.f32 %v3105, %v3964
  %v4101 = vadd.f32 %v3106, %v3973
  %v4102 = vadd.f32 %v3107, %v3982
  %v4103 = vadd.f32 %v3108, %v3991
  %v4104 = vadd.f32 %v3109, %v4000
  %v4105 = vadd.f32 %v3110, %v4009
  %v4106 = vadd.f32 %v3111, %v4018
  %v4107 = vadd.f32 %v3112, %v4027
  %v4108 = vadd.f32 %v3113, %v4036
  %v4109 = vadd.f32 %v3114, %v4045
  %v4110 = vadd.f32 %v3115, %v4054
  %v4111 = vadd.f32 %v3116, %v4063
  %v4112 = vadd.f32 %v3117, %v4072
  %v4113 = vadd.f32 %v3118, %v4081
  %s4114 = scalar_lea.vmem %s0, 64
  %v4115 = vld [vmem:[%s4114] sm:$0xf]
  %v4116 = vld [vmem:[%s4114 + $0x4] sm:$0xf]
  %v4117 = vld [vmem:[%s4114 + $0x8] sm:$0xf]
  %v4118 = vld [vmem:[%s4114 + $0xc] sm:$0xf]
  %v4119 = vld [vmem:[%s4114 + $0x80] sm:$0xf]
  %v4120 = vld [vmem:[%s4114 + $0x84] sm:$0xf]
  %v4121 = vld [vmem:[%s4114 + $0x88] sm:$0xf]
  %v4122 = vld [vmem:[%s4114 + $0x8c] sm:$0xf]
  %v4123 = vld [vmem:[%s4114 + $0x100] sm:$0xf]
  %v4124 = vld [vmem:[%s4114 + $0x104] sm:$0xf]
  %v4125 = vld [vmem:[%s4114 + $0x108] sm:$0xf]
  %v4126 = vld [vmem:[%s4114 + $0x10c] sm:$0xf]
  %v4127 = vld [vmem:[%s4114 + $0x180] sm:$0xf]
  %v4128 = vld [vmem:[%s4114 + $0x184] sm:$0xf]
  %v4129 = vld [vmem:[%s4114 + $0x188] sm:$0xf]
  %v4130 = vld [vmem:[%s4114 + $0x18c] sm:$0xf]
  %v4131 = vld [vmem:[%s4114 + $0x200] sm:$0xf]
  %v4132 = vld [vmem:[%s4114 + $0x204] sm:$0xf]
  %v4133 = vld [vmem:[%s4114 + $0x208] sm:$0xf]
  %v4134 = vld [vmem:[%s4114 + $0x20c] sm:$0xf]
  %v4135 = vld [vmem:[%s4114 + $0x280] sm:$0xf]
  %v4136 = vld [vmem:[%s4114 + $0x284] sm:$0xf]
  %v4137 = vld [vmem:[%s4114 + $0x288] sm:$0xf]
  %v4138 = vld [vmem:[%s4114 + $0x28c] sm:$0xf]
  %v4139 = vld [vmem:[%s4114 + $0x300] sm:$0xf]
  %v4140 = vld [vmem:[%s4114 + $0x304] sm:$0xf]
  %v4141 = vld [vmem:[%s4114 + $0x308] sm:$0xf]
  %v4142 = vld [vmem:[%s4114 + $0x30c] sm:$0xf]
  %v4143 = vld [vmem:[%s4114 + $0x380] sm:$0xf]
  %v4144 = vld [vmem:[%s4114 + $0x384] sm:$0xf]
  %v4145 = vld [vmem:[%s4114 + $0x388] sm:$0xf]
  %v4146 = vld [vmem:[%s4114 + $0x38c] sm:$0xf]
  %v4179 = vunpack.c.l.b16 %v4115
  %v4180 = vunpack.c.l.b16 %v4116
  %v4181 = vunpack.c.l.b16 %v4117
  %v4182 = vunpack.c.l.b16 %v4118
  %v4183 = vunpack.c.l.b16 %v4119
  %v4184 = vunpack.c.l.b16 %v4120
  %v4185 = vunpack.c.l.b16 %v4121
  %v4186 = vunpack.c.l.b16 %v4122
  %v4187 = vunpack.c.l.b16 %v4123
  %v4188 = vunpack.c.l.b16 %v4124
  %v4189 = vunpack.c.l.b16 %v4125
  %v4190 = vunpack.c.l.b16 %v4126
  %v4191 = vunpack.c.l.b16 %v4127
  %v4192 = vunpack.c.l.b16 %v4128
  %v4193 = vunpack.c.l.b16 %v4129
  %v4194 = vunpack.c.l.b16 %v4130
  %v4195 = vunpack.c.l.b16 %v4131
  %v4196 = vunpack.c.l.b16 %v4132
  %v4197 = vunpack.c.l.b16 %v4133
  %v4198 = vunpack.c.l.b16 %v4134
  %v4199 = vunpack.c.l.b16 %v4135
  %v4200 = vunpack.c.l.b16 %v4136
  %v4201 = vunpack.c.l.b16 %v4137
  %v4202 = vunpack.c.l.b16 %v4138
  %v4203 = vunpack.c.l.b16 %v4139
  %v4204 = vunpack.c.l.b16 %v4140
  %v4205 = vunpack.c.l.b16 %v4141
  %v4206 = vunpack.c.l.b16 %v4142
  %v4207 = vunpack.c.l.b16 %v4143
  %v4208 = vunpack.c.l.b16 %v4144
  %v4209 = vunpack.c.l.b16 %v4145
  %v4210 = vunpack.c.l.b16 %v4146
  %v4211 = vpack.c.b16 %v4180, %v4179
  %v4212 = vpack.c.b16 %v4182, %v4181
  %v4213 = vpack.c.b16 %v4184, %v4183
  %v4214 = vpack.c.b16 %v4186, %v4185
  %v4215 = vpack.c.b16 %v4188, %v4187
  %v4216 = vpack.c.b16 %v4190, %v4189
  %v4217 = vpack.c.b16 %v4192, %v4191
  %v4218 = vpack.c.b16 %v4194, %v4193
  %v4219 = vpack.c.b16 %v4196, %v4195
  %v4220 = vpack.c.b16 %v4198, %v4197
  %v4221 = vpack.c.b16 %v4200, %v4199
  %v4222 = vpack.c.b16 %v4202, %v4201
  %v4223 = vpack.c.b16 %v4204, %v4203
  %v4224 = vpack.c.b16 %v4206, %v4205
  %v4225 = vpack.c.b16 %v4208, %v4207
  %v4226 = vpack.c.b16 %v4210, %v4209
  %v4228 = vsel %vm233, %v4211, 0
  %v4231 = vsel %vm233, %v4212, 0
  %v4234 = vsel %vm233, %v4213, 0
  %v4237 = vsel %vm233, %v4214, 0
  %v4240 = vsel %vm233, %v4215, 0
  %v4243 = vsel %vm233, %v4216, 0
  %v4246 = vsel %vm233, %v4217, 0
  %v4249 = vsel %vm233, %v4218, 0
  %v4252 = vsel %vm233, %v4219, 0
  %v4255 = vsel %vm233, %v4220, 0
  %v4258 = vsel %vm233, %v4221, 0
  %v4261 = vsel %vm233, %v4222, 0
  %v4264 = vsel %vm233, %v4223, 0
  %v4267 = vsel %vm233, %v4224, 0
  %v4270 = vsel %vm233, %v4225, 0
  %v4273 = vsel %vm233, %v4226, 0
  %4275 = vmatprep.subr.bf16.mxu0 0
  %4276 = vmatpush1.bf16.msra.mxu0 0
  %4277 = vmatprep.subr.bf16.mxu0 0
  %4278 = vmatpush1.bf16.msra.mxu0 0
  %4279 = vmatprep.subr.bf16.mxu0 0
  %4280 = vmatpush1.bf16.msra.mxu0 0
  %4281 = vmatprep.subr.bf16.mxu0 0
  %4282 = vmatpush1.bf16.msra.mxu0 0
  %4283 = vmatprep.subr.bf16.mxu0 0
  %4284 = vmatpush1.bf16.msra.mxu0 0
  %4285 = vmatprep.subr.bf16.mxu0 %v287
  %4286 = vmatpush1.bf16.msra.mxu0 %v284
  %4287 = vmatprep.subr.bf16.mxu0 %v218
  %4288 = vmatpush1.bf16.msra.mxu0 %v217
  %4289 = vmatprep.subr.bf16.mxu0 %v214
  %4290 = vmatpush1.bf16.msra.mxu0 %v213
  %4291 = vmatprep.subr.bf16.mxu0 0
  %4292 = vmatpush2.bf16.msra.mxu0 0
  %4293 = vmatprep.subr.bf16.mxu0 0
  %4294 = vmatpush2.bf16.msra.mxu0 0
  %4295 = vmatprep.subr.bf16.mxu0 0
  %4296 = vmatpush2.bf16.msra.mxu0 0
  %4297 = vmatprep.subr.bf16.mxu0 0
  %4298 = vmatpush2.bf16.msra.mxu0 0
  %4299 = vmatprep.subr.bf16.mxu0 0
  %4300 = vmatpush2.bf16.msra.mxu0 0
  %4301 = vmatprep.subr.bf16.mxu0 0
  %4302 = vmatpush2.bf16.msra.mxu0 0
  %4303 = vmatprep.subr.bf16.mxu0 0
  %4304 = vmatpush2.bf16.msra.mxu0 0
  %4305 = vmatprep.subr.bf16.mxu0 0
  %4306 = vmatpush2.bf16.msra.mxu0 0
  %4307 = vmatprep.mubr.bf16.mxu0 0
  %4308 = vmatmul.mubr.bf16.gmra.mxu0 %v4228
  %v4309 = vpop.f32.mrf.mxu0
  %v4310 = vadd.f32 %v86, %v4309
  %v4311 = vpop.f32.mrf.mxu0
  %v4312 = vadd.f32 %v90, %v4311
  %v4313 = vpop.f32.mrf.mxu0
  %v4314 = vadd.f32 %v86, %v4313
  %v4315 = vpop.f32.mrf.mxu0
  %v4316 = vadd.f32 %v90, %v4315
  %4317 = vmatprep.mubr.bf16.mxu0 0
  %4318 = vmatmul.mubr.bf16.gmra.mxu0 %v4231
  %v4319 = vpop.f32.mrf.mxu0
  %v4320 = vadd.f32 %v86, %v4319
  %v4321 = vpop.f32.mrf.mxu0
  %v4322 = vadd.f32 %v90, %v4321
  %v4323 = vpop.f32.mrf.mxu0
  %v4324 = vadd.f32 %v86, %v4323
  %v4325 = vpop.f32.mrf.mxu0
  %v4326 = vadd.f32 %v90, %v4325
  %4327 = vmatprep.mubr.bf16.mxu0 0
  %4328 = vmatmul.mubr.bf16.gmra.mxu0 %v4234
  %v4329 = vpop.f32.mrf.mxu0
  %v4330 = vadd.f32 %v86, %v4329
  %v4331 = vpop.f32.mrf.mxu0
  %v4332 = vadd.f32 %v90, %v4331
  %v4333 = vpop.f32.mrf.mxu0
  %v4334 = vadd.f32 %v86, %v4333
  %v4335 = vpop.f32.mrf.mxu0
  %v4336 = vadd.f32 %v90, %v4335
  %4337 = vmatprep.mubr.bf16.mxu0 0
  %4338 = vmatmul.mubr.bf16.gmra.mxu0 %v4237
  %v4339 = vpop.f32.mrf.mxu0
  %v4340 = vadd.f32 %v86, %v4339
  %v4341 = vpop.f32.mrf.mxu0
  %v4342 = vadd.f32 %v90, %v4341
  %v4343 = vpop.f32.mrf.mxu0
  %v4344 = vadd.f32 %v86, %v4343
  %v4345 = vpop.f32.mrf.mxu0
  %v4346 = vadd.f32 %v90, %v4345
  %4347 = vmatprep.mubr.bf16.mxu0 0
  %4348 = vmatmul.mubr.bf16.gmra.mxu0 %v4240
  %v4349 = vpop.f32.mrf.mxu0
  %v4350 = vadd.f32 %v86, %v4349
  %v4351 = vpop.f32.mrf.mxu0
  %v4352 = vadd.f32 %v90, %v4351
  %v4353 = vpop.f32.mrf.mxu0
  %v4354 = vadd.f32 %v86, %v4353
  %v4355 = vpop.f32.mrf.mxu0
  %v4356 = vadd.f32 %v90, %v4355
  %4357 = vmatprep.mubr.bf16.mxu0 0
  %4358 = vmatmul.mubr.bf16.gmra.mxu0 %v4243
  %v4359 = vpop.f32.mrf.mxu0
  %v4360 = vadd.f32 %v86, %v4359
  %v4361 = vpop.f32.mrf.mxu0
  %v4362 = vadd.f32 %v90, %v4361
  %v4363 = vpop.f32.mrf.mxu0
  %v4364 = vadd.f32 %v86, %v4363
  %v4365 = vpop.f32.mrf.mxu0
  %v4366 = vadd.f32 %v90, %v4365
  %4367 = vmatprep.mubr.bf16.mxu0 0
  %4368 = vmatmul.mubr.bf16.gmra.mxu0 %v4246
  %v4369 = vpop.f32.mrf.mxu0
  %v4370 = vadd.f32 %v86, %v4369
  %v4371 = vpop.f32.mrf.mxu0
  %v4372 = vadd.f32 %v90, %v4371
  %v4373 = vpop.f32.mrf.mxu0
  %v4374 = vadd.f32 %v86, %v4373
  %v4375 = vpop.f32.mrf.mxu0
  %v4376 = vadd.f32 %v90, %v4375
  %4377 = vmatprep.mubr.bf16.mxu0 0
  %4378 = vmatmul.mubr.bf16.gmra.mxu0 %v4249
  %v4379 = vpop.f32.mrf.mxu0
  %v4380 = vadd.f32 %v86, %v4379
  %v4381 = vpop.f32.mrf.mxu0
  %v4382 = vadd.f32 %v90, %v4381
  %v4383 = vpop.f32.mrf.mxu0
  %v4384 = vadd.f32 %v86, %v4383
  %v4385 = vpop.f32.mrf.mxu0
  %v4386 = vadd.f32 %v90, %v4385
  %4387 = vmatprep.mubr.bf16.mxu0 0
  %4388 = vmatmul.mubr.bf16.gmra.mxu0 %v4252
  %v4389 = vpop.f32.mrf.mxu0
  %v4390 = vadd.f32 %v86, %v4389
  %v4391 = vpop.f32.mrf.mxu0
  %v4392 = vadd.f32 %v90, %v4391
  %v4393 = vpop.f32.mrf.mxu0
  %v4394 = vadd.f32 %v86, %v4393
  %v4395 = vpop.f32.mrf.mxu0
  %v4396 = vadd.f32 %v90, %v4395
  %4397 = vmatprep.mubr.bf16.mxu0 0
  %4398 = vmatmul.mubr.bf16.gmra.mxu0 %v4255
  %v4399 = vpop.f32.mrf.mxu0
  %v4400 = vadd.f32 %v86, %v4399
  %v4401 = vpop.f32.mrf.mxu0
  %v4402 = vadd.f32 %v90, %v4401
  %v4403 = vpop.f32.mrf.mxu0
  %v4404 = vadd.f32 %v86, %v4403
  %v4405 = vpop.f32.mrf.mxu0
  %v4406 = vadd.f32 %v90, %v4405
  %4407 = vmatprep.mubr.bf16.mxu0 0
  %4408 = vmatmul.mubr.bf16.gmra.mxu0 %v4258
  %v4409 = vpop.f32.mrf.mxu0
  %v4410 = vadd.f32 %v86, %v4409
  %v4411 = vpop.f32.mrf.mxu0
  %v4412 = vadd.f32 %v90, %v4411
  %v4413 = vpop.f32.mrf.mxu0
  %v4414 = vadd.f32 %v86, %v4413
  %v4415 = vpop.f32.mrf.mxu0
  %v4416 = vadd.f32 %v90, %v4415
  %4417 = vmatprep.mubr.bf16.mxu0 0
  %4418 = vmatmul.mubr.bf16.gmra.mxu0 %v4261
  %v4419 = vpop.f32.mrf.mxu0
  %v4420 = vadd.f32 %v86, %v4419
  %v4421 = vpop.f32.mrf.mxu0
  %v4422 = vadd.f32 %v90, %v4421
  %v4423 = vpop.f32.mrf.mxu0
  %v4424 = vadd.f32 %v86, %v4423
  %v4425 = vpop.f32.mrf.mxu0
  %v4426 = vadd.f32 %v90, %v4425
  %4427 = vmatprep.mubr.bf16.mxu0 0
  %4428 = vmatmul.mubr.bf16.gmra.mxu0 %v4264
  %v4429 = vpop.f32.mrf.mxu0
  %v4430 = vadd.f32 %v86, %v4429
  %v4431 = vpop.f32.mrf.mxu0
  %v4432 = vadd.f32 %v90, %v4431
  %v4433 = vpop.f32.mrf.mxu0
  %v4434 = vadd.f32 %v86, %v4433
  %v4435 = vpop.f32.mrf.mxu0
  %v4436 = vadd.f32 %v90, %v4435
  %4437 = vmatprep.mubr.bf16.mxu0 0
  %4438 = vmatmul.mubr.bf16.gmra.mxu0 %v4267
  %v4439 = vpop.f32.mrf.mxu0
  %v4440 = vadd.f32 %v86, %v4439
  %v4441 = vpop.f32.mrf.mxu0
  %v4442 = vadd.f32 %v90, %v4441
  %v4443 = vpop.f32.mrf.mxu0
  %v4444 = vadd.f32 %v86, %v4443
  %v4445 = vpop.f32.mrf.mxu0
  %v4446 = vadd.f32 %v90, %v4445
  %4447 = vmatprep.mubr.bf16.mxu0 0
  %4448 = vmatmul.mubr.bf16.gmra.mxu0 %v4270
  %v4449 = vpop.f32.mrf.mxu0
  %v4450 = vadd.f32 %v86, %v4449
  %v4451 = vpop.f32.mrf.mxu0
  %v4452 = vadd.f32 %v90, %v4451
  %v4453 = vpop.f32.mrf.mxu0
  %v4454 = vadd.f32 %v86, %v4453
  %v4455 = vpop.f32.mrf.mxu0
  %v4456 = vadd.f32 %v90, %v4455
  %4457 = vmatprep.mubr.bf16.mxu0 0
  %4458 = vmatmul.mubr.bf16.gmra.mxu0 %v4273
  %v4459 = vpop.f32.mrf.mxu0
  %v4460 = vadd.f32 %v86, %v4459
  %v4461 = vpop.f32.mrf.mxu0
  %v4462 = vadd.f32 %v90, %v4461
  %v4463 = vpop.f32.mrf.mxu0
  %v4464 = vadd.f32 %v86, %v4463
  %v4465 = vpop.f32.mrf.mxu0
  %v4466 = vadd.f32 %v90, %v4465
  %4467 = vdwg.mxu0
  %4468 = vmatprep.subr.bf16.mxu0 0
  %4469 = vmatpush1.bf16.msra.mxu0 0
  %4470 = vmatprep.subr.bf16.mxu0 0
  %4471 = vmatpush1.bf16.msra.mxu0 0
  %4472 = vmatprep.subr.bf16.mxu0 0
  %4473 = vmatpush1.bf16.msra.mxu0 0
  %4474 = vmatprep.subr.bf16.mxu0 0
  %4475 = vmatpush1.bf16.msra.mxu0 0
  %4476 = vmatprep.subr.bf16.mxu0 0
  %4477 = vmatpush1.bf16.msra.mxu0 0
  %4478 = vmatprep.subr.bf16.mxu0 %v293
  %4479 = vmatpush1.bf16.msra.mxu0 %v290
  %4480 = vmatprep.subr.bf16.mxu0 %v220
  %4481 = vmatpush1.bf16.msra.mxu0 %v219
  %4482 = vmatprep.subr.bf16.mxu0 %v216
  %4483 = vmatpush1.bf16.msra.mxu0 %v215
  %4484 = vmatprep.subr.bf16.mxu0 0
  %4485 = vmatpush2.bf16.msra.mxu0 0
  %4486 = vmatprep.subr.bf16.mxu0 0
  %4487 = vmatpush2.bf16.msra.mxu0 0
  %4488 = vmatprep.subr.bf16.mxu0 0
  %4489 = vmatpush2.bf16.msra.mxu0 0
  %4490 = vmatprep.subr.bf16.mxu0 0
  %4491 = vmatpush2.bf16.msra.mxu0 0
  %4492 = vmatprep.subr.bf16.mxu0 0
  %4493 = vmatpush2.bf16.msra.mxu0 0
  %4494 = vmatprep.subr.bf16.mxu0 0
  %4495 = vmatpush2.bf16.msra.mxu0 0
  %4496 = vmatprep.subr.bf16.mxu0 0
  %4497 = vmatpush2.bf16.msra.mxu0 0
  %4498 = vmatprep.subr.bf16.mxu0 0
  %4499 = vmatpush2.bf16.msra.mxu0 0
  %4500 = vmatprep.mubr.bf16.mxu0 0
  %4501 = vmatmul.mubr.bf16.gmra.mxu0 %v4228
  %v4502 = vpop.f32.mrf.mxu0
  %v4503 = vadd.f32 %v94, %v4502
  %v4504 = vpop.f32.mrf.mxu0
  %v4505 = vadd.f32 %v98, %v4504
  %v4506 = vpop.f32.mrf.mxu0
  %v4507 = vadd.f32 %v94, %v4506
  %v4508 = vpop.f32.mrf.mxu0
  %v4509 = vadd.f32 %v98, %v4508
  %4510 = vmatprep.mubr.bf16.mxu0 0
  %4511 = vmatmul.mubr.bf16.gmra.mxu0 %v4231
  %v4512 = vpop.f32.mrf.mxu0
  %v4513 = vadd.f32 %v94, %v4512
  %v4514 = vpop.f32.mrf.mxu0
  %v4515 = vadd.f32 %v98, %v4514
  %v4516 = vpop.f32.mrf.mxu0
  %v4517 = vadd.f32 %v94, %v4516
  %v4518 = vpop.f32.mrf.mxu0
  %v4519 = vadd.f32 %v98, %v4518
  %4520 = vmatprep.mubr.bf16.mxu0 0
  %4521 = vmatmul.mubr.bf16.gmra.mxu0 %v4234
  %v4522 = vpop.f32.mrf.mxu0
  %v4523 = vadd.f32 %v94, %v4522
  %v4524 = vpop.f32.mrf.mxu0
  %v4525 = vadd.f32 %v98, %v4524
  %v4526 = vpop.f32.mrf.mxu0
  %v4527 = vadd.f32 %v94, %v4526
  %v4528 = vpop.f32.mrf.mxu0
  %v4529 = vadd.f32 %v98, %v4528
  %4530 = vmatprep.mubr.bf16.mxu0 0
  %4531 = vmatmul.mubr.bf16.gmra.mxu0 %v4237
  %v4532 = vpop.f32.mrf.mxu0
  %v4533 = vadd.f32 %v94, %v4532
  %v4534 = vpop.f32.mrf.mxu0
  %v4535 = vadd.f32 %v98, %v4534
  %v4536 = vpop.f32.mrf.mxu0
  %v4537 = vadd.f32 %v94, %v4536
  %v4538 = vpop.f32.mrf.mxu0
  %v4539 = vadd.f32 %v98, %v4538
  %4540 = vmatprep.mubr.bf16.mxu0 0
  %4541 = vmatmul.mubr.bf16.gmra.mxu0 %v4240
  %v4542 = vpop.f32.mrf.mxu0
  %v4543 = vadd.f32 %v94, %v4542
  %v4544 = vpop.f32.mrf.mxu0
  %v4545 = vadd.f32 %v98, %v4544
  %v4546 = vpop.f32.mrf.mxu0
  %v4547 = vadd.f32 %v94, %v4546
  %v4548 = vpop.f32.mrf.mxu0
  %v4549 = vadd.f32 %v98, %v4548
  %4550 = vmatprep.mubr.bf16.mxu0 0
  %4551 = vmatmul.mubr.bf16.gmra.mxu0 %v4243
  %v4552 = vpop.f32.mrf.mxu0
  %v4553 = vadd.f32 %v94, %v4552
  %v4554 = vpop.f32.mrf.mxu0
  %v4555 = vadd.f32 %v98, %v4554
  %v4556 = vpop.f32.mrf.mxu0
  %v4557 = vadd.f32 %v94, %v4556
  %v4558 = vpop.f32.mrf.mxu0
  %v4559 = vadd.f32 %v98, %v4558
  %4560 = vmatprep.mubr.bf16.mxu0 0
  %4561 = vmatmul.mubr.bf16.gmra.mxu0 %v4246
  %v4562 = vpop.f32.mrf.mxu0
  %v4563 = vadd.f32 %v94, %v4562
  %v4564 = vpop.f32.mrf.mxu0
  %v4565 = vadd.f32 %v98, %v4564
  %v4566 = vpop.f32.mrf.mxu0
  %v4567 = vadd.f32 %v94, %v4566
  %v4568 = vpop.f32.mrf.mxu0
  %v4569 = vadd.f32 %v98, %v4568
  %4570 = vmatprep.mubr.bf16.mxu0 0
  %4571 = vmatmul.mubr.bf16.gmra.mxu0 %v4249
  %v4572 = vpop.f32.mrf.mxu0
  %v4573 = vadd.f32 %v94, %v4572
  %v4574 = vpop.f32.mrf.mxu0
  %v4575 = vadd.f32 %v98, %v4574
  %v4576 = vpop.f32.mrf.mxu0
  %v4577 = vadd.f32 %v94, %v4576
  %v4578 = vpop.f32.mrf.mxu0
  %v4579 = vadd.f32 %v98, %v4578
  %4580 = vmatprep.mubr.bf16.mxu0 0
  %4581 = vmatmul.mubr.bf16.gmra.mxu0 %v4252
  %v4582 = vpop.f32.mrf.mxu0
  %v4583 = vadd.f32 %v94, %v4582
  %v4584 = vpop.f32.mrf.mxu0
  %v4585 = vadd.f32 %v98, %v4584
  %v4586 = vpop.f32.mrf.mxu0
  %v4587 = vadd.f32 %v94, %v4586
  %v4588 = vpop.f32.mrf.mxu0
  %v4589 = vadd.f32 %v98, %v4588
  %4590 = vmatprep.mubr.bf16.mxu0 0
  %4591 = vmatmul.mubr.bf16.gmra.mxu0 %v4255
  %v4592 = vpop.f32.mrf.mxu0
  %v4593 = vadd.f32 %v94, %v4592
  %v4594 = vpop.f32.mrf.mxu0
  %v4595 = vadd.f32 %v98, %v4594
  %v4596 = vpop.f32.mrf.mxu0
  %v4597 = vadd.f32 %v94, %v4596
  %v4598 = vpop.f32.mrf.mxu0
  %v4599 = vadd.f32 %v98, %v4598
  %4600 = vmatprep.mubr.bf16.mxu0 0
  %4601 = vmatmul.mubr.bf16.gmra.mxu0 %v4258
  %v4602 = vpop.f32.mrf.mxu0
  %v4603 = vadd.f32 %v94, %v4602
  %v4604 = vpop.f32.mrf.mxu0
  %v4605 = vadd.f32 %v98, %v4604
  %v4606 = vpop.f32.mrf.mxu0
  %v4607 = vadd.f32 %v94, %v4606
  %v4608 = vpop.f32.mrf.mxu0
  %v4609 = vadd.f32 %v98, %v4608
  %4610 = vmatprep.mubr.bf16.mxu0 0
  %4611 = vmatmul.mubr.bf16.gmra.mxu0 %v4261
  %v4612 = vpop.f32.mrf.mxu0
  %v4613 = vadd.f32 %v94, %v4612
  %v4614 = vpop.f32.mrf.mxu0
  %v4615 = vadd.f32 %v98, %v4614
  %v4616 = vpop.f32.mrf.mxu0
  %v4617 = vadd.f32 %v94, %v4616
  %v4618 = vpop.f32.mrf.mxu0
  %v4619 = vadd.f32 %v98, %v4618
  %4620 = vmatprep.mubr.bf16.mxu0 0
  %4621 = vmatmul.mubr.bf16.gmra.mxu0 %v4264
  %v4622 = vpop.f32.mrf.mxu0
  %v4623 = vadd.f32 %v94, %v4622
  %v4624 = vpop.f32.mrf.mxu0
  %v4625 = vadd.f32 %v98, %v4624
  %v4626 = vpop.f32.mrf.mxu0
  %v4627 = vadd.f32 %v94, %v4626
  %v4628 = vpop.f32.mrf.mxu0
  %v4629 = vadd.f32 %v98, %v4628
  %4630 = vmatprep.mubr.bf16.mxu0 0
  %4631 = vmatmul.mubr.bf16.gmra.mxu0 %v4267
  %v4632 = vpop.f32.mrf.mxu0
  %v4633 = vadd.f32 %v94, %v4632
  %v4634 = vpop.f32.mrf.mxu0
  %v4635 = vadd.f32 %v98, %v4634
  %v4636 = vpop.f32.mrf.mxu0
  %v4637 = vadd.f32 %v94, %v4636
  %v4638 = vpop.f32.mrf.mxu0
  %v4639 = vadd.f32 %v98, %v4638
  %4640 = vmatprep.mubr.bf16.mxu0 0
  %4641 = vmatmul.mubr.bf16.gmra.mxu0 %v4270
  %v4642 = vpop.f32.mrf.mxu0
  %v4643 = vadd.f32 %v94, %v4642
  %v4644 = vpop.f32.mrf.mxu0
  %v4645 = vadd.f32 %v98, %v4644
  %v4646 = vpop.f32.mrf.mxu0
  %v4647 = vadd.f32 %v94, %v4646
  %v4648 = vpop.f32.mrf.mxu0
  %v4649 = vadd.f32 %v98, %v4648
  %4650 = vmatprep.mubr.bf16.mxu0 0
  %4651 = vmatmul.mubr.bf16.gmra.mxu0 %v4273
  %v4652 = vpop.f32.mrf.mxu0
  %v4653 = vadd.f32 %v94, %v4652
  %v4654 = vpop.f32.mrf.mxu0
  %v4655 = vadd.f32 %v98, %v4654
  %v4656 = vpop.f32.mrf.mxu0
  %v4657 = vadd.f32 %v94, %v4656
  %v4658 = vpop.f32.mrf.mxu0
  %v4659 = vadd.f32 %v98, %v4658
  %4660 = vdwg.mxu0
  %v4661 = vmax.f32 %v4310, 0.0
  %v4662 = vmax.f32 %v4312, 0.0
  %v4663 = vmax.f32 %v4503, 0.0
  %v4664 = vmax.f32 %v4505, 0.0
  %v4665 = vmax.f32 %v4314, 0.0
  %v4666 = vmax.f32 %v4316, 0.0
  %v4667 = vmax.f32 %v4507, 0.0
  %v4668 = vmax.f32 %v4509, 0.0
  %v4669 = vmax.f32 %v4320, 0.0
  %v4670 = vmax.f32 %v4322, 0.0
  %v4671 = vmax.f32 %v4513, 0.0
  %v4672 = vmax.f32 %v4515, 0.0
  %v4673 = vmax.f32 %v4324, 0.0
  %v4674 = vmax.f32 %v4326, 0.0
  %v4675 = vmax.f32 %v4517, 0.0
  %v4676 = vmax.f32 %v4519, 0.0
  %v4677 = vmax.f32 %v4330, 0.0
  %v4678 = vmax.f32 %v4332, 0.0
  %v4679 = vmax.f32 %v4523, 0.0
  %v4680 = vmax.f32 %v4525, 0.0
  %v4681 = vmax.f32 %v4334, 0.0
  %v4682 = vmax.f32 %v4336, 0.0
  %v4683 = vmax.f32 %v4527, 0.0
  %v4684 = vmax.f32 %v4529, 0.0
  %v4685 = vmax.f32 %v4340, 0.0
  %v4686 = vmax.f32 %v4342, 0.0
  %v4687 = vmax.f32 %v4533, 0.0
  %v4688 = vmax.f32 %v4535, 0.0
  %v4689 = vmax.f32 %v4344, 0.0
  %v4690 = vmax.f32 %v4346, 0.0
  %v4691 = vmax.f32 %v4537, 0.0
  %v4692 = vmax.f32 %v4539, 0.0
  %v4693 = vmax.f32 %v4350, 0.0
  %v4694 = vmax.f32 %v4352, 0.0
  %v4695 = vmax.f32 %v4543, 0.0
  %v4696 = vmax.f32 %v4545, 0.0
  %v4697 = vmax.f32 %v4354, 0.0
  %v4698 = vmax.f32 %v4356, 0.0
  %v4699 = vmax.f32 %v4547, 0.0
  %v4700 = vmax.f32 %v4549, 0.0
  %v4701 = vmax.f32 %v4360, 0.0
  %v4702 = vmax.f32 %v4362, 0.0
  %v4703 = vmax.f32 %v4553, 0.0
  %v4704 = vmax.f32 %v4555, 0.0
  %v4705 = vmax.f32 %v4364, 0.0
  %v4706 = vmax.f32 %v4366, 0.0
  %v4707 = vmax.f32 %v4557, 0.0
  %v4708 = vmax.f32 %v4559, 0.0
  %v4709 = vmax.f32 %v4370, 0.0
  %v4710 = vmax.f32 %v4372, 0.0
  %v4711 = vmax.f32 %v4563, 0.0
  %v4712 = vmax.f32 %v4565, 0.0
  %v4713 = vmax.f32 %v4374, 0.0
  %v4714 = vmax.f32 %v4376, 0.0
  %v4715 = vmax.f32 %v4567, 0.0
  %v4716 = vmax.f32 %v4569, 0.0
  %v4717 = vmax.f32 %v4380, 0.0
  %v4718 = vmax.f32 %v4382, 0.0
  %v4719 = vmax.f32 %v4573, 0.0
  %v4720 = vmax.f32 %v4575, 0.0
  %v4721 = vmax.f32 %v4384, 0.0
  %v4722 = vmax.f32 %v4386, 0.0
  %v4723 = vmax.f32 %v4577, 0.0
  %v4724 = vmax.f32 %v4579, 0.0
  %v4725 = vmax.f32 %v4390, 0.0
  %v4726 = vmax.f32 %v4392, 0.0
  %v4727 = vmax.f32 %v4583, 0.0
  %v4728 = vmax.f32 %v4585, 0.0
  %v4729 = vmax.f32 %v4394, 0.0
  %v4730 = vmax.f32 %v4396, 0.0
  %v4731 = vmax.f32 %v4587, 0.0
  %v4732 = vmax.f32 %v4589, 0.0
  %v4733 = vmax.f32 %v4400, 0.0
  %v4734 = vmax.f32 %v4402, 0.0
  %v4735 = vmax.f32 %v4593, 0.0
  %v4736 = vmax.f32 %v4595, 0.0
  %v4737 = vmax.f32 %v4404, 0.0
  %v4738 = vmax.f32 %v4406, 0.0
  %v4739 = vmax.f32 %v4597, 0.0
  %v4740 = vmax.f32 %v4599, 0.0
  %v4741 = vmax.f32 %v4410, 0.0
  %v4742 = vmax.f32 %v4412, 0.0
  %v4743 = vmax.f32 %v4603, 0.0
  %v4744 = vmax.f32 %v4605, 0.0
  %v4745 = vmax.f32 %v4414, 0.0
  %v4746 = vmax.f32 %v4416, 0.0
  %v4747 = vmax.f32 %v4607, 0.0
  %v4748 = vmax.f32 %v4609, 0.0
  %v4749 = vmax.f32 %v4420, 0.0
  %v4750 = vmax.f32 %v4422, 0.0
  %v4751 = vmax.f32 %v4613, 0.0
  %v4752 = vmax.f32 %v4615, 0.0
  %v4753 = vmax.f32 %v4424, 0.0
  %v4754 = vmax.f32 %v4426, 0.0
  %v4755 = vmax.f32 %v4617, 0.0
  %v4756 = vmax.f32 %v4619, 0.0
  %v4757 = vmax.f32 %v4430, 0.0
  %v4758 = vmax.f32 %v4432, 0.0
  %v4759 = vmax.f32 %v4623, 0.0
  %v4760 = vmax.f32 %v4625, 0.0
  %v4761 = vmax.f32 %v4434, 0.0
  %v4762 = vmax.f32 %v4436, 0.0
  %v4763 = vmax.f32 %v4627, 0.0
  %v4764 = vmax.f32 %v4629, 0.0
  %v4765 = vmax.f32 %v4440, 0.0
  %v4766 = vmax.f32 %v4442, 0.0
  %v4767 = vmax.f32 %v4633, 0.0
  %v4768 = vmax.f32 %v4635, 0.0
  %v4769 = vmax.f32 %v4444, 0.0
  %v4770 = vmax.f32 %v4446, 0.0
  %v4771 = vmax.f32 %v4637, 0.0
  %v4772 = vmax.f32 %v4639, 0.0
  %v4773 = vmax.f32 %v4450, 0.0
  %v4774 = vmax.f32 %v4452, 0.0
  %v4775 = vmax.f32 %v4643, 0.0
  %v4776 = vmax.f32 %v4645, 0.0
  %v4777 = vmax.f32 %v4454, 0.0
  %v4778 = vmax.f32 %v4456, 0.0
  %v4779 = vmax.f32 %v4647, 0.0
  %v4780 = vmax.f32 %v4649, 0.0
  %v4781 = vmax.f32 %v4460, 0.0
  %v4782 = vmax.f32 %v4462, 0.0
  %v4783 = vmax.f32 %v4653, 0.0
  %v4784 = vmax.f32 %v4655, 0.0
  %v4785 = vmax.f32 %v4464, 0.0
  %v4786 = vmax.f32 %v4466, 0.0
  %v4787 = vmax.f32 %v4657, 0.0
  %v4788 = vmax.f32 %v4659, 0.0
  %v4789 = vadd.f32 %v4661, %v4665
  %v4790 = vadd.f32 %v4789, %v4669
  %v4791 = vadd.f32 %v4790, %v4673
  %v4792 = vrot.slane %v4791, 4
  %v4793 = vadd.f32 %v4791, %v4792
  %v4794 = vrot.slane %v4793, 2
  %v4795 = vadd.f32 %v4793, %v4794
  %v4796 = vrot.slane %v4795, 1
  %v4797 = vadd.f32 %v4795, %v4796
  %v4798 = vadd.f32 %v4662, %v4666
  %v4799 = vadd.f32 %v4798, %v4670
  %v4800 = vadd.f32 %v4799, %v4674
  %v4801 = vrot.slane %v4800, 4
  %v4802 = vadd.f32 %v4800, %v4801
  %v4803 = vrot.slane %v4802, 2
  %v4804 = vadd.f32 %v4802, %v4803
  %v4805 = vrot.slane %v4804, 1
  %v4806 = vadd.f32 %v4804, %v4805
  %v4807 = vadd.f32 %v4663, %v4667
  %v4808 = vadd.f32 %v4807, %v4671
  %v4809 = vadd.f32 %v4808, %v4675
  %v4810 = vrot.slane %v4809, 4
  %v4811 = vadd.f32 %v4809, %v4810
  %v4812 = vrot.slane %v4811, 2
  %v4813 = vadd.f32 %v4811, %v4812
  %v4814 = vrot.slane %v4813, 1
  %v4815 = vadd.f32 %v4813, %v4814
  %v4816 = vadd.f32 %v4664, %v4668
  %v4817 = vadd.f32 %v4816, %v4672
  %v4818 = vadd.f32 %v4817, %v4676
  %v4819 = vrot.slane %v4818, 4
  %v4820 = vadd.f32 %v4818, %v4819
  %v4821 = vrot.slane %v4820, 2
  %v4822 = vadd.f32 %v4820, %v4821
  %v4823 = vrot.slane %v4822, 1
  %v4824 = vadd.f32 %v4822, %v4823
  %v4825 = vadd.f32 %v4677, %v4681
  %v4826 = vadd.f32 %v4825, %v4685
  %v4827 = vadd.f32 %v4826, %v4689
  %v4828 = vrot.slane %v4827, 4
  %v4829 = vadd.f32 %v4827, %v4828
  %v4830 = vrot.slane %v4829, 2
  %v4831 = vadd.f32 %v4829, %v4830
  %v4832 = vrot.slane %v4831, 1
  %v4833 = vadd.f32 %v4831, %v4832
  %v4834 = vadd.f32 %v4678, %v4682
  %v4835 = vadd.f32 %v4834, %v4686
  %v4836 = vadd.f32 %v4835, %v4690
  %v4837 = vrot.slane %v4836, 4
  %v4838 = vadd.f32 %v4836, %v4837
  %v4839 = vrot.slane %v4838, 2
  %v4840 = vadd.f32 %v4838, %v4839
  %v4841 = vrot.slane %v4840, 1
  %v4842 = vadd.f32 %v4840, %v4841
  %v4843 = vadd.f32 %v4679, %v4683
  %v4844 = vadd.f32 %v4843, %v4687
  %v4845 = vadd.f32 %v4844, %v4691
  %v4846 = vrot.slane %v4845, 4
  %v4847 = vadd.f32 %v4845, %v4846
  %v4848 = vrot.slane %v4847, 2
  %v4849 = vadd.f32 %v4847, %v4848
  %v4850 = vrot.slane %v4849, 1
  %v4851 = vadd.f32 %v4849, %v4850
  %v4852 = vadd.f32 %v4680, %v4684
  %v4853 = vadd.f32 %v4852, %v4688
  %v4854 = vadd.f32 %v4853, %v4692
  %v4855 = vrot.slane %v4854, 4
  %v4856 = vadd.f32 %v4854, %v4855
  %v4857 = vrot.slane %v4856, 2
  %v4858 = vadd.f32 %v4856, %v4857
  %v4859 = vrot.slane %v4858, 1
  %v4860 = vadd.f32 %v4858, %v4859
  %v4861 = vadd.f32 %v4693, %v4697
  %v4862 = vadd.f32 %v4861, %v4701
  %v4863 = vadd.f32 %v4862, %v4705
  %v4864 = vrot.slane %v4863, 4
  %v4865 = vadd.f32 %v4863, %v4864
  %v4866 = vrot.slane %v4865, 2
  %v4867 = vadd.f32 %v4865, %v4866
  %v4868 = vrot.slane %v4867, 1
  %v4869 = vadd.f32 %v4867, %v4868
  %v4870 = vadd.f32 %v4694, %v4698
  %v4871 = vadd.f32 %v4870, %v4702
  %v4872 = vadd.f32 %v4871, %v4706
  %v4873 = vrot.slane %v4872, 4
  %v4874 = vadd.f32 %v4872, %v4873
  %v4875 = vrot.slane %v4874, 2
  %v4876 = vadd.f32 %v4874, %v4875
  %v4877 = vrot.slane %v4876, 1
  %v4878 = vadd.f32 %v4876, %v4877
  %v4879 = vadd.f32 %v4695, %v4699
  %v4880 = vadd.f32 %v4879, %v4703
  %v4881 = vadd.f32 %v4880, %v4707
  %v4882 = vrot.slane %v4881, 4
  %v4883 = vadd.f32 %v4881, %v4882
  %v4884 = vrot.slane %v4883, 2
  %v4885 = vadd.f32 %v4883, %v4884
  %v4886 = vrot.slane %v4885, 1
  %v4887 = vadd.f32 %v4885, %v4886
  %v4888 = vadd.f32 %v4696, %v4700
  %v4889 = vadd.f32 %v4888, %v4704
  %v4890 = vadd.f32 %v4889, %v4708
  %v4891 = vrot.slane %v4890, 4
  %v4892 = vadd.f32 %v4890, %v4891
  %v4893 = vrot.slane %v4892, 2
  %v4894 = vadd.f32 %v4892, %v4893
  %v4895 = vrot.slane %v4894, 1
  %v4896 = vadd.f32 %v4894, %v4895
  %v4897 = vadd.f32 %v4709, %v4713
  %v4898 = vadd.f32 %v4897, %v4717
  %v4899 = vadd.f32 %v4898, %v4721
  %v4900 = vrot.slane %v4899, 4
  %v4901 = vadd.f32 %v4899, %v4900
  %v4902 = vrot.slane %v4901, 2
  %v4903 = vadd.f32 %v4901, %v4902
  %v4904 = vrot.slane %v4903, 1
  %v4905 = vadd.f32 %v4903, %v4904
  %v4906 = vadd.f32 %v4710, %v4714
  %v4907 = vadd.f32 %v4906, %v4718
  %v4908 = vadd.f32 %v4907, %v4722
  %v4909 = vrot.slane %v4908, 4
  %v4910 = vadd.f32 %v4908, %v4909
  %v4911 = vrot.slane %v4910, 2
  %v4912 = vadd.f32 %v4910, %v4911
  %v4913 = vrot.slane %v4912, 1
  %v4914 = vadd.f32 %v4912, %v4913
  %v4915 = vadd.f32 %v4711, %v4715
  %v4916 = vadd.f32 %v4915, %v4719
  %v4917 = vadd.f32 %v4916, %v4723
  %v4918 = vrot.slane %v4917, 4
  %v4919 = vadd.f32 %v4917, %v4918
  %v4920 = vrot.slane %v4919, 2
  %v4921 = vadd.f32 %v4919, %v4920
  %v4922 = vrot.slane %v4921, 1
  %v4923 = vadd.f32 %v4921, %v4922
  %v4924 = vadd.f32 %v4712, %v4716
  %v4925 = vadd.f32 %v4924, %v4720
  %v4926 = vadd.f32 %v4925, %v4724
  %v4927 = vrot.slane %v4926, 4
  %v4928 = vadd.f32 %v4926, %v4927
  %v4929 = vrot.slane %v4928, 2
  %v4930 = vadd.f32 %v4928, %v4929
  %v4931 = vrot.slane %v4930, 1
  %v4932 = vadd.f32 %v4930, %v4931
  %v4933 = vadd.f32 %v4725, %v4729
  %v4934 = vadd.f32 %v4933, %v4733
  %v4935 = vadd.f32 %v4934, %v4737
  %v4936 = vrot.slane %v4935, 4
  %v4937 = vadd.f32 %v4935, %v4936
  %v4938 = vrot.slane %v4937, 2
  %v4939 = vadd.f32 %v4937, %v4938
  %v4940 = vrot.slane %v4939, 1
  %v4941 = vadd.f32 %v4939, %v4940
  %v4942 = vadd.f32 %v4726, %v4730
  %v4943 = vadd.f32 %v4942, %v4734
  %v4944 = vadd.f32 %v4943, %v4738
  %v4945 = vrot.slane %v4944, 4
  %v4946 = vadd.f32 %v4944, %v4945
  %v4947 = vrot.slane %v4946, 2
  %v4948 = vadd.f32 %v4946, %v4947
  %v4949 = vrot.slane %v4948, 1
  %v4950 = vadd.f32 %v4948, %v4949
  %v4951 = vadd.f32 %v4727, %v4731
  %v4952 = vadd.f32 %v4951, %v4735
  %v4953 = vadd.f32 %v4952, %v4739
  %v4954 = vrot.slane %v4953, 4
  %v4955 = vadd.f32 %v4953, %v4954
  %v4956 = vrot.slane %v4955, 2
  %v4957 = vadd.f32 %v4955, %v4956
  %v4958 = vrot.slane %v4957, 1
  %v4959 = vadd.f32 %v4957, %v4958
  %v4960 = vadd.f32 %v4728, %v4732
  %v4961 = vadd.f32 %v4960, %v4736
  %v4962 = vadd.f32 %v4961, %v4740
  %v4963 = vrot.slane %v4962, 4
  %v4964 = vadd.f32 %v4962, %v4963
  %v4965 = vrot.slane %v4964, 2
  %v4966 = vadd.f32 %v4964, %v4965
  %v4967 = vrot.slane %v4966, 1
  %v4968 = vadd.f32 %v4966, %v4967
  %v4969 = vadd.f32 %v4741, %v4745
  %v4970 = vadd.f32 %v4969, %v4749
  %v4971 = vadd.f32 %v4970, %v4753
  %v4972 = vrot.slane %v4971, 4
  %v4973 = vadd.f32 %v4971, %v4972
  %v4974 = vrot.slane %v4973, 2
  %v4975 = vadd.f32 %v4973, %v4974
  %v4976 = vrot.slane %v4975, 1
  %v4977 = vadd.f32 %v4975, %v4976
  %v4978 = vadd.f32 %v4742, %v4746
  %v4979 = vadd.f32 %v4978, %v4750
  %v4980 = vadd.f32 %v4979, %v4754
  %v4981 = vrot.slane %v4980, 4
  %v4982 = vadd.f32 %v4980, %v4981
  %v4983 = vrot.slane %v4982, 2
  %v4984 = vadd.f32 %v4982, %v4983
  %v4985 = vrot.slane %v4984, 1
  %v4986 = vadd.f32 %v4984, %v4985
  %v4987 = vadd.f32 %v4743, %v4747
  %v4988 = vadd.f32 %v4987, %v4751
  %v4989 = vadd.f32 %v4988, %v4755
  %v4990 = vrot.slane %v4989, 4
  %v4991 = vadd.f32 %v4989, %v4990
  %v4992 = vrot.slane %v4991, 2
  %v4993 = vadd.f32 %v4991, %v4992
  %v4994 = vrot.slane %v4993, 1
  %v4995 = vadd.f32 %v4993, %v4994
  %v4996 = vadd.f32 %v4744, %v4748
  %v4997 = vadd.f32 %v4996, %v4752
  %v4998 = vadd.f32 %v4997, %v4756
  %v4999 = vrot.slane %v4998, 4
  %v5000 = vadd.f32 %v4998, %v4999
  %v5001 = vrot.slane %v5000, 2
  %v5002 = vadd.f32 %v5000, %v5001
  %v5003 = vrot.slane %v5002, 1
  %v5004 = vadd.f32 %v5002, %v5003
  %v5005 = vadd.f32 %v4757, %v4761
  %v5006 = vadd.f32 %v5005, %v4765
  %v5007 = vadd.f32 %v5006, %v4769
  %v5008 = vrot.slane %v5007, 4
  %v5009 = vadd.f32 %v5007, %v5008
  %v5010 = vrot.slane %v5009, 2
  %v5011 = vadd.f32 %v5009, %v5010
  %v5012 = vrot.slane %v5011, 1
  %v5013 = vadd.f32 %v5011, %v5012
  %v5014 = vadd.f32 %v4758, %v4762
  %v5015 = vadd.f32 %v5014, %v4766
  %v5016 = vadd.f32 %v5015, %v4770
  %v5017 = vrot.slane %v5016, 4
  %v5018 = vadd.f32 %v5016, %v5017
  %v5019 = vrot.slane %v5018, 2
  %v5020 = vadd.f32 %v5018, %v5019
  %v5021 = vrot.slane %v5020, 1
  %v5022 = vadd.f32 %v5020, %v5021
  %v5023 = vadd.f32 %v4759, %v4763
  %v5024 = vadd.f32 %v5023, %v4767
  %v5025 = vadd.f32 %v5024, %v4771
  %v5026 = vrot.slane %v5025, 4
  %v5027 = vadd.f32 %v5025, %v5026
  %v5028 = vrot.slane %v5027, 2
  %v5029 = vadd.f32 %v5027, %v5028
  %v5030 = vrot.slane %v5029, 1
  %v5031 = vadd.f32 %v5029, %v5030
  %v5032 = vadd.f32 %v4760, %v4764
  %v5033 = vadd.f32 %v5032, %v4768
  %v5034 = vadd.f32 %v5033, %v4772
  %v5035 = vrot.slane %v5034, 4
  %v5036 = vadd.f32 %v5034, %v5035
  %v5037 = vrot.slane %v5036, 2
  %v5038 = vadd.f32 %v5036, %v5037
  %v5039 = vrot.slane %v5038, 1
  %v5040 = vadd.f32 %v5038, %v5039
  %v5041 = vadd.f32 %v4773, %v4777
  %v5042 = vadd.f32 %v5041, %v4781
  %v5043 = vadd.f32 %v5042, %v4785
  %v5044 = vrot.slane %v5043, 4
  %v5045 = vadd.f32 %v5043, %v5044
  %v5046 = vrot.slane %v5045, 2
  %v5047 = vadd.f32 %v5045, %v5046
  %v5048 = vrot.slane %v5047, 1
  %v5049 = vadd.f32 %v5047, %v5048
  %v5050 = vadd.f32 %v4774, %v4778
  %v5051 = vadd.f32 %v5050, %v4782
  %v5052 = vadd.f32 %v5051, %v4786
  %v5053 = vrot.slane %v5052, 4
  %v5054 = vadd.f32 %v5052, %v5053
  %v5055 = vrot.slane %v5054, 2
  %v5056 = vadd.f32 %v5054, %v5055
  %v5057 = vrot.slane %v5056, 1
  %v5058 = vadd.f32 %v5056, %v5057
  %v5059 = vadd.f32 %v4775, %v4779
  %v5060 = vadd.f32 %v5059, %v4783
  %v5061 = vadd.f32 %v5060, %v4787
  %v5062 = vrot.slane %v5061, 4
  %v5063 = vadd.f32 %v5061, %v5062
  %v5064 = vrot.slane %v5063, 2
  %v5065 = vadd.f32 %v5063, %v5064
  %v5066 = vrot.slane %v5065, 1
  %v5067 = vadd.f32 %v5065, %v5066
  %v5068 = vadd.f32 %v4776, %v4780
  %v5069 = vadd.f32 %v5068, %v4784
  %v5070 = vadd.f32 %v5069, %v4788
  %v5071 = vrot.slane %v5070, 4
  %v5072 = vadd.f32 %v5070, %v5071
  %v5073 = vrot.slane %v5072, 2
  %v5074 = vadd.f32 %v5072, %v5073
  %v5075 = vrot.slane %v5074, 1
  %v5076 = vadd.f32 %v5074, %v5075
  %v5077 = vadd.f32 %v4082, %v4797
  %v5078 = vadd.f32 %v4083, %v4806
  %v5079 = vadd.f32 %v4084, %v4815
  %v5080 = vadd.f32 %v4085, %v4824
  %v5081 = vadd.f32 %v4086, %v4833
  %v5082 = vadd.f32 %v4087, %v4842
  %v5083 = vadd.f32 %v4088, %v4851
  %v5084 = vadd.f32 %v4089, %v4860
  %v5085 = vadd.f32 %v4090, %v4869
  %v5086 = vadd.f32 %v4091, %v4878
  %v5087 = vadd.f32 %v4092, %v4887
  %v5088 = vadd.f32 %v4093, %v4896
  %v5089 = vadd.f32 %v4094, %v4905
  %v5090 = vadd.f32 %v4095, %v4914
  %v5091 = vadd.f32 %v4096, %v4923
  %v5092 = vadd.f32 %v4097, %v4932
  %v5093 = vadd.f32 %v4098, %v4941
  %v5094 = vadd.f32 %v4099, %v4950
  %v5095 = vadd.f32 %v4100, %v4959
  %v5096 = vadd.f32 %v4101, %v4968
  %v5097 = vadd.f32 %v4102, %v4977
  %v5098 = vadd.f32 %v4103, %v4986
  %v5099 = vadd.f32 %v4104, %v4995
  %v5100 = vadd.f32 %v4105, %v5004
  %v5101 = vadd.f32 %v4106, %v5013
  %v5102 = vadd.f32 %v4107, %v5022
  %v5103 = vadd.f32 %v4108, %v5031
  %v5104 = vadd.f32 %v4109, %v5040
  %v5105 = vadd.f32 %v4110, %v5049
  %v5106 = vadd.f32 %v4111, %v5058
  %v5107 = vadd.f32 %v4112, %v5067
  %v5108 = vadd.f32 %v4113, %v5076
  %s5109 = scalar_lea.vmem %s0, 80
  %v5110 = vld [vmem:[%s5109] sm:$0xf]
  %v5111 = vld [vmem:[%s5109 + $0x4] sm:$0xf]
  %v5112 = vld [vmem:[%s5109 + $0x8] sm:$0xf]
  %v5113 = vld [vmem:[%s5109 + $0xc] sm:$0xf]
  %v5114 = vld [vmem:[%s5109 + $0x80] sm:$0xf]
  %v5115 = vld [vmem:[%s5109 + $0x84] sm:$0xf]
  %v5116 = vld [vmem:[%s5109 + $0x88] sm:$0xf]
  %v5117 = vld [vmem:[%s5109 + $0x8c] sm:$0xf]
  %v5118 = vld [vmem:[%s5109 + $0x100] sm:$0xf]
  %v5119 = vld [vmem:[%s5109 + $0x104] sm:$0xf]
  %v5120 = vld [vmem:[%s5109 + $0x108] sm:$0xf]
  %v5121 = vld [vmem:[%s5109 + $0x10c] sm:$0xf]
  %v5122 = vld [vmem:[%s5109 + $0x180] sm:$0xf]
  %v5123 = vld [vmem:[%s5109 + $0x184] sm:$0xf]
  %v5124 = vld [vmem:[%s5109 + $0x188] sm:$0xf]
  %v5125 = vld [vmem:[%s5109 + $0x18c] sm:$0xf]
  %v5126 = vld [vmem:[%s5109 + $0x200] sm:$0xf]
  %v5127 = vld [vmem:[%s5109 + $0x204] sm:$0xf]
  %v5128 = vld [vmem:[%s5109 + $0x208] sm:$0xf]
  %v5129 = vld [vmem:[%s5109 + $0x20c] sm:$0xf]
  %v5130 = vld [vmem:[%s5109 + $0x280] sm:$0xf]
  %v5131 = vld [vmem:[%s5109 + $0x284] sm:$0xf]
  %v5132 = vld [vmem:[%s5109 + $0x288] sm:$0xf]
  %v5133 = vld [vmem:[%s5109 + $0x28c] sm:$0xf]
  %v5134 = vld [vmem:[%s5109 + $0x300] sm:$0xf]
  %v5135 = vld [vmem:[%s5109 + $0x304] sm:$0xf]
  %v5136 = vld [vmem:[%s5109 + $0x308] sm:$0xf]
  %v5137 = vld [vmem:[%s5109 + $0x30c] sm:$0xf]
  %v5138 = vld [vmem:[%s5109 + $0x380] sm:$0xf]
  %v5139 = vld [vmem:[%s5109 + $0x384] sm:$0xf]
  %v5140 = vld [vmem:[%s5109 + $0x388] sm:$0xf]
  %v5141 = vld [vmem:[%s5109 + $0x38c] sm:$0xf]
  %v5174 = vunpack.c.l.b16 %v5110
  %v5175 = vunpack.c.l.b16 %v5111
  %v5176 = vunpack.c.l.b16 %v5112
  %v5177 = vunpack.c.l.b16 %v5113
  %v5178 = vunpack.c.l.b16 %v5114
  %v5179 = vunpack.c.l.b16 %v5115
  %v5180 = vunpack.c.l.b16 %v5116
  %v5181 = vunpack.c.l.b16 %v5117
  %v5182 = vunpack.c.l.b16 %v5118
  %v5183 = vunpack.c.l.b16 %v5119
  %v5184 = vunpack.c.l.b16 %v5120
  %v5185 = vunpack.c.l.b16 %v5121
  %v5186 = vunpack.c.l.b16 %v5122
  %v5187 = vunpack.c.l.b16 %v5123
  %v5188 = vunpack.c.l.b16 %v5124
  %v5189 = vunpack.c.l.b16 %v5125
  %v5190 = vunpack.c.l.b16 %v5126
  %v5191 = vunpack.c.l.b16 %v5127
  %v5192 = vunpack.c.l.b16 %v5128
  %v5193 = vunpack.c.l.b16 %v5129
  %v5194 = vunpack.c.l.b16 %v5130
  %v5195 = vunpack.c.l.b16 %v5131
  %v5196 = vunpack.c.l.b16 %v5132
  %v5197 = vunpack.c.l.b16 %v5133
  %v5198 = vunpack.c.l.b16 %v5134
  %v5199 = vunpack.c.l.b16 %v5135
  %v5200 = vunpack.c.l.b16 %v5136
  %v5201 = vunpack.c.l.b16 %v5137
  %v5202 = vunpack.c.l.b16 %v5138
  %v5203 = vunpack.c.l.b16 %v5139
  %v5204 = vunpack.c.l.b16 %v5140
  %v5205 = vunpack.c.l.b16 %v5141
  %v5206 = vpack.c.b16 %v5175, %v5174
  %v5207 = vpack.c.b16 %v5177, %v5176
  %v5208 = vpack.c.b16 %v5179, %v5178
  %v5209 = vpack.c.b16 %v5181, %v5180
  %v5210 = vpack.c.b16 %v5183, %v5182
  %v5211 = vpack.c.b16 %v5185, %v5184
  %v5212 = vpack.c.b16 %v5187, %v5186
  %v5213 = vpack.c.b16 %v5189, %v5188
  %v5214 = vpack.c.b16 %v5191, %v5190
  %v5215 = vpack.c.b16 %v5193, %v5192
  %v5216 = vpack.c.b16 %v5195, %v5194
  %v5217 = vpack.c.b16 %v5197, %v5196
  %v5218 = vpack.c.b16 %v5199, %v5198
  %v5219 = vpack.c.b16 %v5201, %v5200
  %v5220 = vpack.c.b16 %v5203, %v5202
  %v5221 = vpack.c.b16 %v5205, %v5204
  %v5223 = vsel %vm233, %v5206, 0
  %v5226 = vsel %vm233, %v5207, 0
  %v5229 = vsel %vm233, %v5208, 0
  %v5232 = vsel %vm233, %v5209, 0
  %v5235 = vsel %vm233, %v5210, 0
  %v5238 = vsel %vm233, %v5211, 0
  %v5241 = vsel %vm233, %v5212, 0
  %v5244 = vsel %vm233, %v5213, 0
  %v5247 = vsel %vm233, %v5214, 0
  %v5250 = vsel %vm233, %v5215, 0
  %v5253 = vsel %vm233, %v5216, 0
  %v5256 = vsel %vm233, %v5217, 0
  %v5259 = vsel %vm233, %v5218, 0
  %v5262 = vsel %vm233, %v5219, 0
  %v5265 = vsel %vm233, %v5220, 0
  %v5268 = vsel %vm233, %v5221, 0
  %5270 = vmatprep.subr.bf16.mxu0 0
  %5271 = vmatpush1.bf16.msra.mxu0 0
  %5272 = vmatprep.subr.bf16.mxu0 0
  %5273 = vmatpush1.bf16.msra.mxu0 0
  %5274 = vmatprep.subr.bf16.mxu0 0
  %5275 = vmatpush1.bf16.msra.mxu0 0
  %5276 = vmatprep.subr.bf16.mxu0 0
  %5277 = vmatpush1.bf16.msra.mxu0 0
  %5278 = vmatprep.subr.bf16.mxu0 0
  %5279 = vmatpush1.bf16.msra.mxu0 0
  %5280 = vmatprep.subr.bf16.mxu0 %v287
  %5281 = vmatpush1.bf16.msra.mxu0 %v284
  %5282 = vmatprep.subr.bf16.mxu0 %v218
  %5283 = vmatpush1.bf16.msra.mxu0 %v217
  %5284 = vmatprep.subr.bf16.mxu0 %v214
  %5285 = vmatpush1.bf16.msra.mxu0 %v213
  %5286 = vmatprep.subr.bf16.mxu0 0
  %5287 = vmatpush2.bf16.msra.mxu0 0
  %5288 = vmatprep.subr.bf16.mxu0 0
  %5289 = vmatpush2.bf16.msra.mxu0 0
  %5290 = vmatprep.subr.bf16.mxu0 0
  %5291 = vmatpush2.bf16.msra.mxu0 0
  %5292 = vmatprep.subr.bf16.mxu0 0
  %5293 = vmatpush2.bf16.msra.mxu0 0
  %5294 = vmatprep.subr.bf16.mxu0 0
  %5295 = vmatpush2.bf16.msra.mxu0 0
  %5296 = vmatprep.subr.bf16.mxu0 0
  %5297 = vmatpush2.bf16.msra.mxu0 0
  %5298 = vmatprep.subr.bf16.mxu0 0
  %5299 = vmatpush2.bf16.msra.mxu0 0
  %5300 = vmatprep.subr.bf16.mxu0 0
  %5301 = vmatpush2.bf16.msra.mxu0 0
  %5302 = vmatprep.mubr.bf16.mxu0 0
  %5303 = vmatmul.mubr.bf16.gmra.mxu0 %v5223
  %v5304 = vpop.f32.mrf.mxu0
  %v5305 = vadd.f32 %v86, %v5304
  %v5306 = vpop.f32.mrf.mxu0
  %v5307 = vadd.f32 %v90, %v5306
  %v5308 = vpop.f32.mrf.mxu0
  %v5309 = vadd.f32 %v86, %v5308
  %v5310 = vpop.f32.mrf.mxu0
  %v5311 = vadd.f32 %v90, %v5310
  %5312 = vmatprep.mubr.bf16.mxu0 0
  %5313 = vmatmul.mubr.bf16.gmra.mxu0 %v5226
  %v5314 = vpop.f32.mrf.mxu0
  %v5315 = vadd.f32 %v86, %v5314
  %v5316 = vpop.f32.mrf.mxu0
  %v5317 = vadd.f32 %v90, %v5316
  %v5318 = vpop.f32.mrf.mxu0
  %v5319 = vadd.f32 %v86, %v5318
  %v5320 = vpop.f32.mrf.mxu0
  %v5321 = vadd.f32 %v90, %v5320
  %5322 = vmatprep.mubr.bf16.mxu0 0
  %5323 = vmatmul.mubr.bf16.gmra.mxu0 %v5229
  %v5324 = vpop.f32.mrf.mxu0
  %v5325 = vadd.f32 %v86, %v5324
  %v5326 = vpop.f32.mrf.mxu0
  %v5327 = vadd.f32 %v90, %v5326
  %v5328 = vpop.f32.mrf.mxu0
  %v5329 = vadd.f32 %v86, %v5328
  %v5330 = vpop.f32.mrf.mxu0
  %v5331 = vadd.f32 %v90, %v5330
  %5332 = vmatprep.mubr.bf16.mxu0 0
  %5333 = vmatmul.mubr.bf16.gmra.mxu0 %v5232
  %v5334 = vpop.f32.mrf.mxu0
  %v5335 = vadd.f32 %v86, %v5334
  %v5336 = vpop.f32.mrf.mxu0
  %v5337 = vadd.f32 %v90, %v5336
  %v5338 = vpop.f32.mrf.mxu0
  %v5339 = vadd.f32 %v86, %v5338
  %v5340 = vpop.f32.mrf.mxu0
  %v5341 = vadd.f32 %v90, %v5340
  %5342 = vmatprep.mubr.bf16.mxu0 0
  %5343 = vmatmul.mubr.bf16.gmra.mxu0 %v5235
  %v5344 = vpop.f32.mrf.mxu0
  %v5345 = vadd.f32 %v86, %v5344
  %v5346 = vpop.f32.mrf.mxu0
  %v5347 = vadd.f32 %v90, %v5346
  %v5348 = vpop.f32.mrf.mxu0
  %v5349 = vadd.f32 %v86, %v5348
  %v5350 = vpop.f32.mrf.mxu0
  %v5351 = vadd.f32 %v90, %v5350
  %5352 = vmatprep.mubr.bf16.mxu0 0
  %5353 = vmatmul.mubr.bf16.gmra.mxu0 %v5238
  %v5354 = vpop.f32.mrf.mxu0
  %v5355 = vadd.f32 %v86, %v5354
  %v5356 = vpop.f32.mrf.mxu0
  %v5357 = vadd.f32 %v90, %v5356
  %v5358 = vpop.f32.mrf.mxu0
  %v5359 = vadd.f32 %v86, %v5358
  %v5360 = vpop.f32.mrf.mxu0
  %v5361 = vadd.f32 %v90, %v5360
  %5362 = vmatprep.mubr.bf16.mxu0 0
  %5363 = vmatmul.mubr.bf16.gmra.mxu0 %v5241
  %v5364 = vpop.f32.mrf.mxu0
  %v5365 = vadd.f32 %v86, %v5364
  %v5366 = vpop.f32.mrf.mxu0
  %v5367 = vadd.f32 %v90, %v5366
  %v5368 = vpop.f32.mrf.mxu0
  %v5369 = vadd.f32 %v86, %v5368
  %v5370 = vpop.f32.mrf.mxu0
  %v5371 = vadd.f32 %v90, %v5370
  %5372 = vmatprep.mubr.bf16.mxu0 0
  %5373 = vmatmul.mubr.bf16.gmra.mxu0 %v5244
  %v5374 = vpop.f32.mrf.mxu0
  %v5375 = vadd.f32 %v86, %v5374
  %v5376 = vpop.f32.mrf.mxu0
  %v5377 = vadd.f32 %v90, %v5376
  %v5378 = vpop.f32.mrf.mxu0
  %v5379 = vadd.f32 %v86, %v5378
  %v5380 = vpop.f32.mrf.mxu0
  %v5381 = vadd.f32 %v90, %v5380
  %5382 = vmatprep.mubr.bf16.mxu0 0
  %5383 = vmatmul.mubr.bf16.gmra.mxu0 %v5247
  %v5384 = vpop.f32.mrf.mxu0
  %v5385 = vadd.f32 %v86, %v5384
  %v5386 = vpop.f32.mrf.mxu0
  %v5387 = vadd.f32 %v90, %v5386
  %v5388 = vpop.f32.mrf.mxu0
  %v5389 = vadd.f32 %v86, %v5388
  %v5390 = vpop.f32.mrf.mxu0
  %v5391 = vadd.f32 %v90, %v5390
  %5392 = vmatprep.mubr.bf16.mxu0 0
  %5393 = vmatmul.mubr.bf16.gmra.mxu0 %v5250
  %v5394 = vpop.f32.mrf.mxu0
  %v5395 = vadd.f32 %v86, %v5394
  %v5396 = vpop.f32.mrf.mxu0
  %v5397 = vadd.f32 %v90, %v5396
  %v5398 = vpop.f32.mrf.mxu0
  %v5399 = vadd.f32 %v86, %v5398
  %v5400 = vpop.f32.mrf.mxu0
  %v5401 = vadd.f32 %v90, %v5400
  %5402 = vmatprep.mubr.bf16.mxu0 0
  %5403 = vmatmul.mubr.bf16.gmra.mxu0 %v5253
  %v5404 = vpop.f32.mrf.mxu0
  %v5405 = vadd.f32 %v86, %v5404
  %v5406 = vpop.f32.mrf.mxu0
  %v5407 = vadd.f32 %v90, %v5406
  %v5408 = vpop.f32.mrf.mxu0
  %v5409 = vadd.f32 %v86, %v5408
  %v5410 = vpop.f32.mrf.mxu0
  %v5411 = vadd.f32 %v90, %v5410
  %5412 = vmatprep.mubr.bf16.mxu0 0
  %5413 = vmatmul.mubr.bf16.gmra.mxu0 %v5256
  %v5414 = vpop.f32.mrf.mxu0
  %v5415 = vadd.f32 %v86, %v5414
  %v5416 = vpop.f32.mrf.mxu0
  %v5417 = vadd.f32 %v90, %v5416
  %v5418 = vpop.f32.mrf.mxu0
  %v5419 = vadd.f32 %v86, %v5418
  %v5420 = vpop.f32.mrf.mxu0
  %v5421 = vadd.f32 %v90, %v5420
  %5422 = vmatprep.mubr.bf16.mxu0 0
  %5423 = vmatmul.mubr.bf16.gmra.mxu0 %v5259
  %v5424 = vpop.f32.mrf.mxu0
  %v5425 = vadd.f32 %v86, %v5424
  %v5426 = vpop.f32.mrf.mxu0
  %v5427 = vadd.f32 %v90, %v5426
  %v5428 = vpop.f32.mrf.mxu0
  %v5429 = vadd.f32 %v86, %v5428
  %v5430 = vpop.f32.mrf.mxu0
  %v5431 = vadd.f32 %v90, %v5430
  %5432 = vmatprep.mubr.bf16.mxu0 0
  %5433 = vmatmul.mubr.bf16.gmra.mxu0 %v5262
  %v5434 = vpop.f32.mrf.mxu0
  %v5435 = vadd.f32 %v86, %v5434
  %v5436 = vpop.f32.mrf.mxu0
  %v5437 = vadd.f32 %v90, %v5436
  %v5438 = vpop.f32.mrf.mxu0
  %v5439 = vadd.f32 %v86, %v5438
  %v5440 = vpop.f32.mrf.mxu0
  %v5441 = vadd.f32 %v90, %v5440
  %5442 = vmatprep.mubr.bf16.mxu0 0
  %5443 = vmatmul.mubr.bf16.gmra.mxu0 %v5265
  %v5444 = vpop.f32.mrf.mxu0
  %v5445 = vadd.f32 %v86, %v5444
  %v5446 = vpop.f32.mrf.mxu0
  %v5447 = vadd.f32 %v90, %v5446
  %v5448 = vpop.f32.mrf.mxu0
  %v5449 = vadd.f32 %v86, %v5448
  %v5450 = vpop.f32.mrf.mxu0
  %v5451 = vadd.f32 %v90, %v5450
  %5452 = vmatprep.mubr.bf16.mxu0 0
  %5453 = vmatmul.mubr.bf16.gmra.mxu0 %v5268
  %v5454 = vpop.f32.mrf.mxu0
  %v5455 = vadd.f32 %v86, %v5454
  %v5456 = vpop.f32.mrf.mxu0
  %v5457 = vadd.f32 %v90, %v5456
  %v5458 = vpop.f32.mrf.mxu0
  %v5459 = vadd.f32 %v86, %v5458
  %v5460 = vpop.f32.mrf.mxu0
  %v5461 = vadd.f32 %v90, %v5460
  %5462 = vdwg.mxu0
  %5463 = vmatprep.subr.bf16.mxu0 0
  %5464 = vmatpush1.bf16.msra.mxu0 0
  %5465 = vmatprep.subr.bf16.mxu0 0
  %5466 = vmatpush1.bf16.msra.mxu0 0
  %5467 = vmatprep.subr.bf16.mxu0 0
  %5468 = vmatpush1.bf16.msra.mxu0 0
  %5469 = vmatprep.subr.bf16.mxu0 0
  %5470 = vmatpush1.bf16.msra.mxu0 0
  %5471 = vmatprep.subr.bf16.mxu0 0
  %5472 = vmatpush1.bf16.msra.mxu0 0
  %5473 = vmatprep.subr.bf16.mxu0 %v293
  %5474 = vmatpush1.bf16.msra.mxu0 %v290
  %5475 = vmatprep.subr.bf16.mxu0 %v220
  %5476 = vmatpush1.bf16.msra.mxu0 %v219
  %5477 = vmatprep.subr.bf16.mxu0 %v216
  %5478 = vmatpush1.bf16.msra.mxu0 %v215
  %5479 = vmatprep.subr.bf16.mxu0 0
  %5480 = vmatpush2.bf16.msra.mxu0 0
  %5481 = vmatprep.subr.bf16.mxu0 0
  %5482 = vmatpush2.bf16.msra.mxu0 0
  %5483 = vmatprep.subr.bf16.mxu0 0
  %5484 = vmatpush2.bf16.msra.mxu0 0
  %5485 = vmatprep.subr.bf16.mxu0 0
  %5486 = vmatpush2.bf16.msra.mxu0 0
  %5487 = vmatprep.subr.bf16.mxu0 0
  %5488 = vmatpush2.bf16.msra.mxu0 0
  %5489 = vmatprep.subr.bf16.mxu0 0
  %5490 = vmatpush2.bf16.msra.mxu0 0
  %5491 = vmatprep.subr.bf16.mxu0 0
  %5492 = vmatpush2.bf16.msra.mxu0 0
  %5493 = vmatprep.subr.bf16.mxu0 0
  %5494 = vmatpush2.bf16.msra.mxu0 0
  %5495 = vmatprep.mubr.bf16.mxu0 0
  %5496 = vmatmul.mubr.bf16.gmra.mxu0 %v5223
  %v5497 = vpop.f32.mrf.mxu0
  %v5498 = vadd.f32 %v94, %v5497
  %v5499 = vpop.f32.mrf.mxu0
  %v5500 = vadd.f32 %v98, %v5499
  %v5501 = vpop.f32.mrf.mxu0
  %v5502 = vadd.f32 %v94, %v5501
  %v5503 = vpop.f32.mrf.mxu0
  %v5504 = vadd.f32 %v98, %v5503
  %5505 = vmatprep.mubr.bf16.mxu0 0
  %5506 = vmatmul.mubr.bf16.gmra.mxu0 %v5226
  %v5507 = vpop.f32.mrf.mxu0
  %v5508 = vadd.f32 %v94, %v5507
  %v5509 = vpop.f32.mrf.mxu0
  %v5510 = vadd.f32 %v98, %v5509
  %v5511 = vpop.f32.mrf.mxu0
  %v5512 = vadd.f32 %v94, %v5511
  %v5513 = vpop.f32.mrf.mxu0
  %v5514 = vadd.f32 %v98, %v5513
  %5515 = vmatprep.mubr.bf16.mxu0 0
  %5516 = vmatmul.mubr.bf16.gmra.mxu0 %v5229
  %v5517 = vpop.f32.mrf.mxu0
  %v5518 = vadd.f32 %v94, %v5517
  %v5519 = vpop.f32.mrf.mxu0
  %v5520 = vadd.f32 %v98, %v5519
  %v5521 = vpop.f32.mrf.mxu0
  %v5522 = vadd.f32 %v94, %v5521
  %v5523 = vpop.f32.mrf.mxu0
  %v5524 = vadd.f32 %v98, %v5523
  %5525 = vmatprep.mubr.bf16.mxu0 0
  %5526 = vmatmul.mubr.bf16.gmra.mxu0 %v5232
  %v5527 = vpop.f32.mrf.mxu0
  %v5528 = vadd.f32 %v94, %v5527
  %v5529 = vpop.f32.mrf.mxu0
  %v5530 = vadd.f32 %v98, %v5529
  %v5531 = vpop.f32.mrf.mxu0
  %v5532 = vadd.f32 %v94, %v5531
  %v5533 = vpop.f32.mrf.mxu0
  %v5534 = vadd.f32 %v98, %v5533
  %5535 = vmatprep.mubr.bf16.mxu0 0
  %5536 = vmatmul.mubr.bf16.gmra.mxu0 %v5235
  %v5537 = vpop.f32.mrf.mxu0
  %v5538 = vadd.f32 %v94, %v5537
  %v5539 = vpop.f32.mrf.mxu0
  %v5540 = vadd.f32 %v98, %v5539
  %v5541 = vpop.f32.mrf.mxu0
  %v5542 = vadd.f32 %v94, %v5541
  %v5543 = vpop.f32.mrf.mxu0
  %v5544 = vadd.f32 %v98, %v5543
  %5545 = vmatprep.mubr.bf16.mxu0 0
  %5546 = vmatmul.mubr.bf16.gmra.mxu0 %v5238
  %v5547 = vpop.f32.mrf.mxu0
  %v5548 = vadd.f32 %v94, %v5547
  %v5549 = vpop.f32.mrf.mxu0
  %v5550 = vadd.f32 %v98, %v5549
  %v5551 = vpop.f32.mrf.mxu0
  %v5552 = vadd.f32 %v94, %v5551
  %v5553 = vpop.f32.mrf.mxu0
  %v5554 = vadd.f32 %v98, %v5553
  %5555 = vmatprep.mubr.bf16.mxu0 0
  %5556 = vmatmul.mubr.bf16.gmra.mxu0 %v5241
  %v5557 = vpop.f32.mrf.mxu0
  %v5558 = vadd.f32 %v94, %v5557
  %v5559 = vpop.f32.mrf.mxu0
  %v5560 = vadd.f32 %v98, %v5559
  %v5561 = vpop.f32.mrf.mxu0
  %v5562 = vadd.f32 %v94, %v5561
  %v5563 = vpop.f32.mrf.mxu0
  %v5564 = vadd.f32 %v98, %v5563
  %5565 = vmatprep.mubr.bf16.mxu0 0
  %5566 = vmatmul.mubr.bf16.gmra.mxu0 %v5244
  %v5567 = vpop.f32.mrf.mxu0
  %v5568 = vadd.f32 %v94, %v5567
  %v5569 = vpop.f32.mrf.mxu0
  %v5570 = vadd.f32 %v98, %v5569
  %v5571 = vpop.f32.mrf.mxu0
  %v5572 = vadd.f32 %v94, %v5571
  %v5573 = vpop.f32.mrf.mxu0
  %v5574 = vadd.f32 %v98, %v5573
  %5575 = vmatprep.mubr.bf16.mxu0 0
  %5576 = vmatmul.mubr.bf16.gmra.mxu0 %v5247
  %v5577 = vpop.f32.mrf.mxu0
  %v5578 = vadd.f32 %v94, %v5577
  %v5579 = vpop.f32.mrf.mxu0
  %v5580 = vadd.f32 %v98, %v5579
  %v5581 = vpop.f32.mrf.mxu0
  %v5582 = vadd.f32 %v94, %v5581
  %v5583 = vpop.f32.mrf.mxu0
  %v5584 = vadd.f32 %v98, %v5583
  %5585 = vmatprep.mubr.bf16.mxu0 0
  %5586 = vmatmul.mubr.bf16.gmra.mxu0 %v5250
  %v5587 = vpop.f32.mrf.mxu0
  %v5588 = vadd.f32 %v94, %v5587
  %v5589 = vpop.f32.mrf.mxu0
  %v5590 = vadd.f32 %v98, %v5589
  %v5591 = vpop.f32.mrf.mxu0
  %v5592 = vadd.f32 %v94, %v5591
  %v5593 = vpop.f32.mrf.mxu0
  %v5594 = vadd.f32 %v98, %v5593
  %5595 = vmatprep.mubr.bf16.mxu0 0
  %5596 = vmatmul.mubr.bf16.gmra.mxu0 %v5253
  %v5597 = vpop.f32.mrf.mxu0
  %v5598 = vadd.f32 %v94, %v5597
  %v5599 = vpop.f32.mrf.mxu0
  %v5600 = vadd.f32 %v98, %v5599
  %v5601 = vpop.f32.mrf.mxu0
  %v5602 = vadd.f32 %v94, %v5601
  %v5603 = vpop.f32.mrf.mxu0
  %v5604 = vadd.f32 %v98, %v5603
  %5605 = vmatprep.mubr.bf16.mxu0 0
  %5606 = vmatmul.mubr.bf16.gmra.mxu0 %v5256
  %v5607 = vpop.f32.mrf.mxu0
  %v5608 = vadd.f32 %v94, %v5607
  %v5609 = vpop.f32.mrf.mxu0
  %v5610 = vadd.f32 %v98, %v5609
  %v5611 = vpop.f32.mrf.mxu0
  %v5612 = vadd.f32 %v94, %v5611
  %v5613 = vpop.f32.mrf.mxu0
  %v5614 = vadd.f32 %v98, %v5613
  %5615 = vmatprep.mubr.bf16.mxu0 0
  %5616 = vmatmul.mubr.bf16.gmra.mxu0 %v5259
  %v5617 = vpop.f32.mrf.mxu0
  %v5618 = vadd.f32 %v94, %v5617
  %v5619 = vpop.f32.mrf.mxu0
  %v5620 = vadd.f32 %v98, %v5619
  %v5621 = vpop.f32.mrf.mxu0
  %v5622 = vadd.f32 %v94, %v5621
  %v5623 = vpop.f32.mrf.mxu0
  %v5624 = vadd.f32 %v98, %v5623
  %5625 = vmatprep.mubr.bf16.mxu0 0
  %5626 = vmatmul.mubr.bf16.gmra.mxu0 %v5262
  %v5627 = vpop.f32.mrf.mxu0
  %v5628 = vadd.f32 %v94, %v5627
  %v5629 = vpop.f32.mrf.mxu0
  %v5630 = vadd.f32 %v98, %v5629
  %v5631 = vpop.f32.mrf.mxu0
  %v5632 = vadd.f32 %v94, %v5631
  %v5633 = vpop.f32.mrf.mxu0
  %v5634 = vadd.f32 %v98, %v5633
  %5635 = vmatprep.mubr.bf16.mxu0 0
  %5636 = vmatmul.mubr.bf16.gmra.mxu0 %v5265
  %v5637 = vpop.f32.mrf.mxu0
  %v5638 = vadd.f32 %v94, %v5637
  %v5639 = vpop.f32.mrf.mxu0
  %v5640 = vadd.f32 %v98, %v5639
  %v5641 = vpop.f32.mrf.mxu0
  %v5642 = vadd.f32 %v94, %v5641
  %v5643 = vpop.f32.mrf.mxu0
  %v5644 = vadd.f32 %v98, %v5643
  %5645 = vmatprep.mubr.bf16.mxu0 0
  %5646 = vmatmul.mubr.bf16.gmra.mxu0 %v5268
  %v5647 = vpop.f32.mrf.mxu0
  %v5648 = vadd.f32 %v94, %v5647
  %v5649 = vpop.f32.mrf.mxu0
  %v5650 = vadd.f32 %v98, %v5649
  %v5651 = vpop.f32.mrf.mxu0
  %v5652 = vadd.f32 %v94, %v5651
  %v5653 = vpop.f32.mrf.mxu0
  %v5654 = vadd.f32 %v98, %v5653
  %5655 = vdwg.mxu0
  %v5656 = vmax.f32 %v5305, 0.0
  %v5657 = vmax.f32 %v5307, 0.0
  %v5658 = vmax.f32 %v5498, 0.0
  %v5659 = vmax.f32 %v5500, 0.0
  %v5660 = vmax.f32 %v5309, 0.0
  %v5661 = vmax.f32 %v5311, 0.0
  %v5662 = vmax.f32 %v5502, 0.0
  %v5663 = vmax.f32 %v5504, 0.0
  %v5664 = vmax.f32 %v5315, 0.0
  %v5665 = vmax.f32 %v5317, 0.0
  %v5666 = vmax.f32 %v5508, 0.0
  %v5667 = vmax.f32 %v5510, 0.0
  %v5668 = vmax.f32 %v5319, 0.0
  %v5669 = vmax.f32 %v5321, 0.0
  %v5670 = vmax.f32 %v5512, 0.0
  %v5671 = vmax.f32 %v5514, 0.0
  %v5672 = vmax.f32 %v5325, 0.0
  %v5673 = vmax.f32 %v5327, 0.0
  %v5674 = vmax.f32 %v5518, 0.0
  %v5675 = vmax.f32 %v5520, 0.0
  %v5676 = vmax.f32 %v5329, 0.0
  %v5677 = vmax.f32 %v5331, 0.0
  %v5678 = vmax.f32 %v5522, 0.0
  %v5679 = vmax.f32 %v5524, 0.0
  %v5680 = vmax.f32 %v5335, 0.0
  %v5681 = vmax.f32 %v5337, 0.0
  %v5682 = vmax.f32 %v5528, 0.0
  %v5683 = vmax.f32 %v5530, 0.0
  %v5684 = vmax.f32 %v5339, 0.0
  %v5685 = vmax.f32 %v5341, 0.0
  %v5686 = vmax.f32 %v5532, 0.0
  %v5687 = vmax.f32 %v5534, 0.0
  %v5688 = vmax.f32 %v5345, 0.0
  %v5689 = vmax.f32 %v5347, 0.0
  %v5690 = vmax.f32 %v5538, 0.0
  %v5691 = vmax.f32 %v5540, 0.0
  %v5692 = vmax.f32 %v5349, 0.0
  %v5693 = vmax.f32 %v5351, 0.0
  %v5694 = vmax.f32 %v5542, 0.0
  %v5695 = vmax.f32 %v5544, 0.0
  %v5696 = vmax.f32 %v5355, 0.0
  %v5697 = vmax.f32 %v5357, 0.0
  %v5698 = vmax.f32 %v5548, 0.0
  %v5699 = vmax.f32 %v5550, 0.0
  %v5700 = vmax.f32 %v5359, 0.0
  %v5701 = vmax.f32 %v5361, 0.0
  %v5702 = vmax.f32 %v5552, 0.0
  %v5703 = vmax.f32 %v5554, 0.0
  %v5704 = vmax.f32 %v5365, 0.0
  %v5705 = vmax.f32 %v5367, 0.0
  %v5706 = vmax.f32 %v5558, 0.0
  %v5707 = vmax.f32 %v5560, 0.0
  %v5708 = vmax.f32 %v5369, 0.0
  %v5709 = vmax.f32 %v5371, 0.0
  %v5710 = vmax.f32 %v5562, 0.0
  %v5711 = vmax.f32 %v5564, 0.0
  %v5712 = vmax.f32 %v5375, 0.0
  %v5713 = vmax.f32 %v5377, 0.0
  %v5714 = vmax.f32 %v5568, 0.0
  %v5715 = vmax.f32 %v5570, 0.0
  %v5716 = vmax.f32 %v5379, 0.0
  %v5717 = vmax.f32 %v5381, 0.0
  %v5718 = vmax.f32 %v5572, 0.0
  %v5719 = vmax.f32 %v5574, 0.0
  %v5720 = vmax.f32 %v5385, 0.0
  %v5721 = vmax.f32 %v5387, 0.0
  %v5722 = vmax.f32 %v5578, 0.0
  %v5723 = vmax.f32 %v5580, 0.0
  %v5724 = vmax.f32 %v5389, 0.0
  %v5725 = vmax.f32 %v5391, 0.0
  %v5726 = vmax.f32 %v5582, 0.0
  %v5727 = vmax.f32 %v5584, 0.0
  %v5728 = vmax.f32 %v5395, 0.0
  %v5729 = vmax.f32 %v5397, 0.0
  %v5730 = vmax.f32 %v5588, 0.0
  %v5731 = vmax.f32 %v5590, 0.0
  %v5732 = vmax.f32 %v5399, 0.0
  %v5733 = vmax.f32 %v5401, 0.0
  %v5734 = vmax.f32 %v5592, 0.0
  %v5735 = vmax.f32 %v5594, 0.0
  %v5736 = vmax.f32 %v5405, 0.0
  %v5737 = vmax.f32 %v5407, 0.0
  %v5738 = vmax.f32 %v5598, 0.0
  %v5739 = vmax.f32 %v5600, 0.0
  %v5740 = vmax.f32 %v5409, 0.0
  %v5741 = vmax.f32 %v5411, 0.0
  %v5742 = vmax.f32 %v5602, 0.0
  %v5743 = vmax.f32 %v5604, 0.0
  %v5744 = vmax.f32 %v5415, 0.0
  %v5745 = vmax.f32 %v5417, 0.0
  %v5746 = vmax.f32 %v5608, 0.0
  %v5747 = vmax.f32 %v5610, 0.0
  %v5748 = vmax.f32 %v5419, 0.0
  %v5749 = vmax.f32 %v5421, 0.0
  %v5750 = vmax.f32 %v5612, 0.0
  %v5751 = vmax.f32 %v5614, 0.0
  %v5752 = vmax.f32 %v5425, 0.0
  %v5753 = vmax.f32 %v5427, 0.0
  %v5754 = vmax.f32 %v5618, 0.0
  %v5755 = vmax.f32 %v5620, 0.0
  %v5756 = vmax.f32 %v5429, 0.0
  %v5757 = vmax.f32 %v5431, 0.0
  %v5758 = vmax.f32 %v5622, 0.0
  %v5759 = vmax.f32 %v5624, 0.0
  %v5760 = vmax.f32 %v5435, 0.0
  %v5761 = vmax.f32 %v5437, 0.0
  %v5762 = vmax.f32 %v5628, 0.0
  %v5763 = vmax.f32 %v5630, 0.0
  %v5764 = vmax.f32 %v5439, 0.0
  %v5765 = vmax.f32 %v5441, 0.0
  %v5766 = vmax.f32 %v5632, 0.0
  %v5767 = vmax.f32 %v5634, 0.0
  %v5768 = vmax.f32 %v5445, 0.0
  %v5769 = vmax.f32 %v5447, 0.0
  %v5770 = vmax.f32 %v5638, 0.0
  %v5771 = vmax.f32 %v5640, 0.0
  %v5772 = vmax.f32 %v5449, 0.0
  %v5773 = vmax.f32 %v5451, 0.0
  %v5774 = vmax.f32 %v5642, 0.0
  %v5775 = vmax.f32 %v5644, 0.0
  %v5776 = vmax.f32 %v5455, 0.0
  %v5777 = vmax.f32 %v5457, 0.0
  %v5778 = vmax.f32 %v5648, 0.0
  %v5779 = vmax.f32 %v5650, 0.0
  %v5780 = vmax.f32 %v5459, 0.0
  %v5781 = vmax.f32 %v5461, 0.0
  %v5782 = vmax.f32 %v5652, 0.0
  %v5783 = vmax.f32 %v5654, 0.0
  %v5784 = vadd.f32 %v5656, %v5660
  %v5785 = vadd.f32 %v5784, %v5664
  %v5786 = vadd.f32 %v5785, %v5668
  %v5787 = vrot.slane %v5786, 4
  %v5788 = vadd.f32 %v5786, %v5787
  %v5789 = vrot.slane %v5788, 2
  %v5790 = vadd.f32 %v5788, %v5789
  %v5791 = vrot.slane %v5790, 1
  %v5792 = vadd.f32 %v5790, %v5791
  %v5793 = vadd.f32 %v5657, %v5661
  %v5794 = vadd.f32 %v5793, %v5665
  %v5795 = vadd.f32 %v5794, %v5669
  %v5796 = vrot.slane %v5795, 4
  %v5797 = vadd.f32 %v5795, %v5796
  %v5798 = vrot.slane %v5797, 2
  %v5799 = vadd.f32 %v5797, %v5798
  %v5800 = vrot.slane %v5799, 1
  %v5801 = vadd.f32 %v5799, %v5800
  %v5802 = vadd.f32 %v5658, %v5662
  %v5803 = vadd.f32 %v5802, %v5666
  %v5804 = vadd.f32 %v5803, %v5670
  %v5805 = vrot.slane %v5804, 4
  %v5806 = vadd.f32 %v5804, %v5805
  %v5807 = vrot.slane %v5806, 2
  %v5808 = vadd.f32 %v5806, %v5807
  %v5809 = vrot.slane %v5808, 1
  %v5810 = vadd.f32 %v5808, %v5809
  %v5811 = vadd.f32 %v5659, %v5663
  %v5812 = vadd.f32 %v5811, %v5667
  %v5813 = vadd.f32 %v5812, %v5671
  %v5814 = vrot.slane %v5813, 4
  %v5815 = vadd.f32 %v5813, %v5814
  %v5816 = vrot.slane %v5815, 2
  %v5817 = vadd.f32 %v5815, %v5816
  %v5818 = vrot.slane %v5817, 1
  %v5819 = vadd.f32 %v5817, %v5818
  %v5820 = vadd.f32 %v5672, %v5676
  %v5821 = vadd.f32 %v5820, %v5680
  %v5822 = vadd.f32 %v5821, %v5684
  %v5823 = vrot.slane %v5822, 4
  %v5824 = vadd.f32 %v5822, %v5823
  %v5825 = vrot.slane %v5824, 2
  %v5826 = vadd.f32 %v5824, %v5825
  %v5827 = vrot.slane %v5826, 1
  %v5828 = vadd.f32 %v5826, %v5827
  %v5829 = vadd.f32 %v5673, %v5677
  %v5830 = vadd.f32 %v5829, %v5681
  %v5831 = vadd.f32 %v5830, %v5685
  %v5832 = vrot.slane %v5831, 4
  %v5833 = vadd.f32 %v5831, %v5832
  %v5834 = vrot.slane %v5833, 2
  %v5835 = vadd.f32 %v5833, %v5834
  %v5836 = vrot.slane %v5835, 1
  %v5837 = vadd.f32 %v5835, %v5836
  %v5838 = vadd.f32 %v5674, %v5678
  %v5839 = vadd.f32 %v5838, %v5682
  %v5840 = vadd.f32 %v5839, %v5686
  %v5841 = vrot.slane %v5840, 4
  %v5842 = vadd.f32 %v5840, %v5841
  %v5843 = vrot.slane %v5842, 2
  %v5844 = vadd.f32 %v5842, %v5843
  %v5845 = vrot.slane %v5844, 1
  %v5846 = vadd.f32 %v5844, %v5845
  %v5847 = vadd.f32 %v5675, %v5679
  %v5848 = vadd.f32 %v5847, %v5683
  %v5849 = vadd.f32 %v5848, %v5687
  %v5850 = vrot.slane %v5849, 4
  %v5851 = vadd.f32 %v5849, %v5850
  %v5852 = vrot.slane %v5851, 2
  %v5853 = vadd.f32 %v5851, %v5852
  %v5854 = vrot.slane %v5853, 1
  %v5855 = vadd.f32 %v5853, %v5854
  %v5856 = vadd.f32 %v5688, %v5692
  %v5857 = vadd.f32 %v5856, %v5696
  %v5858 = vadd.f32 %v5857, %v5700
  %v5859 = vrot.slane %v5858, 4
  %v5860 = vadd.f32 %v5858, %v5859
  %v5861 = vrot.slane %v5860, 2
  %v5862 = vadd.f32 %v5860, %v5861
  %v5863 = vrot.slane %v5862, 1
  %v5864 = vadd.f32 %v5862, %v5863
  %v5865 = vadd.f32 %v5689, %v5693
  %v5866 = vadd.f32 %v5865, %v5697
  %v5867 = vadd.f32 %v5866, %v5701
  %v5868 = vrot.slane %v5867, 4
  %v5869 = vadd.f32 %v5867, %v5868
  %v5870 = vrot.slane %v5869, 2
  %v5871 = vadd.f32 %v5869, %v5870
  %v5872 = vrot.slane %v5871, 1
  %v5873 = vadd.f32 %v5871, %v5872
  %v5874 = vadd.f32 %v5690, %v5694
  %v5875 = vadd.f32 %v5874, %v5698
  %v5876 = vadd.f32 %v5875, %v5702
  %v5877 = vrot.slane %v5876, 4
  %v5878 = vadd.f32 %v5876, %v5877
  %v5879 = vrot.slane %v5878, 2
  %v5880 = vadd.f32 %v5878, %v5879
  %v5881 = vrot.slane %v5880, 1
  %v5882 = vadd.f32 %v5880, %v5881
  %v5883 = vadd.f32 %v5691, %v5695
  %v5884 = vadd.f32 %v5883, %v5699
  %v5885 = vadd.f32 %v5884, %v5703
  %v5886 = vrot.slane %v5885, 4
  %v5887 = vadd.f32 %v5885, %v5886
  %v5888 = vrot.slane %v5887, 2
  %v5889 = vadd.f32 %v5887, %v5888
  %v5890 = vrot.slane %v5889, 1
  %v5891 = vadd.f32 %v5889, %v5890
  %v5892 = vadd.f32 %v5704, %v5708
  %v5893 = vadd.f32 %v5892, %v5712
  %v5894 = vadd.f32 %v5893, %v5716
  %v5895 = vrot.slane %v5894, 4
  %v5896 = vadd.f32 %v5894, %v5895
  %v5897 = vrot.slane %v5896, 2
  %v5898 = vadd.f32 %v5896, %v5897
  %v5899 = vrot.slane %v5898, 1
  %v5900 = vadd.f32 %v5898, %v5899
  %v5901 = vadd.f32 %v5705, %v5709
  %v5902 = vadd.f32 %v5901, %v5713
  %v5903 = vadd.f32 %v5902, %v5717
  %v5904 = vrot.slane %v5903, 4
  %v5905 = vadd.f32 %v5903, %v5904
  %v5906 = vrot.slane %v5905, 2
  %v5907 = vadd.f32 %v5905, %v5906
  %v5908 = vrot.slane %v5907, 1
  %v5909 = vadd.f32 %v5907, %v5908
  %v5910 = vadd.f32 %v5706, %v5710
  %v5911 = vadd.f32 %v5910, %v5714
  %v5912 = vadd.f32 %v5911, %v5718
  %v5913 = vrot.slane %v5912, 4
  %v5914 = vadd.f32 %v5912, %v5913
  %v5915 = vrot.slane %v5914, 2
  %v5916 = vadd.f32 %v5914, %v5915
  %v5917 = vrot.slane %v5916, 1
  %v5918 = vadd.f32 %v5916, %v5917
  %v5919 = vadd.f32 %v5707, %v5711
  %v5920 = vadd.f32 %v5919, %v5715
  %v5921 = vadd.f32 %v5920, %v5719
  %v5922 = vrot.slane %v5921, 4
  %v5923 = vadd.f32 %v5921, %v5922
  %v5924 = vrot.slane %v5923, 2
  %v5925 = vadd.f32 %v5923, %v5924
  %v5926 = vrot.slane %v5925, 1
  %v5927 = vadd.f32 %v5925, %v5926
  %v5928 = vadd.f32 %v5720, %v5724
  %v5929 = vadd.f32 %v5928, %v5728
  %v5930 = vadd.f32 %v5929, %v5732
  %v5931 = vrot.slane %v5930, 4
  %v5932 = vadd.f32 %v5930, %v5931
  %v5933 = vrot.slane %v5932, 2
  %v5934 = vadd.f32 %v5932, %v5933
  %v5935 = vrot.slane %v5934, 1
  %v5936 = vadd.f32 %v5934, %v5935
  %v5937 = vadd.f32 %v5721, %v5725
  %v5938 = vadd.f32 %v5937, %v5729
  %v5939 = vadd.f32 %v5938, %v5733
  %v5940 = vrot.slane %v5939, 4
  %v5941 = vadd.f32 %v5939, %v5940
  %v5942 = vrot.slane %v5941, 2
  %v5943 = vadd.f32 %v5941, %v5942
  %v5944 = vrot.slane %v5943, 1
  %v5945 = vadd.f32 %v5943, %v5944
  %v5946 = vadd.f32 %v5722, %v5726
  %v5947 = vadd.f32 %v5946, %v5730
  %v5948 = vadd.f32 %v5947, %v5734
  %v5949 = vrot.slane %v5948, 4
  %v5950 = vadd.f32 %v5948, %v5949
  %v5951 = vrot.slane %v5950, 2
  %v5952 = vadd.f32 %v5950, %v5951
  %v5953 = vrot.slane %v5952, 1
  %v5954 = vadd.f32 %v5952, %v5953
  %v5955 = vadd.f32 %v5723, %v5727
  %v5956 = vadd.f32 %v5955, %v5731
  %v5957 = vadd.f32 %v5956, %v5735
  %v5958 = vrot.slane %v5957, 4
  %v5959 = vadd.f32 %v5957, %v5958
  %v5960 = vrot.slane %v5959, 2
  %v5961 = vadd.f32 %v5959, %v5960
  %v5962 = vrot.slane %v5961, 1
  %v5963 = vadd.f32 %v5961, %v5962
  %v5964 = vadd.f32 %v5736, %v5740
  %v5965 = vadd.f32 %v5964, %v5744
  %v5966 = vadd.f32 %v5965, %v5748
  %v5967 = vrot.slane %v5966, 4
  %v5968 = vadd.f32 %v5966, %v5967
  %v5969 = vrot.slane %v5968, 2
  %v5970 = vadd.f32 %v5968, %v5969
  %v5971 = vrot.slane %v5970, 1
  %v5972 = vadd.f32 %v5970, %v5971
  %v5973 = vadd.f32 %v5737, %v5741
  %v5974 = vadd.f32 %v5973, %v5745
  %v5975 = vadd.f32 %v5974, %v5749
  %v5976 = vrot.slane %v5975, 4
  %v5977 = vadd.f32 %v5975, %v5976
  %v5978 = vrot.slane %v5977, 2
  %v5979 = vadd.f32 %v5977, %v5978
  %v5980 = vrot.slane %v5979, 1
  %v5981 = vadd.f32 %v5979, %v5980
  %v5982 = vadd.f32 %v5738, %v5742
  %v5983 = vadd.f32 %v5982, %v5746
  %v5984 = vadd.f32 %v5983, %v5750
  %v5985 = vrot.slane %v5984, 4
  %v5986 = vadd.f32 %v5984, %v5985
  %v5987 = vrot.slane %v5986, 2
  %v5988 = vadd.f32 %v5986, %v5987
  %v5989 = vrot.slane %v5988, 1
  %v5990 = vadd.f32 %v5988, %v5989
  %v5991 = vadd.f32 %v5739, %v5743
  %v5992 = vadd.f32 %v5991, %v5747
  %v5993 = vadd.f32 %v5992, %v5751
  %v5994 = vrot.slane %v5993, 4
  %v5995 = vadd.f32 %v5993, %v5994
  %v5996 = vrot.slane %v5995, 2
  %v5997 = vadd.f32 %v5995, %v5996
  %v5998 = vrot.slane %v5997, 1
  %v5999 = vadd.f32 %v5997, %v5998
  %v6000 = vadd.f32 %v5752, %v5756
  %v6001 = vadd.f32 %v6000, %v5760
  %v6002 = vadd.f32 %v6001, %v5764
  %v6003 = vrot.slane %v6002, 4
  %v6004 = vadd.f32 %v6002, %v6003
  %v6005 = vrot.slane %v6004, 2
  %v6006 = vadd.f32 %v6004, %v6005
  %v6007 = vrot.slane %v6006, 1
  %v6008 = vadd.f32 %v6006, %v6007
  %v6009 = vadd.f32 %v5753, %v5757
  %v6010 = vadd.f32 %v6009, %v5761
  %v6011 = vadd.f32 %v6010, %v5765
  %v6012 = vrot.slane %v6011, 4
  %v6013 = vadd.f32 %v6011, %v6012
  %v6014 = vrot.slane %v6013, 2
  %v6015 = vadd.f32 %v6013, %v6014
  %v6016 = vrot.slane %v6015, 1
  %v6017 = vadd.f32 %v6015, %v6016
  %v6018 = vadd.f32 %v5754, %v5758
  %v6019 = vadd.f32 %v6018, %v5762
  %v6020 = vadd.f32 %v6019, %v5766
  %v6021 = vrot.slane %v6020, 4
  %v6022 = vadd.f32 %v6020, %v6021
  %v6023 = vrot.slane %v6022, 2
  %v6024 = vadd.f32 %v6022, %v6023
  %v6025 = vrot.slane %v6024, 1
  %v6026 = vadd.f32 %v6024, %v6025
  %v6027 = vadd.f32 %v5755, %v5759
  %v6028 = vadd.f32 %v6027, %v5763
  %v6029 = vadd.f32 %v6028, %v5767
  %v6030 = vrot.slane %v6029, 4
  %v6031 = vadd.f32 %v6029, %v6030
  %v6032 = vrot.slane %v6031, 2
  %v6033 = vadd.f32 %v6031, %v6032
  %v6034 = vrot.slane %v6033, 1
  %v6035 = vadd.f32 %v6033, %v6034
  %v6036 = vadd.f32 %v5768, %v5772
  %v6037 = vadd.f32 %v6036, %v5776
  %v6038 = vadd.f32 %v6037, %v5780
  %v6039 = vrot.slane %v6038, 4
  %v6040 = vadd.f32 %v6038, %v6039
  %v6041 = vrot.slane %v6040, 2
  %v6042 = vadd.f32 %v6040, %v6041
  %v6043 = vrot.slane %v6042, 1
  %v6044 = vadd.f32 %v6042, %v6043
  %v6045 = vadd.f32 %v5769, %v5773
  %v6046 = vadd.f32 %v6045, %v5777
  %v6047 = vadd.f32 %v6046, %v5781
  %v6048 = vrot.slane %v6047, 4
  %v6049 = vadd.f32 %v6047, %v6048
  %v6050 = vrot.slane %v6049, 2
  %v6051 = vadd.f32 %v6049, %v6050
  %v6052 = vrot.slane %v6051, 1
  %v6053 = vadd.f32 %v6051, %v6052
  %v6054 = vadd.f32 %v5770, %v5774
  %v6055 = vadd.f32 %v6054, %v5778
  %v6056 = vadd.f32 %v6055, %v5782
  %v6057 = vrot.slane %v6056, 4
  %v6058 = vadd.f32 %v6056, %v6057
  %v6059 = vrot.slane %v6058, 2
  %v6060 = vadd.f32 %v6058, %v6059
  %v6061 = vrot.slane %v6060, 1
  %v6062 = vadd.f32 %v6060, %v6061
  %v6063 = vadd.f32 %v5771, %v5775
  %v6064 = vadd.f32 %v6063, %v5779
  %v6065 = vadd.f32 %v6064, %v5783
  %v6066 = vrot.slane %v6065, 4
  %v6067 = vadd.f32 %v6065, %v6066
  %v6068 = vrot.slane %v6067, 2
  %v6069 = vadd.f32 %v6067, %v6068
  %v6070 = vrot.slane %v6069, 1
  %v6071 = vadd.f32 %v6069, %v6070
  %v6072 = vadd.f32 %v5077, %v5792
  %v6073 = vadd.f32 %v5078, %v5801
  %v6074 = vadd.f32 %v5079, %v5810
  %v6075 = vadd.f32 %v5080, %v5819
  %v6076 = vadd.f32 %v5081, %v5828
  %v6077 = vadd.f32 %v5082, %v5837
  %v6078 = vadd.f32 %v5083, %v5846
  %v6079 = vadd.f32 %v5084, %v5855
  %v6080 = vadd.f32 %v5085, %v5864
  %v6081 = vadd.f32 %v5086, %v5873
  %v6082 = vadd.f32 %v5087, %v5882
  %v6083 = vadd.f32 %v5088, %v5891
  %v6084 = vadd.f32 %v5089, %v5900
  %v6085 = vadd.f32 %v5090, %v5909
  %v6086 = vadd.f32 %v5091, %v5918
  %v6087 = vadd.f32 %v5092, %v5927
  %v6088 = vadd.f32 %v5093, %v5936
  %v6089 = vadd.f32 %v5094, %v5945
  %v6090 = vadd.f32 %v5095, %v5954
  %v6091 = vadd.f32 %v5096, %v5963
  %v6092 = vadd.f32 %v5097, %v5972
  %v6093 = vadd.f32 %v5098, %v5981
  %v6094 = vadd.f32 %v5099, %v5990
  %v6095 = vadd.f32 %v5100, %v5999
  %v6096 = vadd.f32 %v5101, %v6008
  %v6097 = vadd.f32 %v5102, %v6017
  %v6098 = vadd.f32 %v5103, %v6026
  %v6099 = vadd.f32 %v5104, %v6035
  %v6100 = vadd.f32 %v5105, %v6044
  %v6101 = vadd.f32 %v5106, %v6053
  %v6102 = vadd.f32 %v5107, %v6062
  %v6103 = vadd.f32 %v5108, %v6071
  %s6104 = scalar_lea.vmem %s0, 96
  %v6105 = vld [vmem:[%s6104] sm:$0xf]
  %v6106 = vld [vmem:[%s6104 + $0x4] sm:$0xf]
  %v6107 = vld [vmem:[%s6104 + $0x8] sm:$0xf]
  %v6108 = vld [vmem:[%s6104 + $0xc] sm:$0xf]
  %v6109 = vld [vmem:[%s6104 + $0x80] sm:$0xf]
  %v6110 = vld [vmem:[%s6104 + $0x84] sm:$0xf]
  %v6111 = vld [vmem:[%s6104 + $0x88] sm:$0xf]
  %v6112 = vld [vmem:[%s6104 + $0x8c] sm:$0xf]
  %v6113 = vld [vmem:[%s6104 + $0x100] sm:$0xf]
  %v6114 = vld [vmem:[%s6104 + $0x104] sm:$0xf]
  %v6115 = vld [vmem:[%s6104 + $0x108] sm:$0xf]
  %v6116 = vld [vmem:[%s6104 + $0x10c] sm:$0xf]
  %v6117 = vld [vmem:[%s6104 + $0x180] sm:$0xf]
  %v6118 = vld [vmem:[%s6104 + $0x184] sm:$0xf]
  %v6119 = vld [vmem:[%s6104 + $0x188] sm:$0xf]
  %v6120 = vld [vmem:[%s6104 + $0x18c] sm:$0xf]
  %v6121 = vld [vmem:[%s6104 + $0x200] sm:$0xf]
  %v6122 = vld [vmem:[%s6104 + $0x204] sm:$0xf]
  %v6123 = vld [vmem:[%s6104 + $0x208] sm:$0xf]
  %v6124 = vld [vmem:[%s6104 + $0x20c] sm:$0xf]
  %v6125 = vld [vmem:[%s6104 + $0x280] sm:$0xf]
  %v6126 = vld [vmem:[%s6104 + $0x284] sm:$0xf]
  %v6127 = vld [vmem:[%s6104 + $0x288] sm:$0xf]
  %v6128 = vld [vmem:[%s6104 + $0x28c] sm:$0xf]
  %v6129 = vld [vmem:[%s6104 + $0x300] sm:$0xf]
  %v6130 = vld [vmem:[%s6104 + $0x304] sm:$0xf]
  %v6131 = vld [vmem:[%s6104 + $0x308] sm:$0xf]
  %v6132 = vld [vmem:[%s6104 + $0x30c] sm:$0xf]
  %v6133 = vld [vmem:[%s6104 + $0x380] sm:$0xf]
  %v6134 = vld [vmem:[%s6104 + $0x384] sm:$0xf]
  %v6135 = vld [vmem:[%s6104 + $0x388] sm:$0xf]
  %v6136 = vld [vmem:[%s6104 + $0x38c] sm:$0xf]
  %v6169 = vunpack.c.l.b16 %v6105
  %v6170 = vunpack.c.l.b16 %v6106
  %v6171 = vunpack.c.l.b16 %v6107
  %v6172 = vunpack.c.l.b16 %v6108
  %v6173 = vunpack.c.l.b16 %v6109
  %v6174 = vunpack.c.l.b16 %v6110
  %v6175 = vunpack.c.l.b16 %v6111
  %v6176 = vunpack.c.l.b16 %v6112
  %v6177 = vunpack.c.l.b16 %v6113
  %v6178 = vunpack.c.l.b16 %v6114
  %v6179 = vunpack.c.l.b16 %v6115
  %v6180 = vunpack.c.l.b16 %v6116
  %v6181 = vunpack.c.l.b16 %v6117
  %v6182 = vunpack.c.l.b16 %v6118
  %v6183 = vunpack.c.l.b16 %v6119
  %v6184 = vunpack.c.l.b16 %v6120
  %v6185 = vunpack.c.l.b16 %v6121
  %v6186 = vunpack.c.l.b16 %v6122
  %v6187 = vunpack.c.l.b16 %v6123
  %v6188 = vunpack.c.l.b16 %v6124
  %v6189 = vunpack.c.l.b16 %v6125
  %v6190 = vunpack.c.l.b16 %v6126
  %v6191 = vunpack.c.l.b16 %v6127
  %v6192 = vunpack.c.l.b16 %v6128
  %v6193 = vunpack.c.l.b16 %v6129
  %v6194 = vunpack.c.l.b16 %v6130
  %v6195 = vunpack.c.l.b16 %v6131
  %v6196 = vunpack.c.l.b16 %v6132
  %v6197 = vunpack.c.l.b16 %v6133
  %v6198 = vunpack.c.l.b16 %v6134
  %v6199 = vunpack.c.l.b16 %v6135
  %v6200 = vunpack.c.l.b16 %v6136
  %v6201 = vpack.c.b16 %v6170, %v6169
  %v6202 = vpack.c.b16 %v6172, %v6171
  %v6203 = vpack.c.b16 %v6174, %v6173
  %v6204 = vpack.c.b16 %v6176, %v6175
  %v6205 = vpack.c.b16 %v6178, %v6177
  %v6206 = vpack.c.b16 %v6180, %v6179
  %v6207 = vpack.c.b16 %v6182, %v6181
  %v6208 = vpack.c.b16 %v6184, %v6183
  %v6209 = vpack.c.b16 %v6186, %v6185
  %v6210 = vpack.c.b16 %v6188, %v6187
  %v6211 = vpack.c.b16 %v6190, %v6189
  %v6212 = vpack.c.b16 %v6192, %v6191
  %v6213 = vpack.c.b16 %v6194, %v6193
  %v6214 = vpack.c.b16 %v6196, %v6195
  %v6215 = vpack.c.b16 %v6198, %v6197
  %v6216 = vpack.c.b16 %v6200, %v6199
  %v6218 = vsel %vm233, %v6201, 0
  %v6221 = vsel %vm233, %v6202, 0
  %v6224 = vsel %vm233, %v6203, 0
  %v6227 = vsel %vm233, %v6204, 0
  %v6230 = vsel %vm233, %v6205, 0
  %v6233 = vsel %vm233, %v6206, 0
  %v6236 = vsel %vm233, %v6207, 0
  %v6239 = vsel %vm233, %v6208, 0
  %v6242 = vsel %vm233, %v6209, 0
  %v6245 = vsel %vm233, %v6210, 0
  %v6248 = vsel %vm233, %v6211, 0
  %v6251 = vsel %vm233, %v6212, 0
  %v6254 = vsel %vm233, %v6213, 0
  %v6257 = vsel %vm233, %v6214, 0
  %v6260 = vsel %vm233, %v6215, 0
  %v6263 = vsel %vm233, %v6216, 0
  %6265 = vmatprep.subr.bf16.mxu0 0
  %6266 = vmatpush1.bf16.msra.mxu0 0
  %6267 = vmatprep.subr.bf16.mxu0 0
  %6268 = vmatpush1.bf16.msra.mxu0 0
  %6269 = vmatprep.subr.bf16.mxu0 0
  %6270 = vmatpush1.bf16.msra.mxu0 0
  %6271 = vmatprep.subr.bf16.mxu0 0
  %6272 = vmatpush1.bf16.msra.mxu0 0
  %6273 = vmatprep.subr.bf16.mxu0 0
  %6274 = vmatpush1.bf16.msra.mxu0 0
  %6275 = vmatprep.subr.bf16.mxu0 %v287
  %6276 = vmatpush1.bf16.msra.mxu0 %v284
  %6277 = vmatprep.subr.bf16.mxu0 %v218
  %6278 = vmatpush1.bf16.msra.mxu0 %v217
  %6279 = vmatprep.subr.bf16.mxu0 %v214
  %6280 = vmatpush1.bf16.msra.mxu0 %v213
  %6281 = vmatprep.subr.bf16.mxu0 0
  %6282 = vmatpush2.bf16.msra.mxu0 0
  %6283 = vmatprep.subr.bf16.mxu0 0
  %6284 = vmatpush2.bf16.msra.mxu0 0
  %6285 = vmatprep.subr.bf16.mxu0 0
  %6286 = vmatpush2.bf16.msra.mxu0 0
  %6287 = vmatprep.subr.bf16.mxu0 0
  %6288 = vmatpush2.bf16.msra.mxu0 0
  %6289 = vmatprep.subr.bf16.mxu0 0
  %6290 = vmatpush2.bf16.msra.mxu0 0
  %6291 = vmatprep.subr.bf16.mxu0 0
  %6292 = vmatpush2.bf16.msra.mxu0 0
  %6293 = vmatprep.subr.bf16.mxu0 0
  %6294 = vmatpush2.bf16.msra.mxu0 0
  %6295 = vmatprep.subr.bf16.mxu0 0
  %6296 = vmatpush2.bf16.msra.mxu0 0
  %6297 = vmatprep.mubr.bf16.mxu0 0
  %6298 = vmatmul.mubr.bf16.gmra.mxu0 %v6218
  %v6299 = vpop.f32.mrf.mxu0
  %v6300 = vadd.f32 %v86, %v6299
  %v6301 = vpop.f32.mrf.mxu0
  %v6302 = vadd.f32 %v90, %v6301
  %v6303 = vpop.f32.mrf.mxu0
  %v6304 = vadd.f32 %v86, %v6303
  %v6305 = vpop.f32.mrf.mxu0
  %v6306 = vadd.f32 %v90, %v6305
  %6307 = vmatprep.mubr.bf16.mxu0 0
  %6308 = vmatmul.mubr.bf16.gmra.mxu0 %v6221
  %v6309 = vpop.f32.mrf.mxu0
  %v6310 = vadd.f32 %v86, %v6309
  %v6311 = vpop.f32.mrf.mxu0
  %v6312 = vadd.f32 %v90, %v6311
  %v6313 = vpop.f32.mrf.mxu0
  %v6314 = vadd.f32 %v86, %v6313
  %v6315 = vpop.f32.mrf.mxu0
  %v6316 = vadd.f32 %v90, %v6315
  %6317 = vmatprep.mubr.bf16.mxu0 0
  %6318 = vmatmul.mubr.bf16.gmra.mxu0 %v6224
  %v6319 = vpop.f32.mrf.mxu0
  %v6320 = vadd.f32 %v86, %v6319
  %v6321 = vpop.f32.mrf.mxu0
  %v6322 = vadd.f32 %v90, %v6321
  %v6323 = vpop.f32.mrf.mxu0
  %v6324 = vadd.f32 %v86, %v6323
  %v6325 = vpop.f32.mrf.mxu0
  %v6326 = vadd.f32 %v90, %v6325
  %6327 = vmatprep.mubr.bf16.mxu0 0
  %6328 = vmatmul.mubr.bf16.gmra.mxu0 %v6227
  %v6329 = vpop.f32.mrf.mxu0
  %v6330 = vadd.f32 %v86, %v6329
  %v6331 = vpop.f32.mrf.mxu0
  %v6332 = vadd.f32 %v90, %v6331
  %v6333 = vpop.f32.mrf.mxu0
  %v6334 = vadd.f32 %v86, %v6333
  %v6335 = vpop.f32.mrf.mxu0
  %v6336 = vadd.f32 %v90, %v6335
  %6337 = vmatprep.mubr.bf16.mxu0 0
  %6338 = vmatmul.mubr.bf16.gmra.mxu0 %v6230
  %v6339 = vpop.f32.mrf.mxu0
  %v6340 = vadd.f32 %v86, %v6339
  %v6341 = vpop.f32.mrf.mxu0
  %v6342 = vadd.f32 %v90, %v6341
  %v6343 = vpop.f32.mrf.mxu0
  %v6344 = vadd.f32 %v86, %v6343
  %v6345 = vpop.f32.mrf.mxu0
  %v6346 = vadd.f32 %v90, %v6345
  %6347 = vmatprep.mubr.bf16.mxu0 0
  %6348 = vmatmul.mubr.bf16.gmra.mxu0 %v6233
  %v6349 = vpop.f32.mrf.mxu0
  %v6350 = vadd.f32 %v86, %v6349
  %v6351 = vpop.f32.mrf.mxu0
  %v6352 = vadd.f32 %v90, %v6351
  %v6353 = vpop.f32.mrf.mxu0
  %v6354 = vadd.f32 %v86, %v6353
  %v6355 = vpop.f32.mrf.mxu0
  %v6356 = vadd.f32 %v90, %v6355
  %6357 = vmatprep.mubr.bf16.mxu0 0
  %6358 = vmatmul.mubr.bf16.gmra.mxu0 %v6236
  %v6359 = vpop.f32.mrf.mxu0
  %v6360 = vadd.f32 %v86, %v6359
  %v6361 = vpop.f32.mrf.mxu0
  %v6362 = vadd.f32 %v90, %v6361
  %v6363 = vpop.f32.mrf.mxu0
  %v6364 = vadd.f32 %v86, %v6363
  %v6365 = vpop.f32.mrf.mxu0
  %v6366 = vadd.f32 %v90, %v6365
  %6367 = vmatprep.mubr.bf16.mxu0 0
  %6368 = vmatmul.mubr.bf16.gmra.mxu0 %v6239
  %v6369 = vpop.f32.mrf.mxu0
  %v6370 = vadd.f32 %v86, %v6369
  %v6371 = vpop.f32.mrf.mxu0
  %v6372 = vadd.f32 %v90, %v6371
  %v6373 = vpop.f32.mrf.mxu0
  %v6374 = vadd.f32 %v86, %v6373
  %v6375 = vpop.f32.mrf.mxu0
  %v6376 = vadd.f32 %v90, %v6375
  %6377 = vmatprep.mubr.bf16.mxu0 0
  %6378 = vmatmul.mubr.bf16.gmra.mxu0 %v6242
  %v6379 = vpop.f32.mrf.mxu0
  %v6380 = vadd.f32 %v86, %v6379
  %v6381 = vpop.f32.mrf.mxu0
  %v6382 = vadd.f32 %v90, %v6381
  %v6383 = vpop.f32.mrf.mxu0
  %v6384 = vadd.f32 %v86, %v6383
  %v6385 = vpop.f32.mrf.mxu0
  %v6386 = vadd.f32 %v90, %v6385
  %6387 = vmatprep.mubr.bf16.mxu0 0
  %6388 = vmatmul.mubr.bf16.gmra.mxu0 %v6245
  %v6389 = vpop.f32.mrf.mxu0
  %v6390 = vadd.f32 %v86, %v6389
  %v6391 = vpop.f32.mrf.mxu0
  %v6392 = vadd.f32 %v90, %v6391
  %v6393 = vpop.f32.mrf.mxu0
  %v6394 = vadd.f32 %v86, %v6393
  %v6395 = vpop.f32.mrf.mxu0
  %v6396 = vadd.f32 %v90, %v6395
  %6397 = vmatprep.mubr.bf16.mxu0 0
  %6398 = vmatmul.mubr.bf16.gmra.mxu0 %v6248
  %v6399 = vpop.f32.mrf.mxu0
  %v6400 = vadd.f32 %v86, %v6399
  %v6401 = vpop.f32.mrf.mxu0
  %v6402 = vadd.f32 %v90, %v6401
  %v6403 = vpop.f32.mrf.mxu0
  %v6404 = vadd.f32 %v86, %v6403
  %v6405 = vpop.f32.mrf.mxu0
  %v6406 = vadd.f32 %v90, %v6405
  %6407 = vmatprep.mubr.bf16.mxu0 0
  %6408 = vmatmul.mubr.bf16.gmra.mxu0 %v6251
  %v6409 = vpop.f32.mrf.mxu0
  %v6410 = vadd.f32 %v86, %v6409
  %v6411 = vpop.f32.mrf.mxu0
  %v6412 = vadd.f32 %v90, %v6411
  %v6413 = vpop.f32.mrf.mxu0
  %v6414 = vadd.f32 %v86, %v6413
  %v6415 = vpop.f32.mrf.mxu0
  %v6416 = vadd.f32 %v90, %v6415
  %6417 = vmatprep.mubr.bf16.mxu0 0
  %6418 = vmatmul.mubr.bf16.gmra.mxu0 %v6254
  %v6419 = vpop.f32.mrf.mxu0
  %v6420 = vadd.f32 %v86, %v6419
  %v6421 = vpop.f32.mrf.mxu0
  %v6422 = vadd.f32 %v90, %v6421
  %v6423 = vpop.f32.mrf.mxu0
  %v6424 = vadd.f32 %v86, %v6423
  %v6425 = vpop.f32.mrf.mxu0
  %v6426 = vadd.f32 %v90, %v6425
  %6427 = vmatprep.mubr.bf16.mxu0 0
  %6428 = vmatmul.mubr.bf16.gmra.mxu0 %v6257
  %v6429 = vpop.f32.mrf.mxu0
  %v6430 = vadd.f32 %v86, %v6429
  %v6431 = vpop.f32.mrf.mxu0
  %v6432 = vadd.f32 %v90, %v6431
  %v6433 = vpop.f32.mrf.mxu0
  %v6434 = vadd.f32 %v86, %v6433
  %v6435 = vpop.f32.mrf.mxu0
  %v6436 = vadd.f32 %v90, %v6435
  %6437 = vmatprep.mubr.bf16.mxu0 0
  %6438 = vmatmul.mubr.bf16.gmra.mxu0 %v6260
  %v6439 = vpop.f32.mrf.mxu0
  %v6440 = vadd.f32 %v86, %v6439
  %v6441 = vpop.f32.mrf.mxu0
  %v6442 = vadd.f32 %v90, %v6441
  %v6443 = vpop.f32.mrf.mxu0
  %v6444 = vadd.f32 %v86, %v6443
  %v6445 = vpop.f32.mrf.mxu0
  %v6446 = vadd.f32 %v90, %v6445
  %6447 = vmatprep.mubr.bf16.mxu0 0
  %6448 = vmatmul.mubr.bf16.gmra.mxu0 %v6263
  %v6449 = vpop.f32.mrf.mxu0
  %v6450 = vadd.f32 %v86, %v6449
  %v6451 = vpop.f32.mrf.mxu0
  %v6452 = vadd.f32 %v90, %v6451
  %v6453 = vpop.f32.mrf.mxu0
  %v6454 = vadd.f32 %v86, %v6453
  %v6455 = vpop.f32.mrf.mxu0
  %v6456 = vadd.f32 %v90, %v6455
  %6457 = vdwg.mxu0
  %6458 = vmatprep.subr.bf16.mxu0 0
  %6459 = vmatpush1.bf16.msra.mxu0 0
  %6460 = vmatprep.subr.bf16.mxu0 0
  %6461 = vmatpush1.bf16.msra.mxu0 0
  %6462 = vmatprep.subr.bf16.mxu0 0
  %6463 = vmatpush1.bf16.msra.mxu0 0
  %6464 = vmatprep.subr.bf16.mxu0 0
  %6465 = vmatpush1.bf16.msra.mxu0 0
  %6466 = vmatprep.subr.bf16.mxu0 0
  %6467 = vmatpush1.bf16.msra.mxu0 0
  %6468 = vmatprep.subr.bf16.mxu0 %v293
  %6469 = vmatpush1.bf16.msra.mxu0 %v290
  %6470 = vmatprep.subr.bf16.mxu0 %v220
  %6471 = vmatpush1.bf16.msra.mxu0 %v219
  %6472 = vmatprep.subr.bf16.mxu0 %v216
  %6473 = vmatpush1.bf16.msra.mxu0 %v215
  %6474 = vmatprep.subr.bf16.mxu0 0
  %6475 = vmatpush2.bf16.msra.mxu0 0
  %6476 = vmatprep.subr.bf16.mxu0 0
  %6477 = vmatpush2.bf16.msra.mxu0 0
  %6478 = vmatprep.subr.bf16.mxu0 0
  %6479 = vmatpush2.bf16.msra.mxu0 0
  %6480 = vmatprep.subr.bf16.mxu0 0
  %6481 = vmatpush2.bf16.msra.mxu0 0
  %6482 = vmatprep.subr.bf16.mxu0 0
  %6483 = vmatpush2.bf16.msra.mxu0 0
  %6484 = vmatprep.subr.bf16.mxu0 0
  %6485 = vmatpush2.bf16.msra.mxu0 0
  %6486 = vmatprep.subr.bf16.mxu0 0
  %6487 = vmatpush2.bf16.msra.mxu0 0
  %6488 = vmatprep.subr.bf16.mxu0 0
  %6489 = vmatpush2.bf16.msra.mxu0 0
  %6490 = vmatprep.mubr.bf16.mxu0 0
  %6491 = vmatmul.mubr.bf16.gmra.mxu0 %v6218
  %v6492 = vpop.f32.mrf.mxu0
  %v6493 = vadd.f32 %v94, %v6492
  %v6494 = vpop.f32.mrf.mxu0
  %v6495 = vadd.f32 %v98, %v6494
  %v6496 = vpop.f32.mrf.mxu0
  %v6497 = vadd.f32 %v94, %v6496
  %v6498 = vpop.f32.mrf.mxu0
  %v6499 = vadd.f32 %v98, %v6498
  %6500 = vmatprep.mubr.bf16.mxu0 0
  %6501 = vmatmul.mubr.bf16.gmra.mxu0 %v6221
  %v6502 = vpop.f32.mrf.mxu0
  %v6503 = vadd.f32 %v94, %v6502
  %v6504 = vpop.f32.mrf.mxu0
  %v6505 = vadd.f32 %v98, %v6504
  %v6506 = vpop.f32.mrf.mxu0
  %v6507 = vadd.f32 %v94, %v6506
  %v6508 = vpop.f32.mrf.mxu0
  %v6509 = vadd.f32 %v98, %v6508
  %6510 = vmatprep.mubr.bf16.mxu0 0
  %6511 = vmatmul.mubr.bf16.gmra.mxu0 %v6224
  %v6512 = vpop.f32.mrf.mxu0
  %v6513 = vadd.f32 %v94, %v6512
  %v6514 = vpop.f32.mrf.mxu0
  %v6515 = vadd.f32 %v98, %v6514
  %v6516 = vpop.f32.mrf.mxu0
  %v6517 = vadd.f32 %v94, %v6516
  %v6518 = vpop.f32.mrf.mxu0
  %v6519 = vadd.f32 %v98, %v6518
  %6520 = vmatprep.mubr.bf16.mxu0 0
  %6521 = vmatmul.mubr.bf16.gmra.mxu0 %v6227
  %v6522 = vpop.f32.mrf.mxu0
  %v6523 = vadd.f32 %v94, %v6522
  %v6524 = vpop.f32.mrf.mxu0
  %v6525 = vadd.f32 %v98, %v6524
  %v6526 = vpop.f32.mrf.mxu0
  %v6527 = vadd.f32 %v94, %v6526
  %v6528 = vpop.f32.mrf.mxu0
  %v6529 = vadd.f32 %v98, %v6528
  %6530 = vmatprep.mubr.bf16.mxu0 0
  %6531 = vmatmul.mubr.bf16.gmra.mxu0 %v6230
  %v6532 = vpop.f32.mrf.mxu0
  %v6533 = vadd.f32 %v94, %v6532
  %v6534 = vpop.f32.mrf.mxu0
  %v6535 = vadd.f32 %v98, %v6534
  %v6536 = vpop.f32.mrf.mxu0
  %v6537 = vadd.f32 %v94, %v6536
  %v6538 = vpop.f32.mrf.mxu0
  %v6539 = vadd.f32 %v98, %v6538
  %6540 = vmatprep.mubr.bf16.mxu0 0
  %6541 = vmatmul.mubr.bf16.gmra.mxu0 %v6233
  %v6542 = vpop.f32.mrf.mxu0
  %v6543 = vadd.f32 %v94, %v6542
  %v6544 = vpop.f32.mrf.mxu0
  %v6545 = vadd.f32 %v98, %v6544
  %v6546 = vpop.f32.mrf.mxu0
  %v6547 = vadd.f32 %v94, %v6546
  %v6548 = vpop.f32.mrf.mxu0
  %v6549 = vadd.f32 %v98, %v6548
  %6550 = vmatprep.mubr.bf16.mxu0 0
  %6551 = vmatmul.mubr.bf16.gmra.mxu0 %v6236
  %v6552 = vpop.f32.mrf.mxu0
  %v6553 = vadd.f32 %v94, %v6552
  %v6554 = vpop.f32.mrf.mxu0
  %v6555 = vadd.f32 %v98, %v6554
  %v6556 = vpop.f32.mrf.mxu0
  %v6557 = vadd.f32 %v94, %v6556
  %v6558 = vpop.f32.mrf.mxu0
  %v6559 = vadd.f32 %v98, %v6558
  %6560 = vmatprep.mubr.bf16.mxu0 0
  %6561 = vmatmul.mubr.bf16.gmra.mxu0 %v6239
  %v6562 = vpop.f32.mrf.mxu0
  %v6563 = vadd.f32 %v94, %v6562
  %v6564 = vpop.f32.mrf.mxu0
  %v6565 = vadd.f32 %v98, %v6564
  %v6566 = vpop.f32.mrf.mxu0
  %v6567 = vadd.f32 %v94, %v6566
  %v6568 = vpop.f32.mrf.mxu0
  %v6569 = vadd.f32 %v98, %v6568
  %6570 = vmatprep.mubr.bf16.mxu0 0
  %6571 = vmatmul.mubr.bf16.gmra.mxu0 %v6242
  %v6572 = vpop.f32.mrf.mxu0
  %v6573 = vadd.f32 %v94, %v6572
  %v6574 = vpop.f32.mrf.mxu0
  %v6575 = vadd.f32 %v98, %v6574
  %v6576 = vpop.f32.mrf.mxu0
  %v6577 = vadd.f32 %v94, %v6576
  %v6578 = vpop.f32.mrf.mxu0
  %v6579 = vadd.f32 %v98, %v6578
  %6580 = vmatprep.mubr.bf16.mxu0 0
  %6581 = vmatmul.mubr.bf16.gmra.mxu0 %v6245
  %v6582 = vpop.f32.mrf.mxu0
  %v6583 = vadd.f32 %v94, %v6582
  %v6584 = vpop.f32.mrf.mxu0
  %v6585 = vadd.f32 %v98, %v6584
  %v6586 = vpop.f32.mrf.mxu0
  %v6587 = vadd.f32 %v94, %v6586
  %v6588 = vpop.f32.mrf.mxu0
  %v6589 = vadd.f32 %v98, %v6588
  %6590 = vmatprep.mubr.bf16.mxu0 0
  %6591 = vmatmul.mubr.bf16.gmra.mxu0 %v6248
  %v6592 = vpop.f32.mrf.mxu0
  %v6593 = vadd.f32 %v94, %v6592
  %v6594 = vpop.f32.mrf.mxu0
  %v6595 = vadd.f32 %v98, %v6594
  %v6596 = vpop.f32.mrf.mxu0
  %v6597 = vadd.f32 %v94, %v6596
  %v6598 = vpop.f32.mrf.mxu0
  %v6599 = vadd.f32 %v98, %v6598
  %6600 = vmatprep.mubr.bf16.mxu0 0
  %6601 = vmatmul.mubr.bf16.gmra.mxu0 %v6251
  %v6602 = vpop.f32.mrf.mxu0
  %v6603 = vadd.f32 %v94, %v6602
  %v6604 = vpop.f32.mrf.mxu0
  %v6605 = vadd.f32 %v98, %v6604
  %v6606 = vpop.f32.mrf.mxu0
  %v6607 = vadd.f32 %v94, %v6606
  %v6608 = vpop.f32.mrf.mxu0
  %v6609 = vadd.f32 %v98, %v6608
  %6610 = vmatprep.mubr.bf16.mxu0 0
  %6611 = vmatmul.mubr.bf16.gmra.mxu0 %v6254
  %v6612 = vpop.f32.mrf.mxu0
  %v6613 = vadd.f32 %v94, %v6612
  %v6614 = vpop.f32.mrf.mxu0
  %v6615 = vadd.f32 %v98, %v6614
  %v6616 = vpop.f32.mrf.mxu0
  %v6617 = vadd.f32 %v94, %v6616
  %v6618 = vpop.f32.mrf.mxu0
  %v6619 = vadd.f32 %v98, %v6618
  %6620 = vmatprep.mubr.bf16.mxu0 0
  %6621 = vmatmul.mubr.bf16.gmra.mxu0 %v6257
  %v6622 = vpop.f32.mrf.mxu0
  %v6623 = vadd.f32 %v94, %v6622
  %v6624 = vpop.f32.mrf.mxu0
  %v6625 = vadd.f32 %v98, %v6624
  %v6626 = vpop.f32.mrf.mxu0
  %v6627 = vadd.f32 %v94, %v6626
  %v6628 = vpop.f32.mrf.mxu0
  %v6629 = vadd.f32 %v98, %v6628
  %6630 = vmatprep.mubr.bf16.mxu0 0
  %6631 = vmatmul.mubr.bf16.gmra.mxu0 %v6260
  %v6632 = vpop.f32.mrf.mxu0
  %v6633 = vadd.f32 %v94, %v6632
  %v6634 = vpop.f32.mrf.mxu0
  %v6635 = vadd.f32 %v98, %v6634
  %v6636 = vpop.f32.mrf.mxu0
  %v6637 = vadd.f32 %v94, %v6636
  %v6638 = vpop.f32.mrf.mxu0
  %v6639 = vadd.f32 %v98, %v6638
  %6640 = vmatprep.mubr.bf16.mxu0 0
  %6641 = vmatmul.mubr.bf16.gmra.mxu0 %v6263
  %v6642 = vpop.f32.mrf.mxu0
  %v6643 = vadd.f32 %v94, %v6642
  %v6644 = vpop.f32.mrf.mxu0
  %v6645 = vadd.f32 %v98, %v6644
  %v6646 = vpop.f32.mrf.mxu0
  %v6647 = vadd.f32 %v94, %v6646
  %v6648 = vpop.f32.mrf.mxu0
  %v6649 = vadd.f32 %v98, %v6648
  %6650 = vdwg.mxu0
  %v6651 = vmax.f32 %v6300, 0.0
  %v6652 = vmax.f32 %v6302, 0.0
  %v6653 = vmax.f32 %v6493, 0.0
  %v6654 = vmax.f32 %v6495, 0.0
  %v6655 = vmax.f32 %v6304, 0.0
  %v6656 = vmax.f32 %v6306, 0.0
  %v6657 = vmax.f32 %v6497, 0.0
  %v6658 = vmax.f32 %v6499, 0.0
  %v6659 = vmax.f32 %v6310, 0.0
  %v6660 = vmax.f32 %v6312, 0.0
  %v6661 = vmax.f32 %v6503, 0.0
  %v6662 = vmax.f32 %v6505, 0.0
  %v6663 = vmax.f32 %v6314, 0.0
  %v6664 = vmax.f32 %v6316, 0.0
  %v6665 = vmax.f32 %v6507, 0.0
  %v6666 = vmax.f32 %v6509, 0.0
  %v6667 = vmax.f32 %v6320, 0.0
  %v6668 = vmax.f32 %v6322, 0.0
  %v6669 = vmax.f32 %v6513, 0.0
  %v6670 = vmax.f32 %v6515, 0.0
  %v6671 = vmax.f32 %v6324, 0.0
  %v6672 = vmax.f32 %v6326, 0.0
  %v6673 = vmax.f32 %v6517, 0.0
  %v6674 = vmax.f32 %v6519, 0.0
  %v6675 = vmax.f32 %v6330, 0.0
  %v6676 = vmax.f32 %v6332, 0.0
  %v6677 = vmax.f32 %v6523, 0.0
  %v6678 = vmax.f32 %v6525, 0.0
  %v6679 = vmax.f32 %v6334, 0.0
  %v6680 = vmax.f32 %v6336, 0.0
  %v6681 = vmax.f32 %v6527, 0.0
  %v6682 = vmax.f32 %v6529, 0.0
  %v6683 = vmax.f32 %v6340, 0.0
  %v6684 = vmax.f32 %v6342, 0.0
  %v6685 = vmax.f32 %v6533, 0.0
  %v6686 = vmax.f32 %v6535, 0.0
  %v6687 = vmax.f32 %v6344, 0.0
  %v6688 = vmax.f32 %v6346, 0.0
  %v6689 = vmax.f32 %v6537, 0.0
  %v6690 = vmax.f32 %v6539, 0.0
  %v6691 = vmax.f32 %v6350, 0.0
  %v6692 = vmax.f32 %v6352, 0.0
  %v6693 = vmax.f32 %v6543, 0.0
  %v6694 = vmax.f32 %v6545, 0.0
  %v6695 = vmax.f32 %v6354, 0.0
  %v6696 = vmax.f32 %v6356, 0.0
  %v6697 = vmax.f32 %v6547, 0.0
  %v6698 = vmax.f32 %v6549, 0.0
  %v6699 = vmax.f32 %v6360, 0.0
  %v6700 = vmax.f32 %v6362, 0.0
  %v6701 = vmax.f32 %v6553, 0.0
  %v6702 = vmax.f32 %v6555, 0.0
  %v6703 = vmax.f32 %v6364, 0.0
  %v6704 = vmax.f32 %v6366, 0.0
  %v6705 = vmax.f32 %v6557, 0.0
  %v6706 = vmax.f32 %v6559, 0.0
  %v6707 = vmax.f32 %v6370, 0.0
  %v6708 = vmax.f32 %v6372, 0.0
  %v6709 = vmax.f32 %v6563, 0.0
  %v6710 = vmax.f32 %v6565, 0.0
  %v6711 = vmax.f32 %v6374, 0.0
  %v6712 = vmax.f32 %v6376, 0.0
  %v6713 = vmax.f32 %v6567, 0.0
  %v6714 = vmax.f32 %v6569, 0.0
  %v6715 = vmax.f32 %v6380, 0.0
  %v6716 = vmax.f32 %v6382, 0.0
  %v6717 = vmax.f32 %v6573, 0.0
  %v6718 = vmax.f32 %v6575, 0.0
  %v6719 = vmax.f32 %v6384, 0.0
  %v6720 = vmax.f32 %v6386, 0.0
  %v6721 = vmax.f32 %v6577, 0.0
  %v6722 = vmax.f32 %v6579, 0.0
  %v6723 = vmax.f32 %v6390, 0.0
  %v6724 = vmax.f32 %v6392, 0.0
  %v6725 = vmax.f32 %v6583, 0.0
  %v6726 = vmax.f32 %v6585, 0.0
  %v6727 = vmax.f32 %v6394, 0.0
  %v6728 = vmax.f32 %v6396, 0.0
  %v6729 = vmax.f32 %v6587, 0.0
  %v6730 = vmax.f32 %v6589, 0.0
  %v6731 = vmax.f32 %v6400, 0.0
  %v6732 = vmax.f32 %v6402, 0.0
  %v6733 = vmax.f32 %v6593, 0.0
  %v6734 = vmax.f32 %v6595, 0.0
  %v6735 = vmax.f32 %v6404, 0.0
  %v6736 = vmax.f32 %v6406, 0.0
  %v6737 = vmax.f32 %v6597, 0.0
  %v6738 = vmax.f32 %v6599, 0.0
  %v6739 = vmax.f32 %v6410, 0.0
  %v6740 = vmax.f32 %v6412, 0.0
  %v6741 = vmax.f32 %v6603, 0.0
  %v6742 = vmax.f32 %v6605, 0.0
  %v6743 = vmax.f32 %v6414, 0.0
  %v6744 = vmax.f32 %v6416, 0.0
  %v6745 = vmax.f32 %v6607, 0.0
  %v6746 = vmax.f32 %v6609, 0.0
  %v6747 = vmax.f32 %v6420, 0.0
  %v6748 = vmax.f32 %v6422, 0.0
  %v6749 = vmax.f32 %v6613, 0.0
  %v6750 = vmax.f32 %v6615, 0.0
  %v6751 = vmax.f32 %v6424, 0.0
  %v6752 = vmax.f32 %v6426, 0.0
  %v6753 = vmax.f32 %v6617, 0.0
  %v6754 = vmax.f32 %v6619, 0.0
  %v6755 = vmax.f32 %v6430, 0.0
  %v6756 = vmax.f32 %v6432, 0.0
  %v6757 = vmax.f32 %v6623, 0.0
  %v6758 = vmax.f32 %v6625, 0.0
  %v6759 = vmax.f32 %v6434, 0.0
  %v6760 = vmax.f32 %v6436, 0.0
  %v6761 = vmax.f32 %v6627, 0.0
  %v6762 = vmax.f32 %v6629, 0.0
  %v6763 = vmax.f32 %v6440, 0.0
  %v6764 = vmax.f32 %v6442, 0.0
  %v6765 = vmax.f32 %v6633, 0.0
  %v6766 = vmax.f32 %v6635, 0.0
  %v6767 = vmax.f32 %v6444, 0.0
  %v6768 = vmax.f32 %v6446, 0.0
  %v6769 = vmax.f32 %v6637, 0.0
  %v6770 = vmax.f32 %v6639, 0.0
  %v6771 = vmax.f32 %v6450, 0.0
  %v6772 = vmax.f32 %v6452, 0.0
  %v6773 = vmax.f32 %v6643, 0.0
  %v6774 = vmax.f32 %v6645, 0.0
  %v6775 = vmax.f32 %v6454, 0.0
  %v6776 = vmax.f32 %v6456, 0.0
  %v6777 = vmax.f32 %v6647, 0.0
  %v6778 = vmax.f32 %v6649, 0.0
  %v6779 = vadd.f32 %v6651, %v6655
  %v6780 = vadd.f32 %v6779, %v6659
  %v6781 = vadd.f32 %v6780, %v6663
  %v6782 = vrot.slane %v6781, 4
  %v6783 = vadd.f32 %v6781, %v6782
  %v6784 = vrot.slane %v6783, 2
  %v6785 = vadd.f32 %v6783, %v6784
  %v6786 = vrot.slane %v6785, 1
  %v6787 = vadd.f32 %v6785, %v6786
  %v6788 = vadd.f32 %v6652, %v6656
  %v6789 = vadd.f32 %v6788, %v6660
  %v6790 = vadd.f32 %v6789, %v6664
  %v6791 = vrot.slane %v6790, 4
  %v6792 = vadd.f32 %v6790, %v6791
  %v6793 = vrot.slane %v6792, 2
  %v6794 = vadd.f32 %v6792, %v6793
  %v6795 = vrot.slane %v6794, 1
  %v6796 = vadd.f32 %v6794, %v6795
  %v6797 = vadd.f32 %v6653, %v6657
  %v6798 = vadd.f32 %v6797, %v6661
  %v6799 = vadd.f32 %v6798, %v6665
  %v6800 = vrot.slane %v6799, 4
  %v6801 = vadd.f32 %v6799, %v6800
  %v6802 = vrot.slane %v6801, 2
  %v6803 = vadd.f32 %v6801, %v6802
  %v6804 = vrot.slane %v6803, 1
  %v6805 = vadd.f32 %v6803, %v6804
  %v6806 = vadd.f32 %v6654, %v6658
  %v6807 = vadd.f32 %v6806, %v6662
  %v6808 = vadd.f32 %v6807, %v6666
  %v6809 = vrot.slane %v6808, 4
  %v6810 = vadd.f32 %v6808, %v6809
  %v6811 = vrot.slane %v6810, 2
  %v6812 = vadd.f32 %v6810, %v6811
  %v6813 = vrot.slane %v6812, 1
  %v6814 = vadd.f32 %v6812, %v6813
  %v6815 = vadd.f32 %v6667, %v6671
  %v6816 = vadd.f32 %v6815, %v6675
  %v6817 = vadd.f32 %v6816, %v6679
  %v6818 = vrot.slane %v6817, 4
  %v6819 = vadd.f32 %v6817, %v6818
  %v6820 = vrot.slane %v6819, 2
  %v6821 = vadd.f32 %v6819, %v6820
  %v6822 = vrot.slane %v6821, 1
  %v6823 = vadd.f32 %v6821, %v6822
  %v6824 = vadd.f32 %v6668, %v6672
  %v6825 = vadd.f32 %v6824, %v6676
  %v6826 = vadd.f32 %v6825, %v6680
  %v6827 = vrot.slane %v6826, 4
  %v6828 = vadd.f32 %v6826, %v6827
  %v6829 = vrot.slane %v6828, 2
  %v6830 = vadd.f32 %v6828, %v6829
  %v6831 = vrot.slane %v6830, 1
  %v6832 = vadd.f32 %v6830, %v6831
  %v6833 = vadd.f32 %v6669, %v6673
  %v6834 = vadd.f32 %v6833, %v6677
  %v6835 = vadd.f32 %v6834, %v6681
  %v6836 = vrot.slane %v6835, 4
  %v6837 = vadd.f32 %v6835, %v6836
  %v6838 = vrot.slane %v6837, 2
  %v6839 = vadd.f32 %v6837, %v6838
  %v6840 = vrot.slane %v6839, 1
  %v6841 = vadd.f32 %v6839, %v6840
  %v6842 = vadd.f32 %v6670, %v6674
  %v6843 = vadd.f32 %v6842, %v6678
  %v6844 = vadd.f32 %v6843, %v6682
  %v6845 = vrot.slane %v6844, 4
  %v6846 = vadd.f32 %v6844, %v6845
  %v6847 = vrot.slane %v6846, 2
  %v6848 = vadd.f32 %v6846, %v6847
  %v6849 = vrot.slane %v6848, 1
  %v6850 = vadd.f32 %v6848, %v6849
  %v6851 = vadd.f32 %v6683, %v6687
  %v6852 = vadd.f32 %v6851, %v6691
  %v6853 = vadd.f32 %v6852, %v6695
  %v6854 = vrot.slane %v6853, 4
  %v6855 = vadd.f32 %v6853, %v6854
  %v6856 = vrot.slane %v6855, 2
  %v6857 = vadd.f32 %v6855, %v6856
  %v6858 = vrot.slane %v6857, 1
  %v6859 = vadd.f32 %v6857, %v6858
  %v6860 = vadd.f32 %v6684, %v6688
  %v6861 = vadd.f32 %v6860, %v6692
  %v6862 = vadd.f32 %v6861, %v6696
  %v6863 = vrot.slane %v6862, 4
  %v6864 = vadd.f32 %v6862, %v6863
  %v6865 = vrot.slane %v6864, 2
  %v6866 = vadd.f32 %v6864, %v6865
  %v6867 = vrot.slane %v6866, 1
  %v6868 = vadd.f32 %v6866, %v6867
  %v6869 = vadd.f32 %v6685, %v6689
  %v6870 = vadd.f32 %v6869, %v6693
  %v6871 = vadd.f32 %v6870, %v6697
  %v6872 = vrot.slane %v6871, 4
  %v6873 = vadd.f32 %v6871, %v6872
  %v6874 = vrot.slane %v6873, 2
  %v6875 = vadd.f32 %v6873, %v6874
  %v6876 = vrot.slane %v6875, 1
  %v6877 = vadd.f32 %v6875, %v6876
  %v6878 = vadd.f32 %v6686, %v6690
  %v6879 = vadd.f32 %v6878, %v6694
  %v6880 = vadd.f32 %v6879, %v6698
  %v6881 = vrot.slane %v6880, 4
  %v6882 = vadd.f32 %v6880, %v6881
  %v6883 = vrot.slane %v6882, 2
  %v6884 = vadd.f32 %v6882, %v6883
  %v6885 = vrot.slane %v6884, 1
  %v6886 = vadd.f32 %v6884, %v6885
  %v6887 = vadd.f32 %v6699, %v6703
  %v6888 = vadd.f32 %v6887, %v6707
  %v6889 = vadd.f32 %v6888, %v6711
  %v6890 = vrot.slane %v6889, 4
  %v6891 = vadd.f32 %v6889, %v6890
  %v6892 = vrot.slane %v6891, 2
  %v6893 = vadd.f32 %v6891, %v6892
  %v6894 = vrot.slane %v6893, 1
  %v6895 = vadd.f32 %v6893, %v6894
  %v6896 = vadd.f32 %v6700, %v6704
  %v6897 = vadd.f32 %v6896, %v6708
  %v6898 = vadd.f32 %v6897, %v6712
  %v6899 = vrot.slane %v6898, 4
  %v6900 = vadd.f32 %v6898, %v6899
  %v6901 = vrot.slane %v6900, 2
  %v6902 = vadd.f32 %v6900, %v6901
  %v6903 = vrot.slane %v6902, 1
  %v6904 = vadd.f32 %v6902, %v6903
  %v6905 = vadd.f32 %v6701, %v6705
  %v6906 = vadd.f32 %v6905, %v6709
  %v6907 = vadd.f32 %v6906, %v6713
  %v6908 = vrot.slane %v6907, 4
  %v6909 = vadd.f32 %v6907, %v6908
  %v6910 = vrot.slane %v6909, 2
  %v6911 = vadd.f32 %v6909, %v6910
  %v6912 = vrot.slane %v6911, 1
  %v6913 = vadd.f32 %v6911, %v6912
  %v6914 = vadd.f32 %v6702, %v6706
  %v6915 = vadd.f32 %v6914, %v6710
  %v6916 = vadd.f32 %v6915, %v6714
  %v6917 = vrot.slane %v6916, 4
  %v6918 = vadd.f32 %v6916, %v6917
  %v6919 = vrot.slane %v6918, 2
  %v6920 = vadd.f32 %v6918, %v6919
  %v6921 = vrot.slane %v6920, 1
  %v6922 = vadd.f32 %v6920, %v6921
  %v6923 = vadd.f32 %v6715, %v6719
  %v6924 = vadd.f32 %v6923, %v6723
  %v6925 = vadd.f32 %v6924, %v6727
  %v6926 = vrot.slane %v6925, 4
  %v6927 = vadd.f32 %v6925, %v6926
  %v6928 = vrot.slane %v6927, 2
  %v6929 = vadd.f32 %v6927, %v6928
  %v6930 = vrot.slane %v6929, 1
  %v6931 = vadd.f32 %v6929, %v6930
  %v6932 = vadd.f32 %v6716, %v6720
  %v6933 = vadd.f32 %v6932, %v6724
  %v6934 = vadd.f32 %v6933, %v6728
  %v6935 = vrot.slane %v6934, 4
  %v6936 = vadd.f32 %v6934, %v6935
  %v6937 = vrot.slane %v6936, 2
  %v6938 = vadd.f32 %v6936, %v6937
  %v6939 = vrot.slane %v6938, 1
  %v6940 = vadd.f32 %v6938, %v6939
  %v6941 = vadd.f32 %v6717, %v6721
  %v6942 = vadd.f32 %v6941, %v6725
  %v6943 = vadd.f32 %v6942, %v6729
  %v6944 = vrot.slane %v6943, 4
  %v6945 = vadd.f32 %v6943, %v6944
  %v6946 = vrot.slane %v6945, 2
  %v6947 = vadd.f32 %v6945, %v6946
  %v6948 = vrot.slane %v6947, 1
  %v6949 = vadd.f32 %v6947, %v6948
  %v6950 = vadd.f32 %v6718, %v6722
  %v6951 = vadd.f32 %v6950, %v6726
  %v6952 = vadd.f32 %v6951, %v6730
  %v6953 = vrot.slane %v6952, 4
  %v6954 = vadd.f32 %v6952, %v6953
  %v6955 = vrot.slane %v6954, 2
  %v6956 = vadd.f32 %v6954, %v6955
  %v6957 = vrot.slane %v6956, 1
  %v6958 = vadd.f32 %v6956, %v6957
  %v6959 = vadd.f32 %v6731, %v6735
  %v6960 = vadd.f32 %v6959, %v6739
  %v6961 = vadd.f32 %v6960, %v6743
  %v6962 = vrot.slane %v6961, 4
  %v6963 = vadd.f32 %v6961, %v6962
  %v6964 = vrot.slane %v6963, 2
  %v6965 = vadd.f32 %v6963, %v6964
  %v6966 = vrot.slane %v6965, 1
  %v6967 = vadd.f32 %v6965, %v6966
  %v6968 = vadd.f32 %v6732, %v6736
  %v6969 = vadd.f32 %v6968, %v6740
  %v6970 = vadd.f32 %v6969, %v6744
  %v6971 = vrot.slane %v6970, 4
  %v6972 = vadd.f32 %v6970, %v6971
  %v6973 = vrot.slane %v6972, 2
  %v6974 = vadd.f32 %v6972, %v6973
  %v6975 = vrot.slane %v6974, 1
  %v6976 = vadd.f32 %v6974, %v6975
  %v6977 = vadd.f32 %v6733, %v6737
  %v6978 = vadd.f32 %v6977, %v6741
  %v6979 = vadd.f32 %v6978, %v6745
  %v6980 = vrot.slane %v6979, 4
  %v6981 = vadd.f32 %v6979, %v6980
  %v6982 = vrot.slane %v6981, 2
  %v6983 = vadd.f32 %v6981, %v6982
  %v6984 = vrot.slane %v6983, 1
  %v6985 = vadd.f32 %v6983, %v6984
  %v6986 = vadd.f32 %v6734, %v6738
  %v6987 = vadd.f32 %v6986, %v6742
  %v6988 = vadd.f32 %v6987, %v6746
  %v6989 = vrot.slane %v6988, 4
  %v6990 = vadd.f32 %v6988, %v6989
  %v6991 = vrot.slane %v6990, 2
  %v6992 = vadd.f32 %v6990, %v6991
  %v6993 = vrot.slane %v6992, 1
  %v6994 = vadd.f32 %v6992, %v6993
  %v6995 = vadd.f32 %v6747, %v6751
  %v6996 = vadd.f32 %v6995, %v6755
  %v6997 = vadd.f32 %v6996, %v6759
  %v6998 = vrot.slane %v6997, 4
  %v6999 = vadd.f32 %v6997, %v6998
  %v7000 = vrot.slane %v6999, 2
  %v7001 = vadd.f32 %v6999, %v7000
  %v7002 = vrot.slane %v7001, 1
  %v7003 = vadd.f32 %v7001, %v7002
  %v7004 = vadd.f32 %v6748, %v6752
  %v7005 = vadd.f32 %v7004, %v6756
  %v7006 = vadd.f32 %v7005, %v6760
  %v7007 = vrot.slane %v7006, 4
  %v7008 = vadd.f32 %v7006, %v7007
  %v7009 = vrot.slane %v7008, 2
  %v7010 = vadd.f32 %v7008, %v7009
  %v7011 = vrot.slane %v7010, 1
  %v7012 = vadd.f32 %v7010, %v7011
  %v7013 = vadd.f32 %v6749, %v6753
  %v7014 = vadd.f32 %v7013, %v6757
  %v7015 = vadd.f32 %v7014, %v6761
  %v7016 = vrot.slane %v7015, 4
  %v7017 = vadd.f32 %v7015, %v7016
  %v7018 = vrot.slane %v7017, 2
  %v7019 = vadd.f32 %v7017, %v7018
  %v7020 = vrot.slane %v7019, 1
  %v7021 = vadd.f32 %v7019, %v7020
  %v7022 = vadd.f32 %v6750, %v6754
  %v7023 = vadd.f32 %v7022, %v6758
  %v7024 = vadd.f32 %v7023, %v6762
  %v7025 = vrot.slane %v7024, 4
  %v7026 = vadd.f32 %v7024, %v7025
  %v7027 = vrot.slane %v7026, 2
  %v7028 = vadd.f32 %v7026, %v7027
  %v7029 = vrot.slane %v7028, 1
  %v7030 = vadd.f32 %v7028, %v7029
  %v7031 = vadd.f32 %v6763, %v6767
  %v7032 = vadd.f32 %v7031, %v6771
  %v7033 = vadd.f32 %v7032, %v6775
  %v7034 = vrot.slane %v7033, 4
  %v7035 = vadd.f32 %v7033, %v7034
  %v7036 = vrot.slane %v7035, 2
  %v7037 = vadd.f32 %v7035, %v7036
  %v7038 = vrot.slane %v7037, 1
  %v7039 = vadd.f32 %v7037, %v7038
  %v7040 = vadd.f32 %v6764, %v6768
  %v7041 = vadd.f32 %v7040, %v6772
  %v7042 = vadd.f32 %v7041, %v6776
  %v7043 = vrot.slane %v7042, 4
  %v7044 = vadd.f32 %v7042, %v7043
  %v7045 = vrot.slane %v7044, 2
  %v7046 = vadd.f32 %v7044, %v7045
  %v7047 = vrot.slane %v7046, 1
  %v7048 = vadd.f32 %v7046, %v7047
  %v7049 = vadd.f32 %v6765, %v6769
  %v7050 = vadd.f32 %v7049, %v6773
  %v7051 = vadd.f32 %v7050, %v6777
  %v7052 = vrot.slane %v7051, 4
  %v7053 = vadd.f32 %v7051, %v7052
  %v7054 = vrot.slane %v7053, 2
  %v7055 = vadd.f32 %v7053, %v7054
  %v7056 = vrot.slane %v7055, 1
  %v7057 = vadd.f32 %v7055, %v7056
  %v7058 = vadd.f32 %v6766, %v6770
  %v7059 = vadd.f32 %v7058, %v6774
  %v7060 = vadd.f32 %v7059, %v6778
  %v7061 = vrot.slane %v7060, 4
  %v7062 = vadd.f32 %v7060, %v7061
  %v7063 = vrot.slane %v7062, 2
  %v7064 = vadd.f32 %v7062, %v7063
  %v7065 = vrot.slane %v7064, 1
  %v7066 = vadd.f32 %v7064, %v7065
  %v7067 = vadd.f32 %v6072, %v6787
  %v7068 = vadd.f32 %v6073, %v6796
  %v7069 = vadd.f32 %v6074, %v6805
  %v7070 = vadd.f32 %v6075, %v6814
  %v7071 = vadd.f32 %v6076, %v6823
  %v7072 = vadd.f32 %v6077, %v6832
  %v7073 = vadd.f32 %v6078, %v6841
  %v7074 = vadd.f32 %v6079, %v6850
  %v7075 = vadd.f32 %v6080, %v6859
  %v7076 = vadd.f32 %v6081, %v6868
  %v7077 = vadd.f32 %v6082, %v6877
  %v7078 = vadd.f32 %v6083, %v6886
  %v7079 = vadd.f32 %v6084, %v6895
  %v7080 = vadd.f32 %v6085, %v6904
  %v7081 = vadd.f32 %v6086, %v6913
  %v7082 = vadd.f32 %v6087, %v6922
  %v7083 = vadd.f32 %v6088, %v6931
  %v7084 = vadd.f32 %v6089, %v6940
  %v7085 = vadd.f32 %v6090, %v6949
  %v7086 = vadd.f32 %v6091, %v6958
  %v7087 = vadd.f32 %v6092, %v6967
  %v7088 = vadd.f32 %v6093, %v6976
  %v7089 = vadd.f32 %v6094, %v6985
  %v7090 = vadd.f32 %v6095, %v6994
  %v7091 = vadd.f32 %v6096, %v7003
  %v7092 = vadd.f32 %v6097, %v7012
  %v7093 = vadd.f32 %v6098, %v7021
  %v7094 = vadd.f32 %v6099, %v7030
  %v7095 = vadd.f32 %v6100, %v7039
  %v7096 = vadd.f32 %v6101, %v7048
  %v7097 = vadd.f32 %v6102, %v7057
  %v7098 = vadd.f32 %v6103, %v7066
  %s7099 = scalar_lea.vmem %s0, 112
  %v7100 = vld [vmem:[%s7099] sm:$0xf]
  %v7101 = vld [vmem:[%s7099 + $0x4] sm:$0xf]
  %v7102 = vld [vmem:[%s7099 + $0x8] sm:$0xf]
  %v7103 = vld [vmem:[%s7099 + $0xc] sm:$0xf]
  %v7104 = vld [vmem:[%s7099 + $0x80] sm:$0xf]
  %v7105 = vld [vmem:[%s7099 + $0x84] sm:$0xf]
  %v7106 = vld [vmem:[%s7099 + $0x88] sm:$0xf]
  %v7107 = vld [vmem:[%s7099 + $0x8c] sm:$0xf]
  %v7108 = vld [vmem:[%s7099 + $0x100] sm:$0xf]
  %v7109 = vld [vmem:[%s7099 + $0x104] sm:$0xf]
  %v7110 = vld [vmem:[%s7099 + $0x108] sm:$0xf]
  %v7111 = vld [vmem:[%s7099 + $0x10c] sm:$0xf]
  %v7112 = vld [vmem:[%s7099 + $0x180] sm:$0xf]
  %v7113 = vld [vmem:[%s7099 + $0x184] sm:$0xf]
  %v7114 = vld [vmem:[%s7099 + $0x188] sm:$0xf]
  %v7115 = vld [vmem:[%s7099 + $0x18c] sm:$0xf]
  %v7116 = vld [vmem:[%s7099 + $0x200] sm:$0xf]
  %v7117 = vld [vmem:[%s7099 + $0x204] sm:$0xf]
  %v7118 = vld [vmem:[%s7099 + $0x208] sm:$0xf]
  %v7119 = vld [vmem:[%s7099 + $0x20c] sm:$0xf]
  %v7120 = vld [vmem:[%s7099 + $0x280] sm:$0xf]
  %v7121 = vld [vmem:[%s7099 + $0x284] sm:$0xf]
  %v7122 = vld [vmem:[%s7099 + $0x288] sm:$0xf]
  %v7123 = vld [vmem:[%s7099 + $0x28c] sm:$0xf]
  %v7124 = vld [vmem:[%s7099 + $0x300] sm:$0xf]
  %v7125 = vld [vmem:[%s7099 + $0x304] sm:$0xf]
  %v7126 = vld [vmem:[%s7099 + $0x308] sm:$0xf]
  %v7127 = vld [vmem:[%s7099 + $0x30c] sm:$0xf]
  %v7128 = vld [vmem:[%s7099 + $0x380] sm:$0xf]
  %v7129 = vld [vmem:[%s7099 + $0x384] sm:$0xf]
  %v7130 = vld [vmem:[%s7099 + $0x388] sm:$0xf]
  %v7131 = vld [vmem:[%s7099 + $0x38c] sm:$0xf]
  %v7164 = vunpack.c.l.b16 %v7100
  %v7165 = vunpack.c.l.b16 %v7101
  %v7166 = vunpack.c.l.b16 %v7102
  %v7167 = vunpack.c.l.b16 %v7103
  %v7168 = vunpack.c.l.b16 %v7104
  %v7169 = vunpack.c.l.b16 %v7105
  %v7170 = vunpack.c.l.b16 %v7106
  %v7171 = vunpack.c.l.b16 %v7107
  %v7172 = vunpack.c.l.b16 %v7108
  %v7173 = vunpack.c.l.b16 %v7109
  %v7174 = vunpack.c.l.b16 %v7110
  %v7175 = vunpack.c.l.b16 %v7111
  %v7176 = vunpack.c.l.b16 %v7112
  %v7177 = vunpack.c.l.b16 %v7113
  %v7178 = vunpack.c.l.b16 %v7114
  %v7179 = vunpack.c.l.b16 %v7115
  %v7180 = vunpack.c.l.b16 %v7116
  %v7181 = vunpack.c.l.b16 %v7117
  %v7182 = vunpack.c.l.b16 %v7118
  %v7183 = vunpack.c.l.b16 %v7119
  %v7184 = vunpack.c.l.b16 %v7120
  %v7185 = vunpack.c.l.b16 %v7121
  %v7186 = vunpack.c.l.b16 %v7122
  %v7187 = vunpack.c.l.b16 %v7123
  %v7188 = vunpack.c.l.b16 %v7124
  %v7189 = vunpack.c.l.b16 %v7125
  %v7190 = vunpack.c.l.b16 %v7126
  %v7191 = vunpack.c.l.b16 %v7127
  %v7192 = vunpack.c.l.b16 %v7128
  %v7193 = vunpack.c.l.b16 %v7129
  %v7194 = vunpack.c.l.b16 %v7130
  %v7195 = vunpack.c.l.b16 %v7131
  %v7196 = vpack.c.b16 %v7165, %v7164
  %v7197 = vpack.c.b16 %v7167, %v7166
  %v7198 = vpack.c.b16 %v7169, %v7168
  %v7199 = vpack.c.b16 %v7171, %v7170
  %v7200 = vpack.c.b16 %v7173, %v7172
  %v7201 = vpack.c.b16 %v7175, %v7174
  %v7202 = vpack.c.b16 %v7177, %v7176
  %v7203 = vpack.c.b16 %v7179, %v7178
  %v7204 = vpack.c.b16 %v7181, %v7180
  %v7205 = vpack.c.b16 %v7183, %v7182
  %v7206 = vpack.c.b16 %v7185, %v7184
  %v7207 = vpack.c.b16 %v7187, %v7186
  %v7208 = vpack.c.b16 %v7189, %v7188
  %v7209 = vpack.c.b16 %v7191, %v7190
  %v7210 = vpack.c.b16 %v7193, %v7192
  %v7211 = vpack.c.b16 %v7195, %v7194
  %v7213 = vsel %vm233, %v7196, 0
  %v7216 = vsel %vm233, %v7197, 0
  %v7219 = vsel %vm233, %v7198, 0
  %v7222 = vsel %vm233, %v7199, 0
  %v7225 = vsel %vm233, %v7200, 0
  %v7228 = vsel %vm233, %v7201, 0
  %v7231 = vsel %vm233, %v7202, 0
  %v7234 = vsel %vm233, %v7203, 0
  %v7237 = vsel %vm233, %v7204, 0
  %v7240 = vsel %vm233, %v7205, 0
  %v7243 = vsel %vm233, %v7206, 0
  %v7246 = vsel %vm233, %v7207, 0
  %v7249 = vsel %vm233, %v7208, 0
  %v7252 = vsel %vm233, %v7209, 0
  %v7255 = vsel %vm233, %v7210, 0
  %v7258 = vsel %vm233, %v7211, 0
  %7260 = vmatprep.subr.bf16.mxu0 0
  %7261 = vmatpush1.bf16.msra.mxu0 0
  %7262 = vmatprep.subr.bf16.mxu0 0
  %7263 = vmatpush1.bf16.msra.mxu0 0
  %7264 = vmatprep.subr.bf16.mxu0 0
  %7265 = vmatpush1.bf16.msra.mxu0 0
  %7266 = vmatprep.subr.bf16.mxu0 0
  %7267 = vmatpush1.bf16.msra.mxu0 0
  %7268 = vmatprep.subr.bf16.mxu0 0
  %7269 = vmatpush1.bf16.msra.mxu0 0
  %7270 = vmatprep.subr.bf16.mxu0 %v287
  %7271 = vmatpush1.bf16.msra.mxu0 %v284
  %7272 = vmatprep.subr.bf16.mxu0 %v218
  %7273 = vmatpush1.bf16.msra.mxu0 %v217
  %7274 = vmatprep.subr.bf16.mxu0 %v214
  %7275 = vmatpush1.bf16.msra.mxu0 %v213
  %7276 = vmatprep.subr.bf16.mxu0 0
  %7277 = vmatpush2.bf16.msra.mxu0 0
  %7278 = vmatprep.subr.bf16.mxu0 0
  %7279 = vmatpush2.bf16.msra.mxu0 0
  %7280 = vmatprep.subr.bf16.mxu0 0
  %7281 = vmatpush2.bf16.msra.mxu0 0
  %7282 = vmatprep.subr.bf16.mxu0 0
  %7283 = vmatpush2.bf16.msra.mxu0 0
  %7284 = vmatprep.subr.bf16.mxu0 0
  %7285 = vmatpush2.bf16.msra.mxu0 0
  %7286 = vmatprep.subr.bf16.mxu0 0
  %7287 = vmatpush2.bf16.msra.mxu0 0
  %7288 = vmatprep.subr.bf16.mxu0 0
  %7289 = vmatpush2.bf16.msra.mxu0 0
  %7290 = vmatprep.subr.bf16.mxu0 0
  %7291 = vmatpush2.bf16.msra.mxu0 0
  %7292 = vmatprep.mubr.bf16.mxu0 0
  %7293 = vmatmul.mubr.bf16.gmra.mxu0 %v7213
  %v7294 = vpop.f32.mrf.mxu0
  %v7295 = vadd.f32 %v86, %v7294
  %v7296 = vpop.f32.mrf.mxu0
  %v7297 = vadd.f32 %v90, %v7296
  %v7298 = vpop.f32.mrf.mxu0
  %v7299 = vadd.f32 %v86, %v7298
  %v7300 = vpop.f32.mrf.mxu0
  %v7301 = vadd.f32 %v90, %v7300
  %7302 = vmatprep.mubr.bf16.mxu0 0
  %7303 = vmatmul.mubr.bf16.gmra.mxu0 %v7216
  %v7304 = vpop.f32.mrf.mxu0
  %v7305 = vadd.f32 %v86, %v7304
  %v7306 = vpop.f32.mrf.mxu0
  %v7307 = vadd.f32 %v90, %v7306
  %v7308 = vpop.f32.mrf.mxu0
  %v7309 = vadd.f32 %v86, %v7308
  %v7310 = vpop.f32.mrf.mxu0
  %v7311 = vadd.f32 %v90, %v7310
  %7312 = vmatprep.mubr.bf16.mxu0 0
  %7313 = vmatmul.mubr.bf16.gmra.mxu0 %v7219
  %v7314 = vpop.f32.mrf.mxu0
  %v7315 = vadd.f32 %v86, %v7314
  %v7316 = vpop.f32.mrf.mxu0
  %v7317 = vadd.f32 %v90, %v7316
  %v7318 = vpop.f32.mrf.mxu0
  %v7319 = vadd.f32 %v86, %v7318
  %v7320 = vpop.f32.mrf.mxu0
  %v7321 = vadd.f32 %v90, %v7320
  %7322 = vmatprep.mubr.bf16.mxu0 0
  %7323 = vmatmul.mubr.bf16.gmra.mxu0 %v7222
  %v7324 = vpop.f32.mrf.mxu0
  %v7325 = vadd.f32 %v86, %v7324
  %v7326 = vpop.f32.mrf.mxu0
  %v7327 = vadd.f32 %v90, %v7326
  %v7328 = vpop.f32.mrf.mxu0
  %v7329 = vadd.f32 %v86, %v7328
  %v7330 = vpop.f32.mrf.mxu0
  %v7331 = vadd.f32 %v90, %v7330
  %7332 = vmatprep.mubr.bf16.mxu0 0
  %7333 = vmatmul.mubr.bf16.gmra.mxu0 %v7225
  %v7334 = vpop.f32.mrf.mxu0
  %v7335 = vadd.f32 %v86, %v7334
  %v7336 = vpop.f32.mrf.mxu0
  %v7337 = vadd.f32 %v90, %v7336
  %v7338 = vpop.f32.mrf.mxu0
  %v7339 = vadd.f32 %v86, %v7338
  %v7340 = vpop.f32.mrf.mxu0
  %v7341 = vadd.f32 %v90, %v7340
  %7342 = vmatprep.mubr.bf16.mxu0 0
  %7343 = vmatmul.mubr.bf16.gmra.mxu0 %v7228
  %v7344 = vpop.f32.mrf.mxu0
  %v7345 = vadd.f32 %v86, %v7344
  %v7346 = vpop.f32.mrf.mxu0
  %v7347 = vadd.f32 %v90, %v7346
  %v7348 = vpop.f32.mrf.mxu0
  %v7349 = vadd.f32 %v86, %v7348
  %v7350 = vpop.f32.mrf.mxu0
  %v7351 = vadd.f32 %v90, %v7350
  %7352 = vmatprep.mubr.bf16.mxu0 0
  %7353 = vmatmul.mubr.bf16.gmra.mxu0 %v7231
  %v7354 = vpop.f32.mrf.mxu0
  %v7355 = vadd.f32 %v86, %v7354
  %v7356 = vpop.f32.mrf.mxu0
  %v7357 = vadd.f32 %v90, %v7356
  %v7358 = vpop.f32.mrf.mxu0
  %v7359 = vadd.f32 %v86, %v7358
  %v7360 = vpop.f32.mrf.mxu0
  %v7361 = vadd.f32 %v90, %v7360
  %7362 = vmatprep.mubr.bf16.mxu0 0
  %7363 = vmatmul.mubr.bf16.gmra.mxu0 %v7234
  %v7364 = vpop.f32.mrf.mxu0
  %v7365 = vadd.f32 %v86, %v7364
  %v7366 = vpop.f32.mrf.mxu0
  %v7367 = vadd.f32 %v90, %v7366
  %v7368 = vpop.f32.mrf.mxu0
  %v7369 = vadd.f32 %v86, %v7368
  %v7370 = vpop.f32.mrf.mxu0
  %v7371 = vadd.f32 %v90, %v7370
  %7372 = vmatprep.mubr.bf16.mxu0 0
  %7373 = vmatmul.mubr.bf16.gmra.mxu0 %v7237
  %v7374 = vpop.f32.mrf.mxu0
  %v7375 = vadd.f32 %v86, %v7374
  %v7376 = vpop.f32.mrf.mxu0
  %v7377 = vadd.f32 %v90, %v7376
  %v7378 = vpop.f32.mrf.mxu0
  %v7379 = vadd.f32 %v86, %v7378
  %v7380 = vpop.f32.mrf.mxu0
  %v7381 = vadd.f32 %v90, %v7380
  %7382 = vmatprep.mubr.bf16.mxu0 0
  %7383 = vmatmul.mubr.bf16.gmra.mxu0 %v7240
  %v7384 = vpop.f32.mrf.mxu0
  %v7385 = vadd.f32 %v86, %v7384
  %v7386 = vpop.f32.mrf.mxu0
  %v7387 = vadd.f32 %v90, %v7386
  %v7388 = vpop.f32.mrf.mxu0
  %v7389 = vadd.f32 %v86, %v7388
  %v7390 = vpop.f32.mrf.mxu0
  %v7391 = vadd.f32 %v90, %v7390
  %7392 = vmatprep.mubr.bf16.mxu0 0
  %7393 = vmatmul.mubr.bf16.gmra.mxu0 %v7243
  %v7394 = vpop.f32.mrf.mxu0
  %v7395 = vadd.f32 %v86, %v7394
  %v7396 = vpop.f32.mrf.mxu0
  %v7397 = vadd.f32 %v90, %v7396
  %v7398 = vpop.f32.mrf.mxu0
  %v7399 = vadd.f32 %v86, %v7398
  %v7400 = vpop.f32.mrf.mxu0
  %v7401 = vadd.f32 %v90, %v7400
  %7402 = vmatprep.mubr.bf16.mxu0 0
  %7403 = vmatmul.mubr.bf16.gmra.mxu0 %v7246
  %v7404 = vpop.f32.mrf.mxu0
  %v7405 = vadd.f32 %v86, %v7404
  %v7406 = vpop.f32.mrf.mxu0
  %v7407 = vadd.f32 %v90, %v7406
  %v7408 = vpop.f32.mrf.mxu0
  %v7409 = vadd.f32 %v86, %v7408
  %v7410 = vpop.f32.mrf.mxu0
  %v7411 = vadd.f32 %v90, %v7410
  %7412 = vmatprep.mubr.bf16.mxu0 0
  %7413 = vmatmul.mubr.bf16.gmra.mxu0 %v7249
  %v7414 = vpop.f32.mrf.mxu0
  %v7415 = vadd.f32 %v86, %v7414
  %v7416 = vpop.f32.mrf.mxu0
  %v7417 = vadd.f32 %v90, %v7416
  %v7418 = vpop.f32.mrf.mxu0
  %v7419 = vadd.f32 %v86, %v7418
  %v7420 = vpop.f32.mrf.mxu0
  %v7421 = vadd.f32 %v90, %v7420
  %7422 = vmatprep.mubr.bf16.mxu0 0
  %7423 = vmatmul.mubr.bf16.gmra.mxu0 %v7252
  %v7424 = vpop.f32.mrf.mxu0
  %v7425 = vadd.f32 %v86, %v7424
  %v7426 = vpop.f32.mrf.mxu0
  %v7427 = vadd.f32 %v90, %v7426
  %v7428 = vpop.f32.mrf.mxu0
  %v7429 = vadd.f32 %v86, %v7428
  %v7430 = vpop.f32.mrf.mxu0
  %v7431 = vadd.f32 %v90, %v7430
  %7432 = vmatprep.mubr.bf16.mxu0 0
  %7433 = vmatmul.mubr.bf16.gmra.mxu0 %v7255
  %v7434 = vpop.f32.mrf.mxu0
  %v7435 = vadd.f32 %v86, %v7434
  %v7436 = vpop.f32.mrf.mxu0
  %v7437 = vadd.f32 %v90, %v7436
  %v7438 = vpop.f32.mrf.mxu0
  %v7439 = vadd.f32 %v86, %v7438
  %v7440 = vpop.f32.mrf.mxu0
  %v7441 = vadd.f32 %v90, %v7440
  %7442 = vmatprep.mubr.bf16.mxu0 0
  %7443 = vmatmul.mubr.bf16.gmra.mxu0 %v7258
  %v7444 = vpop.f32.mrf.mxu0
  %v7445 = vadd.f32 %v86, %v7444
  %v7446 = vpop.f32.mrf.mxu0
  %v7447 = vadd.f32 %v90, %v7446
  %v7448 = vpop.f32.mrf.mxu0
  %v7449 = vadd.f32 %v86, %v7448
  %v7450 = vpop.f32.mrf.mxu0
  %v7451 = vadd.f32 %v90, %v7450
  %7452 = vdwg.mxu0
  %7453 = vmatprep.subr.bf16.mxu0 0
  %7454 = vmatpush1.bf16.msra.mxu0 0
  %7455 = vmatprep.subr.bf16.mxu0 0
  %7456 = vmatpush1.bf16.msra.mxu0 0
  %7457 = vmatprep.subr.bf16.mxu0 0
  %7458 = vmatpush1.bf16.msra.mxu0 0
  %7459 = vmatprep.subr.bf16.mxu0 0
  %7460 = vmatpush1.bf16.msra.mxu0 0
  %7461 = vmatprep.subr.bf16.mxu0 0
  %7462 = vmatpush1.bf16.msra.mxu0 0
  %7463 = vmatprep.subr.bf16.mxu0 %v293
  %7464 = vmatpush1.bf16.msra.mxu0 %v290
  %7465 = vmatprep.subr.bf16.mxu0 %v220
  %7466 = vmatpush1.bf16.msra.mxu0 %v219
  %7467 = vmatprep.subr.bf16.mxu0 %v216
  %7468 = vmatpush1.bf16.msra.mxu0 %v215
  %7469 = vmatprep.subr.bf16.mxu0 0
  %7470 = vmatpush2.bf16.msra.mxu0 0
  %7471 = vmatprep.subr.bf16.mxu0 0
  %7472 = vmatpush2.bf16.msra.mxu0 0
  %7473 = vmatprep.subr.bf16.mxu0 0
  %7474 = vmatpush2.bf16.msra.mxu0 0
  %7475 = vmatprep.subr.bf16.mxu0 0
  %7476 = vmatpush2.bf16.msra.mxu0 0
  %7477 = vmatprep.subr.bf16.mxu0 0
  %7478 = vmatpush2.bf16.msra.mxu0 0
  %7479 = vmatprep.subr.bf16.mxu0 0
  %7480 = vmatpush2.bf16.msra.mxu0 0
  %7481 = vmatprep.subr.bf16.mxu0 0
  %7482 = vmatpush2.bf16.msra.mxu0 0
  %7483 = vmatprep.subr.bf16.mxu0 0
  %7484 = vmatpush2.bf16.msra.mxu0 0
  %7485 = vmatprep.mubr.bf16.mxu0 0
  %7486 = vmatmul.mubr.bf16.gmra.mxu0 %v7213
  %v7487 = vpop.f32.mrf.mxu0
  %v7488 = vadd.f32 %v94, %v7487
  %v7489 = vpop.f32.mrf.mxu0
  %v7490 = vadd.f32 %v98, %v7489
  %v7491 = vpop.f32.mrf.mxu0
  %v7492 = vadd.f32 %v94, %v7491
  %v7493 = vpop.f32.mrf.mxu0
  %v7494 = vadd.f32 %v98, %v7493
  %7495 = vmatprep.mubr.bf16.mxu0 0
  %7496 = vmatmul.mubr.bf16.gmra.mxu0 %v7216
  %v7497 = vpop.f32.mrf.mxu0
  %v7498 = vadd.f32 %v94, %v7497
  %v7499 = vpop.f32.mrf.mxu0
  %v7500 = vadd.f32 %v98, %v7499
  %v7501 = vpop.f32.mrf.mxu0
  %v7502 = vadd.f32 %v94, %v7501
  %v7503 = vpop.f32.mrf.mxu0
  %v7504 = vadd.f32 %v98, %v7503
  %7505 = vmatprep.mubr.bf16.mxu0 0
  %7506 = vmatmul.mubr.bf16.gmra.mxu0 %v7219
  %v7507 = vpop.f32.mrf.mxu0
  %v7508 = vadd.f32 %v94, %v7507
  %v7509 = vpop.f32.mrf.mxu0
  %v7510 = vadd.f32 %v98, %v7509
  %v7511 = vpop.f32.mrf.mxu0
  %v7512 = vadd.f32 %v94, %v7511
  %v7513 = vpop.f32.mrf.mxu0
  %v7514 = vadd.f32 %v98, %v7513
  %7515 = vmatprep.mubr.bf16.mxu0 0
  %7516 = vmatmul.mubr.bf16.gmra.mxu0 %v7222
  %v7517 = vpop.f32.mrf.mxu0
  %v7518 = vadd.f32 %v94, %v7517
  %v7519 = vpop.f32.mrf.mxu0
  %v7520 = vadd.f32 %v98, %v7519
  %v7521 = vpop.f32.mrf.mxu0
  %v7522 = vadd.f32 %v94, %v7521
  %v7523 = vpop.f32.mrf.mxu0
  %v7524 = vadd.f32 %v98, %v7523
  %7525 = vmatprep.mubr.bf16.mxu0 0
  %7526 = vmatmul.mubr.bf16.gmra.mxu0 %v7225
  %v7527 = vpop.f32.mrf.mxu0
  %v7528 = vadd.f32 %v94, %v7527
  %v7529 = vpop.f32.mrf.mxu0
  %v7530 = vadd.f32 %v98, %v7529
  %v7531 = vpop.f32.mrf.mxu0
  %v7532 = vadd.f32 %v94, %v7531
  %v7533 = vpop.f32.mrf.mxu0
  %v7534 = vadd.f32 %v98, %v7533
  %7535 = vmatprep.mubr.bf16.mxu0 0
  %7536 = vmatmul.mubr.bf16.gmra.mxu0 %v7228
  %v7537 = vpop.f32.mrf.mxu0
  %v7538 = vadd.f32 %v94, %v7537
  %v7539 = vpop.f32.mrf.mxu0
  %v7540 = vadd.f32 %v98, %v7539
  %v7541 = vpop.f32.mrf.mxu0
  %v7542 = vadd.f32 %v94, %v7541
  %v7543 = vpop.f32.mrf.mxu0
  %v7544 = vadd.f32 %v98, %v7543
  %7545 = vmatprep.mubr.bf16.mxu0 0
  %7546 = vmatmul.mubr.bf16.gmra.mxu0 %v7231
  %v7547 = vpop.f32.mrf.mxu0
  %v7548 = vadd.f32 %v94, %v7547
  %v7549 = vpop.f32.mrf.mxu0
  %v7550 = vadd.f32 %v98, %v7549
  %v7551 = vpop.f32.mrf.mxu0
  %v7552 = vadd.f32 %v94, %v7551
  %v7553 = vpop.f32.mrf.mxu0
  %v7554 = vadd.f32 %v98, %v7553
  %7555 = vmatprep.mubr.bf16.mxu0 0
  %7556 = vmatmul.mubr.bf16.gmra.mxu0 %v7234
  %v7557 = vpop.f32.mrf.mxu0
  %v7558 = vadd.f32 %v94, %v7557
  %v7559 = vpop.f32.mrf.mxu0
  %v7560 = vadd.f32 %v98, %v7559
  %v7561 = vpop.f32.mrf.mxu0
  %v7562 = vadd.f32 %v94, %v7561
  %v7563 = vpop.f32.mrf.mxu0
  %v7564 = vadd.f32 %v98, %v7563
  %7565 = vmatprep.mubr.bf16.mxu0 0
  %7566 = vmatmul.mubr.bf16.gmra.mxu0 %v7237
  %v7567 = vpop.f32.mrf.mxu0
  %v7568 = vadd.f32 %v94, %v7567
  %v7569 = vpop.f32.mrf.mxu0
  %v7570 = vadd.f32 %v98, %v7569
  %v7571 = vpop.f32.mrf.mxu0
  %v7572 = vadd.f32 %v94, %v7571
  %v7573 = vpop.f32.mrf.mxu0
  %v7574 = vadd.f32 %v98, %v7573
  %7575 = vmatprep.mubr.bf16.mxu0 0
  %7576 = vmatmul.mubr.bf16.gmra.mxu0 %v7240
  %v7577 = vpop.f32.mrf.mxu0
  %v7578 = vadd.f32 %v94, %v7577
  %v7579 = vpop.f32.mrf.mxu0
  %v7580 = vadd.f32 %v98, %v7579
  %v7581 = vpop.f32.mrf.mxu0
  %v7582 = vadd.f32 %v94, %v7581
  %v7583 = vpop.f32.mrf.mxu0
  %v7584 = vadd.f32 %v98, %v7583
  %7585 = vmatprep.mubr.bf16.mxu0 0
  %7586 = vmatmul.mubr.bf16.gmra.mxu0 %v7243
  %v7587 = vpop.f32.mrf.mxu0
  %v7588 = vadd.f32 %v94, %v7587
  %v7589 = vpop.f32.mrf.mxu0
  %v7590 = vadd.f32 %v98, %v7589
  %v7591 = vpop.f32.mrf.mxu0
  %v7592 = vadd.f32 %v94, %v7591
  %v7593 = vpop.f32.mrf.mxu0
  %v7594 = vadd.f32 %v98, %v7593
  %7595 = vmatprep.mubr.bf16.mxu0 0
  %7596 = vmatmul.mubr.bf16.gmra.mxu0 %v7246
  %v7597 = vpop.f32.mrf.mxu0
  %v7598 = vadd.f32 %v94, %v7597
  %v7599 = vpop.f32.mrf.mxu0
  %v7600 = vadd.f32 %v98, %v7599
  %v7601 = vpop.f32.mrf.mxu0
  %v7602 = vadd.f32 %v94, %v7601
  %v7603 = vpop.f32.mrf.mxu0
  %v7604 = vadd.f32 %v98, %v7603
  %7605 = vmatprep.mubr.bf16.mxu0 0
  %7606 = vmatmul.mubr.bf16.gmra.mxu0 %v7249
  %v7607 = vpop.f32.mrf.mxu0
  %v7608 = vadd.f32 %v94, %v7607
  %v7609 = vpop.f32.mrf.mxu0
  %v7610 = vadd.f32 %v98, %v7609
  %v7611 = vpop.f32.mrf.mxu0
  %v7612 = vadd.f32 %v94, %v7611
  %v7613 = vpop.f32.mrf.mxu0
  %v7614 = vadd.f32 %v98, %v7613
  %7615 = vmatprep.mubr.bf16.mxu0 0
  %7616 = vmatmul.mubr.bf16.gmra.mxu0 %v7252
  %v7617 = vpop.f32.mrf.mxu0
  %v7618 = vadd.f32 %v94, %v7617
  %v7619 = vpop.f32.mrf.mxu0
  %v7620 = vadd.f32 %v98, %v7619
  %v7621 = vpop.f32.mrf.mxu0
  %v7622 = vadd.f32 %v94, %v7621
  %v7623 = vpop.f32.mrf.mxu0
  %v7624 = vadd.f32 %v98, %v7623
  %7625 = vmatprep.mubr.bf16.mxu0 0
  %7626 = vmatmul.mubr.bf16.gmra.mxu0 %v7255
  %v7627 = vpop.f32.mrf.mxu0
  %v7628 = vadd.f32 %v94, %v7627
  %v7629 = vpop.f32.mrf.mxu0
  %v7630 = vadd.f32 %v98, %v7629
  %v7631 = vpop.f32.mrf.mxu0
  %v7632 = vadd.f32 %v94, %v7631
  %v7633 = vpop.f32.mrf.mxu0
  %v7634 = vadd.f32 %v98, %v7633
  %7635 = vmatprep.mubr.bf16.mxu0 0
  %7636 = vmatmul.mubr.bf16.gmra.mxu0 %v7258
  %v7637 = vpop.f32.mrf.mxu0
  %v7638 = vadd.f32 %v94, %v7637
  %v7639 = vpop.f32.mrf.mxu0
  %v7640 = vadd.f32 %v98, %v7639
  %v7641 = vpop.f32.mrf.mxu0
  %v7642 = vadd.f32 %v94, %v7641
  %v7643 = vpop.f32.mrf.mxu0
  %v7644 = vadd.f32 %v98, %v7643
  %7645 = vdwg.mxu0
  %v7646 = vmax.f32 %v7295, 0.0
  %v7647 = vmax.f32 %v7297, 0.0
  %v7648 = vmax.f32 %v7488, 0.0
  %v7649 = vmax.f32 %v7490, 0.0
  %v7650 = vmax.f32 %v7299, 0.0
  %v7651 = vmax.f32 %v7301, 0.0
  %v7652 = vmax.f32 %v7492, 0.0
  %v7653 = vmax.f32 %v7494, 0.0
  %v7654 = vmax.f32 %v7305, 0.0
  %v7655 = vmax.f32 %v7307, 0.0
  %v7656 = vmax.f32 %v7498, 0.0
  %v7657 = vmax.f32 %v7500, 0.0
  %v7658 = vmax.f32 %v7309, 0.0
  %v7659 = vmax.f32 %v7311, 0.0
  %v7660 = vmax.f32 %v7502, 0.0
  %v7661 = vmax.f32 %v7504, 0.0
  %v7662 = vmax.f32 %v7315, 0.0
  %v7663 = vmax.f32 %v7317, 0.0
  %v7664 = vmax.f32 %v7508, 0.0
  %v7665 = vmax.f32 %v7510, 0.0
  %v7666 = vmax.f32 %v7319, 0.0
  %v7667 = vmax.f32 %v7321, 0.0
  %v7668 = vmax.f32 %v7512, 0.0
  %v7669 = vmax.f32 %v7514, 0.0
  %v7670 = vmax.f32 %v7325, 0.0
  %v7671 = vmax.f32 %v7327, 0.0
  %v7672 = vmax.f32 %v7518, 0.0
  %v7673 = vmax.f32 %v7520, 0.0
  %v7674 = vmax.f32 %v7329, 0.0
  %v7675 = vmax.f32 %v7331, 0.0
  %v7676 = vmax.f32 %v7522, 0.0
  %v7677 = vmax.f32 %v7524, 0.0
  %v7678 = vmax.f32 %v7335, 0.0
  %v7679 = vmax.f32 %v7337, 0.0
  %v7680 = vmax.f32 %v7528, 0.0
  %v7681 = vmax.f32 %v7530, 0.0
  %v7682 = vmax.f32 %v7339, 0.0
  %v7683 = vmax.f32 %v7341, 0.0
  %v7684 = vmax.f32 %v7532, 0.0
  %v7685 = vmax.f32 %v7534, 0.0
  %v7686 = vmax.f32 %v7345, 0.0
  %v7687 = vmax.f32 %v7347, 0.0
  %v7688 = vmax.f32 %v7538, 0.0
  %v7689 = vmax.f32 %v7540, 0.0
  %v7690 = vmax.f32 %v7349, 0.0
  %v7691 = vmax.f32 %v7351, 0.0
  %v7692 = vmax.f32 %v7542, 0.0
  %v7693 = vmax.f32 %v7544, 0.0
  %v7694 = vmax.f32 %v7355, 0.0
  %v7695 = vmax.f32 %v7357, 0.0
  %v7696 = vmax.f32 %v7548, 0.0
  %v7697 = vmax.f32 %v7550, 0.0
  %v7698 = vmax.f32 %v7359, 0.0
  %v7699 = vmax.f32 %v7361, 0.0
  %v7700 = vmax.f32 %v7552, 0.0
  %v7701 = vmax.f32 %v7554, 0.0
  %v7702 = vmax.f32 %v7365, 0.0
  %v7703 = vmax.f32 %v7367, 0.0
  %v7704 = vmax.f32 %v7558, 0.0
  %v7705 = vmax.f32 %v7560, 0.0
  %v7706 = vmax.f32 %v7369, 0.0
  %v7707 = vmax.f32 %v7371, 0.0
  %v7708 = vmax.f32 %v7562, 0.0
  %v7709 = vmax.f32 %v7564, 0.0
  %v7710 = vmax.f32 %v7375, 0.0
  %v7711 = vmax.f32 %v7377, 0.0
  %v7712 = vmax.f32 %v7568, 0.0
  %v7713 = vmax.f32 %v7570, 0.0
  %v7714 = vmax.f32 %v7379, 0.0
  %v7715 = vmax.f32 %v7381, 0.0
  %v7716 = vmax.f32 %v7572, 0.0
  %v7717 = vmax.f32 %v7574, 0.0
  %v7718 = vmax.f32 %v7385, 0.0
  %v7719 = vmax.f32 %v7387, 0.0
  %v7720 = vmax.f32 %v7578, 0.0
  %v7721 = vmax.f32 %v7580, 0.0
  %v7722 = vmax.f32 %v7389, 0.0
  %v7723 = vmax.f32 %v7391, 0.0
  %v7724 = vmax.f32 %v7582, 0.0
  %v7725 = vmax.f32 %v7584, 0.0
  %v7726 = vmax.f32 %v7395, 0.0
  %v7727 = vmax.f32 %v7397, 0.0
  %v7728 = vmax.f32 %v7588, 0.0
  %v7729 = vmax.f32 %v7590, 0.0
  %v7730 = vmax.f32 %v7399, 0.0
  %v7731 = vmax.f32 %v7401, 0.0
  %v7732 = vmax.f32 %v7592, 0.0
  %v7733 = vmax.f32 %v7594, 0.0
  %v7734 = vmax.f32 %v7405, 0.0
  %v7735 = vmax.f32 %v7407, 0.0
  %v7736 = vmax.f32 %v7598, 0.0
  %v7737 = vmax.f32 %v7600, 0.0
  %v7738 = vmax.f32 %v7409, 0.0
  %v7739 = vmax.f32 %v7411, 0.0
  %v7740 = vmax.f32 %v7602, 0.0
  %v7741 = vmax.f32 %v7604, 0.0
  %v7742 = vmax.f32 %v7415, 0.0
  %v7743 = vmax.f32 %v7417, 0.0
  %v7744 = vmax.f32 %v7608, 0.0
  %v7745 = vmax.f32 %v7610, 0.0
  %v7746 = vmax.f32 %v7419, 0.0
  %v7747 = vmax.f32 %v7421, 0.0
  %v7748 = vmax.f32 %v7612, 0.0
  %v7749 = vmax.f32 %v7614, 0.0
  %v7750 = vmax.f32 %v7425, 0.0
  %v7751 = vmax.f32 %v7427, 0.0
  %v7752 = vmax.f32 %v7618, 0.0
  %v7753 = vmax.f32 %v7620, 0.0
  %v7754 = vmax.f32 %v7429, 0.0
  %v7755 = vmax.f32 %v7431, 0.0
  %v7756 = vmax.f32 %v7622, 0.0
  %v7757 = vmax.f32 %v7624, 0.0
  %v7758 = vmax.f32 %v7435, 0.0
  %v7759 = vmax.f32 %v7437, 0.0
  %v7760 = vmax.f32 %v7628, 0.0
  %v7761 = vmax.f32 %v7630, 0.0
  %v7762 = vmax.f32 %v7439, 0.0
  %v7763 = vmax.f32 %v7441, 0.0
  %v7764 = vmax.f32 %v7632, 0.0
  %v7765 = vmax.f32 %v7634, 0.0
  %v7766 = vmax.f32 %v7445, 0.0
  %v7767 = vmax.f32 %v7447, 0.0
  %v7768 = vmax.f32 %v7638, 0.0
  %v7769 = vmax.f32 %v7640, 0.0
  %v7770 = vmax.f32 %v7449, 0.0
  %v7771 = vmax.f32 %v7451, 0.0
  %v7772 = vmax.f32 %v7642, 0.0
  %v7773 = vmax.f32 %v7644, 0.0
  %v7774 = vadd.f32 %v7646, %v7650
  %v7775 = vadd.f32 %v7774, %v7654
  %v7776 = vadd.f32 %v7775, %v7658
  %v7777 = vrot.slane %v7776, 4
  %v7778 = vadd.f32 %v7776, %v7777
  %v7779 = vrot.slane %v7778, 2
  %v7780 = vadd.f32 %v7778, %v7779
  %v7781 = vrot.slane %v7780, 1
  %v7782 = vadd.f32 %v7780, %v7781
  %v7783 = vadd.f32 %v7647, %v7651
  %v7784 = vadd.f32 %v7783, %v7655
  %v7785 = vadd.f32 %v7784, %v7659
  %v7786 = vrot.slane %v7785, 4
  %v7787 = vadd.f32 %v7785, %v7786
  %v7788 = vrot.slane %v7787, 2
  %v7789 = vadd.f32 %v7787, %v7788
  %v7790 = vrot.slane %v7789, 1
  %v7791 = vadd.f32 %v7789, %v7790
  %v7792 = vadd.f32 %v7648, %v7652
  %v7793 = vadd.f32 %v7792, %v7656
  %v7794 = vadd.f32 %v7793, %v7660
  %v7795 = vrot.slane %v7794, 4
  %v7796 = vadd.f32 %v7794, %v7795
  %v7797 = vrot.slane %v7796, 2
  %v7798 = vadd.f32 %v7796, %v7797
  %v7799 = vrot.slane %v7798, 1
  %v7800 = vadd.f32 %v7798, %v7799
  %v7801 = vadd.f32 %v7649, %v7653
  %v7802 = vadd.f32 %v7801, %v7657
  %v7803 = vadd.f32 %v7802, %v7661
  %v7804 = vrot.slane %v7803, 4
  %v7805 = vadd.f32 %v7803, %v7804
  %v7806 = vrot.slane %v7805, 2
  %v7807 = vadd.f32 %v7805, %v7806
  %v7808 = vrot.slane %v7807, 1
  %v7809 = vadd.f32 %v7807, %v7808
  %v7810 = vadd.f32 %v7662, %v7666
  %v7811 = vadd.f32 %v7810, %v7670
  %v7812 = vadd.f32 %v7811, %v7674
  %v7813 = vrot.slane %v7812, 4
  %v7814 = vadd.f32 %v7812, %v7813
  %v7815 = vrot.slane %v7814, 2
  %v7816 = vadd.f32 %v7814, %v7815
  %v7817 = vrot.slane %v7816, 1
  %v7818 = vadd.f32 %v7816, %v7817
  %v7819 = vadd.f32 %v7663, %v7667
  %v7820 = vadd.f32 %v7819, %v7671
  %v7821 = vadd.f32 %v7820, %v7675
  %v7822 = vrot.slane %v7821, 4
  %v7823 = vadd.f32 %v7821, %v7822
  %v7824 = vrot.slane %v7823, 2
  %v7825 = vadd.f32 %v7823, %v7824
  %v7826 = vrot.slane %v7825, 1
  %v7827 = vadd.f32 %v7825, %v7826
  %v7828 = vadd.f32 %v7664, %v7668
  %v7829 = vadd.f32 %v7828, %v7672
  %v7830 = vadd.f32 %v7829, %v7676
  %v7831 = vrot.slane %v7830, 4
  %v7832 = vadd.f32 %v7830, %v7831
  %v7833 = vrot.slane %v7832, 2
  %v7834 = vadd.f32 %v7832, %v7833
  %v7835 = vrot.slane %v7834, 1
  %v7836 = vadd.f32 %v7834, %v7835
  %v7837 = vadd.f32 %v7665, %v7669
  %v7838 = vadd.f32 %v7837, %v7673
  %v7839 = vadd.f32 %v7838, %v7677
  %v7840 = vrot.slane %v7839, 4
  %v7841 = vadd.f32 %v7839, %v7840
  %v7842 = vrot.slane %v7841, 2
  %v7843 = vadd.f32 %v7841, %v7842
  %v7844 = vrot.slane %v7843, 1
  %v7845 = vadd.f32 %v7843, %v7844
  %v7846 = vadd.f32 %v7678, %v7682
  %v7847 = vadd.f32 %v7846, %v7686
  %v7848 = vadd.f32 %v7847, %v7690
  %v7849 = vrot.slane %v7848, 4
  %v7850 = vadd.f32 %v7848, %v7849
  %v7851 = vrot.slane %v7850, 2
  %v7852 = vadd.f32 %v7850, %v7851
  %v7853 = vrot.slane %v7852, 1
  %v7854 = vadd.f32 %v7852, %v7853
  %v7855 = vadd.f32 %v7679, %v7683
  %v7856 = vadd.f32 %v7855, %v7687
  %v7857 = vadd.f32 %v7856, %v7691
  %v7858 = vrot.slane %v7857, 4
  %v7859 = vadd.f32 %v7857, %v7858
  %v7860 = vrot.slane %v7859, 2
  %v7861 = vadd.f32 %v7859, %v7860
  %v7862 = vrot.slane %v7861, 1
  %v7863 = vadd.f32 %v7861, %v7862
  %v7864 = vadd.f32 %v7680, %v7684
  %v7865 = vadd.f32 %v7864, %v7688
  %v7866 = vadd.f32 %v7865, %v7692
  %v7867 = vrot.slane %v7866, 4
  %v7868 = vadd.f32 %v7866, %v7867
  %v7869 = vrot.slane %v7868, 2
  %v7870 = vadd.f32 %v7868, %v7869
  %v7871 = vrot.slane %v7870, 1
  %v7872 = vadd.f32 %v7870, %v7871
  %v7873 = vadd.f32 %v7681, %v7685
  %v7874 = vadd.f32 %v7873, %v7689
  %v7875 = vadd.f32 %v7874, %v7693
  %v7876 = vrot.slane %v7875, 4
  %v7877 = vadd.f32 %v7875, %v7876
  %v7878 = vrot.slane %v7877, 2
  %v7879 = vadd.f32 %v7877, %v7878
  %v7880 = vrot.slane %v7879, 1
  %v7881 = vadd.f32 %v7879, %v7880
  %v7882 = vadd.f32 %v7694, %v7698
  %v7883 = vadd.f32 %v7882, %v7702
  %v7884 = vadd.f32 %v7883, %v7706
  %v7885 = vrot.slane %v7884, 4
  %v7886 = vadd.f32 %v7884, %v7885
  %v7887 = vrot.slane %v7886, 2
  %v7888 = vadd.f32 %v7886, %v7887
  %v7889 = vrot.slane %v7888, 1
  %v7890 = vadd.f32 %v7888, %v7889
  %v7891 = vadd.f32 %v7695, %v7699
  %v7892 = vadd.f32 %v7891, %v7703
  %v7893 = vadd.f32 %v7892, %v7707
  %v7894 = vrot.slane %v7893, 4
  %v7895 = vadd.f32 %v7893, %v7894
  %v7896 = vrot.slane %v7895, 2
  %v7897 = vadd.f32 %v7895, %v7896
  %v7898 = vrot.slane %v7897, 1
  %v7899 = vadd.f32 %v7897, %v7898
  %v7900 = vadd.f32 %v7696, %v7700
  %v7901 = vadd.f32 %v7900, %v7704
  %v7902 = vadd.f32 %v7901, %v7708
  %v7903 = vrot.slane %v7902, 4
  %v7904 = vadd.f32 %v7902, %v7903
  %v7905 = vrot.slane %v7904, 2
  %v7906 = vadd.f32 %v7904, %v7905
  %v7907 = vrot.slane %v7906, 1
  %v7908 = vadd.f32 %v7906, %v7907
  %v7909 = vadd.f32 %v7697, %v7701
  %v7910 = vadd.f32 %v7909, %v7705
  %v7911 = vadd.f32 %v7910, %v7709
  %v7912 = vrot.slane %v7911, 4
  %v7913 = vadd.f32 %v7911, %v7912
  %v7914 = vrot.slane %v7913, 2
  %v7915 = vadd.f32 %v7913, %v7914
  %v7916 = vrot.slane %v7915, 1
  %v7917 = vadd.f32 %v7915, %v7916
  %v7918 = vadd.f32 %v7710, %v7714
  %v7919 = vadd.f32 %v7918, %v7718
  %v7920 = vadd.f32 %v7919, %v7722
  %v7921 = vrot.slane %v7920, 4
  %v7922 = vadd.f32 %v7920, %v7921
  %v7923 = vrot.slane %v7922, 2
  %v7924 = vadd.f32 %v7922, %v7923
  %v7925 = vrot.slane %v7924, 1
  %v7926 = vadd.f32 %v7924, %v7925
  %v7927 = vadd.f32 %v7711, %v7715
  %v7928 = vadd.f32 %v7927, %v7719
  %v7929 = vadd.f32 %v7928, %v7723
  %v7930 = vrot.slane %v7929, 4
  %v7931 = vadd.f32 %v7929, %v7930
  %v7932 = vrot.slane %v7931, 2
  %v7933 = vadd.f32 %v7931, %v7932
  %v7934 = vrot.slane %v7933, 1
  %v7935 = vadd.f32 %v7933, %v7934
  %v7936 = vadd.f32 %v7712, %v7716
  %v7937 = vadd.f32 %v7936, %v7720
  %v7938 = vadd.f32 %v7937, %v7724
  %v7939 = vrot.slane %v7938, 4
  %v7940 = vadd.f32 %v7938, %v7939
  %v7941 = vrot.slane %v7940, 2
  %v7942 = vadd.f32 %v7940, %v7941
  %v7943 = vrot.slane %v7942, 1
  %v7944 = vadd.f32 %v7942, %v7943
  %v7945 = vadd.f32 %v7713, %v7717
  %v7946 = vadd.f32 %v7945, %v7721
  %v7947 = vadd.f32 %v7946, %v7725
  %v7948 = vrot.slane %v7947, 4
  %v7949 = vadd.f32 %v7947, %v7948
  %v7950 = vrot.slane %v7949, 2
  %v7951 = vadd.f32 %v7949, %v7950
  %v7952 = vrot.slane %v7951, 1
  %v7953 = vadd.f32 %v7951, %v7952
  %v7954 = vadd.f32 %v7726, %v7730
  %v7955 = vadd.f32 %v7954, %v7734
  %v7956 = vadd.f32 %v7955, %v7738
  %v7957 = vrot.slane %v7956, 4
  %v7958 = vadd.f32 %v7956, %v7957
  %v7959 = vrot.slane %v7958, 2
  %v7960 = vadd.f32 %v7958, %v7959
  %v7961 = vrot.slane %v7960, 1
  %v7962 = vadd.f32 %v7960, %v7961
  %v7963 = vadd.f32 %v7727, %v7731
  %v7964 = vadd.f32 %v7963, %v7735
  %v7965 = vadd.f32 %v7964, %v7739
  %v7966 = vrot.slane %v7965, 4
  %v7967 = vadd.f32 %v7965, %v7966
  %v7968 = vrot.slane %v7967, 2
  %v7969 = vadd.f32 %v7967, %v7968
  %v7970 = vrot.slane %v7969, 1
  %v7971 = vadd.f32 %v7969, %v7970
  %v7972 = vadd.f32 %v7728, %v7732
  %v7973 = vadd.f32 %v7972, %v7736
  %v7974 = vadd.f32 %v7973, %v7740
  %v7975 = vrot.slane %v7974, 4
  %v7976 = vadd.f32 %v7974, %v7975
  %v7977 = vrot.slane %v7976, 2
  %v7978 = vadd.f32 %v7976, %v7977
  %v7979 = vrot.slane %v7978, 1
  %v7980 = vadd.f32 %v7978, %v7979
  %v7981 = vadd.f32 %v7729, %v7733
  %v7982 = vadd.f32 %v7981, %v7737
  %v7983 = vadd.f32 %v7982, %v7741
  %v7984 = vrot.slane %v7983, 4
  %v7985 = vadd.f32 %v7983, %v7984
  %v7986 = vrot.slane %v7985, 2
  %v7987 = vadd.f32 %v7985, %v7986
  %v7988 = vrot.slane %v7987, 1
  %v7989 = vadd.f32 %v7987, %v7988
  %v7990 = vadd.f32 %v7742, %v7746
  %v7991 = vadd.f32 %v7990, %v7750
  %v7992 = vadd.f32 %v7991, %v7754
  %v7993 = vrot.slane %v7992, 4
  %v7994 = vadd.f32 %v7992, %v7993
  %v7995 = vrot.slane %v7994, 2
  %v7996 = vadd.f32 %v7994, %v7995
  %v7997 = vrot.slane %v7996, 1
  %v7998 = vadd.f32 %v7996, %v7997
  %v7999 = vadd.f32 %v7743, %v7747
  %v8000 = vadd.f32 %v7999, %v7751
  %v8001 = vadd.f32 %v8000, %v7755
  %v8002 = vrot.slane %v8001, 4
  %v8003 = vadd.f32 %v8001, %v8002
  %v8004 = vrot.slane %v8003, 2
  %v8005 = vadd.f32 %v8003, %v8004
  %v8006 = vrot.slane %v8005, 1
  %v8007 = vadd.f32 %v8005, %v8006
  %v8008 = vadd.f32 %v7744, %v7748
  %v8009 = vadd.f32 %v8008, %v7752
  %v8010 = vadd.f32 %v8009, %v7756
  %v8011 = vrot.slane %v8010, 4
  %v8012 = vadd.f32 %v8010, %v8011
  %v8013 = vrot.slane %v8012, 2
  %v8014 = vadd.f32 %v8012, %v8013
  %v8015 = vrot.slane %v8014, 1
  %v8016 = vadd.f32 %v8014, %v8015
  %v8017 = vadd.f32 %v7745, %v7749
  %v8018 = vadd.f32 %v8017, %v7753
  %v8019 = vadd.f32 %v8018, %v7757
  %v8020 = vrot.slane %v8019, 4
  %v8021 = vadd.f32 %v8019, %v8020
  %v8022 = vrot.slane %v8021, 2
  %v8023 = vadd.f32 %v8021, %v8022
  %v8024 = vrot.slane %v8023, 1
  %v8025 = vadd.f32 %v8023, %v8024
  %v8026 = vadd.f32 %v7758, %v7762
  %v8027 = vadd.f32 %v8026, %v7766
  %v8028 = vadd.f32 %v8027, %v7770
  %v8029 = vrot.slane %v8028, 4
  %v8030 = vadd.f32 %v8028, %v8029
  %v8031 = vrot.slane %v8030, 2
  %v8032 = vadd.f32 %v8030, %v8031
  %v8033 = vrot.slane %v8032, 1
  %v8034 = vadd.f32 %v8032, %v8033
  %v8035 = vadd.f32 %v7759, %v7763
  %v8036 = vadd.f32 %v8035, %v7767
  %v8037 = vadd.f32 %v8036, %v7771
  %v8038 = vrot.slane %v8037, 4
  %v8039 = vadd.f32 %v8037, %v8038
  %v8040 = vrot.slane %v8039, 2
  %v8041 = vadd.f32 %v8039, %v8040
  %v8042 = vrot.slane %v8041, 1
  %v8043 = vadd.f32 %v8041, %v8042
  %v8044 = vadd.f32 %v7760, %v7764
  %v8045 = vadd.f32 %v8044, %v7768
  %v8046 = vadd.f32 %v8045, %v7772
  %v8047 = vrot.slane %v8046, 4
  %v8048 = vadd.f32 %v8046, %v8047
  %v8049 = vrot.slane %v8048, 2
  %v8050 = vadd.f32 %v8048, %v8049
  %v8051 = vrot.slane %v8050, 1
  %v8052 = vadd.f32 %v8050, %v8051
  %v8053 = vadd.f32 %v7761, %v7765
  %v8054 = vadd.f32 %v8053, %v7769
  %v8055 = vadd.f32 %v8054, %v7773
  %v8056 = vrot.slane %v8055, 4
  %v8057 = vadd.f32 %v8055, %v8056
  %v8058 = vrot.slane %v8057, 2
  %v8059 = vadd.f32 %v8057, %v8058
  %v8060 = vrot.slane %v8059, 1
  %v8061 = vadd.f32 %v8059, %v8060
  %v8062 = vadd.f32 %v7067, %v7782
  %v8063 = vadd.f32 %v7068, %v7791
  %v8064 = vadd.f32 %v7069, %v7800
  %v8065 = vadd.f32 %v7070, %v7809
  %v8066 = vadd.f32 %v7071, %v7818
  %v8067 = vadd.f32 %v7072, %v7827
  %v8068 = vadd.f32 %v7073, %v7836
  %v8069 = vadd.f32 %v7074, %v7845
  %v8070 = vadd.f32 %v7075, %v7854
  %v8071 = vadd.f32 %v7076, %v7863
  %v8072 = vadd.f32 %v7077, %v7872
  %v8073 = vadd.f32 %v7078, %v7881
  %v8074 = vadd.f32 %v7079, %v7890
  %v8075 = vadd.f32 %v7080, %v7899
  %v8076 = vadd.f32 %v7081, %v7908
  %v8077 = vadd.f32 %v7082, %v7917
  %v8078 = vadd.f32 %v7083, %v7926
  %v8079 = vadd.f32 %v7084, %v7935
  %v8080 = vadd.f32 %v7085, %v7944
  %v8081 = vadd.f32 %v7086, %v7953
  %v8082 = vadd.f32 %v7087, %v7962
  %v8083 = vadd.f32 %v7088, %v7971
  %v8084 = vadd.f32 %v7089, %v7980
  %v8085 = vadd.f32 %v7090, %v7989
  %v8086 = vadd.f32 %v7091, %v7998
  %v8087 = vadd.f32 %v7092, %v8007
  %v8088 = vadd.f32 %v7093, %v8016
  %v8089 = vadd.f32 %v7094, %v8025
  %v8090 = vadd.f32 %v7095, %v8034
  %v8091 = vadd.f32 %v7096, %v8043
  %v8092 = vadd.f32 %v7097, %v8052
  %v8093 = vadd.f32 %v7098, %v8061
  %vm8126 = vcmask 1041409
  %v8127 = vsel %vm8126, %v8066, %v8062
  %vm8128 = vcmask 1042434
  %v8129 = vsel %vm8128, %v8070, %v8127
  %vm8130 = vcmask 1043459
  %v8131 = vsel %vm8130, %v8074, %v8129
  %vm8132 = vcmask 1044484
  %v8133 = vsel %vm8132, %v8078, %v8131
  %vm8134 = vcmask 1045509
  %v8135 = vsel %vm8134, %v8082, %v8133
  %vm8136 = vcmask 1046534
  %v8137 = vsel %vm8136, %v8086, %v8135
  %vm8138 = vcmask 1047559
  %v8139 = vsel %vm8138, %v8090, %v8137
  %v8140 = vsel %vm8126, %v8067, %v8063
  %v8141 = vsel %vm8128, %v8071, %v8140
  %v8142 = vsel %vm8130, %v8075, %v8141
  %v8143 = vsel %vm8132, %v8079, %v8142
  %v8144 = vsel %vm8134, %v8083, %v8143
  %v8145 = vsel %vm8136, %v8087, %v8144
  %v8146 = vsel %vm8138, %v8091, %v8145
  %v8147 = vsel %vm8126, %v8068, %v8064
  %v8148 = vsel %vm8128, %v8072, %v8147
  %v8149 = vsel %vm8130, %v8076, %v8148
  %v8150 = vsel %vm8132, %v8080, %v8149
  %v8151 = vsel %vm8134, %v8084, %v8150
  %v8152 = vsel %vm8136, %v8088, %v8151
  %v8153 = vsel %vm8138, %v8092, %v8152
  %v8154 = vsel %vm8126, %v8069, %v8065
  %v8155 = vsel %vm8128, %v8073, %v8154
  %v8156 = vsel %vm8130, %v8077, %v8155
  %v8157 = vsel %vm8132, %v8081, %v8156
  %v8158 = vsel %vm8134, %v8085, %v8157
  %v8159 = vsel %vm8136, %v8089, %v8158
  %v8160 = vsel %vm8138, %v8093, %v8159
  %v8165 = vadd.f32 %v46, %v8139
  %v8166 = vadd.f32 %v47, %v8146
  %v8167 = vadd.f32 %v48, %v8153
  %v8168 = vadd.f32 %v49, %v8160
  %8169 = vst [vmem:[#allocation2] sm:$0xff] %v8165
  %8170 = vst [vmem:[#allocation2 + $0x8] sm:$0xff] %v8166
  %8171 = vst [vmem:[#allocation2 + $0x10] sm:$0xff] %v8167
  %8172 = vst [vmem:[#allocation2 + $0x18] sm:$0xff] %v8168
  // Predicated region
  $region34: #{simclr_forward.1} parent=0 // pred_check
    %p8173 = pneg %p27
  $region35: #{simclr_forward.1} parent=0 // pred_check_branch
    %8175 = sbr.rel (%p8173) target = $region37
  $region36: #{simclr_forward.1} parent=0 // pred_region
    %v8176 = vld [vmem:[#allocation2] sm:$0xff]
    %v8177 = vld [vmem:[#allocation2 + $0x8] sm:$0xff]
    %v8178 = vld [vmem:[#allocation2 + $0x10] sm:$0xff]
    %v8179 = vld [vmem:[#allocation2 + $0x18] sm:$0xff]
    %v8180 = vmul.f32 %v8176, 0.00390625
    %v8181 = vmul.f32 %v8177, 0.00390625
    %v8182 = vmul.f32 %v8178, 0.00390625
    %v8183 = vmul.f32 %v8179, 0.00390625
    %v8184 = vpack.c.bf16 %v8180, %v8180
    %v8185 = vpack.c.bf16 %v8181, %v8181
    %v8186 = vpack.c.bf16 %v8182, %v8182
    %v8187 = vpack.c.bf16 %v8183, %v8183
    %v8188 = vld [vmem:[%s3] sm:$0xff]
    %v8189 = vld [vmem:[%s3 + $0x8] sm:$0xff]
    %v8190 = vld [vmem:[%s3 + $0x10] sm:$0xff]
    %v8191 = vld [vmem:[%s3 + $0x18] sm:$0xff]
    %v8192 = vld [vmem:[%s3 + $0x20] sm:$0xff]
    %v8193 = vld [vmem:[%s3 + $0x28] sm:$0xff]
    %v8194 = vld [vmem:[%s3 + $0x30] sm:$0xff]
    %v8195 = vld [vmem:[%s3 + $0x38] sm:$0xff]
    %v8196 = vld [vmem:[%s3 + $0x40] sm:$0xff]
    %v8197 = vld [vmem:[%s3 + $0x48] sm:$0xff]
    %v8198 = vld [vmem:[%s3 + $0x50] sm:$0xff]
    %v8199 = vld [vmem:[%s3 + $0x58] sm:$0xff]
    %v8200 = vld [vmem:[%s3 + $0x60] sm:$0xff]
    %v8201 = vld [vmem:[%s3 + $0x68] sm:$0xff]
    %v8202 = vld [vmem:[%s3 + $0x70] sm:$0xff]
    %v8203 = vld [vmem:[%s3 + $0x78] sm:$0xff]
    %v8204 = vld [vmem:[%s3 + $0x80] sm:$0xff]
    %v8205 = vld [vmem:[%s3 + $0x88] sm:$0xff]
    %v8206 = vld [vmem:[%s3 + $0x90] sm:$0xff]
    %v8207 = vld [vmem:[%s3 + $0x98] sm:$0xff]
    %v8208 = vld [vmem:[%s3 + $0xa0] sm:$0xff]
    %v8209 = vld [vmem:[%s3 + $0xa8] sm:$0xff]
    %v8210 = vld [vmem:[%s3 + $0xb0] sm:$0xff]
    %v8211 = vld [vmem:[%s3 + $0xb8] sm:$0xff]
    %v8212 = vld [vmem:[%s3 + $0xc0] sm:$0xff]
    %v8213 = vld [vmem:[%s3 + $0xc8] sm:$0xff]
    %v8214 = vld [vmem:[%s3 + $0xd0] sm:$0xff]
    %v8215 = vld [vmem:[%s3 + $0xd8] sm:$0xff]
    %v8216 = vld [vmem:[%s3 + $0xe0] sm:$0xff]
    %v8217 = vld [vmem:[%s3 + $0xe8] sm:$0xff]
    %v8218 = vld [vmem:[%s3 + $0xf0] sm:$0xff]
    %v8219 = vld [vmem:[%s3 + $0xf8] sm:$0xff]
    %v8220 = vld [vmem:[%s3 + $0x100] sm:$0xff]
    %v8221 = vld [vmem:[%s3 + $0x108] sm:$0xff]
    %v8222 = vld [vmem:[%s3 + $0x110] sm:$0xff]
    %v8223 = vld [vmem:[%s3 + $0x118] sm:$0xff]
    %v8224 = vld [vmem:[%s3 + $0x120] sm:$0xff]
    %v8225 = vld [vmem:[%s3 + $0x128] sm:$0xff]
    %v8226 = vld [vmem:[%s3 + $0x130] sm:$0xff]
    %v8227 = vld [vmem:[%s3 + $0x138] sm:$0xff]
    %v8228 = vld [vmem:[%s3 + $0x140] sm:$0xff]
    %v8229 = vld [vmem:[%s3 + $0x148] sm:$0xff]
    %v8230 = vld [vmem:[%s3 + $0x150] sm:$0xff]
    %v8231 = vld [vmem:[%s3 + $0x158] sm:$0xff]
    %v8232 = vld [vmem:[%s3 + $0x160] sm:$0xff]
    %v8233 = vld [vmem:[%s3 + $0x168] sm:$0xff]
    %v8234 = vld [vmem:[%s3 + $0x170] sm:$0xff]
    %v8235 = vld [vmem:[%s3 + $0x178] sm:$0xff]
    %v8236 = vld [vmem:[%s3 + $0x180] sm:$0xff]
    %v8237 = vld [vmem:[%s3 + $0x188] sm:$0xff]
    %v8238 = vld [vmem:[%s3 + $0x190] sm:$0xff]
    %v8239 = vld [vmem:[%s3 + $0x198] sm:$0xff]
    %v8240 = vld [vmem:[%s3 + $0x1a0] sm:$0xff]
    %v8241 = vld [vmem:[%s3 + $0x1a8] sm:$0xff]
    %v8242 = vld [vmem:[%s3 + $0x1b0] sm:$0xff]
    %v8243 = vld [vmem:[%s3 + $0x1b8] sm:$0xff]
    %v8244 = vld [vmem:[%s3 + $0x1c0] sm:$0xff]
    %v8245 = vld [vmem:[%s3 + $0x1c8] sm:$0xff]
    %v8246 = vld [vmem:[%s3 + $0x1d0] sm:$0xff]
    %v8247 = vld [vmem:[%s3 + $0x1d8] sm:$0xff]
    %v8248 = vld [vmem:[%s3 + $0x1e0] sm:$0xff]
    %v8249 = vld [vmem:[%s3 + $0x1e8] sm:$0xff]
    %v8250 = vld [vmem:[%s3 + $0x1f0] sm:$0xff]
    %v8251 = vld [vmem:[%s3 + $0x1f8] sm:$0xff]
    %v8252 = vld [vmem:[%s3 + $0x200] sm:$0xff]
    %v8253 = vld [vmem:[%s3 + $0x208] sm:$0xff]
    %v8254 = vld [vmem:[%s3 + $0x210] sm:$0xff]
    %v8255 = vld [vmem:[%s3 + $0x218] sm:$0xff]
    %v8256 = vld [vmem:[%s3 + $0x220] sm:$0xff]
    %v8257 = vld [vmem:[%s3 + $0x228] sm:$0xff]
    %v8258 = vld [vmem:[%s3 + $0x230] sm:$0xff]
    %v8259 = vld [vmem:[%s3 + $0x238] sm:$0xff]
    %v8260 = vld [vmem:[%s3 + $0x240] sm:$0xff]
    %v8261 = vld [vmem:[%s3 + $0x248] sm:$0xff]
    %v8262 = vld [vmem:[%s3 + $0x250] sm:$0xff]
    %v8263 = vld [vmem:[%s3 + $0x258] sm:$0xff]
    %v8264 = vld [vmem:[%s3 + $0x260] sm:$0xff]
    %v8265 = vld [vmem:[%s3 + $0x268] sm:$0xff]
    %v8266 = vld [vmem:[%s3 + $0x270] sm:$0xff]
    %v8267 = vld [vmem:[%s3 + $0x278] sm:$0xff]
    %v8268 = vld [vmem:[%s3 + $0x280] sm:$0xff]
    %v8269 = vld [vmem:[%s3 + $0x288] sm:$0xff]
    %v8270 = vld [vmem:[%s3 + $0x290] sm:$0xff]
    %v8271 = vld [vmem:[%s3 + $0x298] sm:$0xff]
    %v8272 = vld [vmem:[%s3 + $0x2a0] sm:$0xff]
    %v8273 = vld [vmem:[%s3 + $0x2a8] sm:$0xff]
    %v8274 = vld [vmem:[%s3 + $0x2b0] sm:$0xff]
    %v8275 = vld [vmem:[%s3 + $0x2b8] sm:$0xff]
    %v8276 = vld [vmem:[%s3 + $0x2c0] sm:$0xff]
    %v8277 = vld [vmem:[%s3 + $0x2c8] sm:$0xff]
    %v8278 = vld [vmem:[%s3 + $0x2d0] sm:$0xff]
    %v8279 = vld [vmem:[%s3 + $0x2d8] sm:$0xff]
    %v8280 = vld [vmem:[%s3 + $0x2e0] sm:$0xff]
    %v8281 = vld [vmem:[%s3 + $0x2e8] sm:$0xff]
    %v8282 = vld [vmem:[%s3 + $0x2f0] sm:$0xff]
    %v8283 = vld [vmem:[%s3 + $0x2f8] sm:$0xff]
    %v8284 = vld [vmem:[%s3 + $0x300] sm:$0xff]
    %v8285 = vld [vmem:[%s3 + $0x308] sm:$0xff]
    %v8286 = vld [vmem:[%s3 + $0x310] sm:$0xff]
    %v8287 = vld [vmem:[%s3 + $0x318] sm:$0xff]
    %v8288 = vld [vmem:[%s3 + $0x320] sm:$0xff]
    %v8289 = vld [vmem:[%s3 + $0x328] sm:$0xff]
    %v8290 = vld [vmem:[%s3 + $0x330] sm:$0xff]
    %v8291 = vld [vmem:[%s3 + $0x338] sm:$0xff]
    %v8292 = vld [vmem:[%s3 + $0x340] sm:$0xff]
    %v8293 = vld [vmem:[%s3 + $0x348] sm:$0xff]
    %v8294 = vld [vmem:[%s3 + $0x350] sm:$0xff]
    %v8295 = vld [vmem:[%s3 + $0x358] sm:$0xff]
    %v8296 = vld [vmem:[%s3 + $0x360] sm:$0xff]
    %v8297 = vld [vmem:[%s3 + $0x368] sm:$0xff]
    %v8298 = vld [vmem:[%s3 + $0x370] sm:$0xff]
    %v8299 = vld [vmem:[%s3 + $0x378] sm:$0xff]
    %v8300 = vld [vmem:[%s3 + $0x380] sm:$0xff]
    %v8301 = vld [vmem:[%s3 + $0x388] sm:$0xff]
    %v8302 = vld [vmem:[%s3 + $0x390] sm:$0xff]
    %v8303 = vld [vmem:[%s3 + $0x398] sm:$0xff]
    %v8304 = vld [vmem:[%s3 + $0x3a0] sm:$0xff]
    %v8305 = vld [vmem:[%s3 + $0x3a8] sm:$0xff]
    %v8306 = vld [vmem:[%s3 + $0x3b0] sm:$0xff]
    %v8307 = vld [vmem:[%s3 + $0x3b8] sm:$0xff]
    %v8308 = vld [vmem:[%s3 + $0x3c0] sm:$0xff]
    %v8309 = vld [vmem:[%s3 + $0x3c8] sm:$0xff]
    %v8310 = vld [vmem:[%s3 + $0x3d0] sm:$0xff]
    %v8311 = vld [vmem:[%s3 + $0x3d8] sm:$0xff]
    %v8312 = vld [vmem:[%s3 + $0x3e0] sm:$0xff]
    %v8313 = vld [vmem:[%s3 + $0x3e8] sm:$0xff]
    %v8314 = vld [vmem:[%s3 + $0x3f0] sm:$0xff]
    %v8315 = vld [vmem:[%s3 + $0x3f8] sm:$0xff]
    %v8316 = vld [vmem:[%s4] sm:$0xf]
    %v8318 = vlaneseq
    %v8319 = vshrl.u32 %v8318, 7
    %v8320 = vsub.s32 0, %v8319
    %v8321 = vrot.slane %v8316, %v8320
    %v8322 = vlaneseq
    %v8323 = vshrl.u32 %v8322, 7
    %v8324 = vsub.s32 1, %v8323
    %v8325 = vrot.slane %v8316, %v8324
    %v8326 = vlaneseq
    %v8327 = vshrl.u32 %v8326, 7
    %v8328 = vsub.s32 2, %v8327
    %v8329 = vrot.slane %v8316, %v8328
    %v8330 = vlaneseq
    %v8331 = vshrl.u32 %v8330, 7
    %v8332 = vsub.s32 3, %v8331
    %v8333 = vrot.slane %v8316, %v8332
    %v8466 = vunpack.c.l.b16 %v8188
    %v8467 = vunpack.c.h.b16 %v8188
    %v8468 = vunpack.c.l.b16 %v8189
    %v8469 = vunpack.c.h.b16 %v8189
    %v8470 = vunpack.c.l.b16 %v8190
    %v8471 = vunpack.c.h.b16 %v8190
    %v8472 = vunpack.c.l.b16 %v8191
    %v8473 = vunpack.c.h.b16 %v8191
    %v8474 = vunpack.c.l.b16 %v8192
    %v8475 = vunpack.c.h.b16 %v8192
    %v8476 = vunpack.c.l.b16 %v8193
    %v8477 = vunpack.c.h.b16 %v8193
    %v8478 = vunpack.c.l.b16 %v8194
    %v8479 = vunpack.c.h.b16 %v8194
    %v8480 = vunpack.c.l.b16 %v8195
    %v8481 = vunpack.c.h.b16 %v8195
    %v8482 = vunpack.c.l.b16 %v8196
    %v8483 = vunpack.c.h.b16 %v8196
    %v8484 = vunpack.c.l.b16 %v8197
    %v8485 = vunpack.c.h.b16 %v8197
    %v8486 = vunpack.c.l.b16 %v8198
    %v8487 = vunpack.c.h.b16 %v8198
    %v8488 = vunpack.c.l.b16 %v8199
    %v8489 = vunpack.c.h.b16 %v8199
    %v8490 = vunpack.c.l.b16 %v8200
    %v8491 = vunpack.c.h.b16 %v8200
    %v8492 = vunpack.c.l.b16 %v8201
    %v8493 = vunpack.c.h.b16 %v8201
    %v8494 = vunpack.c.l.b16 %v8202
    %v8495 = vunpack.c.h.b16 %v8202
    %v8496 = vunpack.c.l.b16 %v8203
    %v8497 = vunpack.c.h.b16 %v8203
    %v8498 = vunpack.c.l.b16 %v8204
    %v8499 = vunpack.c.h.b16 %v8204
    %v8500 = vunpack.c.l.b16 %v8205
    %v8501 = vunpack.c.h.b16 %v8205
    %v8502 = vunpack.c.l.b16 %v8206
    %v8503 = vunpack.c.h.b16 %v8206
    %v8504 = vunpack.c.l.b16 %v8207
    %v8505 = vunpack.c.h.b16 %v8207
    %v8506 = vunpack.c.l.b16 %v8208
    %v8507 = vunpack.c.h.b16 %v8208
    %v8508 = vunpack.c.l.b16 %v8209
    %v8509 = vunpack.c.h.b16 %v8209
    %v8510 = vunpack.c.l.b16 %v8210
    %v8511 = vunpack.c.h.b16 %v8210
    %v8512 = vunpack.c.l.b16 %v8211
    %v8513 = vunpack.c.h.b16 %v8211
    %v8514 = vunpack.c.l.b16 %v8212
    %v8515 = vunpack.c.h.b16 %v8212
    %v8516 = vunpack.c.l.b16 %v8213
    %v8517 = vunpack.c.h.b16 %v8213
    %v8518 = vunpack.c.l.b16 %v8214
    %v8519 = vunpack.c.h.b16 %v8214
    %v8520 = vunpack.c.l.b16 %v8215
    %v8521 = vunpack.c.h.b16 %v8215
    %v8522 = vunpack.c.l.b16 %v8216
    %v8523 = vunpack.c.h.b16 %v8216
    %v8524 = vunpack.c.l.b16 %v8217
    %v8525 = vunpack.c.h.b16 %v8217
    %v8526 = vunpack.c.l.b16 %v8218
    %v8527 = vunpack.c.h.b16 %v8218
    %v8528 = vunpack.c.l.b16 %v8219
    %v8529 = vunpack.c.h.b16 %v8219
    %v8530 = vunpack.c.l.b16 %v8220
    %v8531 = vunpack.c.h.b16 %v8220
    %v8532 = vunpack.c.l.b16 %v8221
    %v8533 = vunpack.c.h.b16 %v8221
    %v8534 = vunpack.c.l.b16 %v8222
    %v8535 = vunpack.c.h.b16 %v8222
    %v8536 = vunpack.c.l.b16 %v8223
    %v8537 = vunpack.c.h.b16 %v8223
    %v8538 = vunpack.c.l.b16 %v8224
    %v8539 = vunpack.c.h.b16 %v8224
    %v8540 = vunpack.c.l.b16 %v8225
    %v8541 = vunpack.c.h.b16 %v8225
    %v8542 = vunpack.c.l.b16 %v8226
    %v8543 = vunpack.c.h.b16 %v8226
    %v8544 = vunpack.c.l.b16 %v8227
    %v8545 = vunpack.c.h.b16 %v8227
    %v8546 = vunpack.c.l.b16 %v8228
    %v8547 = vunpack.c.h.b16 %v8228
    %v8548 = vunpack.c.l.b16 %v8229
    %v8549 = vunpack.c.h.b16 %v8229
    %v8550 = vunpack.c.l.b16 %v8230
    %v8551 = vunpack.c.h.b16 %v8230
    %v8552 = vunpack.c.l.b16 %v8231
    %v8553 = vunpack.c.h.b16 %v8231
    %v8554 = vunpack.c.l.b16 %v8232
    %v8555 = vunpack.c.h.b16 %v8232
    %v8556 = vunpack.c.l.b16 %v8233
    %v8557 = vunpack.c.h.b16 %v8233
    %v8558 = vunpack.c.l.b16 %v8234
    %v8559 = vunpack.c.h.b16 %v8234
    %v8560 = vunpack.c.l.b16 %v8235
    %v8561 = vunpack.c.h.b16 %v8235
    %v8562 = vunpack.c.l.b16 %v8236
    %v8563 = vunpack.c.h.b16 %v8236
    %v8564 = vunpack.c.l.b16 %v8237
    %v8565 = vunpack.c.h.b16 %v8237
    %v8566 = vunpack.c.l.b16 %v8238
    %v8567 = vunpack.c.h.b16 %v8238
    %v8568 = vunpack.c.l.b16 %v8239
    %v8569 = vunpack.c.h.b16 %v8239
    %v8570 = vunpack.c.l.b16 %v8240
    %v8571 = vunpack.c.h.b16 %v8240
    %v8572 = vunpack.c.l.b16 %v8241
    %v8573 = vunpack.c.h.b16 %v8241
    %v8574 = vunpack.c.l.b16 %v8242
    %v8575 = vunpack.c.h.b16 %v8242
    %v8576 = vunpack.c.l.b16 %v8243
    %v8577 = vunpack.c.h.b16 %v8243
    %v8578 = vunpack.c.l.b16 %v8244
    %v8579 = vunpack.c.h.b16 %v8244
    %v8580 = vunpack.c.l.b16 %v8245
    %v8581 = vunpack.c.h.b16 %v8245
    %v8582 = vunpack.c.l.b16 %v8246
    %v8583 = vunpack.c.h.b16 %v8246
    %v8584 = vunpack.c.l.b16 %v8247
    %v8585 = vunpack.c.h.b16 %v8247
    %v8586 = vunpack.c.l.b16 %v8248
    %v8587 = vunpack.c.h.b16 %v8248
    %v8588 = vunpack.c.l.b16 %v8249
    %v8589 = vunpack.c.h.b16 %v8249
    %v8590 = vunpack.c.l.b16 %v8250
    %v8591 = vunpack.c.h.b16 %v8250
    %v8592 = vunpack.c.l.b16 %v8251
    %v8593 = vunpack.c.h.b16 %v8251
    %v8594 = vunpack.c.l.b16 %v8252
    %v8595 = vunpack.c.h.b16 %v8252
    %v8596 = vunpack.c.l.b16 %v8253
    %v8597 = vunpack.c.h.b16 %v8253
    %v8598 = vunpack.c.l.b16 %v8254
    %v8599 = vunpack.c.h.b16 %v8254
    %v8600 = vunpack.c.l.b16 %v8255
    %v8601 = vunpack.c.h.b16 %v8255
    %v8602 = vunpack.c.l.b16 %v8256
    %v8603 = vunpack.c.h.b16 %v8256
    %v8604 = vunpack.c.l.b16 %v8257
    %v8605 = vunpack.c.h.b16 %v8257
    %v8606 = vunpack.c.l.b16 %v8258
    %v8607 = vunpack.c.h.b16 %v8258
    %v8608 = vunpack.c.l.b16 %v8259
    %v8609 = vunpack.c.h.b16 %v8259
    %v8610 = vunpack.c.l.b16 %v8260
    %v8611 = vunpack.c.h.b16 %v8260
    %v8612 = vunpack.c.l.b16 %v8261
    %v8613 = vunpack.c.h.b16 %v8261
    %v8614 = vunpack.c.l.b16 %v8262
    %v8615 = vunpack.c.h.b16 %v8262
    %v8616 = vunpack.c.l.b16 %v8263
    %v8617 = vunpack.c.h.b16 %v8263
    %v8618 = vunpack.c.l.b16 %v8264
    %v8619 = vunpack.c.h.b16 %v8264
    %v8620 = vunpack.c.l.b16 %v8265
    %v8621 = vunpack.c.h.b16 %v8265
    %v8622 = vunpack.c.l.b16 %v8266
    %v8623 = vunpack.c.h.b16 %v8266
    %v8624 = vunpack.c.l.b16 %v8267
    %v8625 = vunpack.c.h.b16 %v8267
    %v8626 = vunpack.c.l.b16 %v8268
    %v8627 = vunpack.c.h.b16 %v8268
    %v8628 = vunpack.c.l.b16 %v8269
    %v8629 = vunpack.c.h.b16 %v8269
    %v8630 = vunpack.c.l.b16 %v8270
    %v8631 = vunpack.c.h.b16 %v8270
    %v8632 = vunpack.c.l.b16 %v8271
    %v8633 = vunpack.c.h.b16 %v8271
    %v8634 = vunpack.c.l.b16 %v8272
    %v8635 = vunpack.c.h.b16 %v8272
    %v8636 = vunpack.c.l.b16 %v8273
    %v8637 = vunpack.c.h.b16 %v8273
    %v8638 = vunpack.c.l.b16 %v8274
    %v8639 = vunpack.c.h.b16 %v8274
    %v8640 = vunpack.c.l.b16 %v8275
    %v8641 = vunpack.c.h.b16 %v8275
    %v8642 = vunpack.c.l.b16 %v8276
    %v8643 = vunpack.c.h.b16 %v8276
    %v8644 = vunpack.c.l.b16 %v8277
    %v8645 = vunpack.c.h.b16 %v8277
    %v8646 = vunpack.c.l.b16 %v8278
    %v8647 = vunpack.c.h.b16 %v8278
    %v8648 = vunpack.c.l.b16 %v8279
    %v8649 = vunpack.c.h.b16 %v8279
    %v8650 = vunpack.c.l.b16 %v8280
    %v8651 = vunpack.c.h.b16 %v8280
    %v8652 = vunpack.c.l.b16 %v8281
    %v8653 = vunpack.c.h.b16 %v8281
    %v8654 = vunpack.c.l.b16 %v8282
    %v8655 = vunpack.c.h.b16 %v8282
    %v8656 = vunpack.c.l.b16 %v8283
    %v8657 = vunpack.c.h.b16 %v8283
    %v8658 = vunpack.c.l.b16 %v8284
    %v8659 = vunpack.c.h.b16 %v8284
    %v8660 = vunpack.c.l.b16 %v8285
    %v8661 = vunpack.c.h.b16 %v8285
    %v8662 = vunpack.c.l.b16 %v8286
    %v8663 = vunpack.c.h.b16 %v8286
    %v8664 = vunpack.c.l.b16 %v8287
    %v8665 = vunpack.c.h.b16 %v8287
    %v8666 = vunpack.c.l.b16 %v8288
    %v8667 = vunpack.c.h.b16 %v8288
    %v8668 = vunpack.c.l.b16 %v8289
    %v8669 = vunpack.c.h.b16 %v8289
    %v8670 = vunpack.c.l.b16 %v8290
    %v8671 = vunpack.c.h.b16 %v8290
    %v8672 = vunpack.c.l.b16 %v8291
    %v8673 = vunpack.c.h.b16 %v8291
    %v8674 = vunpack.c.l.b16 %v8292
    %v8675 = vunpack.c.h.b16 %v8292
    %v8676 = vunpack.c.l.b16 %v8293
    %v8677 = vunpack.c.h.b16 %v8293
    %v8678 = vunpack.c.l.b16 %v8294
    %v8679 = vunpack.c.h.b16 %v8294
    %v8680 = vunpack.c.l.b16 %v8295
    %v8681 = vunpack.c.h.b16 %v8295
    %v8682 = vunpack.c.l.b16 %v8296
    %v8683 = vunpack.c.h.b16 %v8296
    %v8684 = vunpack.c.l.b16 %v8297
    %v8685 = vunpack.c.h.b16 %v8297
    %v8686 = vunpack.c.l.b16 %v8298
    %v8687 = vunpack.c.h.b16 %v8298
    %v8688 = vunpack.c.l.b16 %v8299
    %v8689 = vunpack.c.h.b16 %v8299
    %v8690 = vunpack.c.l.b16 %v8300
    %v8691 = vunpack.c.h.b16 %v8300
    %v8692 = vunpack.c.l.b16 %v8301
    %v8693 = vunpack.c.h.b16 %v8301
    %v8694 = vunpack.c.l.b16 %v8302
    %v8695 = vunpack.c.h.b16 %v8302
    %v8696 = vunpack.c.l.b16 %v8303
    %v8697 = vunpack.c.h.b16 %v8303
    %v8698 = vunpack.c.l.b16 %v8304
    %v8699 = vunpack.c.h.b16 %v8304
    %v8700 = vunpack.c.l.b16 %v8305
    %v8701 = vunpack.c.h.b16 %v8305
    %v8702 = vunpack.c.l.b16 %v8306
    %v8703 = vunpack.c.h.b16 %v8306
    %v8704 = vunpack.c.l.b16 %v8307
    %v8705 = vunpack.c.h.b16 %v8307
    %v8706 = vunpack.c.l.b16 %v8308
    %v8707 = vunpack.c.h.b16 %v8308
    %v8708 = vunpack.c.l.b16 %v8309
    %v8709 = vunpack.c.h.b16 %v8309
    %v8710 = vunpack.c.l.b16 %v8310
    %v8711 = vunpack.c.h.b16 %v8310
    %v8712 = vunpack.c.l.b16 %v8311
    %v8713 = vunpack.c.h.b16 %v8311
    %v8714 = vunpack.c.l.b16 %v8312
    %v8715 = vunpack.c.h.b16 %v8312
    %v8716 = vunpack.c.l.b16 %v8313
    %v8717 = vunpack.c.h.b16 %v8313
    %v8718 = vunpack.c.l.b16 %v8314
    %v8719 = vunpack.c.h.b16 %v8314
    %v8720 = vunpack.c.l.b16 %v8315
    %v8721 = vunpack.c.h.b16 %v8315
    %v8722 = vpack.c.b16 %v8470, %v8466
    %v8723 = vpack.c.b16 %v8471, %v8467
    %v8724 = vpack.c.b16 %v8472, %v8468
    %v8725 = vpack.c.b16 %v8473, %v8469
    %v8726 = vpack.c.b16 %v8478, %v8474
    %v8727 = vpack.c.b16 %v8479, %v8475
    %v8728 = vpack.c.b16 %v8480, %v8476
    %v8729 = vpack.c.b16 %v8481, %v8477
    %v8730 = vpack.c.b16 %v8486, %v8482
    %v8731 = vpack.c.b16 %v8487, %v8483
    %v8732 = vpack.c.b16 %v8488, %v8484
    %v8733 = vpack.c.b16 %v8489, %v8485
    %v8734 = vpack.c.b16 %v8494, %v8490
    %v8735 = vpack.c.b16 %v8495, %v8491
    %v8736 = vpack.c.b16 %v8496, %v8492
    %v8737 = vpack.c.b16 %v8497, %v8493
    %v8738 = vpack.c.b16 %v8502, %v8498
    %v8739 = vpack.c.b16 %v8503, %v8499
    %v8740 = vpack.c.b16 %v8504, %v8500
    %v8741 = vpack.c.b16 %v8505, %v8501
    %v8742 = vpack.c.b16 %v8510, %v8506
    %v8743 = vpack.c.b16 %v8511, %v8507
    %v8744 = vpack.c.b16 %v8512, %v8508
    %v8745 = vpack.c.b16 %v8513, %v8509
    %v8746 = vpack.c.b16 %v8518, %v8514
    %v8747 = vpack.c.b16 %v8519, %v8515
    %v8748 = vpack.c.b16 %v8520, %v8516
    %v8749 = vpack.c.b16 %v8521, %v8517
    %v8750 = vpack.c.b16 %v8526, %v8522
    %v8751 = vpack.c.b16 %v8527, %v8523
    %v8752 = vpack.c.b16 %v8528, %v8524
    %v8753 = vpack.c.b16 %v8529, %v8525
    %v8754 = vpack.c.b16 %v8534, %v8530
    %v8755 = vpack.c.b16 %v8535, %v8531
    %v8756 = vpack.c.b16 %v8536, %v8532
    %v8757 = vpack.c.b16 %v8537, %v8533
    %v8758 = vpack.c.b16 %v8542, %v8538
    %v8759 = vpack.c.b16 %v8543, %v8539
    %v8760 = vpack.c.b16 %v8544, %v8540
    %v8761 = vpack.c.b16 %v8545, %v8541
    %v8762 = vpack.c.b16 %v8550, %v8546
    %v8763 = vpack.c.b16 %v8551, %v8547
    %v8764 = vpack.c.b16 %v8552, %v8548
    %v8765 = vpack.c.b16 %v8553, %v8549
    %v8766 = vpack.c.b16 %v8558, %v8554
    %v8767 = vpack.c.b16 %v8559, %v8555
    %v8768 = vpack.c.b16 %v8560, %v8556
    %v8769 = vpack.c.b16 %v8561, %v8557
    %v8770 = vpack.c.b16 %v8566, %v8562
    %v8771 = vpack.c.b16 %v8567, %v8563
    %v8772 = vpack.c.b16 %v8568, %v8564
    %v8773 = vpack.c.b16 %v8569, %v8565
    %v8774 = vpack.c.b16 %v8574, %v8570
    %v8775 = vpack.c.b16 %v8575, %v8571
    %v8776 = vpack.c.b16 %v8576, %v8572
    %v8777 = vpack.c.b16 %v8577, %v8573
    %v8778 = vpack.c.b16 %v8582, %v8578
    %v8779 = vpack.c.b16 %v8583, %v8579
    %v8780 = vpack.c.b16 %v8584, %v8580
    %v8781 = vpack.c.b16 %v8585, %v8581
    %v8782 = vpack.c.b16 %v8590, %v8586
    %v8783 = vpack.c.b16 %v8591, %v8587
    %v8784 = vpack.c.b16 %v8592, %v8588
    %v8785 = vpack.c.b16 %v8593, %v8589
    %v8786 = vpack.c.b16 %v8598, %v8594
    %v8787 = vpack.c.b16 %v8599, %v8595
    %v8788 = vpack.c.b16 %v8600, %v8596
    %v8789 = vpack.c.b16 %v8601, %v8597
    %v8790 = vpack.c.b16 %v8606, %v8602
    %v8791 = vpack.c.b16 %v8607, %v8603
    %v8792 = vpack.c.b16 %v8608, %v8604
    %v8793 = vpack.c.b16 %v8609, %v8605
    %v8794 = vpack.c.b16 %v8614, %v8610
    %v8795 = vpack.c.b16 %v8615, %v8611
    %v8796 = vpack.c.b16 %v8616, %v8612
    %v8797 = vpack.c.b16 %v8617, %v8613
    %v8798 = vpack.c.b16 %v8622, %v8618
    %v8799 = vpack.c.b16 %v8623, %v8619
    %v8800 = vpack.c.b16 %v8624, %v8620
    %v8801 = vpack.c.b16 %v8625, %v8621
    %v8802 = vpack.c.b16 %v8630, %v8626
    %v8803 = vpack.c.b16 %v8631, %v8627
    %v8804 = vpack.c.b16 %v8632, %v8628
    %v8805 = vpack.c.b16 %v8633, %v8629
    %v8806 = vpack.c.b16 %v8638, %v8634
    %v8807 = vpack.c.b16 %v8639, %v8635
    %v8808 = vpack.c.b16 %v8640, %v8636
    %v8809 = vpack.c.b16 %v8641, %v8637
    %v8810 = vpack.c.b16 %v8646, %v8642
    %v8811 = vpack.c.b16 %v8647, %v8643
    %v8812 = vpack.c.b16 %v8648, %v8644
    %v8813 = vpack.c.b16 %v8649, %v8645
    %v8814 = vpack.c.b16 %v8654, %v8650
    %v8815 = vpack.c.b16 %v8655, %v8651
    %v8816 = vpack.c.b16 %v8656, %v8652
    %v8817 = vpack.c.b16 %v8657, %v8653
    %v8818 = vpack.c.b16 %v8662, %v8658
    %v8819 = vpack.c.b16 %v8663, %v8659
    %v8820 = vpack.c.b16 %v8664, %v8660
    %v8821 = vpack.c.b16 %v8665, %v8661
    %v8822 = vpack.c.b16 %v8670, %v8666
    %v8823 = vpack.c.b16 %v8671, %v8667
    %v8824 = vpack.c.b16 %v8672, %v8668
    %v8825 = vpack.c.b16 %v8673, %v8669
    %v8826 = vpack.c.b16 %v8678, %v8674
    %v8827 = vpack.c.b16 %v8679, %v8675
    %v8828 = vpack.c.b16 %v8680, %v8676
    %v8829 = vpack.c.b16 %v8681, %v8677
    %v8830 = vpack.c.b16 %v8686, %v8682
    %v8831 = vpack.c.b16 %v8687, %v8683
    %v8832 = vpack.c.b16 %v8688, %v8684
    %v8833 = vpack.c.b16 %v8689, %v8685
    %v8834 = vpack.c.b16 %v8694, %v8690
    %v8835 = vpack.c.b16 %v8695, %v8691
    %v8836 = vpack.c.b16 %v8696, %v8692
    %v8837 = vpack.c.b16 %v8697, %v8693
    %v8838 = vpack.c.b16 %v8702, %v8698
    %v8839 = vpack.c.b16 %v8703, %v8699
    %v8840 = vpack.c.b16 %v8704, %v8700
    %v8841 = vpack.c.b16 %v8705, %v8701
    %v8842 = vpack.c.b16 %v8710, %v8706
    %v8843 = vpack.c.b16 %v8711, %v8707
    %v8844 = vpack.c.b16 %v8712, %v8708
    %v8845 = vpack.c.b16 %v8713, %v8709
    %v8846 = vpack.c.b16 %v8718, %v8714
    %v8847 = vpack.c.b16 %v8719, %v8715
    %v8848 = vpack.c.b16 %v8720, %v8716
    %v8849 = vpack.c.b16 %v8721, %v8717
    %8978 = vmatprep.subr.bf16.mxu0 %v8751
    %8979 = vmatpush1.bf16.msra.mxu0 %v8750
    %8980 = vmatprep.subr.bf16.mxu0 %v8747
    %8981 = vmatpush1.bf16.msra.mxu0 %v8746
    %8982 = vmatprep.subr.bf16.mxu0 %v8743
    %8983 = vmatpush1.bf16.msra.mxu0 %v8742
    %8984 = vmatprep.subr.bf16.mxu0 %v8739
    %8985 = vmatpush1.bf16.msra.mxu0 %v8738
    %8986 = vmatprep.subr.bf16.mxu0 %v8735
    %8987 = vmatpush1.bf16.msra.mxu0 %v8734
    %8988 = vmatprep.subr.bf16.mxu0 %v8731
    %8989 = vmatpush1.bf16.msra.mxu0 %v8730
    %8990 = vmatprep.subr.bf16.mxu0 %v8727
    %8991 = vmatpush1.bf16.msra.mxu0 %v8726
    %8992 = vmatprep.subr.bf16.mxu0 %v8723
    %8993 = vmatpush1.bf16.msra.mxu0 %v8722
    %8994 = vmatprep.subr.bf16.mxu0 %v8783
    %8995 = vmatpush2.bf16.msra.mxu0 %v8782
    %8996 = vmatprep.subr.bf16.mxu0 %v8779
    %8997 = vmatpush2.bf16.msra.mxu0 %v8778
    %8998 = vmatprep.subr.bf16.mxu0 %v8775
    %8999 = vmatpush2.bf16.msra.mxu0 %v8774
    %9000 = vmatprep.subr.bf16.mxu0 %v8771
    %9001 = vmatpush2.bf16.msra.mxu0 %v8770
    %9002 = vmatprep.subr.bf16.mxu0 %v8767
    %9003 = vmatpush2.bf16.msra.mxu0 %v8766
    %9004 = vmatprep.subr.bf16.mxu0 %v8763
    %9005 = vmatpush2.bf16.msra.mxu0 %v8762
    %9006 = vmatprep.subr.bf16.mxu0 %v8759
    %9007 = vmatpush2.bf16.msra.mxu0 %v8758
    %9008 = vmatprep.subr.bf16.mxu0 %v8755
    %9009 = vmatpush2.bf16.msra.mxu0 %v8754
    %9010 = vmatprep.mubr.bf16.mxu0 %v8185
    %9011 = vmatmul.mubr.bf16.gmra.mxu0 %v8184
    %v9012 = vpop.f32.mrf.mxu0
    %v9013 = vadd.f32 %v8321, %v9012
    %v9014 = vpop.f32.mrf.mxu0
    %v9015 = vadd.f32 %v8325, %v9014
    %v9016 = vpop.f32.mrf.mxu0
    %v9017 = vpop.f32.mrf.mxu0
    %9018 = vdwg.mxu0
    %9019 = vmatprep.subr.bf16.mxu0 %v8815
    %9020 = vmatpush1.bf16.msra.mxu0 %v8814
    %9021 = vmatprep.subr.bf16.mxu0 %v8811
    %9022 = vmatpush1.bf16.msra.mxu0 %v8810
    %9023 = vmatprep.subr.bf16.mxu0 %v8807
    %9024 = vmatpush1.bf16.msra.mxu0 %v8806
    %9025 = vmatprep.subr.bf16.mxu0 %v8803
    %9026 = vmatpush1.bf16.msra.mxu0 %v8802
    %9027 = vmatprep.subr.bf16.mxu0 %v8799
    %9028 = vmatpush1.bf16.msra.mxu0 %v8798
    %9029 = vmatprep.subr.bf16.mxu0 %v8795
    %9030 = vmatpush1.bf16.msra.mxu0 %v8794
    %9031 = vmatprep.subr.bf16.mxu0 %v8791
    %9032 = vmatpush1.bf16.msra.mxu0 %v8790
    %9033 = vmatprep.subr.bf16.mxu0 %v8787
    %9034 = vmatpush1.bf16.msra.mxu0 %v8786
    %9035 = vmatprep.subr.bf16.mxu0 %v8847
    %9036 = vmatpush2.bf16.msra.mxu0 %v8846
    %9037 = vmatprep.subr.bf16.mxu0 %v8843
    %9038 = vmatpush2.bf16.msra.mxu0 %v8842
    %9039 = vmatprep.subr.bf16.mxu0 %v8839
    %9040 = vmatpush2.bf16.msra.mxu0 %v8838
    %9041 = vmatprep.subr.bf16.mxu0 %v8835
    %9042 = vmatpush2.bf16.msra.mxu0 %v8834
    %9043 = vmatprep.subr.bf16.mxu0 %v8831
    %9044 = vmatpush2.bf16.msra.mxu0 %v8830
    %9045 = vmatprep.subr.bf16.mxu0 %v8827
    %9046 = vmatpush2.bf16.msra.mxu0 %v8826
    %9047 = vmatprep.subr.bf16.mxu0 %v8823
    %9048 = vmatpush2.bf16.msra.mxu0 %v8822
    %9049 = vmatprep.subr.bf16.mxu0 %v8819
    %9050 = vmatpush2.bf16.msra.mxu0 %v8818
    %9051 = vmatprep.mubr.bf16.mxu0 %v8187
    %9052 = vmatmul.mubr.bf16.gmra.mxu0 %v8186
    %v9053 = vpop.f32.mrf.mxu0
    %v9054 = vadd.f32 %v9013, %v9053
    %v9055 = vpop.f32.mrf.mxu0
    %v9056 = vadd.f32 %v9015, %v9055
    %v9057 = vpop.f32.mrf.mxu0
    %v9058 = vpop.f32.mrf.mxu0
    %9059 = vdwg.mxu0
    %9060 = vmatprep.subr.bf16.mxu0 %v8753
    %9061 = vmatpush1.bf16.msra.mxu0 %v8752
    %9062 = vmatprep.subr.bf16.mxu0 %v8749
    %9063 = vmatpush1.bf16.msra.mxu0 %v8748
    %9064 = vmatprep.subr.bf16.mxu0 %v8745
    %9065 = vmatpush1.bf16.msra.mxu0 %v8744
    %9066 = vmatprep.subr.bf16.mxu0 %v8741
    %9067 = vmatpush1.bf16.msra.mxu0 %v8740
    %9068 = vmatprep.subr.bf16.mxu0 %v8737
    %9069 = vmatpush1.bf16.msra.mxu0 %v8736
    %9070 = vmatprep.subr.bf16.mxu0 %v8733
    %9071 = vmatpush1.bf16.msra.mxu0 %v8732
    %9072 = vmatprep.subr.bf16.mxu0 %v8729
    %9073 = vmatpush1.bf16.msra.mxu0 %v8728
    %9074 = vmatprep.subr.bf16.mxu0 %v8725
    %9075 = vmatpush1.bf16.msra.mxu0 %v8724
    %9076 = vmatprep.subr.bf16.mxu0 %v8785
    %9077 = vmatpush2.bf16.msra.mxu0 %v8784
    %9078 = vmatprep.subr.bf16.mxu0 %v8781
    %9079 = vmatpush2.bf16.msra.mxu0 %v8780
    %9080 = vmatprep.subr.bf16.mxu0 %v8777
    %9081 = vmatpush2.bf16.msra.mxu0 %v8776
    %9082 = vmatprep.subr.bf16.mxu0 %v8773
    %9083 = vmatpush2.bf16.msra.mxu0 %v8772
    %9084 = vmatprep.subr.bf16.mxu0 %v8769
    %9085 = vmatpush2.bf16.msra.mxu0 %v8768
    %9086 = vmatprep.subr.bf16.mxu0 %v8765
    %9087 = vmatpush2.bf16.msra.mxu0 %v8764
    %9088 = vmatprep.subr.bf16.mxu0 %v8761
    %9089 = vmatpush2.bf16.msra.mxu0 %v8760
    %9090 = vmatprep.subr.bf16.mxu0 %v8757
    %9091 = vmatpush2.bf16.msra.mxu0 %v8756
    %9092 = vmatprep.mubr.bf16.mxu0 %v8185
    %9093 = vmatmul.mubr.bf16.gmra.mxu0 %v8184
    %v9094 = vpop.f32.mrf.mxu0
    %v9095 = vadd.f32 %v8329, %v9094
    %v9096 = vpop.f32.mrf.mxu0
    %v9097 = vadd.f32 %v8333, %v9096
    %v9098 = vpop.f32.mrf.mxu0
    %v9099 = vpop.f32.mrf.mxu0
    %9100 = vdwg.mxu0
    %9101 = vmatprep.subr.bf16.mxu0 %v8817
    %9102 = vmatpush1.bf16.msra.mxu0 %v8816
    %9103 = vmatprep.subr.bf16.mxu0 %v8813
    %9104 = vmatpush1.bf16.msra.mxu0 %v8812
    %9105 = vmatprep.subr.bf16.mxu0 %v8809
    %9106 = vmatpush1.bf16.msra.mxu0 %v8808
    %9107 = vmatprep.subr.bf16.mxu0 %v8805
    %9108 = vmatpush1.bf16.msra.mxu0 %v8804
    %9109 = vmatprep.subr.bf16.mxu0 %v8801
    %9110 = vmatpush1.bf16.msra.mxu0 %v8800
    %9111 = vmatprep.subr.bf16.mxu0 %v8797
    %9112 = vmatpush1.bf16.msra.mxu0 %v8796
    %9113 = vmatprep.subr.bf16.mxu0 %v8793
    %9114 = vmatpush1.bf16.msra.mxu0 %v8792
    %9115 = vmatprep.subr.bf16.mxu0 %v8789
    %9116 = vmatpush1.bf16.msra.mxu0 %v8788
    %9117 = vmatprep.subr.bf16.mxu0 %v8849
    %9118 = vmatpush2.bf16.msra.mxu0 %v8848
    %9119 = vmatprep.subr.bf16.mxu0 %v8845
    %9120 = vmatpush2.bf16.msra.mxu0 %v8844
    %9121 = vmatprep.subr.bf16.mxu0 %v8841
    %9122 = vmatpush2.bf16.msra.mxu0 %v8840
    %9123 = vmatprep.subr.bf16.mxu0 %v8837
    %9124 = vmatpush2.bf16.msra.mxu0 %v8836
    %9125 = vmatprep.subr.bf16.mxu0 %v8833
    %9126 = vmatpush2.bf16.msra.mxu0 %v8832
    %9127 = vmatprep.subr.bf16.mxu0 %v8829
    %9128 = vmatpush2.bf16.msra.mxu0 %v8828
    %9129 = vmatprep.subr.bf16.mxu0 %v8825
    %9130 = vmatpush2.bf16.msra.mxu0 %v8824
    %9131 = vmatprep.subr.bf16.mxu0 %v8821
    %9132 = vmatpush2.bf16.msra.mxu0 %v8820
    %9133 = vmatprep.mubr.bf16.mxu0 %v8187
    %9134 = vmatmul.mubr.bf16.gmra.mxu0 %v8186
    %v9135 = vpop.f32.mrf.mxu0
    %v9136 = vadd.f32 %v9095, %v9135
    %v9137 = vpop.f32.mrf.mxu0
    %v9138 = vadd.f32 %v9097, %v9137
    %v9139 = vpop.f32.mrf.mxu0
    %v9140 = vpop.f32.mrf.mxu0
    %9141 = vdwg.mxu0
    %v9142 = vmax.f32 %v9054, 0.0
    %v9143 = vmax.f32 %v9056, 0.0
    %v9144 = vmax.f32 %v9136, 0.0
    %v9145 = vmax.f32 %v9138, 0.0
    %v9146 = vpack.c.bf16 %v9142, %v9142
    %v9147 = vpack.c.bf16 %v9143, %v9143
    %v9148 = vpack.c.bf16 %v9144, %v9144
    %v9149 = vpack.c.bf16 %v9145, %v9145
    %v9150 = vld [vmem:[%s5] sm:$0xf]
    %v9151 = vld [vmem:[%s5 + $0x4] sm:$0xf]
    %v9152 = vld [vmem:[%s5 + $0x8] sm:$0xf]
    %v9153 = vld [vmem:[%s5 + $0xc] sm:$0xf]
    %v9154 = vld [vmem:[%s5 + $0x10] sm:$0xf]
    %v9155 = vld [vmem:[%s5 + $0x14] sm:$0xf]
    %v9156 = vld [vmem:[%s5 + $0x18] sm:$0xf]
    %v9157 = vld [vmem:[%s5 + $0x1c] sm:$0xf]
    %v9158 = vld [vmem:[%s5 + $0x20] sm:$0xf]
    %v9159 = vld [vmem:[%s5 + $0x24] sm:$0xf]
    %v9160 = vld [vmem:[%s5 + $0x28] sm:$0xf]
    %v9161 = vld [vmem:[%s5 + $0x2c] sm:$0xf]
    %v9162 = vld [vmem:[%s5 + $0x30] sm:$0xf]
    %v9163 = vld [vmem:[%s5 + $0x34] sm:$0xf]
    %v9164 = vld [vmem:[%s5 + $0x38] sm:$0xf]
    %v9165 = vld [vmem:[%s5 + $0x3c] sm:$0xf]
    %v9166 = vld [vmem:[%s5 + $0x40] sm:$0xf]
    %v9167 = vld [vmem:[%s5 + $0x44] sm:$0xf]
    %v9168 = vld [vmem:[%s5 + $0x48] sm:$0xf]
    %v9169 = vld [vmem:[%s5 + $0x4c] sm:$0xf]
    %v9170 = vld [vmem:[%s5 + $0x50] sm:$0xf]
    %v9171 = vld [vmem:[%s5 + $0x54] sm:$0xf]
    %v9172 = vld [vmem:[%s5 + $0x58] sm:$0xf]
    %v9173 = vld [vmem:[%s5 + $0x5c] sm:$0xf]
    %v9174 = vld [vmem:[%s5 + $0x60] sm:$0xf]
    %v9175 = vld [vmem:[%s5 + $0x64] sm:$0xf]
    %v9176 = vld [vmem:[%s5 + $0x68] sm:$0xf]
    %v9177 = vld [vmem:[%s5 + $0x6c] sm:$0xf]
    %v9178 = vld [vmem:[%s5 + $0x70] sm:$0xf]
    %v9179 = vld [vmem:[%s5 + $0x74] sm:$0xf]
    %v9180 = vld [vmem:[%s5 + $0x78] sm:$0xf]
    %v9181 = vld [vmem:[%s5 + $0x7c] sm:$0xf]
    %v9182 = vld [vmem:[%s5 + $0x80] sm:$0xf]
    %v9183 = vld [vmem:[%s5 + $0x84] sm:$0xf]
    %v9184 = vld [vmem:[%s5 + $0x88] sm:$0xf]
    %v9185 = vld [vmem:[%s5 + $0x8c] sm:$0xf]
    %v9186 = vld [vmem:[%s5 + $0x90] sm:$0xf]
    %v9187 = vld [vmem:[%s5 + $0x94] sm:$0xf]
    %v9188 = vld [vmem:[%s5 + $0x98] sm:$0xf]
    %v9189 = vld [vmem:[%s5 + $0x9c] sm:$0xf]
    %v9190 = vld [vmem:[%s5 + $0xa0] sm:$0xf]
    %v9191 = vld [vmem:[%s5 + $0xa4] sm:$0xf]
    %v9192 = vld [vmem:[%s5 + $0xa8] sm:$0xf]
    %v9193 = vld [vmem:[%s5 + $0xac] sm:$0xf]
    %v9194 = vld [vmem:[%s5 + $0xb0] sm:$0xf]
    %v9195 = vld [vmem:[%s5 + $0xb4] sm:$0xf]
    %v9196 = vld [vmem:[%s5 + $0xb8] sm:$0xf]
    %v9197 = vld [vmem:[%s5 + $0xbc] sm:$0xf]
    %v9198 = vld [vmem:[%s5 + $0xc0] sm:$0xf]
    %v9199 = vld [vmem:[%s5 + $0xc4] sm:$0xf]
    %v9200 = vld [vmem:[%s5 + $0xc8] sm:$0xf]
    %v9201 = vld [vmem:[%s5 + $0xcc] sm:$0xf]
    %v9202 = vld [vmem:[%s5 + $0xd0] sm:$0xf]
    %v9203 = vld [vmem:[%s5 + $0xd4] sm:$0xf]
    %v9204 = vld [vmem:[%s5 + $0xd8] sm:$0xf]
    %v9205 = vld [vmem:[%s5 + $0xdc] sm:$0xf]
    %v9206 = vld [vmem:[%s5 + $0xe0] sm:$0xf]
    %v9207 = vld [vmem:[%s5 + $0xe4] sm:$0xf]
    %v9208 = vld [vmem:[%s5 + $0xe8] sm:$0xf]
    %v9209 = vld [vmem:[%s5 + $0xec] sm:$0xf]
    %v9210 = vld [vmem:[%s5 + $0xf0] sm:$0xf]
    %v9211 = vld [vmem:[%s5 + $0xf4] sm:$0xf]
    %v9212 = vld [vmem:[%s5 + $0xf8] sm:$0xf]
    %v9213 = vld [vmem:[%s5 + $0xfc] sm:$0xf]
    %v9214 = vld [vmem:[%s6] sm:$0x1]
    %v9216 = vlaneseq
    %v9217 = vshrl.u32 %v9216, 7
    %v9218 = vsub.s32 0, %v9217
    %v9219 = vrot.slane %v9214, %v9218
    %v9285 = vunpack.c.l.b16 %v9150
    %v9286 = vunpack.c.l.b16 %v9151
    %v9287 = vunpack.c.l.b16 %v9152
    %v9288 = vunpack.c.l.b16 %v9153
    %v9289 = vunpack.c.l.b16 %v9154
    %v9290 = vunpack.c.l.b16 %v9155
    %v9291 = vunpack.c.l.b16 %v9156
    %v9292 = vunpack.c.l.b16 %v9157
    %v9293 = vunpack.c.l.b16 %v9158
    %v9294 = vunpack.c.l.b16 %v9159
    %v9295 = vunpack.c.l.b16 %v9160
    %v9296 = vunpack.c.l.b16 %v9161
    %v9297 = vunpack.c.l.b16 %v9162
    %v9298 = vunpack.c.l.b16 %v9163
    %v9299 = vunpack.c.l.b16 %v9164
    %v9300 = vunpack.c.l.b16 %v9165
    %v9301 = vunpack.c.l.b16 %v9166
    %v9302 = vunpack.c.l.b16 %v9167
    %v9303 = vunpack.c.l.b16 %v9168
    %v9304 = vunpack.c.l.b16 %v9169
    %v9305 = vunpack.c.l.b16 %v9170
    %v9306 = vunpack.c.l.b16 %v9171
    %v9307 = vunpack.c.l.b16 %v9172
    %v9308 = vunpack.c.l.b16 %v9173
    %v9309 = vunpack.c.l.b16 %v9174
    %v9310 = vunpack.c.l.b16 %v9175
    %v9311 = vunpack.c.l.b16 %v9176
    %v9312 = vunpack.c.l.b16 %v9177
    %v9313 = vunpack.c.l.b16 %v9178
    %v9314 = vunpack.c.l.b16 %v9179
    %v9315 = vunpack.c.l.b16 %v9180
    %v9316 = vunpack.c.l.b16 %v9181
    %v9317 = vunpack.c.l.b16 %v9182
    %v9318 = vunpack.c.l.b16 %v9183
    %v9319 = vunpack.c.l.b16 %v9184
    %v9320 = vunpack.c.l.b16 %v9185
    %v9321 = vunpack.c.l.b16 %v9186
    %v9322 = vunpack.c.l.b16 %v9187
    %v9323 = vunpack.c.l.b16 %v9188
    %v9324 = vunpack.c.l.b16 %v9189
    %v9325 = vunpack.c.l.b16 %v9190
    %v9326 = vunpack.c.l.b16 %v9191
    %v9327 = vunpack.c.l.b16 %v9192
    %v9328 = vunpack.c.l.b16 %v9193
    %v9329 = vunpack.c.l.b16 %v9194
    %v9330 = vunpack.c.l.b16 %v9195
    %v9331 = vunpack.c.l.b16 %v9196
    %v9332 = vunpack.c.l.b16 %v9197
    %v9333 = vunpack.c.l.b16 %v9198
    %v9334 = vunpack.c.l.b16 %v9199
    %v9335 = vunpack.c.l.b16 %v9200
    %v9336 = vunpack.c.l.b16 %v9201
    %v9337 = vunpack.c.l.b16 %v9202
    %v9338 = vunpack.c.l.b16 %v9203
    %v9339 = vunpack.c.l.b16 %v9204
    %v9340 = vunpack.c.l.b16 %v9205
    %v9341 = vunpack.c.l.b16 %v9206
    %v9342 = vunpack.c.l.b16 %v9207
    %v9343 = vunpack.c.l.b16 %v9208
    %v9344 = vunpack.c.l.b16 %v9209
    %v9345 = vunpack.c.l.b16 %v9210
    %v9346 = vunpack.c.l.b16 %v9211
    %v9347 = vunpack.c.l.b16 %v9212
    %v9348 = vunpack.c.l.b16 %v9213
    %v9349 = vpack.c.b16 %v9286, %v9285
    %v9350 = vpack.c.b16 %v9288, %v9287
    %v9351 = vpack.c.b16 %v9290, %v9289
    %v9352 = vpack.c.b16 %v9292, %v9291
    %v9353 = vpack.c.b16 %v9294, %v9293
    %v9354 = vpack.c.b16 %v9296, %v9295
    %v9355 = vpack.c.b16 %v9298, %v9297
    %v9356 = vpack.c.b16 %v9300, %v9299
    %v9357 = vpack.c.b16 %v9302, %v9301
    %v9358 = vpack.c.b16 %v9304, %v9303
    %v9359 = vpack.c.b16 %v9306, %v9305
    %v9360 = vpack.c.b16 %v9308, %v9307
    %v9361 = vpack.c.b16 %v9310, %v9309
    %v9362 = vpack.c.b16 %v9312, %v9311
    %v9363 = vpack.c.b16 %v9314, %v9313
    %v9364 = vpack.c.b16 %v9316, %v9315
    %v9365 = vpack.c.b16 %v9318, %v9317
    %v9366 = vpack.c.b16 %v9320, %v9319
    %v9367 = vpack.c.b16 %v9322, %v9321
    %v9368 = vpack.c.b16 %v9324, %v9323
    %v9369 = vpack.c.b16 %v9326, %v9325
    %v9370 = vpack.c.b16 %v9328, %v9327
    %v9371 = vpack.c.b16 %v9330, %v9329
    %v9372 = vpack.c.b16 %v9332, %v9331
    %v9373 = vpack.c.b16 %v9334, %v9333
    %v9374 = vpack.c.b16 %v9336, %v9335
    %v9375 = vpack.c.b16 %v9338, %v9337
    %v9376 = vpack.c.b16 %v9340, %v9339
    %v9377 = vpack.c.b16 %v9342, %v9341
    %v9378 = vpack.c.b16 %v9344, %v9343
    %v9379 = vpack.c.b16 %v9346, %v9345
    %v9380 = vpack.c.b16 %v9348, %v9347
    %9413 = vmatprep.subr.bf16.mxu0 0
    %9414 = vmatpush1.bf16.msra.mxu0 %v9356
    %9415 = vmatprep.subr.bf16.mxu0 0
    %9416 = vmatpush1.bf16.msra.mxu0 %v9355
    %9417 = vmatprep.subr.bf16.mxu0 0
    %9418 = vmatpush1.bf16.msra.mxu0 %v9354
    %9419 = vmatprep.subr.bf16.mxu0 0
    %9420 = vmatpush1.bf16.msra.mxu0 %v9353
    %9421 = vmatprep.subr.bf16.mxu0 0
    %9422 = vmatpush1.bf16.msra.mxu0 %v9352
    %9423 = vmatprep.subr.bf16.mxu0 0
    %9424 = vmatpush1.bf16.msra.mxu0 %v9351
    %9425 = vmatprep.subr.bf16.mxu0 0
    %9426 = vmatpush1.bf16.msra.mxu0 %v9350
    %9427 = vmatprep.subr.bf16.mxu0 0
    %9428 = vmatpush1.bf16.msra.mxu0 %v9349
    %9429 = vmatprep.subr.bf16.mxu0 0
    %9430 = vmatpush2.bf16.msra.mxu0 %v9364
    %9431 = vmatprep.subr.bf16.mxu0 0
    %9432 = vmatpush2.bf16.msra.mxu0 %v9363
    %9433 = vmatprep.subr.bf16.mxu0 0
    %9434 = vmatpush2.bf16.msra.mxu0 %v9362
    %9435 = vmatprep.subr.bf16.mxu0 0
    %9436 = vmatpush2.bf16.msra.mxu0 %v9361
    %9437 = vmatprep.subr.bf16.mxu0 0
    %9438 = vmatpush2.bf16.msra.mxu0 %v9360
    %9439 = vmatprep.subr.bf16.mxu0 0
    %9440 = vmatpush2.bf16.msra.mxu0 %v9359
    %9441 = vmatprep.subr.bf16.mxu0 0
    %9442 = vmatpush2.bf16.msra.mxu0 %v9358
    %9443 = vmatprep.subr.bf16.mxu0 0
    %9444 = vmatpush2.bf16.msra.mxu0 %v9357
    %9445 = vmatprep.mubr.bf16.mxu0 %v9147
    %9446 = vmatmul.mubr.bf16.gmra.mxu0 %v9146
    %v9447 = vpop.f32.mrf.mxu0
    %v9448 = vadd.f32 %v9219, %v9447
    %v9449 = vpop.f32.mrf.mxu0
    %v9450 = vpop.f32.mrf.mxu0
    %v9451 = vpop.f32.mrf.mxu0
    %9452 = vdwg.mxu0
    %9453 = vmatprep.subr.bf16.mxu0 0
    %9454 = vmatpush1.bf16.msra.mxu0 %v9372
    %9455 = vmatprep.subr.bf16.mxu0 0
    %9456 = vmatpush1.bf16.msra.mxu0 %v9371
    %9457 = vmatprep.subr.bf16.mxu0 0
    %9458 = vmatpush1.bf16.msra.mxu0 %v9370
    %9459 = vmatprep.subr.bf16.mxu0 0
    %9460 = vmatpush1.bf16.msra.mxu0 %v9369
    %9461 = vmatprep.subr.bf16.mxu0 0
    %9462 = vmatpush1.bf16.msra.mxu0 %v9368
    %9463 = vmatprep.subr.bf16.mxu0 0
    %9464 = vmatpush1.bf16.msra.mxu0 %v9367
    %9465 = vmatprep.subr.bf16.mxu0 0
    %9466 = vmatpush1.bf16.msra.mxu0 %v9366
    %9467 = vmatprep.subr.bf16.mxu0 0
    %9468 = vmatpush1.bf16.msra.mxu0 %v9365
    %9469 = vmatprep.subr.bf16.mxu0 0
    %9470 = vmatpush2.bf16.msra.mxu0 %v9380
    %9471 = vmatprep.subr.bf16.mxu0 0
    %9472 = vmatpush2.bf16.msra.mxu0 %v9379
    %9473 = vmatprep.subr.bf16.mxu0 0
    %9474 = vmatpush2.bf16.msra.mxu0 %v9378
    %9475 = vmatprep.subr.bf16.mxu0 0
    %9476 = vmatpush2.bf16.msra.mxu0 %v9377
    %9477 = vmatprep.subr.bf16.mxu0 0
    %9478 = vmatpush2.bf16.msra.mxu0 %v9376
    %9479 = vmatprep.subr.bf16.mxu0 0
    %9480 = vmatpush2.bf16.msra.mxu0 %v9375
    %9481 = vmatprep.subr.bf16.mxu0 0
    %9482 = vmatpush2.bf16.msra.mxu0 %v9374
    %9483 = vmatprep.subr.bf16.mxu0 0
    %9484 = vmatpush2.bf16.msra.mxu0 %v9373
    %9485 = vmatprep.mubr.bf16.mxu0 %v9149
    %9486 = vmatmul.mubr.bf16.gmra.mxu0 %v9148
    %v9487 = vpop.f32.mrf.mxu0
    %v9488 = vadd.f32 %v9448, %v9487
    %v9489 = vpop.f32.mrf.mxu0
    %v9490 = vpop.f32.mrf.mxu0
    %v9491 = vpop.f32.mrf.mxu0
    %9492 = vdwg.mxu0
    %9493 = vst [vmem:[%s7] sm:$0xff] %v9488
  $region37: #{simclr_forward.1} parent=0 // pred_fallthru
    _
  // Predicated region
  $region38: #{simclr_forward.1} parent=0 // pred_check
    _
  $region39: #{simclr_forward.1} parent=0 // pred_check_branch
    %9495 = sbr.rel (0) target = $region41
  $region40: #{simclr_forward.1} parent=0 // pred_region
    _
  $region41: #{simclr_forward.1} parent=0 // pred_fallthru
    _
  // Predicated region
  $region42: #{simclr_forward.1} parent=0 // pred_check
    _
  $region43: #{simclr_forward.1} parent=0 // pred_check_branch
    %9497 = sbr.rel (0) target = $region45
  $region44: #{simclr_forward.1} parent=0 // pred_region
    _
  $region45: #{simclr_forward.1} parent=0 // pred_fallthru
    _

</llo_original>
